<compile_context>
chip_gen: v7x
topology: tpu7x:2x2x1
jax: 0.10.0
libtpu: 0.0.40
codegen_flags: <defaults>
</compile_context>

<pallas_src>
import numpy as np
import jax
import jax.numpy as jnp
from jax import lax
from jax.experimental import pallas as pl
from jax.experimental.pallas import tpu as pltpu


# ----------------------------------------------------------------------------
# In-kernel math helpers (traced inside the Pallas kernel body)
# ----------------------------------------------------------------------------
def _quantize(x, bits):
    # Module_Quantize (QMode.DET): fixed-point quantize to `bits` bits on [-1, 1 - 2^(1-bits)].
    # TODO(synk): Module_Quantize source not provided; standard deterministic rule assumed.
    s = float(2 ** (bits - 1))
    return jnp.clip(jnp.round(x * s) * (1.0 / s), -1.0, 1.0 - 1.0 / s)


def _binarize(x):
    # ActivationModule.BINARIZE.
    # TODO(synk): sign(0) -> +1 here; torch.sign(0) == 0 differs only on the measure-zero set.
    return jnp.where(x >= 0.0, 1.0, -1.0)


# ----------------------------------------------------------------------------
# Fused whole-network kernel
# ----------------------------------------------------------------------------
def _make_fused_kernel(*, batch, layers, n_fc, input_bits, fc_bits):
    n_conv = len(layers)
    n_inputs = 1 + 3 * n_conv + 2 * n_fc + 2

    def kernel(*refs):
        in_refs = refs[:n_inputs]
        out_ref = refs[n_inputs]
        scr_refs = refs[n_inputs + 1:]

        x_ref = in_refs[0]
        conv_refs = in_refs[1:1 + 3 * n_conv]
        fc_refs = in_refs[1 + 3 * n_conv:1 + 3 * n_conv + 2 * n_fc]
        cls_w_ref, cls_b_ref = in_refs[1 + 3 * n_conv + 2 * n_fc:]

        act_in_ref = scr_refs[0]
        conv_scr = scr_refs[1:1 + 2 * n_conv]
        fcbuf_ref = scr_refs[1 + 2 * n_conv]

        # ---- input fixed-point quantization (Module_Quantize on the network input) ----
        xin = x_ref[...]
        if input_bits < 32:
            xin = _quantize(xin, input_bits)
        act_in_ref[...] = xin.astype(act_in_ref.dtype)   # exact in bf16 for <=8-bit values

        # ---- conv stack: ternary conv (in-kernel im2col, one batched MXU matmul per
        #      layer) + folded eval-BatchNorm + binarize + fused 2x2 max-pool ----
        src_ref = act_in_ref
        for li, L in enumerate(layers):
            w_ref, sc_ref, bi_ref = conv_refs[3 * li:3 * li + 3]
            prow_ref, aout_ref = conv_scr[2 * li:2 * li + 2]
            k, cin, cout = L["k"], L["Cin"], L["Cout"]
            ow, oheff = L["OW"], L["OHeff"]
            kk = k * k * cin
            g = batch * oheff

            # im2col: one window-slab copy per conv tap, batched over the batch dim.
            for i in range(k):
                for j in range(k):
                    tap = i * k + j
                    prow_ref[:, :, :, tap * cin:(tap + 1) * cin] = (
                        src_ref[:, i:i + oheff, j:j + ow, :].astype(prow_ref.dtype))

            # One batched bf16 MXU matmul for the whole layer:
            #   (g, ow, kk) x (g, kk, cout) -> (g, ow, cout), g = batch * OHeff.
            patches = prow_ref[...].reshape(g, ow, kk)            # merge leading dims only
            w_b = jnp.broadcast_to(w_ref[...], (g, kk, cout))
            y = lax.dot_general(patches, w_b,
                                dimension_numbers=(((2,), (1,)), ((0,), (0,))),
                                preferred_element_type=jnp.float32)
            act = _binarize(y * sc_ref[...] + bi_ref[...])        # (g, ow, cout) in {-1,+1}

            if L["pool"]:
                ph_n, pw_n = L["PH"], L["PW"]
                g2 = batch * ph_n
                # Row pairs live along the (major) g axis -> cheap reshape + max.
                re = act.reshape(g2, 2, ow, cout)
                rmax = jnp.maximum(re[:, 0, :, :], re[:, 1, :, :])      # (g2, ow, cout)
                # Column pairs along the sublane axis -> 0/1 selection matmuls on MXU.
                rr = lax.broadcasted_iota(jnp.int32, (pw_n, ow), 0)
                cc = lax.broadcasted_iota(jnp.int32, (pw_n, ow), 1)
                sel_e = jnp.broadcast_to((cc == 2 * rr).astype(jnp.float32), (g2, pw_n, ow))
                sel_o = jnp.broadcast_to((cc == 2 * rr + 1).astype(jnp.float32), (g2, pw_n, ow))
                dn = (((2,), (1,)), ((0,), (0,)))
                pooled = jnp.maximum(
                    lax.dot_general(sel_e, rmax, dn, preferred_element_type=jnp.float32),
                    lax.dot_general(sel_o, rmax, dn, preferred_element_type=jnp.float32))
                aout_ref[...] = pooled.reshape(batch, ph_n, pw_n, cout).astype(aout_ref.dtype)
            else:
                aout_ref[...] = act.reshape(batch, oheff, ow, cout).astype(aout_ref.dtype)
            src_ref = aout_ref

        # ---- flatten: the PyTorch NCHW reshape order is absorbed into a host-side
        #      row-permutation of the first FC weight, so we only copy NHWC-contiguous
        #      channel slices here. ----
        last = layers[-1]
        hl, wl, cl = last["Hout"], last["Wout"], last["Cout"]
        for n in range(batch):
            for h in range(hl):
                for w in range(wl):
                    col = (h * wl + w) * cl
                    fcbuf_ref[n:n + 1, col:col + cl] = (
                        src_ref[n, h, w:w + 1, :].astype(fcbuf_ref.dtype))

        # ---- FC stack: quantize -> linear -> binarize (Dropout(p=0.0) == identity),
        #      then the classifier; all chained on VMEM-resident data ----
        h_act = fcbuf_ref[...]
        for f in range(n_fc):
            wf_ref, bf_ref = fc_refs[2 * f:2 * f + 2]
            if fc_bits < 32:
                h_act = _quantize(h_act, fc_bits)
            h_act = jnp.dot(h_act, wf_ref[...],
                            preferred_element_type=jnp.float32) + bf_ref[...]
            h_act = _binarize(h_act)
        logits = jnp.dot(h_act, cls_w_ref[...],
                         preferred_element_type=jnp.float32) + cls_b_ref[...]
        out_ref[...] = logits

    return kernel


def _full_spec(shape):
    zeros = (0,) * len(shape)
    return pl.BlockSpec(shape, lambda i: zeros)


def build_cnn_forward(conv_cfg, *, batch, in_ch, in_dim, input_bits,
                      fc_height, fc_layers, fc_bits, out_height):
    """Derive the static layer geometry and build the single fused pallas_call."""
    layers = []
    h = w = in_dim
    cin = in_ch
    for (cout, k, stride, pool) in conv_cfg:
        # TODO(synk): only stride-1 convolutions implemented (matches the given config).
        assert stride == 1, "fused kernel currently supports stride=1 convolutions"
        oh_, ow_ = (h - k) // stride + 1, (w - k) // stride + 1
        if pool:
            ph_, pw_ = oh_ // 2, ow_ // 2          # MaxPool2d(2): floor, drops trailing row/col
            hout, wout, oheff = ph_, pw_, 2 * ph_
        else:
            ph_ = pw_ = None
            hout, wout, oheff = oh_, ow_, oh_
        layers.append(dict(Cin=cin, Cout=cout, k=k, H=h, W=w, OH=oh_, OW=ow_,
                           OHeff=oheff, pool=pool, PH=ph_, PW=pw_, Hout=hout, Wout=wout))
        h, w, cin = hout, wout, cout
    flat_dim = h * w * cin

    kernel = _make_fused_kernel(batch=batch, layers=layers, n_fc=fc_layers,
                                input_bits=input_bits, fc_bits=fc_bits)

    in_specs = [_full_spec((batch, in_dim, in_dim, in_ch))]
    for L in layers:
        kk = L["k"] * L["k"] * L["Cin"]
        in_specs += [_full_spec((kk, L["Cout"])),
                     _full_spec((1, L["Cout"])),
                     _full_spec((1, L["Cout"]))]
    prev = flat_dim
    for _ in range(fc_layers):
        in_specs += [_full_spec((prev, fc_height)), _full_spec((1, fc_height))]
        prev = fc_height
    in_specs += [_full_spec((prev, out_height)), _full_spec((1, out_height))]

    act_dt = jnp.bfloat16 if input_bits < 16 else jnp.float32
    scratch_shapes = [pltpu.VMEM((batch, in_dim, in_dim, in_ch), act_dt)]
    for L in layers:
        kk = L["k"] * L["k"] * L["Cin"]
        scratch_shapes += [
            pltpu.VMEM((batch, L["OHeff"], L["OW"], kk), jnp.bfloat16),            # im2col patches
            pltpu.VMEM((batch, L["Hout"], L["Wout"], L["Cout"]), jnp.bfloat16),    # layer output (+-1)
        ]
    scratch_shapes += [pltpu.VMEM((batch, flat_dim), jnp.float32)]                 # FC input

    fwd = pl.pallas_call(
        kernel,
        out_shape=jax.ShapeDtypeStruct((batch, out_height), jnp.float32),
        grid=(1,),
        in_specs=in_specs,
        out_specs=_full_spec((batch, out_height)),
        scratch_shapes=scratch_shapes,
        compiler_params=pltpu.CompilerParams(dimension_semantics=("arbitrary",)),
    )
    return fwd, layers, flat_dim


# ----------------------------------------------------------------------------
# Host-side, forward-invariant weight preparation (hoisted out of the forward)
# ----------------------------------------------------------------------------
def ternarize(w):
    # TODO(synk): TernaryConv2d source not provided; standard TWN rule
    # (threshold 0.7*mean|w|, unit magnitudes {-1,0,+1}, no per-filter alpha) assumed.
    delta = 0.7 * jnp.mean(jnp.abs(w))
    return jnp.where(w > delta, 1.0, jnp.where(w < -delta, -1.0, 0.0)).astype(jnp.float32)


def prepare_operands(params, layers, flat_dim):
    """Ternarize conv weights, fold eval BatchNorm + conv bias into per-channel
    scale/bias, lay weights out as (K, Cout) bf16 matmul operands, and fold the
    NHWC->NCHW flatten permutation into the first FC weight."""
    eps = 1e-5
    ops = []
    for p, L in zip(params["conv"], layers):
        wt = ternarize(p["w"])                                           # (Cout, Cin, k, k)
        wmat = jnp.transpose(wt, (2, 3, 1, 0)).reshape(-1, L["Cout"])    # (k*k*Cin, Cout)
        scale = p["gamma"] / jnp.sqrt(p["rvar"] + eps)
        bias = p["beta"] - p["rmean"] * scale + scale * p["b"]
        ops += [wmat.astype(jnp.bfloat16),
                scale.reshape(1, -1).astype(jnp.float32),
                bias.reshape(1, -1).astype(jnp.float32)]
    hl, wl, cl = layers[-1]["Hout"], layers[-1]["Wout"], layers[-1]["Cout"]
    k_nhwc = np.arange(flat_dim)
    hh, ww, cc = k_nhwc // (wl * cl), (k_nhwc // cl) % wl, k_nhwc % cl
    perm = cc * (hl * wl) + hh * wl + ww        # kernel (NHWC) flat idx -> PyTorch NCHW flat idx
    for idx, p in enumerate(params["fc"]):
        wt = jnp.transpose(p["w"])              # (in, out)
        if idx == 0:
            wt = wt[perm, :]
        ops += [wt, p["b"].reshape(1, -1)]
    ops += [jnp.transpose(params["cls"]["w"]), params["cls"]["b"].reshape(1, -1)]
    return ops


def make_params(key, in_ch, conv_cfg, fc_in, fc_height, fc_layers, out_height):
    params = {"conv": [], "fc": [], "cls": None}
    for (out_c, ksize, _stride, _pool) in conv_cfg:
        key, k1, k2, k3, k4, k5, k6 = jax.random.split(key, 7)
        w = 0.1 * jax.random.normal(k1, (out_c, in_ch, ksize, ksize), jnp.float32)
        b = 0.1 * jax.random.normal(k2, (out_c,), jnp.float32)
        gamma = jax.random.uniform(k3, (out_c,), jnp.float32, 0.5, 1.5)
        beta = 0.1 * jax.random.normal(k4, (out_c,), jnp.float32)
        rmean = 0.1 * jax.random.normal(k5, (out_c,), jnp.float32)
        rvar = jax.random.uniform(k6, (out_c,), jnp.float32, 0.5, 1.5)
        params["conv"].append(dict(w=w, b=b, gamma=gamma, beta=beta, rmean=rmean, rvar=rvar))
        in_ch = out_c
    prev = fc_in
    for _ in range(fc_layers):
        key, k1, k2 = jax.random.split(key, 3)
        bound = 1.0 / (prev ** 0.5)
        w = jax.random.uniform(k1, (fc_height, prev), jnp.float32, -bound, bound)
        b = jax.random.uniform(k2, (fc_height,), jnp.float32, -bound, bound)
        params["fc"].append(dict(w=w, b=b))
        prev = fc_height
    key, k1, k2 = jax.random.split(key, 3)
    bound = 1.0 / (prev ** 0.5)
    params["cls"] = dict(
        w=jax.random.uniform(k1, (out_height, prev), jnp.float32, -bound, bound),
        b=jax.random.uniform(k2, (out_height,), jnp.float32, -bound, bound),
    )
    return params


# ----------------------------------------------------------------------------
if __name__ == "__main__":
    # CNNParams: input_channels=3, input_dimensions=16, input_bitwidth=8,
    #            output_height=10, fc_height=32, fc_layers=2, fc_bitwidth=4,
    #            conv_layers=[(8,k3,s1,pool), (16,k3,s1,pool)], activation=BINARIZE,
    #            dropout_rate=0.0 (inference / eval-mode BatchNorm forward).
    batch, in_ch, dim = 2, 3, 16
    input_bitwidth, fc_bitwidth = 8, 4
    fc_height, fc_layers, out_height = 32, 2, 10
    conv_cfg = [(8, 3, 1, True), (16, 3, 1, True)]   # (out_channels, kernel, stride, pool)

    fwd, layers, flat_dim = build_cnn_forward(
        conv_cfg, batch=batch, in_ch=in_ch, in_dim=dim, input_bits=input_bitwidth,
        fc_height=fc_height, fc_layers=fc_layers, fc_bits=fc_bitwidth,
        out_height=out_height)
    # 16 -conv3-> 14 -pool-> 7 -conv3-> 5 -pool-> 2  => flatten 16*2*2 = 64
    assert flat_dim == 16 * 2 * 2, flat_dim

    key = jax.random.PRNGKey(0)
    key, kx, kp = jax.random.split(key, 3)
    x = jax.random.normal(kx, (batch, in_ch, dim, dim), jnp.float32)
    params = make_params(kp, in_ch, conv_cfg, flat_dim, fc_height, fc_layers, out_height)
    operands = prepare_operands(params, layers, flat_dim)   # done once, not per forward

    @jax.jit
    def cnn_forward(x_nchw, ops):
        x_nhwc = jnp.transpose(x_nchw, (0, 2, 3, 1))         # NCHW -> NHWC
        return fwd(x_nhwc, *ops)

    out = cnn_forward(x, operands)
    jax.block_until_ready(out)
    assert out.shape == (batch, out_height), out.shape
    print("KERNEL_OK")
</pallas_src>

<mosaic_0001>
module attributes {stable_mosaic.version = 11 : i64} {
  func.func @kernel(%arg0: i32, %arg1: memref<2x16x16x3xf32, #tpu.memory_space<vmem>>, %arg2: memref<27x8xbf16, #tpu.memory_space<vmem>>, %arg3: memref<1x8xf32, #tpu.memory_space<vmem>>, %arg4: memref<1x8xf32, #tpu.memory_space<vmem>>, %arg5: memref<72x16xbf16, #tpu.memory_space<vmem>>, %arg6: memref<1x16xf32, #tpu.memory_space<vmem>>, %arg7: memref<1x16xf32, #tpu.memory_space<vmem>>, %arg8: memref<64x32xf32, #tpu.memory_space<vmem>>, %arg9: memref<1x32xf32, #tpu.memory_space<vmem>>, %arg10: memref<32x32xf32, #tpu.memory_space<vmem>>, %arg11: memref<1x32xf32, #tpu.memory_space<vmem>>, %arg12: memref<32x10xf32, #tpu.memory_space<vmem>>, %arg13: memref<1x10xf32, #tpu.memory_space<vmem>>, %arg14: memref<2x10xf32, #tpu.memory_space<vmem>>, %arg15: memref<2x16x16x3xbf16, #tpu.memory_space<vmem>>, %arg16: memref<2x14x14x27xbf16, #tpu.memory_space<vmem>>, %arg17: memref<2x7x7x8xbf16, #tpu.memory_space<vmem>>, %arg18: memref<2x4x5x72xbf16, #tpu.memory_space<vmem>>, %arg19: memref<2x2x2x16xbf16, #tpu.memory_space<vmem>>, %arg20: memref<2x64xf32, #tpu.memory_space<vmem>>) attributes {dimension_semantics = [#tpu.dimension_semantics<arbitrary>], iteration_bounds = array<i64: 1>, scalar_prefetch = 0 : i64, scratch_operands = 6 : i64, tpu.core_type = #tpu.core_type<tc>, window_params = [{pipeline_mode = #tpu.pipeline_mode<synchronous>, transform_indices = @transform_0, window_bounds = array<i64: 2, 16, 16, 3>}, {pipeline_mode = #tpu.pipeline_mode<synchronous>, transform_indices = @transform_1, window_bounds = array<i64: 27, 8>}, {pipeline_mode = #tpu.pipeline_mode<synchronous>, transform_indices = @transform_2, window_bounds = array<i64: 1, 8>}, {pipeline_mode = #tpu.pipeline_mode<synchronous>, transform_indices = @transform_3, window_bounds = array<i64: 1, 8>}, {pipeline_mode = #tpu.pipeline_mode<synchronous>, transform_indices = @transform_4, window_bounds = array<i64: 72, 16>}, {pipeline_mode = #tpu.pipeline_mode<synchronous>, transform_indices = @transform_5, window_bounds = array<i64: 1, 16>}, {pipeline_mode = #tpu.pipeline_mode<synchronous>, transform_indices = @transform_6, window_bounds = array<i64: 1, 16>}, {pipeline_mode = #tpu.pipeline_mode<synchronous>, transform_indices = @transform_7, window_bounds = array<i64: 64, 32>}, {pipeline_mode = #tpu.pipeline_mode<synchronous>, transform_indices = @transform_8, window_bounds = array<i64: 1, 32>}, {pipeline_mode = #tpu.pipeline_mode<synchronous>, transform_indices = @transform_9, window_bounds = array<i64: 32, 32>}, {pipeline_mode = #tpu.pipeline_mode<synchronous>, transform_indices = @transform_10, window_bounds = array<i64: 1, 32>}, {pipeline_mode = #tpu.pipeline_mode<synchronous>, transform_indices = @transform_11, window_bounds = array<i64: 32, 10>}, {pipeline_mode = #tpu.pipeline_mode<synchronous>, transform_indices = @transform_12, window_bounds = array<i64: 1, 10>}, {pipeline_mode = #tpu.pipeline_mode<synchronous>, transform_indices = @transform_13, window_bounds = array<i64: 2, 10>}]} {
    %c0 = arith.constant 0 : index
    %c0_0 = arith.constant 0 : index
    %c0_1 = arith.constant 0 : index
    %c0_2 = arith.constant 0 : index
    %0 = vector.load %arg1[%c0, %c0_0, %c0_1, %c0_2] : memref<2x16x16x3xf32, #tpu.memory_space<vmem>>, vector<2x16x16x3xf32>
    %cst = arith.constant 1.280000e+02 : f32
    %1 = vector.broadcast %cst : f32 to vector<2x16x16x3xf32>
    %2 = arith.mulf %0, %1 : vector<2x16x16x3xf32>
    %3 = math.roundeven %2 : vector<2x16x16x3xf32>
    %cst_3 = arith.constant 7.812500e-03 : f32
    %4 = vector.broadcast %cst_3 : f32 to vector<2x16x16x3xf32>
    %5 = arith.mulf %3, %4 : vector<2x16x16x3xf32>
    %cst_4 = arith.constant -1.000000e+00 : f32
    %cst_5 = arith.constant 0.9921875 : f32
    %6 = vector.broadcast %cst_4 : f32 to vector<2x16x16x3xf32>
    %7 = arith.maximumf %6, %5 : vector<2x16x16x3xf32>
    %8 = vector.broadcast %cst_5 : f32 to vector<2x16x16x3xf32>
    %9 = arith.minimumf %8, %7 : vector<2x16x16x3xf32>
    %10 = arith.truncf %9 : vector<2x16x16x3xf32> to vector<2x16x16x3xbf16>
    %c0_6 = arith.constant 0 : index
    %c0_7 = arith.constant 0 : index
    %c0_8 = arith.constant 0 : index
    %c0_9 = arith.constant 0 : index
    %11 = vector.load %arg15[%c0_6, %c0_7, %c0_8, %c0_9] : memref<2x16x16x3xbf16, #tpu.memory_space<vmem>>, vector<2x16x16x3xbf16>
    tpu.vector_store %arg15[%c0_6, %c0_7, %c0_8, %c0_9], %10 {strides = array<i32>} : memref<2x16x16x3xbf16, #tpu.memory_space<vmem>>, vector<2x16x16x3xbf16>,
    %c0_10 = arith.constant 0 : index
    %c0_11 = arith.constant 0 : index
    %c0_12 = arith.constant 0 : index
    %c0_13 = arith.constant 0 : index
    %12 = vector.load %arg15[%c0_10, %c0_11, %c0_12, %c0_13] : memref<2x16x16x3xbf16, #tpu.memory_space<vmem>>, vector<2x14x14x3xbf16>
    %c0_14 = arith.constant 0 : index
    %c0_15 = arith.constant 0 : index
    %c0_16 = arith.constant 0 : index
    %c0_17 = arith.constant 0 : index
    %13 = vector.load %arg16[%c0_14, %c0_15, %c0_16, %c0_17] : memref<2x14x14x27xbf16, #tpu.memory_space<vmem>>, vector<2x14x14x3xbf16>
    tpu.vector_store %arg16[%c0_14, %c0_15, %c0_16, %c0_17], %12 {strides = array<i32>} : memref<2x14x14x27xbf16, #tpu.memory_space<vmem>>, vector<2x14x14x3xbf16>,
    %c0_18 = arith.constant 0 : index
    %c0_19 = arith.constant 0 : index
    %c1 = arith.constant 1 : index
    %c0_20 = arith.constant 0 : index
    %14 = vector.load %arg15[%c0_18, %c0_19, %c1, %c0_20] : memref<2x16x16x3xbf16, #tpu.memory_space<vmem>>, vector<2x14x14x3xbf16>
    %c0_21 = arith.constant 0 : index
    %c0_22 = arith.constant 0 : index
    %c0_23 = arith.constant 0 : index
    %c3 = arith.constant 3 : index
    %15 = vector.load %arg16[%c0_21, %c0_22, %c0_23, %c3] : memref<2x14x14x27xbf16, #tpu.memory_space<vmem>>, vector<2x14x14x3xbf16>
    tpu.vector_store %arg16[%c0_21, %c0_22, %c0_23, %c3], %14 {strides = array<i32>} : memref<2x14x14x27xbf16, #tpu.memory_space<vmem>>, vector<2x14x14x3xbf16>,
    %c0_24 = arith.constant 0 : index
    %c0_25 = arith.constant 0 : index
    %c2 = arith.constant 2 : index
    %c0_26 = arith.constant 0 : index
    %16 = vector.load %arg15[%c0_24, %c0_25, %c2, %c0_26] : memref<2x16x16x3xbf16, #tpu.memory_space<vmem>>, vector<2x14x14x3xbf16>
    %c0_27 = arith.constant 0 : index
    %c0_28 = arith.constant 0 : index
    %c0_29 = arith.constant 0 : index
    %c6 = arith.constant 6 : index
    %17 = vector.load %arg16[%c0_27, %c0_28, %c0_29, %c6] : memref<2x14x14x27xbf16, #tpu.memory_space<vmem>>, vector<2x14x14x3xbf16>
    tpu.vector_store %arg16[%c0_27, %c0_28, %c0_29, %c6], %16 {strides = array<i32>} : memref<2x14x14x27xbf16, #tpu.memory_space<vmem>>, vector<2x14x14x3xbf16>,
    %c0_30 = arith.constant 0 : index
    %c1_31 = arith.constant 1 : index
    %c0_32 = arith.constant 0 : index
    %c0_33 = arith.constant 0 : index
    %18 = vector.load %arg15[%c0_30, %c1_31, %c0_32, %c0_33] : memref<2x16x16x3xbf16, #tpu.memory_space<vmem>>, vector<2x14x14x3xbf16>
    %c0_34 = arith.constant 0 : index
    %c0_35 = arith.constant 0 : index
    %c0_36 = arith.constant 0 : index
    %c9 = arith.constant 9 : index
    %19 = vector.load %arg16[%c0_34, %c0_35, %c0_36, %c9] : memref<2x14x14x27xbf16, #tpu.memory_space<vmem>>, vector<2x14x14x3xbf16>
    tpu.vector_store %arg16[%c0_34, %c0_35, %c0_36, %c9], %18 {strides = array<i32>} : memref<2x14x14x27xbf16, #tpu.memory_space<vmem>>, vector<2x14x14x3xbf16>,
    %c0_37 = arith.constant 0 : index
    %c1_38 = arith.constant 1 : index
    %c1_39 = arith.constant 1 : index
    %c0_40 = arith.constant 0 : index
    %20 = vector.load %arg15[%c0_37, %c1_38, %c1_39, %c0_40] : memref<2x16x16x3xbf16, #tpu.memory_space<vmem>>, vector<2x14x14x3xbf16>
    %c0_41 = arith.constant 0 : index
    %c0_42 = arith.constant 0 : index
    %c0_43 = arith.constant 0 : index
    %c12 = arith.constant 12 : index
    %21 = vector.load %arg16[%c0_41, %c0_42, %c0_43, %c12] : memref<2x14x14x27xbf16, #tpu.memory_space<vmem>>, vector<2x14x14x3xbf16>
    tpu.vector_store %arg16[%c0_41, %c0_42, %c0_43, %c12], %20 {strides = array<i32>} : memref<2x14x14x27xbf16, #tpu.memory_space<vmem>>, vector<2x14x14x3xbf16>,
    %c0_44 = arith.constant 0 : index
    %c1_45 = arith.constant 1 : index
    %c2_46 = arith.constant 2 : index
    %c0_47 = arith.constant 0 : index
    %22 = vector.load %arg15[%c0_44, %c1_45, %c2_46, %c0_47] : memref<2x16x16x3xbf16, #tpu.memory_space<vmem>>, vector<2x14x14x3xbf16>
    %c0_48 = arith.constant 0 : index
    %c0_49 = arith.constant 0 : index
    %c0_50 = arith.constant 0 : index
    %c15 = arith.constant 15 : index
    %23 = vector.load %arg16[%c0_48, %c0_49, %c0_50, %c15] : memref<2x14x14x27xbf16, #tpu.memory_space<vmem>>, vector<2x14x14x3xbf16>
    tpu.vector_store %arg16[%c0_48, %c0_49, %c0_50, %c15], %22 {strides = array<i32>} : memref<2x14x14x27xbf16, #tpu.memory_space<vmem>>, vector<2x14x14x3xbf16>,
    %c0_51 = arith.constant 0 : index
    %c2_52 = arith.constant 2 : index
    %c0_53 = arith.constant 0 : index
    %c0_54 = arith.constant 0 : index
    %24 = vector.load %arg15[%c0_51, %c2_52, %c0_53, %c0_54] : memref<2x16x16x3xbf16, #tpu.memory_space<vmem>>, vector<2x14x14x3xbf16>
    %c0_55 = arith.constant 0 : index
    %c0_56 = arith.constant 0 : index
    %c0_57 = arith.constant 0 : index
    %c18 = arith.constant 18 : index
    %25 = vector.load %arg16[%c0_55, %c0_56, %c0_57, %c18] : memref<2x14x14x27xbf16, #tpu.memory_space<vmem>>, vector<2x14x14x3xbf16>
    tpu.vector_store %arg16[%c0_55, %c0_56, %c0_57, %c18], %24 {strides = array<i32>} : memref<2x14x14x27xbf16, #tpu.memory_space<vmem>>, vector<2x14x14x3xbf16>,
    %c0_58 = arith.constant 0 : index
    %c2_59 = arith.constant 2 : index
    %c1_60 = arith.constant 1 : index
    %c0_61 = arith.constant 0 : index
    %26 = vector.load %arg15[%c0_58, %c2_59, %c1_60, %c0_61] : memref<2x16x16x3xbf16, #tpu.memory_space<vmem>>, vector<2x14x14x3xbf16>
    %c0_62 = arith.constant 0 : index
    %c0_63 = arith.constant 0 : index
    %c0_64 = arith.constant 0 : index
    %c21 = arith.constant 21 : index
    %27 = vector.load %arg16[%c0_62, %c0_63, %c0_64, %c21] : memref<2x14x14x27xbf16, #tpu.memory_space<vmem>>, vector<2x14x14x3xbf16>
    tpu.vector_store %arg16[%c0_62, %c0_63, %c0_64, %c21], %26 {strides = array<i32>} : memref<2x14x14x27xbf16, #tpu.memory_space<vmem>>, vector<2x14x14x3xbf16>,
    %c0_65 = arith.constant 0 : index
    %c2_66 = arith.constant 2 : index
    %c2_67 = arith.constant 2 : index
    %c0_68 = arith.constant 0 : index
    %28 = vector.load %arg15[%c0_65, %c2_66, %c2_67, %c0_68] : memref<2x16x16x3xbf16, #tpu.memory_space<vmem>>, vector<2x14x14x3xbf16>
    %c0_69 = arith.constant 0 : index
    %c0_70 = arith.constant 0 : index
    %c0_71 = arith.constant 0 : index
    %c24 = arith.constant 24 : index
    %29 = vector.load %arg16[%c0_69, %c0_70, %c0_71, %c24] : memref<2x14x14x27xbf16, #tpu.memory_space<vmem>>, vector<2x14x14x3xbf16>
    tpu.vector_store %arg16[%c0_69, %c0_70, %c0_71, %c24], %28 {strides = array<i32>} : memref<2x14x14x27xbf16, #tpu.memory_space<vmem>>, vector<2x14x14x3xbf16>,
    %c0_72 = arith.constant 0 : index
    %c0_73 = arith.constant 0 : index
    %c0_74 = arith.constant 0 : index
    %c0_75 = arith.constant 0 : index
    %30 = vector.load %arg16[%c0_72, %c0_73, %c0_74, %c0_75] : memref<2x14x14x27xbf16, #tpu.memory_space<vmem>>, vector<2x14x14x27xbf16>
    %31 = vector.shape_cast %30 : vector<2x14x14x27xbf16> to vector<28x14x27xbf16>
    %c0_76 = arith.constant 0 : index
    %c0_77 = arith.constant 0 : index
    %32 = vector.load %arg2[%c0_76, %c0_77] : memref<27x8xbf16, #tpu.memory_space<vmem>>, vector<27x8xbf16>
    %33 = vector.shape_cast %32 : vector<27x8xbf16> to vector<1x27x8xbf16>
    %34 = vector.broadcast %33 : vector<1x27x8xbf16> to vector<28x27x8xbf16>
    %cst_78 = arith.constant dense<0.000000e+00> : vector<28x14x8xf32>
    %35 = tpu.matmul %31, %34, %cst_78 {dimension_numbers = #tpu.dot_dimension_numbers<[2], [1], [1], [2], [0, 0, 0, 1, 1, 2], [0], [0]>} : vector<28x14x27xbf16>, vector<28x27x8xbf16>, vector<28x14x8xf32> -> vector<28x14x8xf32>
    %c0_79 = arith.constant 0 : index
    %c0_80 = arith.constant 0 : index
    %36 = vector.load %arg3[%c0_79, %c0_80] : memref<1x8xf32, #tpu.memory_space<vmem>>, vector<1x8xf32>
    %37 = vector.shape_cast %36 : vector<1x8xf32> to vector<1x1x8xf32>
    %38 = vector.broadcast %37 : vector<1x1x8xf32> to vector<28x14x8xf32>
    %39 = arith.mulf %35, %38 : vector<28x14x8xf32>
    %c0_81 = arith.constant 0 : index
    %c0_82 = arith.constant 0 : index
    %40 = vector.load %arg4[%c0_81, %c0_82] : memref<1x8xf32, #tpu.memory_space<vmem>>, vector<1x8xf32>
    %41 = vector.shape_cast %40 : vector<1x8xf32> to vector<1x1x8xf32>
    %42 = vector.broadcast %41 : vector<1x1x8xf32> to vector<28x14x8xf32>
    %43 = arith.addf %39, %42 : vector<28x14x8xf32>
    %cst_83 = arith.constant 0.000000e+00 : f32
    %44 = vector.broadcast %cst_83 : f32 to vector<28x14x8xf32>
    %45 = arith.cmpf oge, %43, %44 : vector<28x14x8xf32>
    %cst_84 = arith.constant 1.000000e+00 : f32
    %cst_85 = arith.constant -1.000000e+00 : f32
    %46 = vector.broadcast %cst_84 : f32 to vector<28x14x8xf32>
    %47 = vector.broadcast %cst_85 : f32 to vector<28x14x8xf32>
    %48 = arith.select %45, %46, %47 : vector<28x14x8xi1>, vector<28x14x8xf32>
    %49 = vector.shape_cast %48 : vector<28x14x8xf32> to vector<14x2x14x8xf32>
    %50 = vector.extract_strided_slice %49 {offsets = [0, 0, 0, 0], sizes = [14, 1, 14, 8], strides = [1, 1, 1, 1]} : vector<14x2x14x8xf32> to vector<14x1x14x8xf32>
    %51 = vector.shape_cast %50 : vector<14x1x14x8xf32> to vector<14x14x8xf32>
    %52 = vector.extract_strided_slice %49 {offsets = [0, 1, 0, 0], sizes = [14, 1, 14, 8], strides = [1, 1, 1, 1]} : vector<14x2x14x8xf32> to vector<14x1x14x8xf32>
    %53 = vector.shape_cast %52 : vector<14x1x14x8xf32> to vector<14x14x8xf32>
    %54 = arith.maximumf %51, %53 : vector<14x14x8xf32>
    %55 = tpu.iota {dimensions = array<i32: 0>} : vector<7x14xi32>
    %56 = tpu.iota {dimensions = array<i32: 1>} : vector<7x14xi32>
    %c2_i32 = arith.constant 2 : i32
    %57 = vector.broadcast %c2_i32 : i32 to vector<7x14xi32>
    %58 = arith.muli %57, %55 : vector<7x14xi32>
    %59 = arith.cmpi eq, %56, %58 : vector<7x14xi32>
    %60 = arith.extui %59 : vector<7x14xi1> to vector<7x14xi32>
    %61 = arith.sitofp %60 : vector<7x14xi32> to vector<7x14xf32>
    %62 = vector.shape_cast %61 : vector<7x14xf32> to vector<1x7x14xf32>
    %63 = vector.broadcast %62 : vector<1x7x14xf32> to vector<14x7x14xf32>
    %c2_i32_86 = arith.constant 2 : i32
    %64 = vector.broadcast %c2_i32_86 : i32 to vector<7x14xi32>
    %65 = arith.muli %64, %55 : vector<7x14xi32>
    %c1_i32 = arith.constant 1 : i32
    %66 = vector.broadcast %c1_i32 : i32 to vector<7x14xi32>
    %67 = arith.addi %65, %66 : vector<7x14xi32>
    %68 = arith.cmpi eq, %56, %67 : vector<7x14xi32>
    %69 = arith.extui %68 : vector<7x14xi1> to vector<7x14xi32>
    %70 = arith.sitofp %69 : vector<7x14xi32> to vector<7x14xf32>
    %71 = vector.shape_cast %70 : vector<7x14xf32> to vector<1x7x14xf32>
    %72 = vector.broadcast %71 : vector<1x7x14xf32> to vector<14x7x14xf32>
    %cst_87 = arith.constant dense<0.000000e+00> : vector<14x7x8xf32>
    %73 = tpu.matmul %63, %54, %cst_87 {dimension_numbers = #tpu.dot_dimension_numbers<[2], [1], [1], [2], [0, 0, 0, 1, 1, 2], [0], [0]>} : vector<14x7x14xf32>, vector<14x14x8xf32>, vector<14x7x8xf32> -> vector<14x7x8xf32>
    %cst_88 = arith.constant dense<0.000000e+00> : vector<14x7x8xf32>
    %74 = tpu.matmul %72, %54, %cst_88 {dimension_numbers = #tpu.dot_dimension_numbers<[2], [1], [1], [2], [0, 0, 0, 1, 1, 2], [0], [0]>} : vector<14x7x14xf32>, vector<14x14x8xf32>, vector<14x7x8xf32> -> vector<14x7x8xf32>
    %75 = arith.maximumf %73, %74 : vector<14x7x8xf32>
    %76 = vector.shape_cast %75 : vector<14x7x8xf32> to vector<2x7x7x8xf32>
    %77 = arith.truncf %76 : vector<2x7x7x8xf32> to vector<2x7x7x8xbf16>
    %c0_89 = arith.constant 0 : index
    %c0_90 = arith.constant 0 : index
    %c0_91 = arith.constant 0 : index
    %c0_92 = arith.constant 0 : index
    %78 = vector.load %arg17[%c0_89, %c0_90, %c0_91, %c0_92] : memref<2x7x7x8xbf16, #tpu.memory_space<vmem>>, vector<2x7x7x8xbf16>
    tpu.vector_store %arg17[%c0_89, %c0_90, %c0_91, %c0_92], %77 {strides = array<i32>} : memref<2x7x7x8xbf16, #tpu.memory_space<vmem>>, vector<2x7x7x8xbf16>,
    %c0_93 = arith.constant 0 : index
    %c0_94 = arith.constant 0 : index
    %c0_95 = arith.constant 0 : index
    %c0_96 = arith.constant 0 : index
    %79 = vector.load %arg17[%c0_93, %c0_94, %c0_95, %c0_96] : memref<2x7x7x8xbf16, #tpu.memory_space<vmem>>, vector<2x4x5x8xbf16>
    %c0_97 = arith.constant 0 : index
    %c0_98 = arith.constant 0 : index
    %c0_99 = arith.constant 0 : index
    %c0_100 = arith.constant 0 : index
    %80 = vector.load %arg18[%c0_97, %c0_98, %c0_99, %c0_100] : memref<2x4x5x72xbf16, #tpu.memory_space<vmem>>, vector<2x4x5x8xbf16>
    tpu.vector_store %arg18[%c0_97, %c0_98, %c0_99, %c0_100], %79 {strides = array<i32>} : memref<2x4x5x72xbf16, #tpu.memory_space<vmem>>, vector<2x4x5x8xbf16>,
    %c0_101 = arith.constant 0 : index
    %c0_102 = arith.constant 0 : index
    %c1_103 = arith.constant 1 : index
    %c0_104 = arith.constant 0 : index
    %81 = vector.load %arg17[%c0_101, %c0_102, %c1_103, %c0_104] : memref<2x7x7x8xbf16, #tpu.memory_space<vmem>>, vector<2x4x5x8xbf16>
    %c0_105 = arith.constant 0 : index
    %c0_106 = arith.constant 0 : index
    %c0_107 = arith.constant 0 : index
    %c8 = arith.constant 8 : index
    %82 = vector.load %arg18[%c0_105, %c0_106, %c0_107, %c8] : memref<2x4x5x72xbf16, #tpu.memory_space<vmem>>, vector<2x4x5x8xbf16>
    tpu.vector_store %arg18[%c0_105, %c0_106, %c0_107, %c8], %81 {strides = array<i32>} : memref<2x4x5x72xbf16, #tpu.memory_space<vmem>>, vector<2x4x5x8xbf16>,
    %c0_108 = arith.constant 0 : index
    %c0_109 = arith.constant 0 : index
    %c2_110 = arith.constant 2 : index
    %c0_111 = arith.constant 0 : index
    %83 = vector.load %arg17[%c0_108, %c0_109, %c2_110, %c0_111] : memref<2x7x7x8xbf16, #tpu.memory_space<vmem>>, vector<2x4x5x8xbf16>
    %c0_112 = arith.constant 0 : index
    %c0_113 = arith.constant 0 : index
    %c0_114 = arith.constant 0 : index
    %c16 = arith.constant 16 : index
    %84 = vector.load %arg18[%c0_112, %c0_113, %c0_114, %c16] : memref<2x4x5x72xbf16, #tpu.memory_space<vmem>>, vector<2x4x5x8xbf16>
    tpu.vector_store %arg18[%c0_112, %c0_113, %c0_114, %c16], %83 {strides = array<i32>} : memref<2x4x5x72xbf16, #tpu.memory_space<vmem>>, vector<2x4x5x8xbf16>,
    %c0_115 = arith.constant 0 : index
    %c1_116 = arith.constant 1 : index
    %c0_117 = arith.constant 0 : index
    %c0_118 = arith.constant 0 : index
    %85 = vector.load %arg17[%c0_115, %c1_116, %c0_117, %c0_118] : memref<2x7x7x8xbf16, #tpu.memory_space<vmem>>, vector<2x4x5x8xbf16>
    %c0_119 = arith.constant 0 : index
    %c0_120 = arith.constant 0 : index
    %c0_121 = arith.constant 0 : index
    %c24_122 = arith.constant 24 : index
    %86 = vector.load %arg18[%c0_119, %c0_120, %c0_121, %c24_122] : memref<2x4x5x72xbf16, #tpu.memory_space<vmem>>, vector<2x4x5x8xbf16>
    tpu.vector_store %arg18[%c0_119, %c0_120, %c0_121, %c24_122], %85 {strides = array<i32>} : memref<2x4x5x72xbf16, #tpu.memory_space<vmem>>, vector<2x4x5x8xbf16>,
    %c0_123 = arith.constant 0 : index
    %c1_124 = arith.constant 1 : index
    %c1_125 = arith.constant 1 : index
    %c0_126 = arith.constant 0 : index
    %87 = vector.load %arg17[%c0_123, %c1_124, %c1_125, %c0_126] : memref<2x7x7x8xbf16, #tpu.memory_space<vmem>>, vector<2x4x5x8xbf16>
    %c0_127 = arith.constant 0 : index
    %c0_128 = arith.constant 0 : index
    %c0_129 = arith.constant 0 : index
    %c32 = arith.constant 32 : index
    %88 = vector.load %arg18[%c0_127, %c0_128, %c0_129, %c32] : memref<2x4x5x72xbf16, #tpu.memory_space<vmem>>, vector<2x4x5x8xbf16>
    tpu.vector_store %arg18[%c0_127, %c0_128, %c0_129, %c32], %87 {strides = array<i32>} : memref<2x4x5x72xbf16, #tpu.memory_space<vmem>>, vector<2x4x5x8xbf16>,
    %c0_130 = arith.constant 0 : index
    %c1_131 = arith.constant 1 : index
    %c2_132 = arith.constant 2 : index
    %c0_133 = arith.constant 0 : index
    %89 = vector.load %arg17[%c0_130, %c1_131, %c2_132, %c0_133] : memref<2x7x7x8xbf16, #tpu.memory_space<vmem>>, vector<2x4x5x8xbf16>
    %c0_134 = arith.constant 0 : index
    %c0_135 = arith.constant 0 : index
    %c0_136 = arith.constant 0 : index
    %c40 = arith.constant 40 : index
    %90 = vector.load %arg18[%c0_134, %c0_135, %c0_136, %c40] : memref<2x4x5x72xbf16, #tpu.memory_space<vmem>>, vector<2x4x5x8xbf16>
    tpu.vector_store %arg18[%c0_134, %c0_135, %c0_136, %c40], %89 {strides = array<i32>} : memref<2x4x5x72xbf16, #tpu.memory_space<vmem>>, vector<2x4x5x8xbf16>,
    %c0_137 = arith.constant 0 : index
    %c2_138 = arith.constant 2 : index
    %c0_139 = arith.constant 0 : index
    %c0_140 = arith.constant 0 : index
    %91 = vector.load %arg17[%c0_137, %c2_138, %c0_139, %c0_140] : memref<2x7x7x8xbf16, #tpu.memory_space<vmem>>, vector<2x4x5x8xbf16>
    %c0_141 = arith.constant 0 : index
    %c0_142 = arith.constant 0 : index
    %c0_143 = arith.constant 0 : index
    %c48 = arith.constant 48 : index
    %92 = vector.load %arg18[%c0_141, %c0_142, %c0_143, %c48] : memref<2x4x5x72xbf16, #tpu.memory_space<vmem>>, vector<2x4x5x8xbf16>
    tpu.vector_store %arg18[%c0_141, %c0_142, %c0_143, %c48], %91 {strides = array<i32>} : memref<2x4x5x72xbf16, #tpu.memory_space<vmem>>, vector<2x4x5x8xbf16>,
    %c0_144 = arith.constant 0 : index
    %c2_145 = arith.constant 2 : index
    %c1_146 = arith.constant 1 : index
    %c0_147 = arith.constant 0 : index
    %93 = vector.load %arg17[%c0_144, %c2_145, %c1_146, %c0_147] : memref<2x7x7x8xbf16, #tpu.memory_space<vmem>>, vector<2x4x5x8xbf16>
    %c0_148 = arith.constant 0 : index
    %c0_149 = arith.constant 0 : index
    %c0_150 = arith.constant 0 : index
    %c56 = arith.constant 56 : index
    %94 = vector.load %arg18[%c0_148, %c0_149, %c0_150, %c56] : memref<2x4x5x72xbf16, #tpu.memory_space<vmem>>, vector<2x4x5x8xbf16>
    tpu.vector_store %arg18[%c0_148, %c0_149, %c0_150, %c56], %93 {strides = array<i32>} : memref<2x4x5x72xbf16, #tpu.memory_space<vmem>>, vector<2x4x5x8xbf16>,
    %c0_151 = arith.constant 0 : index
    %c2_152 = arith.constant 2 : index
    %c2_153 = arith.constant 2 : index
    %c0_154 = arith.constant 0 : index
    %95 = vector.load %arg17[%c0_151, %c2_152, %c2_153, %c0_154] : memref<2x7x7x8xbf16, #tpu.memory_space<vmem>>, vector<2x4x5x8xbf16>
    %c0_155 = arith.constant 0 : index
    %c0_156 = arith.constant 0 : index
    %c0_157 = arith.constant 0 : index
    %c64 = arith.constant 64 : index
    %96 = vector.load %arg18[%c0_155, %c0_156, %c0_157, %c64] : memref<2x4x5x72xbf16, #tpu.memory_space<vmem>>, vector<2x4x5x8xbf16>
    tpu.vector_store %arg18[%c0_155, %c0_156, %c0_157, %c64], %95 {strides = array<i32>} : memref<2x4x5x72xbf16, #tpu.memory_space<vmem>>, vector<2x4x5x8xbf16>,
    %c0_158 = arith.constant 0 : index
    %c0_159 = arith.constant 0 : index
    %c0_160 = arith.constant 0 : index
    %c0_161 = arith.constant 0 : index
    %97 = vector.load %arg18[%c0_158, %c0_159, %c0_160, %c0_161] : memref<2x4x5x72xbf16, #tpu.memory_space<vmem>>, vector<2x4x5x72xbf16>
    %98 = vector.shape_cast %97 : vector<2x4x5x72xbf16> to vector<8x5x72xbf16>
    %c0_162 = arith.constant 0 : index
    %c0_163 = arith.constant 0 : index
    %99 = vector.load %arg5[%c0_162, %c0_163] : memref<72x16xbf16, #tpu.memory_space<vmem>>, vector<72x16xbf16>
    %100 = vector.shape_cast %99 : vector<72x16xbf16> to vector<1x72x16xbf16>
    %101 = vector.broadcast %100 : vector<1x72x16xbf16> to vector<8x72x16xbf16>
    %cst_164 = arith.constant dense<0.000000e+00> : vector<8x5x16xf32>
    %102 = tpu.matmul %98, %101, %cst_164 {dimension_numbers = #tpu.dot_dimension_numbers<[2], [1], [1], [2], [0, 0, 0, 1, 1, 2], [0], [0]>} : vector<8x5x72xbf16>, vector<8x72x16xbf16>, vector<8x5x16xf32> -> vector<8x5x16xf32>
    %c0_165 = arith.constant 0 : index
    %c0_166 = arith.constant 0 : index
    %103 = vector.load %arg6[%c0_165, %c0_166] : memref<1x16xf32, #tpu.memory_space<vmem>>, vector<1x16xf32>
    %104 = vector.shape_cast %103 : vector<1x16xf32> to vector<1x1x16xf32>
    %105 = vector.broadcast %104 : vector<1x1x16xf32> to vector<8x5x16xf32>
    %106 = arith.mulf %102, %105 : vector<8x5x16xf32>
    %c0_167 = arith.constant 0 : index
    %c0_168 = arith.constant 0 : index
    %107 = vector.load %arg7[%c0_167, %c0_168] : memref<1x16xf32, #tpu.memory_space<vmem>>, vector<1x16xf32>
    %108 = vector.shape_cast %107 : vector<1x16xf32> to vector<1x1x16xf32>
    %109 = vector.broadcast %108 : vector<1x1x16xf32> to vector<8x5x16xf32>
    %110 = arith.addf %106, %109 : vector<8x5x16xf32>
    %cst_169 = arith.constant 0.000000e+00 : f32
    %111 = vector.broadcast %cst_169 : f32 to vector<8x5x16xf32>
    %112 = arith.cmpf oge, %110, %111 : vector<8x5x16xf32>
    %cst_170 = arith.constant 1.000000e+00 : f32
    %cst_171 = arith.constant -1.000000e+00 : f32
    %113 = vector.broadcast %cst_170 : f32 to vector<8x5x16xf32>
    %114 = vector.broadcast %cst_171 : f32 to vector<8x5x16xf32>
    %115 = arith.select %112, %113, %114 : vector<8x5x16xi1>, vector<8x5x16xf32>
    %116 = vector.shape_cast %115 : vector<8x5x16xf32> to vector<4x2x5x16xf32>
    %117 = vector.extract_strided_slice %116 {offsets = [0, 0, 0, 0], sizes = [4, 1, 5, 16], strides = [1, 1, 1, 1]} : vector<4x2x5x16xf32> to vector<4x1x5x16xf32>
    %118 = vector.shape_cast %117 : vector<4x1x5x16xf32> to vector<4x5x16xf32>
    %119 = vector.extract_strided_slice %116 {offsets = [0, 1, 0, 0], sizes = [4, 1, 5, 16], strides = [1, 1, 1, 1]} : vector<4x2x5x16xf32> to vector<4x1x5x16xf32>
    %120 = vector.shape_cast %119 : vector<4x1x5x16xf32> to vector<4x5x16xf32>
    %121 = arith.maximumf %118, %120 : vector<4x5x16xf32>
    %122 = tpu.iota {dimensions = array<i32: 0>} : vector<2x5xi32>
    %123 = tpu.iota {dimensions = array<i32: 1>} : vector<2x5xi32>
    %c2_i32_172 = arith.constant 2 : i32
    %124 = vector.broadcast %c2_i32_172 : i32 to vector<2x5xi32>
    %125 = arith.muli %124, %122 : vector<2x5xi32>
    %126 = arith.cmpi eq, %123, %125 : vector<2x5xi32>
    %127 = arith.extui %126 : vector<2x5xi1> to vector<2x5xi32>
    %128 = arith.sitofp %127 : vector<2x5xi32> to vector<2x5xf32>
    %129 = vector.shape_cast %128 : vector<2x5xf32> to vector<1x2x5xf32>
    %130 = vector.broadcast %129 : vector<1x2x5xf32> to vector<4x2x5xf32>
    %c2_i32_173 = arith.constant 2 : i32
    %131 = vector.broadcast %c2_i32_173 : i32 to vector<2x5xi32>
    %132 = arith.muli %131, %122 : vector<2x5xi32>
    %c1_i32_174 = arith.constant 1 : i32
    %133 = vector.broadcast %c1_i32_174 : i32 to vector<2x5xi32>
    %134 = arith.addi %132, %133 : vector<2x5xi32>
    %135 = arith.cmpi eq, %123, %134 : vector<2x5xi32>
    %136 = arith.extui %135 : vector<2x5xi1> to vector<2x5xi32>
    %137 = arith.sitofp %136 : vector<2x5xi32> to vector<2x5xf32>
    %138 = vector.shape_cast %137 : vector<2x5xf32> to vector<1x2x5xf32>
    %139 = vector.broadcast %138 : vector<1x2x5xf32> to vector<4x2x5xf32>
    %cst_175 = arith.constant dense<0.000000e+00> : vector<4x2x16xf32>
    %140 = tpu.matmul %130, %121, %cst_175 {dimension_numbers = #tpu.dot_dimension_numbers<[2], [1], [1], [2], [0, 0, 0, 1, 1, 2], [0], [0]>} : vector<4x2x5xf32>, vector<4x5x16xf32>, vector<4x2x16xf32> -> vector<4x2x16xf32>
    %cst_176 = arith.constant dense<0.000000e+00> : vector<4x2x16xf32>
    %141 = tpu.matmul %139, %121, %cst_176 {dimension_numbers = #tpu.dot_dimension_numbers<[2], [1], [1], [2], [0, 0, 0, 1, 1, 2], [0], [0]>} : vector<4x2x5xf32>, vector<4x5x16xf32>, vector<4x2x16xf32> -> vector<4x2x16xf32>
    %142 = arith.maximumf %140, %141 : vector<4x2x16xf32>
    %143 = vector.shape_cast %142 : vector<4x2x16xf32> to vector<2x2x2x16xf32>
    %144 = arith.truncf %143 : vector<2x2x2x16xf32> to vector<2x2x2x16xbf16>
    %c0_177 = arith.constant 0 : index
    %c0_178 = arith.constant 0 : index
    %c0_179 = arith.constant 0 : index
    %c0_180 = arith.constant 0 : index
    %145 = vector.load %arg19[%c0_177, %c0_178, %c0_179, %c0_180] : memref<2x2x2x16xbf16, #tpu.memory_space<vmem>>, vector<2x2x2x16xbf16>
    tpu.vector_store %arg19[%c0_177, %c0_178, %c0_179, %c0_180], %144 {strides = array<i32>} : memref<2x2x2x16xbf16, #tpu.memory_space<vmem>>, vector<2x2x2x16xbf16>,
    %c0_181 = arith.constant 0 : index
    %c0_182 = arith.constant 0 : index
    %c0_183 = arith.constant 0 : index
    %c0_184 = arith.constant 0 : index
    %146 = vector.load %arg19[%c0_181, %c0_182, %c0_183, %c0_184] : memref<2x2x2x16xbf16, #tpu.memory_space<vmem>>, vector<1x1x1x16xbf16>
    %147 = vector.shape_cast %146 : vector<1x1x1x16xbf16> to vector<1x16xbf16>
    %148 = arith.extf %147 : vector<1x16xbf16> to vector<1x16xf32>
    %c0_185 = arith.constant 0 : index
    %c0_186 = arith.constant 0 : index
    %149 = vector.load %arg20[%c0_185, %c0_186] : memref<2x64xf32, #tpu.memory_space<vmem>>, vector<1x16xf32>
    tpu.vector_store %arg20[%c0_185, %c0_186], %148 {strides = array<i32>} : memref<2x64xf32, #tpu.memory_space<vmem>>, vector<1x16xf32>,
    %c0_187 = arith.constant 0 : index
    %c0_188 = arith.constant 0 : index
    %c1_189 = arith.constant 1 : index
    %c0_190 = arith.constant 0 : index
    %150 = vector.load %arg19[%c0_187, %c0_188, %c1_189, %c0_190] : memref<2x2x2x16xbf16, #tpu.memory_space<vmem>>, vector<1x1x1x16xbf16>
    %151 = vector.shape_cast %150 : vector<1x1x1x16xbf16> to vector<1x16xbf16>
    %152 = arith.extf %151 : vector<1x16xbf16> to vector<1x16xf32>
    %c0_191 = arith.constant 0 : index
    %c16_192 = arith.constant 16 : index
    %153 = vector.load %arg20[%c0_191, %c16_192] : memref<2x64xf32, #tpu.memory_space<vmem>>, vector<1x16xf32>
    tpu.vector_store %arg20[%c0_191, %c16_192], %152 {strides = array<i32>} : memref<2x64xf32, #tpu.memory_space<vmem>>, vector<1x16xf32>,
    %c0_193 = arith.constant 0 : index
    %c1_194 = arith.constant 1 : index
    %c0_195 = arith.constant 0 : index
    %c0_196 = arith.constant 0 : index
    %154 = vector.load %arg19[%c0_193, %c1_194, %c0_195, %c0_196] : memref<2x2x2x16xbf16, #tpu.memory_space<vmem>>, vector<1x1x1x16xbf16>
    %155 = vector.shape_cast %154 : vector<1x1x1x16xbf16> to vector<1x16xbf16>
    %156 = arith.extf %155 : vector<1x16xbf16> to vector<1x16xf32>
    %c0_197 = arith.constant 0 : index
    %c32_198 = arith.constant 32 : index
    %157 = vector.load %arg20[%c0_197, %c32_198] : memref<2x64xf32, #tpu.memory_space<vmem>>, vector<1x16xf32>
    tpu.vector_store %arg20[%c0_197, %c32_198], %156 {strides = array<i32>} : memref<2x64xf32, #tpu.memory_space<vmem>>, vector<1x16xf32>,
    %c0_199 = arith.constant 0 : index
    %c1_200 = arith.constant 1 : index
    %c1_201 = arith.constant 1 : index
    %c0_202 = arith.constant 0 : index
    %158 = vector.load %arg19[%c0_199, %c1_200, %c1_201, %c0_202] : memref<2x2x2x16xbf16, #tpu.memory_space<vmem>>, vector<1x1x1x16xbf16>
    %159 = vector.shape_cast %158 : vector<1x1x1x16xbf16> to vector<1x16xbf16>
    %160 = arith.extf %159 : vector<1x16xbf16> to vector<1x16xf32>
    %c0_203 = arith.constant 0 : index
    %c48_204 = arith.constant 48 : index
    %161 = vector.load %arg20[%c0_203, %c48_204] : memref<2x64xf32, #tpu.memory_space<vmem>>, vector<1x16xf32>
    tpu.vector_store %arg20[%c0_203, %c48_204], %160 {strides = array<i32>} : memref<2x64xf32, #tpu.memory_space<vmem>>, vector<1x16xf32>,
    %c1_205 = arith.constant 1 : index
    %c0_206 = arith.constant 0 : index
    %c0_207 = arith.constant 0 : index
    %c0_208 = arith.constant 0 : index
    %162 = vector.load %arg19[%c1_205, %c0_206, %c0_207, %c0_208] : memref<2x2x2x16xbf16, #tpu.memory_space<vmem>>, vector<1x1x1x16xbf16>
    %163 = vector.shape_cast %162 : vector<1x1x1x16xbf16> to vector<1x16xbf16>
    %164 = arith.extf %163 : vector<1x16xbf16> to vector<1x16xf32>
    %c1_209 = arith.constant 1 : index
    %c0_210 = arith.constant 0 : index
    %165 = vector.load %arg20[%c1_209, %c0_210] : memref<2x64xf32, #tpu.memory_space<vmem>>, vector<1x16xf32>
    tpu.vector_store %arg20[%c1_209, %c0_210], %164 {strides = array<i32>} : memref<2x64xf32, #tpu.memory_space<vmem>>, vector<1x16xf32>,
    %c1_211 = arith.constant 1 : index
    %c0_212 = arith.constant 0 : index
    %c1_213 = arith.constant 1 : index
    %c0_214 = arith.constant 0 : index
    %166 = vector.load %arg19[%c1_211, %c0_212, %c1_213, %c0_214] : memref<2x2x2x16xbf16, #tpu.memory_space<vmem>>, vector<1x1x1x16xbf16>
    %167 = vector.shape_cast %166 : vector<1x1x1x16xbf16> to vector<1x16xbf16>
    %168 = arith.extf %167 : vector<1x16xbf16> to vector<1x16xf32>
    %c1_215 = arith.constant 1 : index
    %c16_216 = arith.constant 16 : index
    %169 = vector.load %arg20[%c1_215, %c16_216] : memref<2x64xf32, #tpu.memory_space<vmem>>, vector<1x16xf32>
    tpu.vector_store %arg20[%c1_215, %c16_216], %168 {strides = array<i32>} : memref<2x64xf32, #tpu.memory_space<vmem>>, vector<1x16xf32>,
    %c1_217 = arith.constant 1 : index
    %c1_218 = arith.constant 1 : index
    %c0_219 = arith.constant 0 : index
    %c0_220 = arith.constant 0 : index
    %170 = vector.load %arg19[%c1_217, %c1_218, %c0_219, %c0_220] : memref<2x2x2x16xbf16, #tpu.memory_space<vmem>>, vector<1x1x1x16xbf16>
    %171 = vector.shape_cast %170 : vector<1x1x1x16xbf16> to vector<1x16xbf16>
    %172 = arith.extf %171 : vector<1x16xbf16> to vector<1x16xf32>
    %c1_221 = arith.constant 1 : index
    %c32_222 = arith.constant 32 : index
    %173 = vector.load %arg20[%c1_221, %c32_222] : memref<2x64xf32, #tpu.memory_space<vmem>>, vector<1x16xf32>
    tpu.vector_store %arg20[%c1_221, %c32_222], %172 {strides = array<i32>} : memref<2x64xf32, #tpu.memory_space<vmem>>, vector<1x16xf32>,
    %c1_223 = arith.constant 1 : index
    %c1_224 = arith.constant 1 : index
    %c1_225 = arith.constant 1 : index
    %c0_226 = arith.constant 0 : index
    %174 = vector.load %arg19[%c1_223, %c1_224, %c1_225, %c0_226] : memref<2x2x2x16xbf16, #tpu.memory_space<vmem>>, vector<1x1x1x16xbf16>
    %175 = vector.shape_cast %174 : vector<1x1x1x16xbf16> to vector<1x16xbf16>
    %176 = arith.extf %175 : vector<1x16xbf16> to vector<1x16xf32>
    %c1_227 = arith.constant 1 : index
    %c48_228 = arith.constant 48 : index
    %177 = vector.load %arg20[%c1_227, %c48_228] : memref<2x64xf32, #tpu.memory_space<vmem>>, vector<1x16xf32>
    tpu.vector_store %arg20[%c1_227, %c48_228], %176 {strides = array<i32>} : memref<2x64xf32, #tpu.memory_space<vmem>>, vector<1x16xf32>,
    %c0_229 = arith.constant 0 : index
    %c0_230 = arith.constant 0 : index
    %178 = vector.load %arg20[%c0_229, %c0_230] : memref<2x64xf32, #tpu.memory_space<vmem>>, vector<2x64xf32>
    %cst_231 = arith.constant 8.000000e+00 : f32
    %179 = vector.broadcast %cst_231 : f32 to vector<2x64xf32>
    %180 = arith.mulf %178, %179 : vector<2x64xf32>
    %181 = math.roundeven %180 : vector<2x64xf32>
    %cst_232 = arith.constant 1.250000e-01 : f32
    %182 = vector.broadcast %cst_232 : f32 to vector<2x64xf32>
    %183 = arith.mulf %181, %182 : vector<2x64xf32>
    %cst_233 = arith.constant -1.000000e+00 : f32
    %cst_234 = arith.constant 8.750000e-01 : f32
    %184 = vector.broadcast %cst_233 : f32 to vector<2x64xf32>
    %185 = arith.maximumf %184, %183 : vector<2x64xf32>
    %186 = vector.broadcast %cst_234 : f32 to vector<2x64xf32>
    %187 = arith.minimumf %186, %185 : vector<2x64xf32>
    %c0_235 = arith.constant 0 : index
    %c0_236 = arith.constant 0 : index
    %188 = vector.load %arg8[%c0_235, %c0_236] : memref<64x32xf32, #tpu.memory_space<vmem>>, vector<64x32xf32>
    %cst_237 = arith.constant dense<0.000000e+00> : vector<2x32xf32>
    %189 = tpu.matmul %187, %188, %cst_237 {dimension_numbers = #tpu.dot_dimension_numbers<[1], [0], [0], [1], [0, 0, 1, 1], [], []>} : vector<2x64xf32>, vector<64x32xf32>, vector<2x32xf32> -> vector<2x32xf32>
    %c0_238 = arith.constant 0 : index
    %c0_239 = arith.constant 0 : index
    %190 = vector.load %arg9[%c0_238, %c0_239] : memref<1x32xf32, #tpu.memory_space<vmem>>, vector<1x32xf32>
    %191 = vector.broadcast %190 : vector<1x32xf32> to vector<2x32xf32>
    %192 = arith.addf %189, %191 : vector<2x32xf32>
    %cst_240 = arith.constant 0.000000e+00 : f32
    %193 = vector.broadcast %cst_240 : f32 to vector<2x32xf32>
    %194 = arith.cmpf oge, %192, %193 : vector<2x32xf32>
    %cst_241 = arith.constant 1.000000e+00 : f32
    %cst_242 = arith.constant -1.000000e+00 : f32
    %195 = vector.broadcast %cst_241 : f32 to vector<2x32xf32>
    %196 = vector.broadcast %cst_242 : f32 to vector<2x32xf32>
    %197 = arith.select %194, %195, %196 : vector<2x32xi1>, vector<2x32xf32>
    %cst_243 = arith.constant 8.000000e+00 : f32
    %198 = vector.broadcast %cst_243 : f32 to vector<2x32xf32>
    %199 = arith.mulf %197, %198 : vector<2x32xf32>
    %200 = math.roundeven %199 : vector<2x32xf32>
    %cst_244 = arith.constant 1.250000e-01 : f32
    %201 = vector.broadcast %cst_244 : f32 to vector<2x32xf32>
    %202 = arith.mulf %200, %201 : vector<2x32xf32>
    %cst_245 = arith.constant -1.000000e+00 : f32
    %cst_246 = arith.constant 8.750000e-01 : f32
    %203 = vector.broadcast %cst_245 : f32 to vector<2x32xf32>
    %204 = arith.maximumf %203, %202 : vector<2x32xf32>
    %205 = vector.broadcast %cst_246 : f32 to vector<2x32xf32>
    %206 = arith.minimumf %205, %204 : vector<2x32xf32>
    %c0_247 = arith.constant 0 : index
    %c0_248 = arith.constant 0 : index
    %207 = vector.load %arg10[%c0_247, %c0_248] : memref<32x32xf32, #tpu.memory_space<vmem>>, vector<32x32xf32>
    %cst_249 = arith.constant dense<0.000000e+00> : vector<2x32xf32>
    %208 = tpu.matmul %206, %207, %cst_249 {dimension_numbers = #tpu.dot_dimension_numbers<[1], [0], [0], [1], [0, 0, 1, 1], [], []>} : vector<2x32xf32>, vector<32x32xf32>, vector<2x32xf32> -> vector<2x32xf32>
    %c0_250 = arith.constant 0 : index
    %c0_251 = arith.constant 0 : index
    %209 = vector.load %arg11[%c0_250, %c0_251] : memref<1x32xf32, #tpu.memory_space<vmem>>, vector<1x32xf32>
    %210 = vector.broadcast %209 : vector<1x32xf32> to vector<2x32xf32>
    %211 = arith.addf %208, %210 : vector<2x32xf32>
    %cst_252 = arith.constant 0.000000e+00 : f32
    %212 = vector.broadcast %cst_252 : f32 to vector<2x32xf32>
    %213 = arith.cmpf oge, %211, %212 : vector<2x32xf32>
    %cst_253 = arith.constant 1.000000e+00 : f32
    %cst_254 = arith.constant -1.000000e+00 : f32
    %214 = vector.broadcast %cst_253 : f32 to vector<2x32xf32>
    %215 = vector.broadcast %cst_254 : f32 to vector<2x32xf32>
    %216 = arith.select %213, %214, %215 : vector<2x32xi1>, vector<2x32xf32>
    %c0_255 = arith.constant 0 : index
    %c0_256 = arith.constant 0 : index
    %217 = vector.load %arg12[%c0_255, %c0_256] : memref<32x10xf32, #tpu.memory_space<vmem>>, vector<32x10xf32>
    %cst_257 = arith.constant dense<0.000000e+00> : vector<2x10xf32>
    %218 = tpu.matmul %216, %217, %cst_257 {dimension_numbers = #tpu.dot_dimension_numbers<[1], [0], [0], [1], [0, 0, 1, 1], [], []>} : vector<2x32xf32>, vector<32x10xf32>, vector<2x10xf32> -> vector<2x10xf32>
    %c0_258 = arith.constant 0 : index
    %c0_259 = arith.constant 0 : index
    %219 = vector.load %arg13[%c0_258, %c0_259] : memref<1x10xf32, #tpu.memory_space<vmem>>, vector<1x10xf32>
    %220 = vector.broadcast %219 : vector<1x10xf32> to vector<2x10xf32>
    %221 = arith.addf %218, %220 : vector<2x10xf32>
    %c0_260 = arith.constant 0 : index
    %c0_261 = arith.constant 0 : index
    %222 = vector.load %arg14[%c0_260, %c0_261] : memref<2x10xf32, #tpu.memory_space<vmem>>, vector<2x10xf32>
    tpu.vector_store %arg14[%c0_260, %c0_261], %221 {strides = array<i32>} : memref<2x10xf32, #tpu.memory_space<vmem>>, vector<2x10xf32>,
    return
  }
  func.func @transform_0(%arg0: i32) -> (i32, i32, i32, i32) {
    %c0_i32 = arith.constant 0 : i32
    %c0_i32_0 = arith.constant 0 : i32
    %c0_i32_1 = arith.constant 0 : i32
    %c0_i32_2 = arith.constant 0 : i32
    %c0_i32_3 = arith.constant 0 : i32
    return %c0_i32, %c0_i32_0, %c0_i32_1, %c0_i32_2 : i32, i32, i32, i32
  }
  func.func @transform_1(%arg0: i32) -> (i32, i32) {
    %c0_i32 = arith.constant 0 : i32
    %c0_i32_0 = arith.constant 0 : i32
    %c0_i32_1 = arith.constant 0 : i32
    return %c0_i32, %c0_i32_0 : i32, i32
  }
  func.func @transform_2(%arg0: i32) -> (i32, i32) {
    %c0_i32 = arith.constant 0 : i32
    %c0_i32_0 = arith.constant 0 : i32
    %c0_i32_1 = arith.constant 0 : i32
    return %c0_i32, %c0_i32_0 : i32, i32
  }
  func.func @transform_3(%arg0: i32) -> (i32, i32) {
    %c0_i32 = arith.constant 0 : i32
    %c0_i32_0 = arith.constant 0 : i32
    %c0_i32_1 = arith.constant 0 : i32
    return %c0_i32, %c0_i32_0 : i32, i32
  }
  func.func @transform_4(%arg0: i32) -> (i32, i32) {
    %c0_i32 = arith.constant 0 : i32
    %c0_i32_0 = arith.constant 0 : i32
    %c0_i32_1 = arith.constant 0 : i32
    return %c0_i32, %c0_i32_0 : i32, i32
  }
  func.func @transform_5(%arg0: i32) -> (i32, i32) {
    %c0_i32 = arith.constant 0 : i32
    %c0_i32_0 = arith.constant 0 : i32
    %c0_i32_1 = arith.constant 0 : i32
    return %c0_i32, %c0_i32_0 : i32, i32
  }
  func.func @transform_6(%arg0: i32) -> (i32, i32) {
    %c0_i32 = arith.constant 0 : i32
    %c0_i32_0 = arith.constant 0 : i32
    %c0_i32_1 = arith.constant 0 : i32
    return %c0_i32, %c0_i32_0 : i32, i32
  }
  func.func @transform_7(%arg0: i32) -> (i32, i32) {
    %c0_i32 = arith.constant 0 : i32
    %c0_i32_0 = arith.constant 0 : i32
    %c0_i32_1 = arith.constant 0 : i32
    return %c0_i32, %c0_i32_0 : i32, i32
  }
  func.func @transform_8(%arg0: i32) -> (i32, i32) {
    %c0_i32 = arith.constant 0 : i32
    %c0_i32_0 = arith.constant 0 : i32
    %c0_i32_1 = arith.constant 0 : i32
    return %c0_i32, %c0_i32_0 : i32, i32
  }
  func.func @transform_9(%arg0: i32) -> (i32, i32) {
    %c0_i32 = arith.constant 0 : i32
    %c0_i32_0 = arith.constant 0 : i32
    %c0_i32_1 = arith.constant 0 : i32
    return %c0_i32, %c0_i32_0 : i32, i32
  }
  func.func @transform_10(%arg0: i32) -> (i32, i32) {
    %c0_i32 = arith.constant 0 : i32
    %c0_i32_0 = arith.constant 0 : i32
    %c0_i32_1 = arith.constant 0 : i32
    return %c0_i32, %c0_i32_0 : i32, i32
  }
  func.func @transform_11(%arg0: i32) -> (i32, i32) {
    %c0_i32 = arith.constant 0 : i32
    %c0_i32_0 = arith.constant 0 : i32
    %c0_i32_1 = arith.constant 0 : i32
    return %c0_i32, %c0_i32_0 : i32, i32
  }
  func.func @transform_12(%arg0: i32) -> (i32, i32) {
    %c0_i32 = arith.constant 0 : i32
    %c0_i32_0 = arith.constant 0 : i32
    %c0_i32_1 = arith.constant 0 : i32
    return %c0_i32, %c0_i32_0 : i32, i32
  }
  func.func @transform_13(%arg0: i32) -> (i32, i32) {
    %c0_i32 = arith.constant 0 : i32
    %c0_i32_0 = arith.constant 0 : i32
    %c0_i32_1 = arith.constant 0 : i32
    return %c0_i32, %c0_i32_0 : i32, i32
  }
}

</mosaic_0001>

<llo_original>
// kernel: cnn_forward.1
$region0: #{cnn_forward.1}
  #allocation0 [shape = 'u32[]', space=smem, size = 0x4, offset = 0x4, fixed_abs, tag = 'smem constant byte address 0x4 - core index']
  #allocation1 [shape = 'u32[144,128]{1,0:T(1,128)}', space=vmem, size = 0x12000, scoped, tag = 'internal scratch']
  #allocation2 [shape = 'bf16[2,16,16,3]{3,2,1,0:T(16,128)(2,1)}', space=vmem, size = 0x20000, scoped, tag = 'scratch operand']
  #allocation3 [shape = 'bf16[2,14,14,27]{3,2,1,0:T(8,128)(2,1)}', space=vmem, size = 0x1c000, scoped, tag = 'scratch operand']
  #allocation4 [shape = 'bf16[2,7,7,8]{3,2,1,0:T(8,128)(2,1)}', space=vmem, size = 0x7000, scoped, tag = 'scratch operand']
  #allocation5 [shape = 'bf16[2,4,5,72]{3,2,1,0:T(8,128)(2,1)}', space=vmem, size = 0x4000, scoped, tag = 'scratch operand']
  #allocation6 [shape = 'bf16[2,2,2,16]{3,2,1,0:T(2,128)(2,1)}', space=vmem, size = 0x800, scoped, tag = 'scratch operand']
  #allocation7 [shape = 'f32[2,64]{1,0:T(2,128)}', space=vmem, size = 0x400, scoped, tag = 'scratch operand']
  %s0 = inlined_call_operand.vmem [shape: f32[2,16,16,3], index: 0, kind: input, shape index: {}]
  %s1 = inlined_call_operand.vmem [shape: bf16[27,8], index: 1, kind: input, shape index: {}]
  %s2 = inlined_call_operand.vmem [shape: f32[1,8], index: 2, kind: input, shape index: {}]
  %s3 = inlined_call_operand.vmem [shape: f32[1,8], index: 3, kind: input, shape index: {}]
  %s4 = inlined_call_operand.vmem [shape: bf16[72,16], index: 4, kind: input, shape index: {}]
  %s5 = inlined_call_operand.vmem [shape: f32[1,16], index: 5, kind: input, shape index: {}]
  %s6 = inlined_call_operand.vmem [shape: f32[1,16], index: 6, kind: input, shape index: {}]
  %s7 = inlined_call_operand.vmem [shape: f32[64,32], index: 7, kind: input, shape index: {}]
  %s8 = inlined_call_operand.vmem [shape: f32[1,32], index: 8, kind: input, shape index: {}]
  %s9 = inlined_call_operand.vmem [shape: f32[32,32], index: 9, kind: input, shape index: {}]
  %s10 = inlined_call_operand.vmem [shape: f32[1,32], index: 10, kind: input, shape index: {}]
  %s11 = inlined_call_operand.vmem [shape: f32[32,10], index: 11, kind: input, shape index: {}]
  %s12 = inlined_call_operand.vmem [shape: f32[1,10], index: 12, kind: input, shape index: {}]
  %s13 = inlined_call_operand.hbm [shape: f32[2,10], index: 13, kind: output, shape index: {}]
  %s14 = sld [smem:[#allocation0]]
  $region62: #{cnn_forward.1} parent=0
    _
  %s16 = ssub.s32 1, %s14
  %s17 = scalar_select 0, %s16, %s14
  $region1: #{cnn_forward.1} parent=0
    #allocation8 [shape = 'u8[1024]{0}', space=vmem, size = 0x400, scoped, tag = 'output window, operand 0, single buffered']
    #allocation9 [shape = 's32[1]{0}', space=sflag, size = 0x4, scoped, tag = 'scoped memory for cnn_forward.1']
    %18 = vsyncpa [#allocation9], 0
    // Predicated region
    $region2: #{cnn_forward.1} parent=1 // pred_check
      _
    $region3: #{cnn_forward.1} parent=1 // pred_check_branch
      %20 = sbr.rel (0) target = $region5
    $region4: #{cnn_forward.1} parent=1 // pred_region
      _
    $region5: #{cnn_forward.1} parent=1 // pred_fallthru
      _
    // Predicated region
    $region6: #{cnn_forward.1} parent=1 // pred_check
      _
    $region7: #{cnn_forward.1} parent=1 // pred_check_branch
      %22 = sbr.rel (0) target = $region9
    $region8: #{cnn_forward.1} parent=1 // pred_region
      _
    $region9: #{cnn_forward.1} parent=1 // pred_fallthru
      _
    // Predicated region
    $region10: #{cnn_forward.1} parent=1 // pred_check
      _
    $region11: #{cnn_forward.1} parent=1 // pred_check_branch
      %24 = sbr.rel (0) target = $region13
    $region12: #{cnn_forward.1} parent=1 // pred_region
      _
    $region13: #{cnn_forward.1} parent=1 // pred_fallthru
      _
    // Predicated region
    $region14: #{cnn_forward.1} parent=1 // pred_check
      _
    $region15: #{cnn_forward.1} parent=1 // pred_check_branch
      %26 = sbr.rel (0) target = $region17
    $region16: #{cnn_forward.1} parent=1 // pred_region
      _
    $region17: #{cnn_forward.1} parent=1 // pred_fallthru
      _
    // Predicated region
    $region18: #{cnn_forward.1} parent=1 // pred_check
      _
    $region19: #{cnn_forward.1} parent=1 // pred_check_branch
      %28 = sbr.rel (0) target = $region21
    $region20: #{cnn_forward.1} parent=1 // pred_region
      _
    $region21: #{cnn_forward.1} parent=1 // pred_fallthru
      _
    // Predicated region
    $region22: #{cnn_forward.1} parent=1 // pred_check
      _
    $region23: #{cnn_forward.1} parent=1 // pred_check_branch
      %30 = sbr.rel (0) target = $region25
    $region24: #{cnn_forward.1} parent=1 // pred_region
      _
    $region25: #{cnn_forward.1} parent=1 // pred_fallthru
      _
    // Predicated region
    $region26: #{cnn_forward.1} parent=1 // pred_check
      _
    $region27: #{cnn_forward.1} parent=1 // pred_check_branch
      %32 = sbr.rel (0) target = $region29
    $region28: #{cnn_forward.1} parent=1 // pred_region
      _
    $region29: #{cnn_forward.1} parent=1 // pred_fallthru
      _
    // Predicated region
    $region30: #{cnn_forward.1} parent=1 // pred_check
      _
    $region31: #{cnn_forward.1} parent=1 // pred_check_branch
      %34 = sbr.rel (0) target = $region33
    $region32: #{cnn_forward.1} parent=1 // pred_region
      _
    $region33: #{cnn_forward.1} parent=1 // pred_fallthru
      _
    // Predicated region
    $region34: #{cnn_forward.1} parent=1 // pred_check
      _
    $region35: #{cnn_forward.1} parent=1 // pred_check_branch
      %36 = sbr.rel (0) target = $region37
    $region36: #{cnn_forward.1} parent=1 // pred_region
      _
    $region37: #{cnn_forward.1} parent=1 // pred_fallthru
      _
    // Predicated region
    $region38: #{cnn_forward.1} parent=1 // pred_check
      _
    $region39: #{cnn_forward.1} parent=1 // pred_check_branch
      %38 = sbr.rel (0) target = $region41
    $region40: #{cnn_forward.1} parent=1 // pred_region
      _
    $region41: #{cnn_forward.1} parent=1 // pred_fallthru
      _
    // Predicated region
    $region42: #{cnn_forward.1} parent=1 // pred_check
      _
    $region43: #{cnn_forward.1} parent=1 // pred_check_branch
      %40 = sbr.rel (0) target = $region45
    $region44: #{cnn_forward.1} parent=1 // pred_region
      _
    $region45: #{cnn_forward.1} parent=1 // pred_fallthru
      _
    // Predicated region
    $region46: #{cnn_forward.1} parent=1 // pred_check
      _
    $region47: #{cnn_forward.1} parent=1 // pred_check_branch
      %42 = sbr.rel (0) target = $region49
    $region48: #{cnn_forward.1} parent=1 // pred_region
      _
    $region49: #{cnn_forward.1} parent=1 // pred_fallthru
      _
    // Predicated region
    $region50: #{cnn_forward.1} parent=1 // pred_check
      _
    $region51: #{cnn_forward.1} parent=1 // pred_check_branch
      %44 = sbr.rel (0) target = $region53
    $region52: #{cnn_forward.1} parent=1 // pred_region
      _
    $region53: #{cnn_forward.1} parent=1 // pred_fallthru
      _
    %v46 = vld [vmem:[%s0] sm:$0xff]
    %v47 = vld [vmem:[%s0 + $0x8] sm:$0xff]
    %v48 = vld [vmem:[%s0 + $0x10] sm:$0xff]
    %v49 = vld [vmem:[%s0 + $0x18] sm:$0xff]
    %v50 = vld [vmem:[%s0 + $0x20] sm:$0xff]
    %v51 = vld [vmem:[%s0 + $0x28] sm:$0xff]
    %v52 = vld [vmem:[%s0 + $0x30] sm:$0xff]
    %v53 = vld [vmem:[%s0 + $0x38] sm:$0xff]
    %v54 = vld [vmem:[%s0 + $0x40] sm:$0xff]
    %v55 = vld [vmem:[%s0 + $0x48] sm:$0xff]
    %v56 = vld [vmem:[%s0 + $0x50] sm:$0xff]
    %v57 = vld [vmem:[%s0 + $0x58] sm:$0xff]
    %v58 = vld [vmem:[%s0 + $0x60] sm:$0xff]
    %v59 = vld [vmem:[%s0 + $0x68] sm:$0xff]
    %v60 = vld [vmem:[%s0 + $0x70] sm:$0xff]
    %v61 = vld [vmem:[%s0 + $0x78] sm:$0xff]
    %v62 = vld [vmem:[%s0 + $0x80] sm:$0xff]
    %v63 = vld [vmem:[%s0 + $0x88] sm:$0xff]
    %v64 = vld [vmem:[%s0 + $0x90] sm:$0xff]
    %v65 = vld [vmem:[%s0 + $0x98] sm:$0xff]
    %v66 = vld [vmem:[%s0 + $0xa0] sm:$0xff]
    %v67 = vld [vmem:[%s0 + $0xa8] sm:$0xff]
    %v68 = vld [vmem:[%s0 + $0xb0] sm:$0xff]
    %v69 = vld [vmem:[%s0 + $0xb8] sm:$0xff]
    %v70 = vld [vmem:[%s0 + $0xc0] sm:$0xff]
    %v71 = vld [vmem:[%s0 + $0xc8] sm:$0xff]
    %v72 = vld [vmem:[%s0 + $0xd0] sm:$0xff]
    %v73 = vld [vmem:[%s0 + $0xd8] sm:$0xff]
    %v74 = vld [vmem:[%s0 + $0xe0] sm:$0xff]
    %v75 = vld [vmem:[%s0 + $0xe8] sm:$0xff]
    %v76 = vld [vmem:[%s0 + $0xf0] sm:$0xff]
    %v77 = vld [vmem:[%s0 + $0xf8] sm:$0xff]
    %v78 = vld [vmem:[%s0 + $0x100] sm:$0xff]
    %v79 = vld [vmem:[%s0 + $0x108] sm:$0xff]
    %v80 = vld [vmem:[%s0 + $0x110] sm:$0xff]
    %v81 = vld [vmem:[%s0 + $0x118] sm:$0xff]
    %v82 = vld [vmem:[%s0 + $0x120] sm:$0xff]
    %v83 = vld [vmem:[%s0 + $0x128] sm:$0xff]
    %v84 = vld [vmem:[%s0 + $0x130] sm:$0xff]
    %v85 = vld [vmem:[%s0 + $0x138] sm:$0xff]
    %v86 = vld [vmem:[%s0 + $0x140] sm:$0xff]
    %v87 = vld [vmem:[%s0 + $0x148] sm:$0xff]
    %v88 = vld [vmem:[%s0 + $0x150] sm:$0xff]
    %v89 = vld [vmem:[%s0 + $0x158] sm:$0xff]
    %v90 = vld [vmem:[%s0 + $0x160] sm:$0xff]
    %v91 = vld [vmem:[%s0 + $0x168] sm:$0xff]
    %v92 = vld [vmem:[%s0 + $0x170] sm:$0xff]
    %v93 = vld [vmem:[%s0 + $0x178] sm:$0xff]
    %v94 = vld [vmem:[%s0 + $0x180] sm:$0xff]
    %v95 = vld [vmem:[%s0 + $0x188] sm:$0xff]
    %v96 = vld [vmem:[%s0 + $0x190] sm:$0xff]
    %v97 = vld [vmem:[%s0 + $0x198] sm:$0xff]
    %v98 = vld [vmem:[%s0 + $0x1a0] sm:$0xff]
    %v99 = vld [vmem:[%s0 + $0x1a8] sm:$0xff]
    %v100 = vld [vmem:[%s0 + $0x1b0] sm:$0xff]
    %v101 = vld [vmem:[%s0 + $0x1b8] sm:$0xff]
    %v102 = vld [vmem:[%s0 + $0x1c0] sm:$0xff]
    %v103 = vld [vmem:[%s0 + $0x1c8] sm:$0xff]
    %v104 = vld [vmem:[%s0 + $0x1d0] sm:$0xff]
    %v105 = vld [vmem:[%s0 + $0x1d8] sm:$0xff]
    %v106 = vld [vmem:[%s0 + $0x1e0] sm:$0xff]
    %v107 = vld [vmem:[%s0 + $0x1e8] sm:$0xff]
    %v108 = vld [vmem:[%s0 + $0x1f0] sm:$0xff]
    %v109 = vld [vmem:[%s0 + $0x1f8] sm:$0xff]
    %v110 = vmul.f32 %v46, 128.0
    %v111 = vmul.f32 %v47, 128.0
    %v112 = vmul.f32 %v48, 128.0
    %v113 = vmul.f32 %v49, 128.0
    %v114 = vmul.f32 %v50, 128.0
    %v115 = vmul.f32 %v51, 128.0
    %v116 = vmul.f32 %v52, 128.0
    %v117 = vmul.f32 %v53, 128.0
    %v118 = vmul.f32 %v54, 128.0
    %v119 = vmul.f32 %v55, 128.0
    %v120 = vmul.f32 %v56, 128.0
    %v121 = vmul.f32 %v57, 128.0
    %v122 = vmul.f32 %v58, 128.0
    %v123 = vmul.f32 %v59, 128.0
    %v124 = vmul.f32 %v60, 128.0
    %v125 = vmul.f32 %v61, 128.0
    %v126 = vmul.f32 %v62, 128.0
    %v127 = vmul.f32 %v63, 128.0
    %v128 = vmul.f32 %v64, 128.0
    %v129 = vmul.f32 %v65, 128.0
    %v130 = vmul.f32 %v66, 128.0
    %v131 = vmul.f32 %v67, 128.0
    %v132 = vmul.f32 %v68, 128.0
    %v133 = vmul.f32 %v69, 128.0
    %v134 = vmul.f32 %v70, 128.0
    %v135 = vmul.f32 %v71, 128.0
    %v136 = vmul.f32 %v72, 128.0
    %v137 = vmul.f32 %v73, 128.0
    %v138 = vmul.f32 %v74, 128.0
    %v139 = vmul.f32 %v75, 128.0
    %v140 = vmul.f32 %v76, 128.0
    %v141 = vmul.f32 %v77, 128.0
    %v142 = vmul.f32 %v78, 128.0
    %v143 = vmul.f32 %v79, 128.0
    %v144 = vmul.f32 %v80, 128.0
    %v145 = vmul.f32 %v81, 128.0
    %v146 = vmul.f32 %v82, 128.0
    %v147 = vmul.f32 %v83, 128.0
    %v148 = vmul.f32 %v84, 128.0
    %v149 = vmul.f32 %v85, 128.0
    %v150 = vmul.f32 %v86, 128.0
    %v151 = vmul.f32 %v87, 128.0
    %v152 = vmul.f32 %v88, 128.0
    %v153 = vmul.f32 %v89, 128.0
    %v154 = vmul.f32 %v90, 128.0
    %v155 = vmul.f32 %v91, 128.0
    %v156 = vmul.f32 %v92, 128.0
    %v157 = vmul.f32 %v93, 128.0
    %v158 = vmul.f32 %v94, 128.0
    %v159 = vmul.f32 %v95, 128.0
    %v160 = vmul.f32 %v96, 128.0
    %v161 = vmul.f32 %v97, 128.0
    %v162 = vmul.f32 %v98, 128.0
    %v163 = vmul.f32 %v99, 128.0
    %v164 = vmul.f32 %v100, 128.0
    %v165 = vmul.f32 %v101, 128.0
    %v166 = vmul.f32 %v102, 128.0
    %v167 = vmul.f32 %v103, 128.0
    %v168 = vmul.f32 %v104, 128.0
    %v169 = vmul.f32 %v105, 128.0
    %v170 = vmul.f32 %v106, 128.0
    %v171 = vmul.f32 %v107, 128.0
    %v172 = vmul.f32 %v108, 128.0
    %v173 = vmul.f32 %v109, 128.0
    %v174 = vround.ne.pseudo %v110
    %v175 = vround.ne.pseudo %v111
    %v176 = vround.ne.pseudo %v112
    %v177 = vround.ne.pseudo %v113
    %v178 = vround.ne.pseudo %v114
    %v179 = vround.ne.pseudo %v115
    %v180 = vround.ne.pseudo %v116
    %v181 = vround.ne.pseudo %v117
    %v182 = vround.ne.pseudo %v118
    %v183 = vround.ne.pseudo %v119
    %v184 = vround.ne.pseudo %v120
    %v185 = vround.ne.pseudo %v121
    %v186 = vround.ne.pseudo %v122
    %v187 = vround.ne.pseudo %v123
    %v188 = vround.ne.pseudo %v124
    %v189 = vround.ne.pseudo %v125
    %v190 = vround.ne.pseudo %v126
    %v191 = vround.ne.pseudo %v127
    %v192 = vround.ne.pseudo %v128
    %v193 = vround.ne.pseudo %v129
    %v194 = vround.ne.pseudo %v130
    %v195 = vround.ne.pseudo %v131
    %v196 = vround.ne.pseudo %v132
    %v197 = vround.ne.pseudo %v133
    %v198 = vround.ne.pseudo %v134
    %v199 = vround.ne.pseudo %v135
    %v200 = vround.ne.pseudo %v136
    %v201 = vround.ne.pseudo %v137
    %v202 = vround.ne.pseudo %v138
    %v203 = vround.ne.pseudo %v139
    %v204 = vround.ne.pseudo %v140
    %v205 = vround.ne.pseudo %v141
    %v206 = vround.ne.pseudo %v142
    %v207 = vround.ne.pseudo %v143
    %v208 = vround.ne.pseudo %v144
    %v209 = vround.ne.pseudo %v145
    %v210 = vround.ne.pseudo %v146
    %v211 = vround.ne.pseudo %v147
    %v212 = vround.ne.pseudo %v148
    %v213 = vround.ne.pseudo %v149
    %v214 = vround.ne.pseudo %v150
    %v215 = vround.ne.pseudo %v151
    %v216 = vround.ne.pseudo %v152
    %v217 = vround.ne.pseudo %v153
    %v218 = vround.ne.pseudo %v154
    %v219 = vround.ne.pseudo %v155
    %v220 = vround.ne.pseudo %v156
    %v221 = vround.ne.pseudo %v157
    %v222 = vround.ne.pseudo %v158
    %v223 = vround.ne.pseudo %v159
    %v224 = vround.ne.pseudo %v160
    %v225 = vround.ne.pseudo %v161
    %v226 = vround.ne.pseudo %v162
    %v227 = vround.ne.pseudo %v163
    %v228 = vround.ne.pseudo %v164
    %v229 = vround.ne.pseudo %v165
    %v230 = vround.ne.pseudo %v166
    %v231 = vround.ne.pseudo %v167
    %v232 = vround.ne.pseudo %v168
    %v233 = vround.ne.pseudo %v169
    %v234 = vround.ne.pseudo %v170
    %v235 = vround.ne.pseudo %v171
    %v236 = vround.ne.pseudo %v172
    %v237 = vround.ne.pseudo %v173
    %v238 = vmul.f32 %v174, 0.0078125
    %v239 = vmul.f32 %v175, 0.0078125
    %v240 = vmul.f32 %v176, 0.0078125
    %v241 = vmul.f32 %v177, 0.0078125
    %v242 = vmul.f32 %v178, 0.0078125
    %v243 = vmul.f32 %v179, 0.0078125
    %v244 = vmul.f32 %v180, 0.0078125
    %v245 = vmul.f32 %v181, 0.0078125
    %v246 = vmul.f32 %v182, 0.0078125
    %v247 = vmul.f32 %v183, 0.0078125
    %v248 = vmul.f32 %v184, 0.0078125
    %v249 = vmul.f32 %v185, 0.0078125
    %v250 = vmul.f32 %v186, 0.0078125
    %v251 = vmul.f32 %v187, 0.0078125
    %v252 = vmul.f32 %v188, 0.0078125
    %v253 = vmul.f32 %v189, 0.0078125
    %v254 = vmul.f32 %v190, 0.0078125
    %v255 = vmul.f32 %v191, 0.0078125
    %v256 = vmul.f32 %v192, 0.0078125
    %v257 = vmul.f32 %v193, 0.0078125
    %v258 = vmul.f32 %v194, 0.0078125
    %v259 = vmul.f32 %v195, 0.0078125
    %v260 = vmul.f32 %v196, 0.0078125
    %v261 = vmul.f32 %v197, 0.0078125
    %v262 = vmul.f32 %v198, 0.0078125
    %v263 = vmul.f32 %v199, 0.0078125
    %v264 = vmul.f32 %v200, 0.0078125
    %v265 = vmul.f32 %v201, 0.0078125
    %v266 = vmul.f32 %v202, 0.0078125
    %v267 = vmul.f32 %v203, 0.0078125
    %v268 = vmul.f32 %v204, 0.0078125
    %v269 = vmul.f32 %v205, 0.0078125
    %v270 = vmul.f32 %v206, 0.0078125
    %v271 = vmul.f32 %v207, 0.0078125
    %v272 = vmul.f32 %v208, 0.0078125
    %v273 = vmul.f32 %v209, 0.0078125
    %v274 = vmul.f32 %v210, 0.0078125
    %v275 = vmul.f32 %v211, 0.0078125
    %v276 = vmul.f32 %v212, 0.0078125
    %v277 = vmul.f32 %v213, 0.0078125
    %v278 = vmul.f32 %v214, 0.0078125
    %v279 = vmul.f32 %v215, 0.0078125
    %v280 = vmul.f32 %v216, 0.0078125
    %v281 = vmul.f32 %v217, 0.0078125
    %v282 = vmul.f32 %v218, 0.0078125
    %v283 = vmul.f32 %v219, 0.0078125
    %v284 = vmul.f32 %v220, 0.0078125
    %v285 = vmul.f32 %v221, 0.0078125
    %v286 = vmul.f32 %v222, 0.0078125
    %v287 = vmul.f32 %v223, 0.0078125
    %v288 = vmul.f32 %v224, 0.0078125
    %v289 = vmul.f32 %v225, 0.0078125
    %v290 = vmul.f32 %v226, 0.0078125
    %v291 = vmul.f32 %v227, 0.0078125
    %v292 = vmul.f32 %v228, 0.0078125
    %v293 = vmul.f32 %v229, 0.0078125
    %v294 = vmul.f32 %v230, 0.0078125
    %v295 = vmul.f32 %v231, 0.0078125
    %v296 = vmul.f32 %v232, 0.0078125
    %v297 = vmul.f32 %v233, 0.0078125
    %v298 = vmul.f32 %v234, 0.0078125
    %v299 = vmul.f32 %v235, 0.0078125
    %v300 = vmul.f32 %v236, 0.0078125
    %v301 = vmul.f32 %v237, 0.0078125
    %v302 = vmax.f32 %v238, -1.0
    %v303 = vmax.f32 %v239, -1.0
    %v304 = vmax.f32 %v240, -1.0
    %v305 = vmax.f32 %v241, -1.0
    %v306 = vmax.f32 %v242, -1.0
    %v307 = vmax.f32 %v243, -1.0
    %v308 = vmax.f32 %v244, -1.0
    %v309 = vmax.f32 %v245, -1.0
    %v310 = vmax.f32 %v246, -1.0
    %v311 = vmax.f32 %v247, -1.0
    %v312 = vmax.f32 %v248, -1.0
    %v313 = vmax.f32 %v249, -1.0
    %v314 = vmax.f32 %v250, -1.0
    %v315 = vmax.f32 %v251, -1.0
    %v316 = vmax.f32 %v252, -1.0
    %v317 = vmax.f32 %v253, -1.0
    %v318 = vmax.f32 %v254, -1.0
    %v319 = vmax.f32 %v255, -1.0
    %v320 = vmax.f32 %v256, -1.0
    %v321 = vmax.f32 %v257, -1.0
    %v322 = vmax.f32 %v258, -1.0
    %v323 = vmax.f32 %v259, -1.0
    %v324 = vmax.f32 %v260, -1.0
    %v325 = vmax.f32 %v261, -1.0
    %v326 = vmax.f32 %v262, -1.0
    %v327 = vmax.f32 %v263, -1.0
    %v328 = vmax.f32 %v264, -1.0
    %v329 = vmax.f32 %v265, -1.0
    %v330 = vmax.f32 %v266, -1.0
    %v331 = vmax.f32 %v267, -1.0
    %v332 = vmax.f32 %v268, -1.0
    %v333 = vmax.f32 %v269, -1.0
    %v334 = vmax.f32 %v270, -1.0
    %v335 = vmax.f32 %v271, -1.0
    %v336 = vmax.f32 %v272, -1.0
    %v337 = vmax.f32 %v273, -1.0
    %v338 = vmax.f32 %v274, -1.0
    %v339 = vmax.f32 %v275, -1.0
    %v340 = vmax.f32 %v276, -1.0
    %v341 = vmax.f32 %v277, -1.0
    %v342 = vmax.f32 %v278, -1.0
    %v343 = vmax.f32 %v279, -1.0
    %v344 = vmax.f32 %v280, -1.0
    %v345 = vmax.f32 %v281, -1.0
    %v346 = vmax.f32 %v282, -1.0
    %v347 = vmax.f32 %v283, -1.0
    %v348 = vmax.f32 %v284, -1.0
    %v349 = vmax.f32 %v285, -1.0
    %v350 = vmax.f32 %v286, -1.0
    %v351 = vmax.f32 %v287, -1.0
    %v352 = vmax.f32 %v288, -1.0
    %v353 = vmax.f32 %v289, -1.0
    %v354 = vmax.f32 %v290, -1.0
    %v355 = vmax.f32 %v291, -1.0
    %v356 = vmax.f32 %v292, -1.0
    %v357 = vmax.f32 %v293, -1.0
    %v358 = vmax.f32 %v294, -1.0
    %v359 = vmax.f32 %v295, -1.0
    %v360 = vmax.f32 %v296, -1.0
    %v361 = vmax.f32 %v297, -1.0
    %v362 = vmax.f32 %v298, -1.0
    %v363 = vmax.f32 %v299, -1.0
    %v364 = vmax.f32 %v300, -1.0
    %v365 = vmax.f32 %v301, -1.0
    %v366 = vmin.f32 %v302, 0.9921875
    %v367 = vmin.f32 %v303, 0.9921875
    %v368 = vmin.f32 %v304, 0.9921875
    %v369 = vmin.f32 %v305, 0.9921875
    %v370 = vmin.f32 %v306, 0.9921875
    %v371 = vmin.f32 %v307, 0.9921875
    %v372 = vmin.f32 %v308, 0.9921875
    %v373 = vmin.f32 %v309, 0.9921875
    %v374 = vmin.f32 %v310, 0.9921875
    %v375 = vmin.f32 %v311, 0.9921875
    %v376 = vmin.f32 %v312, 0.9921875
    %v377 = vmin.f32 %v313, 0.9921875
    %v378 = vmin.f32 %v314, 0.9921875
    %v379 = vmin.f32 %v315, 0.9921875
    %v380 = vmin.f32 %v316, 0.9921875
    %v381 = vmin.f32 %v317, 0.9921875
    %v382 = vmin.f32 %v318, 0.9921875
    %v383 = vmin.f32 %v319, 0.9921875
    %v384 = vmin.f32 %v320, 0.9921875
    %v385 = vmin.f32 %v321, 0.9921875
    %v386 = vmin.f32 %v322, 0.9921875
    %v387 = vmin.f32 %v323, 0.9921875
    %v388 = vmin.f32 %v324, 0.9921875
    %v389 = vmin.f32 %v325, 0.9921875
    %v390 = vmin.f32 %v326, 0.9921875
    %v391 = vmin.f32 %v327, 0.9921875
    %v392 = vmin.f32 %v328, 0.9921875
    %v393 = vmin.f32 %v329, 0.9921875
    %v394 = vmin.f32 %v330, 0.9921875
    %v395 = vmin.f32 %v331, 0.9921875
    %v396 = vmin.f32 %v332, 0.9921875
    %v397 = vmin.f32 %v333, 0.9921875
    %v398 = vmin.f32 %v334, 0.9921875
    %v399 = vmin.f32 %v335, 0.9921875
    %v400 = vmin.f32 %v336, 0.9921875
    %v401 = vmin.f32 %v337, 0.9921875
    %v402 = vmin.f32 %v338, 0.9921875
    %v403 = vmin.f32 %v339, 0.9921875
    %v404 = vmin.f32 %v340, 0.9921875
    %v405 = vmin.f32 %v341, 0.9921875
    %v406 = vmin.f32 %v342, 0.9921875
    %v407 = vmin.f32 %v343, 0.9921875
    %v408 = vmin.f32 %v344, 0.9921875
    %v409 = vmin.f32 %v345, 0.9921875
    %v410 = vmin.f32 %v346, 0.9921875
    %v411 = vmin.f32 %v347, 0.9921875
    %v412 = vmin.f32 %v348, 0.9921875
    %v413 = vmin.f32 %v349, 0.9921875
    %v414 = vmin.f32 %v350, 0.9921875
    %v415 = vmin.f32 %v351, 0.9921875
    %v416 = vmin.f32 %v352, 0.9921875
    %v417 = vmin.f32 %v353, 0.9921875
    %v418 = vmin.f32 %v354, 0.9921875
    %v419 = vmin.f32 %v355, 0.9921875
    %v420 = vmin.f32 %v356, 0.9921875
    %v421 = vmin.f32 %v357, 0.9921875
    %v422 = vmin.f32 %v358, 0.9921875
    %v423 = vmin.f32 %v359, 0.9921875
    %v424 = vmin.f32 %v360, 0.9921875
    %v425 = vmin.f32 %v361, 0.9921875
    %v426 = vmin.f32 %v362, 0.9921875
    %v427 = vmin.f32 %v363, 0.9921875
    %v428 = vmin.f32 %v364, 0.9921875
    %v429 = vmin.f32 %v365, 0.9921875
    %v430 = vpack.c.bf16 %v367, %v366
    %v431 = vpack.c.bf16 %v369, %v368
    %v432 = vpack.c.bf16 %v371, %v370
    %v433 = vpack.c.bf16 %v373, %v372
    %v434 = vpack.c.bf16 %v375, %v374
    %v435 = vpack.c.bf16 %v377, %v376
    %v436 = vpack.c.bf16 %v379, %v378
    %v437 = vpack.c.bf16 %v381, %v380
    %v438 = vpack.c.bf16 %v383, %v382
    %v439 = vpack.c.bf16 %v385, %v384
    %v440 = vpack.c.bf16 %v387, %v386
    %v441 = vpack.c.bf16 %v389, %v388
    %v442 = vpack.c.bf16 %v391, %v390
    %v443 = vpack.c.bf16 %v393, %v392
    %v444 = vpack.c.bf16 %v395, %v394
    %v445 = vpack.c.bf16 %v397, %v396
    %v446 = vpack.c.bf16 %v399, %v398
    %v447 = vpack.c.bf16 %v401, %v400
    %v448 = vpack.c.bf16 %v403, %v402
    %v449 = vpack.c.bf16 %v405, %v404
    %v450 = vpack.c.bf16 %v407, %v406
    %v451 = vpack.c.bf16 %v409, %v408
    %v452 = vpack.c.bf16 %v411, %v410
    %v453 = vpack.c.bf16 %v413, %v412
    %v454 = vpack.c.bf16 %v415, %v414
    %v455 = vpack.c.bf16 %v417, %v416
    %v456 = vpack.c.bf16 %v419, %v418
    %v457 = vpack.c.bf16 %v421, %v420
    %v458 = vpack.c.bf16 %v423, %v422
    %v459 = vpack.c.bf16 %v425, %v424
    %v460 = vpack.c.bf16 %v427, %v426
    %v461 = vpack.c.bf16 %v429, %v428
    %vm462 = vcmask 23552
    %463 = vst.msk [vmem:[#allocation2] sm:$0xff] %vm462, %v430
    %464 = vst.msk [vmem:[#allocation2 + $0x8] sm:$0xff] %vm462, %v431
    %465 = vst.msk [vmem:[#allocation2 + $0x10] sm:$0xff] %vm462, %v432
    %466 = vst.msk [vmem:[#allocation2 + $0x18] sm:$0xff] %vm462, %v433
    %467 = vst.msk [vmem:[#allocation2 + $0x20] sm:$0xff] %vm462, %v434
    %468 = vst.msk [vmem:[#allocation2 + $0x28] sm:$0xff] %vm462, %v435
    %469 = vst.msk [vmem:[#allocation2 + $0x30] sm:$0xff] %vm462, %v436
    %470 = vst.msk [vmem:[#allocation2 + $0x38] sm:$0xff] %vm462, %v437
    %471 = vst.msk [vmem:[#allocation2 + $0x40] sm:$0xff] %vm462, %v438
    %472 = vst.msk [vmem:[#allocation2 + $0x48] sm:$0xff] %vm462, %v439
    %473 = vst.msk [vmem:[#allocation2 + $0x50] sm:$0xff] %vm462, %v440
    %474 = vst.msk [vmem:[#allocation2 + $0x58] sm:$0xff] %vm462, %v441
    %475 = vst.msk [vmem:[#allocation2 + $0x60] sm:$0xff] %vm462, %v442
    %476 = vst.msk [vmem:[#allocation2 + $0x68] sm:$0xff] %vm462, %v443
    %477 = vst.msk [vmem:[#allocation2 + $0x70] sm:$0xff] %vm462, %v444
    %478 = vst.msk [vmem:[#allocation2 + $0x78] sm:$0xff] %vm462, %v445
    %479 = vst.msk [vmem:[#allocation2 + $0x80] sm:$0xff] %vm462, %v446
    %480 = vst.msk [vmem:[#allocation2 + $0x88] sm:$0xff] %vm462, %v447
    %481 = vst.msk [vmem:[#allocation2 + $0x90] sm:$0xff] %vm462, %v448
    %482 = vst.msk [vmem:[#allocation2 + $0x98] sm:$0xff] %vm462, %v449
    %483 = vst.msk [vmem:[#allocation2 + $0xa0] sm:$0xff] %vm462, %v450
    %484 = vst.msk [vmem:[#allocation2 + $0xa8] sm:$0xff] %vm462, %v451
    %485 = vst.msk [vmem:[#allocation2 + $0xb0] sm:$0xff] %vm462, %v452
    %486 = vst.msk [vmem:[#allocation2 + $0xb8] sm:$0xff] %vm462, %v453
    %487 = vst.msk [vmem:[#allocation2 + $0xc0] sm:$0xff] %vm462, %v454
    %488 = vst.msk [vmem:[#allocation2 + $0xc8] sm:$0xff] %vm462, %v455
    %489 = vst.msk [vmem:[#allocation2 + $0xd0] sm:$0xff] %vm462, %v456
    %490 = vst.msk [vmem:[#allocation2 + $0xd8] sm:$0xff] %vm462, %v457
    %491 = vst.msk [vmem:[#allocation2 + $0xe0] sm:$0xff] %vm462, %v458
    %492 = vst.msk [vmem:[#allocation2 + $0xe8] sm:$0xff] %vm462, %v459
    %493 = vst.msk [vmem:[#allocation2 + $0xf0] sm:$0xff] %vm462, %v460
    %494 = vst.msk [vmem:[#allocation2 + $0xf8] sm:$0xff] %vm462, %v461
    %v495 = vld [vmem:[#allocation2] sm:$0x7f]
    %v496 = vld [vmem:[#allocation2 + $0x8] sm:$0x7f]
    %v497 = vld [vmem:[#allocation2 + $0x10] sm:$0x7f]
    %v498 = vld [vmem:[#allocation2 + $0x18] sm:$0x7f]
    %v499 = vld [vmem:[#allocation2 + $0x20] sm:$0x7f]
    %v500 = vld [vmem:[#allocation2 + $0x28] sm:$0x7f]
    %v501 = vld [vmem:[#allocation2 + $0x30] sm:$0x7f]
    %v502 = vld [vmem:[#allocation2 + $0x38] sm:$0x7f]
    %v503 = vld [vmem:[#allocation2 + $0x40] sm:$0x7f]
    %v504 = vld [vmem:[#allocation2 + $0x48] sm:$0x7f]
    %v505 = vld [vmem:[#allocation2 + $0x50] sm:$0x7f]
    %v506 = vld [vmem:[#allocation2 + $0x58] sm:$0x7f]
    %v507 = vld [vmem:[#allocation2 + $0x60] sm:$0x7f]
    %v508 = vld [vmem:[#allocation2 + $0x68] sm:$0x7f]
    %v509 = vld [vmem:[#allocation2 + $0x80] sm:$0x7f]
    %v510 = vld [vmem:[#allocation2 + $0x88] sm:$0x7f]
    %v511 = vld [vmem:[#allocation2 + $0x90] sm:$0x7f]
    %v512 = vld [vmem:[#allocation2 + $0x98] sm:$0x7f]
    %v513 = vld [vmem:[#allocation2 + $0xa0] sm:$0x7f]
    %v514 = vld [vmem:[#allocation2 + $0xa8] sm:$0x7f]
    %v515 = vld [vmem:[#allocation2 + $0xb0] sm:$0x7f]
    %v516 = vld [vmem:[#allocation2 + $0xb8] sm:$0x7f]
    %v517 = vld [vmem:[#allocation2 + $0xc0] sm:$0x7f]
    %v518 = vld [vmem:[#allocation2 + $0xc8] sm:$0x7f]
    %v519 = vld [vmem:[#allocation2 + $0xd0] sm:$0x7f]
    %v520 = vld [vmem:[#allocation2 + $0xd8] sm:$0x7f]
    %v521 = vld [vmem:[#allocation2 + $0xe0] sm:$0x7f]
    %v522 = vld [vmem:[#allocation2 + $0xe8] sm:$0x7f]
    %v551 = vunpack.c.l.b16 %v495
    %v552 = vunpack.c.h.b16 %v495
    %v553 = vunpack.c.l.b16 %v496
    %v554 = vunpack.c.h.b16 %v496
    %v555 = vunpack.c.l.b16 %v497
    %v556 = vunpack.c.h.b16 %v497
    %v557 = vunpack.c.l.b16 %v498
    %v558 = vunpack.c.h.b16 %v498
    %v559 = vunpack.c.l.b16 %v499
    %v560 = vunpack.c.h.b16 %v499
    %v561 = vunpack.c.l.b16 %v500
    %v562 = vunpack.c.h.b16 %v500
    %v563 = vunpack.c.l.b16 %v501
    %v564 = vunpack.c.h.b16 %v501
    %v565 = vunpack.c.l.b16 %v502
    %v566 = vunpack.c.h.b16 %v502
    %v567 = vunpack.c.l.b16 %v503
    %v568 = vunpack.c.h.b16 %v503
    %v569 = vunpack.c.l.b16 %v504
    %v570 = vunpack.c.h.b16 %v504
    %v571 = vunpack.c.l.b16 %v505
    %v572 = vunpack.c.h.b16 %v505
    %v573 = vunpack.c.l.b16 %v506
    %v574 = vunpack.c.h.b16 %v506
    %v575 = vunpack.c.l.b16 %v507
    %v576 = vunpack.c.h.b16 %v507
    %v577 = vunpack.c.l.b16 %v508
    %v578 = vunpack.c.h.b16 %v508
    %v579 = vunpack.c.l.b16 %v509
    %v580 = vunpack.c.h.b16 %v509
    %v581 = vunpack.c.l.b16 %v510
    %v582 = vunpack.c.h.b16 %v510
    %v583 = vunpack.c.l.b16 %v511
    %v584 = vunpack.c.h.b16 %v511
    %v585 = vunpack.c.l.b16 %v512
    %v586 = vunpack.c.h.b16 %v512
    %v587 = vunpack.c.l.b16 %v513
    %v588 = vunpack.c.h.b16 %v513
    %v589 = vunpack.c.l.b16 %v514
    %v590 = vunpack.c.h.b16 %v514
    %v591 = vunpack.c.l.b16 %v515
    %v592 = vunpack.c.h.b16 %v515
    %v593 = vunpack.c.l.b16 %v516
    %v594 = vunpack.c.h.b16 %v516
    %v595 = vunpack.c.l.b16 %v517
    %v596 = vunpack.c.h.b16 %v517
    %v597 = vunpack.c.l.b16 %v518
    %v598 = vunpack.c.h.b16 %v518
    %v599 = vunpack.c.l.b16 %v519
    %v600 = vunpack.c.h.b16 %v519
    %v601 = vunpack.c.l.b16 %v520
    %v602 = vunpack.c.h.b16 %v520
    %v603 = vunpack.c.l.b16 %v521
    %v604 = vunpack.c.h.b16 %v521
    %v605 = vunpack.c.l.b16 %v522
    %v606 = vunpack.c.h.b16 %v522
    %v607 = vpack.c.b16 %v551, %v551
    %v608 = vpack.c.b16 %v552, %v552
    %v609 = vpack.c.b16 %v553, %v553
    %v610 = vpack.c.b16 %v554, %v554
    %v611 = vpack.c.b16 %v555, %v555
    %v612 = vpack.c.b16 %v556, %v556
    %v613 = vpack.c.b16 %v557, %v557
    %v614 = vpack.c.b16 %v558, %v558
    %v615 = vpack.c.b16 %v559, %v559
    %v616 = vpack.c.b16 %v560, %v560
    %v617 = vpack.c.b16 %v561, %v561
    %v618 = vpack.c.b16 %v562, %v562
    %v619 = vpack.c.b16 %v563, %v563
    %v620 = vpack.c.b16 %v564, %v564
    %v621 = vpack.c.b16 %v565, %v565
    %v622 = vpack.c.b16 %v566, %v566
    %v623 = vpack.c.b16 %v567, %v567
    %v624 = vpack.c.b16 %v568, %v568
    %v625 = vpack.c.b16 %v569, %v569
    %v626 = vpack.c.b16 %v570, %v570
    %v627 = vpack.c.b16 %v571, %v571
    %v628 = vpack.c.b16 %v572, %v572
    %v629 = vpack.c.b16 %v573, %v573
    %v630 = vpack.c.b16 %v574, %v574
    %v631 = vpack.c.b16 %v575, %v575
    %v632 = vpack.c.b16 %v576, %v576
    %v633 = vpack.c.b16 %v577, %v577
    %v634 = vpack.c.b16 %v578, %v578
    %v635 = vpack.c.b16 %v579, %v579
    %v636 = vpack.c.b16 %v580, %v580
    %v637 = vpack.c.b16 %v581, %v581
    %v638 = vpack.c.b16 %v582, %v582
    %v639 = vpack.c.b16 %v583, %v583
    %v640 = vpack.c.b16 %v584, %v584
    %v641 = vpack.c.b16 %v585, %v585
    %v642 = vpack.c.b16 %v586, %v586
    %v643 = vpack.c.b16 %v587, %v587
    %v644 = vpack.c.b16 %v588, %v588
    %v645 = vpack.c.b16 %v589, %v589
    %v646 = vpack.c.b16 %v590, %v590
    %v647 = vpack.c.b16 %v591, %v591
    %v648 = vpack.c.b16 %v592, %v592
    %v649 = vpack.c.b16 %v593, %v593
    %v650 = vpack.c.b16 %v594, %v594
    %v651 = vpack.c.b16 %v595, %v595
    %v652 = vpack.c.b16 %v596, %v596
    %v653 = vpack.c.b16 %v597, %v597
    %v654 = vpack.c.b16 %v598, %v598
    %v655 = vpack.c.b16 %v599, %v599
    %v656 = vpack.c.b16 %v600, %v600
    %v657 = vpack.c.b16 %v601, %v601
    %v658 = vpack.c.b16 %v602, %v602
    %v659 = vpack.c.b16 %v603, %v603
    %v660 = vpack.c.b16 %v604, %v604
    %v661 = vpack.c.b16 %v605, %v605
    %v662 = vpack.c.b16 %v606, %v606
    %vm719 = vcmask 19456
    %720 = vst.msk [vmem:[#allocation3] sm:$0xf] %vm719, %v607
    %vm721 = vcmask 18432
    %722 = vst.msk [vmem:[#allocation3 + $0x4] sm:$0x7] %vm721, %v608
    %723 = vst.msk [vmem:[#allocation3 + $0x8] sm:$0xf] %vm719, %v609
    %724 = vst.msk [vmem:[#allocation3 + $0xc] sm:$0x7] %vm721, %v610
    %725 = vst.msk [vmem:[#allocation3 + $0x10] sm:$0xf] %vm719, %v611
    %726 = vst.msk [vmem:[#allocation3 + $0x14] sm:$0x7] %vm721, %v612
    %727 = vst.msk [vmem:[#allocation3 + $0x18] sm:$0xf] %vm719, %v613
    %728 = vst.msk [vmem:[#allocation3 + $0x1c] sm:$0x7] %vm721, %v614
    %729 = vst.msk [vmem:[#allocation3 + $0x20] sm:$0xf] %vm719, %v615
    %730 = vst.msk [vmem:[#allocation3 + $0x24] sm:$0x7] %vm721, %v616
    %731 = vst.msk [vmem:[#allocation3 + $0x28] sm:$0xf] %vm719, %v617
    %732 = vst.msk [vmem:[#allocation3 + $0x2c] sm:$0x7] %vm721, %v618
    %733 = vst.msk [vmem:[#allocation3 + $0x30] sm:$0xf] %vm719, %v619
    %734 = vst.msk [vmem:[#allocation3 + $0x34] sm:$0x7] %vm721, %v620
    %735 = vst.msk [vmem:[#allocation3 + $0x38] sm:$0xf] %vm719, %v621
    %736 = vst.msk [vmem:[#allocation3 + $0x3c] sm:$0x7] %vm721, %v622
    %737 = vst.msk [vmem:[#allocation3 + $0x40] sm:$0xf] %vm719, %v623
    %738 = vst.msk [vmem:[#allocation3 + $0x44] sm:$0x7] %vm721, %v624
    %739 = vst.msk [vmem:[#allocation3 + $0x48] sm:$0xf] %vm719, %v625
    %740 = vst.msk [vmem:[#allocation3 + $0x4c] sm:$0x7] %vm721, %v626
    %741 = vst.msk [vmem:[#allocation3 + $0x50] sm:$0xf] %vm719, %v627
    %742 = vst.msk [vmem:[#allocation3 + $0x54] sm:$0x7] %vm721, %v628
    %743 = vst.msk [vmem:[#allocation3 + $0x58] sm:$0xf] %vm719, %v629
    %744 = vst.msk [vmem:[#allocation3 + $0x5c] sm:$0x7] %vm721, %v630
    %745 = vst.msk [vmem:[#allocation3 + $0x60] sm:$0xf] %vm719, %v631
    %746 = vst.msk [vmem:[#allocation3 + $0x64] sm:$0x7] %vm721, %v632
    %747 = vst.msk [vmem:[#allocation3 + $0x68] sm:$0xf] %vm719, %v633
    %748 = vst.msk [vmem:[#allocation3 + $0x6c] sm:$0x7] %vm721, %v634
    %749 = vst.msk [vmem:[#allocation3 + $0x70] sm:$0xf] %vm719, %v635
    %750 = vst.msk [vmem:[#allocation3 + $0x74] sm:$0x7] %vm721, %v636
    %751 = vst.msk [vmem:[#allocation3 + $0x78] sm:$0xf] %vm719, %v637
    %752 = vst.msk [vmem:[#allocation3 + $0x7c] sm:$0x7] %vm721, %v638
    %753 = vst.msk [vmem:[#allocation3 + $0x80] sm:$0xf] %vm719, %v639
    %754 = vst.msk [vmem:[#allocation3 + $0x84] sm:$0x7] %vm721, %v640
    %755 = vst.msk [vmem:[#allocation3 + $0x88] sm:$0xf] %vm719, %v641
    %756 = vst.msk [vmem:[#allocation3 + $0x8c] sm:$0x7] %vm721, %v642
    %757 = vst.msk [vmem:[#allocation3 + $0x90] sm:$0xf] %vm719, %v643
    %758 = vst.msk [vmem:[#allocation3 + $0x94] sm:$0x7] %vm721, %v644
    %759 = vst.msk [vmem:[#allocation3 + $0x98] sm:$0xf] %vm719, %v645
    %760 = vst.msk [vmem:[#allocation3 + $0x9c] sm:$0x7] %vm721, %v646
    %761 = vst.msk [vmem:[#allocation3 + $0xa0] sm:$0xf] %vm719, %v647
    %762 = vst.msk [vmem:[#allocation3 + $0xa4] sm:$0x7] %vm721, %v648
    %763 = vst.msk [vmem:[#allocation3 + $0xa8] sm:$0xf] %vm719, %v649
    %764 = vst.msk [vmem:[#allocation3 + $0xac] sm:$0x7] %vm721, %v650
    %765 = vst.msk [vmem:[#allocation3 + $0xb0] sm:$0xf] %vm719, %v651
    %766 = vst.msk [vmem:[#allocation3 + $0xb4] sm:$0x7] %vm721, %v652
    %767 = vst.msk [vmem:[#allocation3 + $0xb8] sm:$0xf] %vm719, %v653
    %768 = vst.msk [vmem:[#allocation3 + $0xbc] sm:$0x7] %vm721, %v654
    %769 = vst.msk [vmem:[#allocation3 + $0xc0] sm:$0xf] %vm719, %v655
    %770 = vst.msk [vmem:[#allocation3 + $0xc4] sm:$0x7] %vm721, %v656
    %771 = vst.msk [vmem:[#allocation3 + $0xc8] sm:$0xf] %vm719, %v657
    %772 = vst.msk [vmem:[#allocation3 + $0xcc] sm:$0x7] %vm721, %v658
    %773 = vst.msk [vmem:[#allocation3 + $0xd0] sm:$0xf] %vm719, %v659
    %774 = vst.msk [vmem:[#allocation3 + $0xd4] sm:$0x7] %vm721, %v660
    %775 = vst.msk [vmem:[#allocation3 + $0xd8] sm:$0xf] %vm719, %v661
    %776 = vst.msk [vmem:[#allocation3 + $0xdc] sm:$0x7] %vm721, %v662
    %v777 = vld [vmem:[#allocation2] sm:$0xff]
    %v778 = vld [vmem:[#allocation2 + $0x8] sm:$0xff]
    %v779 = vld [vmem:[#allocation2 + $0x10] sm:$0xff]
    %v780 = vld [vmem:[#allocation2 + $0x18] sm:$0xff]
    %v781 = vld [vmem:[#allocation2 + $0x20] sm:$0xff]
    %v782 = vld [vmem:[#allocation2 + $0x28] sm:$0xff]
    %v783 = vld [vmem:[#allocation2 + $0x30] sm:$0xff]
    %v784 = vld [vmem:[#allocation2 + $0x38] sm:$0xff]
    %v785 = vld [vmem:[#allocation2 + $0x40] sm:$0xff]
    %v786 = vld [vmem:[#allocation2 + $0x48] sm:$0xff]
    %v787 = vld [vmem:[#allocation2 + $0x50] sm:$0xff]
    %v788 = vld [vmem:[#allocation2 + $0x58] sm:$0xff]
    %v789 = vld [vmem:[#allocation2 + $0x60] sm:$0xff]
    %v790 = vld [vmem:[#allocation2 + $0x68] sm:$0xff]
    %v791 = vld [vmem:[#allocation2 + $0x80] sm:$0xff]
    %v792 = vld [vmem:[#allocation2 + $0x88] sm:$0xff]
    %v793 = vld [vmem:[#allocation2 + $0x90] sm:$0xff]
    %v794 = vld [vmem:[#allocation2 + $0x98] sm:$0xff]
    %v795 = vld [vmem:[#allocation2 + $0xa0] sm:$0xff]
    %v796 = vld [vmem:[#allocation2 + $0xa8] sm:$0xff]
    %v797 = vld [vmem:[#allocation2 + $0xb0] sm:$0xff]
    %v798 = vld [vmem:[#allocation2 + $0xb8] sm:$0xff]
    %v799 = vld [vmem:[#allocation2 + $0xc0] sm:$0xff]
    %v800 = vld [vmem:[#allocation2 + $0xc8] sm:$0xff]
    %v801 = vld [vmem:[#allocation2 + $0xd0] sm:$0xff]
    %v802 = vld [vmem:[#allocation2 + $0xd8] sm:$0xff]
    %v803 = vld [vmem:[#allocation2 + $0xe0] sm:$0xff]
    %v804 = vld [vmem:[#allocation2 + $0xe8] sm:$0xff]
    %v833 = vunpack.c.l.b16 %v777
    %v834 = vunpack.c.h.b16 %v777
    %v835 = vunpack.c.l.b16 %v778
    %v836 = vunpack.c.h.b16 %v778
    %v837 = vunpack.c.l.b16 %v779
    %v838 = vunpack.c.h.b16 %v779
    %v839 = vunpack.c.l.b16 %v780
    %v840 = vunpack.c.h.b16 %v780
    %v841 = vunpack.c.l.b16 %v781
    %v842 = vunpack.c.h.b16 %v781
    %v843 = vunpack.c.l.b16 %v782
    %v844 = vunpack.c.h.b16 %v782
    %v845 = vunpack.c.l.b16 %v783
    %v846 = vunpack.c.h.b16 %v783
    %v847 = vunpack.c.l.b16 %v784
    %v848 = vunpack.c.h.b16 %v784
    %v849 = vunpack.c.l.b16 %v785
    %v850 = vunpack.c.h.b16 %v785
    %v851 = vunpack.c.l.b16 %v786
    %v852 = vunpack.c.h.b16 %v786
    %v853 = vunpack.c.l.b16 %v787
    %v854 = vunpack.c.h.b16 %v787
    %v855 = vunpack.c.l.b16 %v788
    %v856 = vunpack.c.h.b16 %v788
    %v857 = vunpack.c.l.b16 %v789
    %v858 = vunpack.c.h.b16 %v789
    %v859 = vunpack.c.l.b16 %v790
    %v860 = vunpack.c.h.b16 %v790
    %v861 = vunpack.c.l.b16 %v791
    %v862 = vunpack.c.h.b16 %v791
    %v863 = vunpack.c.l.b16 %v792
    %v864 = vunpack.c.h.b16 %v792
    %v865 = vunpack.c.l.b16 %v793
    %v866 = vunpack.c.h.b16 %v793
    %v867 = vunpack.c.l.b16 %v794
    %v868 = vunpack.c.h.b16 %v794
    %v869 = vunpack.c.l.b16 %v795
    %v870 = vunpack.c.h.b16 %v795
    %v871 = vunpack.c.l.b16 %v796
    %v872 = vunpack.c.h.b16 %v796
    %v873 = vunpack.c.l.b16 %v797
    %v874 = vunpack.c.h.b16 %v797
    %v875 = vunpack.c.l.b16 %v798
    %v876 = vunpack.c.h.b16 %v798
    %v877 = vunpack.c.l.b16 %v799
    %v878 = vunpack.c.h.b16 %v799
    %v879 = vunpack.c.l.b16 %v800
    %v880 = vunpack.c.h.b16 %v800
    %v881 = vunpack.c.l.b16 %v801
    %v882 = vunpack.c.h.b16 %v801
    %v883 = vunpack.c.l.b16 %v802
    %v884 = vunpack.c.h.b16 %v802
    %v885 = vunpack.c.l.b16 %v803
    %v886 = vunpack.c.h.b16 %v803
    %v887 = vunpack.c.l.b16 %v804
    %v888 = vunpack.c.h.b16 %v804
    %v889 = vpack.c.b16 %v833, %v833
    %v890 = vpack.c.b16 %v834, %v834
    %v891 = vpack.c.b16 %v835, %v835
    %v892 = vpack.c.b16 %v836, %v836
    %v893 = vpack.c.b16 %v837, %v837
    %v894 = vpack.c.b16 %v838, %v838
    %v895 = vpack.c.b16 %v839, %v839
    %v896 = vpack.c.b16 %v840, %v840
    %v897 = vpack.c.b16 %v841, %v841
    %v898 = vpack.c.b16 %v842, %v842
    %v899 = vpack.c.b16 %v843, %v843
    %v900 = vpack.c.b16 %v844, %v844
    %v901 = vpack.c.b16 %v845, %v845
    %v902 = vpack.c.b16 %v846, %v846
    %v903 = vpack.c.b16 %v847, %v847
    %v904 = vpack.c.b16 %v848, %v848
    %v905 = vpack.c.b16 %v849, %v849
    %v906 = vpack.c.b16 %v850, %v850
    %v907 = vpack.c.b16 %v851, %v851
    %v908 = vpack.c.b16 %v852, %v852
    %v909 = vpack.c.b16 %v853, %v853
    %v910 = vpack.c.b16 %v854, %v854
    %v911 = vpack.c.b16 %v855, %v855
    %v912 = vpack.c.b16 %v856, %v856
    %v913 = vpack.c.b16 %v857, %v857
    %v914 = vpack.c.b16 %v858, %v858
    %v915 = vpack.c.b16 %v859, %v859
    %v916 = vpack.c.b16 %v860, %v860
    %v917 = vpack.c.b16 %v861, %v861
    %v918 = vpack.c.b16 %v862, %v862
    %v919 = vpack.c.b16 %v863, %v863
    %v920 = vpack.c.b16 %v864, %v864
    %v921 = vpack.c.b16 %v865, %v865
    %v922 = vpack.c.b16 %v866, %v866
    %v923 = vpack.c.b16 %v867, %v867
    %v924 = vpack.c.b16 %v868, %v868
    %v925 = vpack.c.b16 %v869, %v869
    %v926 = vpack.c.b16 %v870, %v870
    %v927 = vpack.c.b16 %v871, %v871
    %v928 = vpack.c.b16 %v872, %v872
    %v929 = vpack.c.b16 %v873, %v873
    %v930 = vpack.c.b16 %v874, %v874
    %v931 = vpack.c.b16 %v875, %v875
    %v932 = vpack.c.b16 %v876, %v876
    %v933 = vpack.c.b16 %v877, %v877
    %v934 = vpack.c.b16 %v878, %v878
    %v935 = vpack.c.b16 %v879, %v879
    %v936 = vpack.c.b16 %v880, %v880
    %v937 = vpack.c.b16 %v881, %v881
    %v938 = vpack.c.b16 %v882, %v882
    %v939 = vpack.c.b16 %v883, %v883
    %v940 = vpack.c.b16 %v884, %v884
    %v941 = vpack.c.b16 %v885, %v885
    %v942 = vpack.c.b16 %v886, %v886
    %v943 = vpack.c.b16 %v887, %v887
    %v944 = vpack.c.b16 %v888, %v888
    %vm945 = vsmask.f32 3328
    %vm946 = vsmask.f32 7440
    %vm947 = vmor %vm945, %vm946
    %v949 = vshrl.u32 %v889, 16
    %v951 = vrot.slane %v949, 4
    %v952 = vshll.u32 %v889, 16
    %v954 = vrot.slane %v952, 5
    %v955 = vor.u32 %v951, %v954
    %v956 = vrot.slane %v955, 4
    %v958 = vshll.u32 %v890, 16
    %v960 = vrot.slane %v958, 5
    %v961 = vsel %vm947, %v956, %v960
    %v962 = vshrl.u32 %v890, 16
    %v964 = vrot.slane %v962, 4
    %v965 = vor.u32 %v964, %v960
    %v966 = vrot.slane %v965, 4
    %v968 = vshrl.u32 %v891, 16
    %v970 = vrot.slane %v968, 4
    %v971 = vshll.u32 %v891, 16
    %v973 = vrot.slane %v971, 5
    %v974 = vor.u32 %v970, %v973
    %v975 = vrot.slane %v974, 4
    %v977 = vshll.u32 %v892, 16
    %v979 = vrot.slane %v977, 5
    %v980 = vsel %vm947, %v975, %v979
    %v981 = vshrl.u32 %v892, 16
    %v983 = vrot.slane %v981, 4
    %v984 = vor.u32 %v983, %v979
    %v985 = vrot.slane %v984, 4
    %v987 = vshrl.u32 %v893, 16
    %v989 = vrot.slane %v987, 4
    %v990 = vshll.u32 %v893, 16
    %v992 = vrot.slane %v990, 5
    %v993 = vor.u32 %v989, %v992
    %v994 = vrot.slane %v993, 4
    %v996 = vshll.u32 %v894, 16
    %v998 = vrot.slane %v996, 5
    %v999 = vsel %vm947, %v994, %v998
    %v1000 = vshrl.u32 %v894, 16
    %v1002 = vrot.slane %v1000, 4
    %v1003 = vor.u32 %v1002, %v998
    %v1004 = vrot.slane %v1003, 4
    %v1006 = vshrl.u32 %v895, 16
    %v1008 = vrot.slane %v1006, 4
    %v1009 = vshll.u32 %v895, 16
    %v1011 = vrot.slane %v1009, 5
    %v1012 = vor.u32 %v1008, %v1011
    %v1013 = vrot.slane %v1012, 4
    %v1015 = vshll.u32 %v896, 16
    %v1017 = vrot.slane %v1015, 5
    %v1018 = vsel %vm947, %v1013, %v1017
    %v1019 = vshrl.u32 %v896, 16
    %v1021 = vrot.slane %v1019, 4
    %v1022 = vor.u32 %v1021, %v1017
    %v1023 = vrot.slane %v1022, 4
    %v1025 = vshrl.u32 %v897, 16
    %v1027 = vrot.slane %v1025, 4
    %v1028 = vshll.u32 %v897, 16
    %v1030 = vrot.slane %v1028, 5
    %v1031 = vor.u32 %v1027, %v1030
    %v1032 = vrot.slane %v1031, 4
    %v1034 = vshll.u32 %v898, 16
    %v1036 = vrot.slane %v1034, 5
    %v1037 = vsel %vm947, %v1032, %v1036
    %v1038 = vshrl.u32 %v898, 16
    %v1040 = vrot.slane %v1038, 4
    %v1041 = vor.u32 %v1040, %v1036
    %v1042 = vrot.slane %v1041, 4
    %v1044 = vshrl.u32 %v899, 16
    %v1046 = vrot.slane %v1044, 4
    %v1047 = vshll.u32 %v899, 16
    %v1049 = vrot.slane %v1047, 5
    %v1050 = vor.u32 %v1046, %v1049
    %v1051 = vrot.slane %v1050, 4
    %v1053 = vshll.u32 %v900, 16
    %v1055 = vrot.slane %v1053, 5
    %v1056 = vsel %vm947, %v1051, %v1055
    %v1057 = vshrl.u32 %v900, 16
    %v1059 = vrot.slane %v1057, 4
    %v1060 = vor.u32 %v1059, %v1055
    %v1061 = vrot.slane %v1060, 4
    %v1063 = vshrl.u32 %v901, 16
    %v1065 = vrot.slane %v1063, 4
    %v1066 = vshll.u32 %v901, 16
    %v1068 = vrot.slane %v1066, 5
    %v1069 = vor.u32 %v1065, %v1068
    %v1070 = vrot.slane %v1069, 4
    %v1072 = vshll.u32 %v902, 16
    %v1074 = vrot.slane %v1072, 5
    %v1075 = vsel %vm947, %v1070, %v1074
    %v1076 = vshrl.u32 %v902, 16
    %v1078 = vrot.slane %v1076, 4
    %v1079 = vor.u32 %v1078, %v1074
    %v1080 = vrot.slane %v1079, 4
    %v1082 = vshrl.u32 %v903, 16
    %v1084 = vrot.slane %v1082, 4
    %v1085 = vshll.u32 %v903, 16
    %v1087 = vrot.slane %v1085, 5
    %v1088 = vor.u32 %v1084, %v1087
    %v1089 = vrot.slane %v1088, 4
    %v1091 = vshll.u32 %v904, 16
    %v1093 = vrot.slane %v1091, 5
    %v1094 = vsel %vm947, %v1089, %v1093
    %v1095 = vshrl.u32 %v904, 16
    %v1097 = vrot.slane %v1095, 4
    %v1098 = vor.u32 %v1097, %v1093
    %v1099 = vrot.slane %v1098, 4
    %v1101 = vshrl.u32 %v905, 16
    %v1103 = vrot.slane %v1101, 4
    %v1104 = vshll.u32 %v905, 16
    %v1106 = vrot.slane %v1104, 5
    %v1107 = vor.u32 %v1103, %v1106
    %v1108 = vrot.slane %v1107, 4
    %v1110 = vshll.u32 %v906, 16
    %v1112 = vrot.slane %v1110, 5
    %v1113 = vsel %vm947, %v1108, %v1112
    %v1114 = vshrl.u32 %v906, 16
    %v1116 = vrot.slane %v1114, 4
    %v1117 = vor.u32 %v1116, %v1112
    %v1118 = vrot.slane %v1117, 4
    %v1120 = vshrl.u32 %v907, 16
    %v1122 = vrot.slane %v1120, 4
    %v1123 = vshll.u32 %v907, 16
    %v1125 = vrot.slane %v1123, 5
    %v1126 = vor.u32 %v1122, %v1125
    %v1127 = vrot.slane %v1126, 4
    %v1129 = vshll.u32 %v908, 16
    %v1131 = vrot.slane %v1129, 5
    %v1132 = vsel %vm947, %v1127, %v1131
    %v1133 = vshrl.u32 %v908, 16
    %v1135 = vrot.slane %v1133, 4
    %v1136 = vor.u32 %v1135, %v1131
    %v1137 = vrot.slane %v1136, 4
    %v1139 = vshrl.u32 %v909, 16
    %v1141 = vrot.slane %v1139, 4
    %v1142 = vshll.u32 %v909, 16
    %v1144 = vrot.slane %v1142, 5
    %v1145 = vor.u32 %v1141, %v1144
    %v1146 = vrot.slane %v1145, 4
    %v1148 = vshll.u32 %v910, 16
    %v1150 = vrot.slane %v1148, 5
    %v1151 = vsel %vm947, %v1146, %v1150
    %v1152 = vshrl.u32 %v910, 16
    %v1154 = vrot.slane %v1152, 4
    %v1155 = vor.u32 %v1154, %v1150
    %v1156 = vrot.slane %v1155, 4
    %v1158 = vshrl.u32 %v911, 16
    %v1160 = vrot.slane %v1158, 4
    %v1161 = vshll.u32 %v911, 16
    %v1163 = vrot.slane %v1161, 5
    %v1164 = vor.u32 %v1160, %v1163
    %v1165 = vrot.slane %v1164, 4
    %v1167 = vshll.u32 %v912, 16
    %v1169 = vrot.slane %v1167, 5
    %v1170 = vsel %vm947, %v1165, %v1169
    %v1171 = vshrl.u32 %v912, 16
    %v1173 = vrot.slane %v1171, 4
    %v1174 = vor.u32 %v1173, %v1169
    %v1175 = vrot.slane %v1174, 4
    %v1177 = vshrl.u32 %v913, 16
    %v1179 = vrot.slane %v1177, 4
    %v1180 = vshll.u32 %v913, 16
    %v1182 = vrot.slane %v1180, 5
    %v1183 = vor.u32 %v1179, %v1182
    %v1184 = vrot.slane %v1183, 4
    %v1186 = vshll.u32 %v914, 16
    %v1188 = vrot.slane %v1186, 5
    %v1189 = vsel %vm947, %v1184, %v1188
    %v1190 = vshrl.u32 %v914, 16
    %v1192 = vrot.slane %v1190, 4
    %v1193 = vor.u32 %v1192, %v1188
    %v1194 = vrot.slane %v1193, 4
    %v1196 = vshrl.u32 %v915, 16
    %v1198 = vrot.slane %v1196, 4
    %v1199 = vshll.u32 %v915, 16
    %v1201 = vrot.slane %v1199, 5
    %v1202 = vor.u32 %v1198, %v1201
    %v1203 = vrot.slane %v1202, 4
    %v1205 = vshll.u32 %v916, 16
    %v1207 = vrot.slane %v1205, 5
    %v1208 = vsel %vm947, %v1203, %v1207
    %v1209 = vshrl.u32 %v916, 16
    %v1211 = vrot.slane %v1209, 4
    %v1212 = vor.u32 %v1211, %v1207
    %v1213 = vrot.slane %v1212, 4
    %v1215 = vshrl.u32 %v917, 16
    %v1217 = vrot.slane %v1215, 4
    %v1218 = vshll.u32 %v917, 16
    %v1220 = vrot.slane %v1218, 5
    %v1221 = vor.u32 %v1217, %v1220
    %v1222 = vrot.slane %v1221, 4
    %v1224 = vshll.u32 %v918, 16
    %v1226 = vrot.slane %v1224, 5
    %v1227 = vsel %vm947, %v1222, %v1226
    %v1228 = vshrl.u32 %v918, 16
    %v1230 = vrot.slane %v1228, 4
    %v1231 = vor.u32 %v1230, %v1226
    %v1232 = vrot.slane %v1231, 4
    %v1234 = vshrl.u32 %v919, 16
    %v1236 = vrot.slane %v1234, 4
    %v1237 = vshll.u32 %v919, 16
    %v1239 = vrot.slane %v1237, 5
    %v1240 = vor.u32 %v1236, %v1239
    %v1241 = vrot.slane %v1240, 4
    %v1243 = vshll.u32 %v920, 16
    %v1245 = vrot.slane %v1243, 5
    %v1246 = vsel %vm947, %v1241, %v1245
    %v1247 = vshrl.u32 %v920, 16
    %v1249 = vrot.slane %v1247, 4
    %v1250 = vor.u32 %v1249, %v1245
    %v1251 = vrot.slane %v1250, 4
    %v1253 = vshrl.u32 %v921, 16
    %v1255 = vrot.slane %v1253, 4
    %v1256 = vshll.u32 %v921, 16
    %v1258 = vrot.slane %v1256, 5
    %v1259 = vor.u32 %v1255, %v1258
    %v1260 = vrot.slane %v1259, 4
    %v1262 = vshll.u32 %v922, 16
    %v1264 = vrot.slane %v1262, 5
    %v1265 = vsel %vm947, %v1260, %v1264
    %v1266 = vshrl.u32 %v922, 16
    %v1268 = vrot.slane %v1266, 4
    %v1269 = vor.u32 %v1268, %v1264
    %v1270 = vrot.slane %v1269, 4
    %v1272 = vshrl.u32 %v923, 16
    %v1274 = vrot.slane %v1272, 4
    %v1275 = vshll.u32 %v923, 16
    %v1277 = vrot.slane %v1275, 5
    %v1278 = vor.u32 %v1274, %v1277
    %v1279 = vrot.slane %v1278, 4
    %v1281 = vshll.u32 %v924, 16
    %v1283 = vrot.slane %v1281, 5
    %v1284 = vsel %vm947, %v1279, %v1283
    %v1285 = vshrl.u32 %v924, 16
    %v1287 = vrot.slane %v1285, 4
    %v1288 = vor.u32 %v1287, %v1283
    %v1289 = vrot.slane %v1288, 4
    %v1291 = vshrl.u32 %v925, 16
    %v1293 = vrot.slane %v1291, 4
    %v1294 = vshll.u32 %v925, 16
    %v1296 = vrot.slane %v1294, 5
    %v1297 = vor.u32 %v1293, %v1296
    %v1298 = vrot.slane %v1297, 4
    %v1300 = vshll.u32 %v926, 16
    %v1302 = vrot.slane %v1300, 5
    %v1303 = vsel %vm947, %v1298, %v1302
    %v1304 = vshrl.u32 %v926, 16
    %v1306 = vrot.slane %v1304, 4
    %v1307 = vor.u32 %v1306, %v1302
    %v1308 = vrot.slane %v1307, 4
    %v1310 = vshrl.u32 %v927, 16
    %v1312 = vrot.slane %v1310, 4
    %v1313 = vshll.u32 %v927, 16
    %v1315 = vrot.slane %v1313, 5
    %v1316 = vor.u32 %v1312, %v1315
    %v1317 = vrot.slane %v1316, 4
    %v1319 = vshll.u32 %v928, 16
    %v1321 = vrot.slane %v1319, 5
    %v1322 = vsel %vm947, %v1317, %v1321
    %v1323 = vshrl.u32 %v928, 16
    %v1325 = vrot.slane %v1323, 4
    %v1326 = vor.u32 %v1325, %v1321
    %v1327 = vrot.slane %v1326, 4
    %v1329 = vshrl.u32 %v929, 16
    %v1331 = vrot.slane %v1329, 4
    %v1332 = vshll.u32 %v929, 16
    %v1334 = vrot.slane %v1332, 5
    %v1335 = vor.u32 %v1331, %v1334
    %v1336 = vrot.slane %v1335, 4
    %v1338 = vshll.u32 %v930, 16
    %v1340 = vrot.slane %v1338, 5
    %v1341 = vsel %vm947, %v1336, %v1340
    %v1342 = vshrl.u32 %v930, 16
    %v1344 = vrot.slane %v1342, 4
    %v1345 = vor.u32 %v1344, %v1340
    %v1346 = vrot.slane %v1345, 4
    %v1348 = vshrl.u32 %v931, 16
    %v1350 = vrot.slane %v1348, 4
    %v1351 = vshll.u32 %v931, 16
    %v1353 = vrot.slane %v1351, 5
    %v1354 = vor.u32 %v1350, %v1353
    %v1355 = vrot.slane %v1354, 4
    %v1357 = vshll.u32 %v932, 16
    %v1359 = vrot.slane %v1357, 5
    %v1360 = vsel %vm947, %v1355, %v1359
    %v1361 = vshrl.u32 %v932, 16
    %v1363 = vrot.slane %v1361, 4
    %v1364 = vor.u32 %v1363, %v1359
    %v1365 = vrot.slane %v1364, 4
    %v1367 = vshrl.u32 %v933, 16
    %v1369 = vrot.slane %v1367, 4
    %v1370 = vshll.u32 %v933, 16
    %v1372 = vrot.slane %v1370, 5
    %v1373 = vor.u32 %v1369, %v1372
    %v1374 = vrot.slane %v1373, 4
    %v1376 = vshll.u32 %v934, 16
    %v1378 = vrot.slane %v1376, 5
    %v1379 = vsel %vm947, %v1374, %v1378
    %v1380 = vshrl.u32 %v934, 16
    %v1382 = vrot.slane %v1380, 4
    %v1383 = vor.u32 %v1382, %v1378
    %v1384 = vrot.slane %v1383, 4
    %v1386 = vshrl.u32 %v935, 16
    %v1388 = vrot.slane %v1386, 4
    %v1389 = vshll.u32 %v935, 16
    %v1391 = vrot.slane %v1389, 5
    %v1392 = vor.u32 %v1388, %v1391
    %v1393 = vrot.slane %v1392, 4
    %v1395 = vshll.u32 %v936, 16
    %v1397 = vrot.slane %v1395, 5
    %v1398 = vsel %vm947, %v1393, %v1397
    %v1399 = vshrl.u32 %v936, 16
    %v1401 = vrot.slane %v1399, 4
    %v1402 = vor.u32 %v1401, %v1397
    %v1403 = vrot.slane %v1402, 4
    %v1405 = vshrl.u32 %v937, 16
    %v1407 = vrot.slane %v1405, 4
    %v1408 = vshll.u32 %v937, 16
    %v1410 = vrot.slane %v1408, 5
    %v1411 = vor.u32 %v1407, %v1410
    %v1412 = vrot.slane %v1411, 4
    %v1414 = vshll.u32 %v938, 16
    %v1416 = vrot.slane %v1414, 5
    %v1417 = vsel %vm947, %v1412, %v1416
    %v1418 = vshrl.u32 %v938, 16
    %v1420 = vrot.slane %v1418, 4
    %v1421 = vor.u32 %v1420, %v1416
    %v1422 = vrot.slane %v1421, 4
    %v1424 = vshrl.u32 %v939, 16
    %v1426 = vrot.slane %v1424, 4
    %v1427 = vshll.u32 %v939, 16
    %v1429 = vrot.slane %v1427, 5
    %v1430 = vor.u32 %v1426, %v1429
    %v1431 = vrot.slane %v1430, 4
    %v1433 = vshll.u32 %v940, 16
    %v1435 = vrot.slane %v1433, 5
    %v1436 = vsel %vm947, %v1431, %v1435
    %v1437 = vshrl.u32 %v940, 16
    %v1439 = vrot.slane %v1437, 4
    %v1440 = vor.u32 %v1439, %v1435
    %v1441 = vrot.slane %v1440, 4
    %v1443 = vshrl.u32 %v941, 16
    %v1445 = vrot.slane %v1443, 4
    %v1446 = vshll.u32 %v941, 16
    %v1448 = vrot.slane %v1446, 5
    %v1449 = vor.u32 %v1445, %v1448
    %v1450 = vrot.slane %v1449, 4
    %v1452 = vshll.u32 %v942, 16
    %v1454 = vrot.slane %v1452, 5
    %v1455 = vsel %vm947, %v1450, %v1454
    %v1456 = vshrl.u32 %v942, 16
    %v1458 = vrot.slane %v1456, 4
    %v1459 = vor.u32 %v1458, %v1454
    %v1460 = vrot.slane %v1459, 4
    %v1462 = vshrl.u32 %v943, 16
    %v1464 = vrot.slane %v1462, 4
    %v1465 = vshll.u32 %v943, 16
    %v1467 = vrot.slane %v1465, 5
    %v1468 = vor.u32 %v1464, %v1467
    %v1469 = vrot.slane %v1468, 4
    %v1471 = vshll.u32 %v944, 16
    %v1473 = vrot.slane %v1471, 5
    %v1474 = vsel %vm947, %v1469, %v1473
    %v1475 = vshrl.u32 %v944, 16
    %v1477 = vrot.slane %v1475, 4
    %v1478 = vor.u32 %v1477, %v1473
    %v1479 = vrot.slane %v1478, 4
    %1480 = vrot.lane.b32.xlu0 %v961, 3
    %v1481 = vpop.permute.xlu0 %1480
    %1482 = vrot.lane.b32.xlu0 %v966, 3
    %v1483 = vpop.permute.xlu0 %1482
    %1484 = vrot.lane.b32.xlu0 %v980, 3
    %v1485 = vpop.permute.xlu0 %1484
    %1486 = vrot.lane.b32.xlu0 %v985, 3
    %v1487 = vpop.permute.xlu0 %1486
    %1488 = vrot.lane.b32.xlu0 %v999, 3
    %v1489 = vpop.permute.xlu0 %1488
    %1490 = vrot.lane.b32.xlu0 %v1004, 3
    %v1491 = vpop.permute.xlu0 %1490
    %1492 = vrot.lane.b32.xlu0 %v1018, 3
    %v1493 = vpop.permute.xlu0 %1492
    %1494 = vrot.lane.b32.xlu0 %v1023, 3
    %v1495 = vpop.permute.xlu0 %1494
    %1496 = vrot.lane.b32.xlu0 %v1037, 3
    %v1497 = vpop.permute.xlu0 %1496
    %1498 = vrot.lane.b32.xlu0 %v1042, 3
    %v1499 = vpop.permute.xlu0 %1498
    %1500 = vrot.lane.b32.xlu0 %v1056, 3
    %v1501 = vpop.permute.xlu0 %1500
    %1502 = vrot.lane.b32.xlu0 %v1061, 3
    %v1503 = vpop.permute.xlu0 %1502
    %1504 = vrot.lane.b32.xlu0 %v1075, 3
    %v1505 = vpop.permute.xlu0 %1504
    %1506 = vrot.lane.b32.xlu0 %v1080, 3
    %v1507 = vpop.permute.xlu0 %1506
    %1508 = vrot.lane.b32.xlu0 %v1094, 3
    %v1509 = vpop.permute.xlu0 %1508
    %1510 = vrot.lane.b32.xlu0 %v1099, 3
    %v1511 = vpop.permute.xlu0 %1510
    %1512 = vrot.lane.b32.xlu0 %v1113, 3
    %v1513 = vpop.permute.xlu0 %1512
    %1514 = vrot.lane.b32.xlu0 %v1118, 3
    %v1515 = vpop.permute.xlu0 %1514
    %1516 = vrot.lane.b32.xlu0 %v1132, 3
    %v1517 = vpop.permute.xlu0 %1516
    %1518 = vrot.lane.b32.xlu0 %v1137, 3
    %v1519 = vpop.permute.xlu0 %1518
    %1520 = vrot.lane.b32.xlu0 %v1151, 3
    %v1521 = vpop.permute.xlu0 %1520
    %1522 = vrot.lane.b32.xlu0 %v1156, 3
    %v1523 = vpop.permute.xlu0 %1522
    %1524 = vrot.lane.b32.xlu0 %v1170, 3
    %v1525 = vpop.permute.xlu0 %1524
    %1526 = vrot.lane.b32.xlu0 %v1175, 3
    %v1527 = vpop.permute.xlu0 %1526
    %1528 = vrot.lane.b32.xlu0 %v1189, 3
    %v1529 = vpop.permute.xlu0 %1528
    %1530 = vrot.lane.b32.xlu0 %v1194, 3
    %v1531 = vpop.permute.xlu0 %1530
    %1532 = vrot.lane.b32.xlu0 %v1208, 3
    %v1533 = vpop.permute.xlu0 %1532
    %1534 = vrot.lane.b32.xlu0 %v1213, 3
    %v1535 = vpop.permute.xlu0 %1534
    %1536 = vrot.lane.b32.xlu0 %v1227, 3
    %v1537 = vpop.permute.xlu0 %1536
    %1538 = vrot.lane.b32.xlu0 %v1232, 3
    %v1539 = vpop.permute.xlu0 %1538
    %1540 = vrot.lane.b32.xlu0 %v1246, 3
    %v1541 = vpop.permute.xlu0 %1540
    %1542 = vrot.lane.b32.xlu0 %v1251, 3
    %v1543 = vpop.permute.xlu0 %1542
    %1544 = vrot.lane.b32.xlu0 %v1265, 3
    %v1545 = vpop.permute.xlu0 %1544
    %1546 = vrot.lane.b32.xlu0 %v1270, 3
    %v1547 = vpop.permute.xlu0 %1546
    %1548 = vrot.lane.b32.xlu0 %v1284, 3
    %v1549 = vpop.permute.xlu0 %1548
    %1550 = vrot.lane.b32.xlu0 %v1289, 3
    %v1551 = vpop.permute.xlu0 %1550
    %1552 = vrot.lane.b32.xlu0 %v1303, 3
    %v1553 = vpop.permute.xlu0 %1552
    %1554 = vrot.lane.b32.xlu0 %v1308, 3
    %v1555 = vpop.permute.xlu0 %1554
    %1556 = vrot.lane.b32.xlu0 %v1322, 3
    %v1557 = vpop.permute.xlu0 %1556
    %1558 = vrot.lane.b32.xlu0 %v1327, 3
    %v1559 = vpop.permute.xlu0 %1558
    %1560 = vrot.lane.b32.xlu0 %v1341, 3
    %v1561 = vpop.permute.xlu0 %1560
    %1562 = vrot.lane.b32.xlu0 %v1346, 3
    %v1563 = vpop.permute.xlu0 %1562
    %1564 = vrot.lane.b32.xlu0 %v1360, 3
    %v1565 = vpop.permute.xlu0 %1564
    %1566 = vrot.lane.b32.xlu0 %v1365, 3
    %v1567 = vpop.permute.xlu0 %1566
    %1568 = vrot.lane.b32.xlu0 %v1379, 3
    %v1569 = vpop.permute.xlu0 %1568
    %1570 = vrot.lane.b32.xlu0 %v1384, 3
    %v1571 = vpop.permute.xlu0 %1570
    %1572 = vrot.lane.b32.xlu0 %v1398, 3
    %v1573 = vpop.permute.xlu0 %1572
    %1574 = vrot.lane.b32.xlu0 %v1403, 3
    %v1575 = vpop.permute.xlu0 %1574
    %1576 = vrot.lane.b32.xlu0 %v1417, 3
    %v1577 = vpop.permute.xlu0 %1576
    %1578 = vrot.lane.b32.xlu0 %v1422, 3
    %v1579 = vpop.permute.xlu0 %1578
    %1580 = vrot.lane.b32.xlu0 %v1436, 3
    %v1581 = vpop.permute.xlu0 %1580
    %1582 = vrot.lane.b32.xlu0 %v1441, 3
    %v1583 = vpop.permute.xlu0 %1582
    %1584 = vrot.lane.b32.xlu0 %v1455, 3
    %v1585 = vpop.permute.xlu0 %1584
    %1586 = vrot.lane.b32.xlu0 %v1460, 3
    %v1587 = vpop.permute.xlu0 %1586
    %1588 = vrot.lane.b32.xlu0 %v1474, 3
    %v1589 = vpop.permute.xlu0 %1588
    %1590 = vrot.lane.b32.xlu0 %v1479, 3
    %v1591 = vpop.permute.xlu0 %1590
    %vm1648 = vcmask 44056
    %1649 = vst.msk [vmem:[#allocation3] sm:$0xf] %vm1648, %v1481
    %vm1650 = vcmask 43032
    %1651 = vst.msk [vmem:[#allocation3 + $0x4] sm:$0x7] %vm1650, %v1483
    %1652 = vst.msk [vmem:[#allocation3 + $0x8] sm:$0xf] %vm1648, %v1485
    %1653 = vst.msk [vmem:[#allocation3 + $0xc] sm:$0x7] %vm1650, %v1487
    %1654 = vst.msk [vmem:[#allocation3 + $0x10] sm:$0xf] %vm1648, %v1489
    %1655 = vst.msk [vmem:[#allocation3 + $0x14] sm:$0x7] %vm1650, %v1491
    %1656 = vst.msk [vmem:[#allocation3 + $0x18] sm:$0xf] %vm1648, %v1493
    %1657 = vst.msk [vmem:[#allocation3 + $0x1c] sm:$0x7] %vm1650, %v1495
    %1658 = vst.msk [vmem:[#allocation3 + $0x20] sm:$0xf] %vm1648, %v1497
    %1659 = vst.msk [vmem:[#allocation3 + $0x24] sm:$0x7] %vm1650, %v1499
    %1660 = vst.msk [vmem:[#allocation3 + $0x28] sm:$0xf] %vm1648, %v1501
    %1661 = vst.msk [vmem:[#allocation3 + $0x2c] sm:$0x7] %vm1650, %v1503
    %1662 = vst.msk [vmem:[#allocation3 + $0x30] sm:$0xf] %vm1648, %v1505
    %1663 = vst.msk [vmem:[#allocation3 + $0x34] sm:$0x7] %vm1650, %v1507
    %1664 = vst.msk [vmem:[#allocation3 + $0x38] sm:$0xf] %vm1648, %v1509
    %1665 = vst.msk [vmem:[#allocation3 + $0x3c] sm:$0x7] %vm1650, %v1511
    %1666 = vst.msk [vmem:[#allocation3 + $0x40] sm:$0xf] %vm1648, %v1513
    %1667 = vst.msk [vmem:[#allocation3 + $0x44] sm:$0x7] %vm1650, %v1515
    %1668 = vst.msk [vmem:[#allocation3 + $0x48] sm:$0xf] %vm1648, %v1517
    %1669 = vst.msk [vmem:[#allocation3 + $0x4c] sm:$0x7] %vm1650, %v1519
    %1670 = vst.msk [vmem:[#allocation3 + $0x50] sm:$0xf] %vm1648, %v1521
    %1671 = vst.msk [vmem:[#allocation3 + $0x54] sm:$0x7] %vm1650, %v1523
    %1672 = vst.msk [vmem:[#allocation3 + $0x58] sm:$0xf] %vm1648, %v1525
    %1673 = vst.msk [vmem:[#allocation3 + $0x5c] sm:$0x7] %vm1650, %v1527
    %1674 = vst.msk [vmem:[#allocation3 + $0x60] sm:$0xf] %vm1648, %v1529
    %1675 = vst.msk [vmem:[#allocation3 + $0x64] sm:$0x7] %vm1650, %v1531
    %1676 = vst.msk [vmem:[#allocation3 + $0x68] sm:$0xf] %vm1648, %v1533
    %1677 = vst.msk [vmem:[#allocation3 + $0x6c] sm:$0x7] %vm1650, %v1535
    %1678 = vst.msk [vmem:[#allocation3 + $0x70] sm:$0xf] %vm1648, %v1537
    %1679 = vst.msk [vmem:[#allocation3 + $0x74] sm:$0x7] %vm1650, %v1539
    %1680 = vst.msk [vmem:[#allocation3 + $0x78] sm:$0xf] %vm1648, %v1541
    %1681 = vst.msk [vmem:[#allocation3 + $0x7c] sm:$0x7] %vm1650, %v1543
    %1682 = vst.msk [vmem:[#allocation3 + $0x80] sm:$0xf] %vm1648, %v1545
    %1683 = vst.msk [vmem:[#allocation3 + $0x84] sm:$0x7] %vm1650, %v1547
    %1684 = vst.msk [vmem:[#allocation3 + $0x88] sm:$0xf] %vm1648, %v1549
    %1685 = vst.msk [vmem:[#allocation3 + $0x8c] sm:$0x7] %vm1650, %v1551
    %1686 = vst.msk [vmem:[#allocation3 + $0x90] sm:$0xf] %vm1648, %v1553
    %1687 = vst.msk [vmem:[#allocation3 + $0x94] sm:$0x7] %vm1650, %v1555
    %1688 = vst.msk [vmem:[#allocation3 + $0x98] sm:$0xf] %vm1648, %v1557
    %1689 = vst.msk [vmem:[#allocation3 + $0x9c] sm:$0x7] %vm1650, %v1559
    %1690 = vst.msk [vmem:[#allocation3 + $0xa0] sm:$0xf] %vm1648, %v1561
    %1691 = vst.msk [vmem:[#allocation3 + $0xa4] sm:$0x7] %vm1650, %v1563
    %1692 = vst.msk [vmem:[#allocation3 + $0xa8] sm:$0xf] %vm1648, %v1565
    %1693 = vst.msk [vmem:[#allocation3 + $0xac] sm:$0x7] %vm1650, %v1567
    %1694 = vst.msk [vmem:[#allocation3 + $0xb0] sm:$0xf] %vm1648, %v1569
    %1695 = vst.msk [vmem:[#allocation3 + $0xb4] sm:$0x7] %vm1650, %v1571
    %1696 = vst.msk [vmem:[#allocation3 + $0xb8] sm:$0xf] %vm1648, %v1573
    %1697 = vst.msk [vmem:[#allocation3 + $0xbc] sm:$0x7] %vm1650, %v1575
    %1698 = vst.msk [vmem:[#allocation3 + $0xc0] sm:$0xf] %vm1648, %v1577
    %1699 = vst.msk [vmem:[#allocation3 + $0xc4] sm:$0x7] %vm1650, %v1579
    %1700 = vst.msk [vmem:[#allocation3 + $0xc8] sm:$0xf] %vm1648, %v1581
    %1701 = vst.msk [vmem:[#allocation3 + $0xcc] sm:$0x7] %vm1650, %v1583
    %1702 = vst.msk [vmem:[#allocation3 + $0xd0] sm:$0xf] %vm1648, %v1585
    %1703 = vst.msk [vmem:[#allocation3 + $0xd4] sm:$0x7] %vm1650, %v1587
    %1704 = vst.msk [vmem:[#allocation3 + $0xd8] sm:$0xf] %vm1648, %v1589
    %1705 = vst.msk [vmem:[#allocation3 + $0xdc] sm:$0x7] %vm1650, %v1591
    %v1706 = vld [vmem:[#allocation2] sm:$0xfe]
    %v1707 = vld [vmem:[#allocation2 + $0x8] sm:$0xfe]
    %v1708 = vld [vmem:[#allocation2 + $0x10] sm:$0xfe]
    %v1709 = vld [vmem:[#allocation2 + $0x18] sm:$0xfe]
    %v1710 = vld [vmem:[#allocation2 + $0x20] sm:$0xfe]
    %v1711 = vld [vmem:[#allocation2 + $0x28] sm:$0xfe]
    %v1712 = vld [vmem:[#allocation2 + $0x30] sm:$0xfe]
    %v1713 = vld [vmem:[#allocation2 + $0x38] sm:$0xfe]
    %v1714 = vld [vmem:[#allocation2 + $0x40] sm:$0xfe]
    %v1715 = vld [vmem:[#allocation2 + $0x48] sm:$0xfe]
    %v1716 = vld [vmem:[#allocation2 + $0x50] sm:$0xfe]
    %v1717 = vld [vmem:[#allocation2 + $0x58] sm:$0xfe]
    %v1718 = vld [vmem:[#allocation2 + $0x60] sm:$0xfe]
    %v1719 = vld [vmem:[#allocation2 + $0x68] sm:$0xfe]
    %v1720 = vld [vmem:[#allocation2 + $0x80] sm:$0xfe]
    %v1721 = vld [vmem:[#allocation2 + $0x88] sm:$0xfe]
    %v1722 = vld [vmem:[#allocation2 + $0x90] sm:$0xfe]
    %v1723 = vld [vmem:[#allocation2 + $0x98] sm:$0xfe]
    %v1724 = vld [vmem:[#allocation2 + $0xa0] sm:$0xfe]
    %v1725 = vld [vmem:[#allocation2 + $0xa8] sm:$0xfe]
    %v1726 = vld [vmem:[#allocation2 + $0xb0] sm:$0xfe]
    %v1727 = vld [vmem:[#allocation2 + $0xb8] sm:$0xfe]
    %v1728 = vld [vmem:[#allocation2 + $0xc0] sm:$0xfe]
    %v1729 = vld [vmem:[#allocation2 + $0xc8] sm:$0xfe]
    %v1730 = vld [vmem:[#allocation2 + $0xd0] sm:$0xfe]
    %v1731 = vld [vmem:[#allocation2 + $0xd8] sm:$0xfe]
    %v1732 = vld [vmem:[#allocation2 + $0xe0] sm:$0xfe]
    %v1733 = vld [vmem:[#allocation2 + $0xe8] sm:$0xfe]
    %v1762 = vunpack.c.l.b16 %v1706
    %v1763 = vunpack.c.h.b16 %v1706
    %v1764 = vunpack.c.l.b16 %v1707
    %v1765 = vunpack.c.h.b16 %v1707
    %v1766 = vunpack.c.l.b16 %v1708
    %v1767 = vunpack.c.h.b16 %v1708
    %v1768 = vunpack.c.l.b16 %v1709
    %v1769 = vunpack.c.h.b16 %v1709
    %v1770 = vunpack.c.l.b16 %v1710
    %v1771 = vunpack.c.h.b16 %v1710
    %v1772 = vunpack.c.l.b16 %v1711
    %v1773 = vunpack.c.h.b16 %v1711
    %v1774 = vunpack.c.l.b16 %v1712
    %v1775 = vunpack.c.h.b16 %v1712
    %v1776 = vunpack.c.l.b16 %v1713
    %v1777 = vunpack.c.h.b16 %v1713
    %v1778 = vunpack.c.l.b16 %v1714
    %v1779 = vunpack.c.h.b16 %v1714
    %v1780 = vunpack.c.l.b16 %v1715
    %v1781 = vunpack.c.h.b16 %v1715
    %v1782 = vunpack.c.l.b16 %v1716
    %v1783 = vunpack.c.h.b16 %v1716
    %v1784 = vunpack.c.l.b16 %v1717
    %v1785 = vunpack.c.h.b16 %v1717
    %v1786 = vunpack.c.l.b16 %v1718
    %v1787 = vunpack.c.h.b16 %v1718
    %v1788 = vunpack.c.l.b16 %v1719
    %v1789 = vunpack.c.h.b16 %v1719
    %v1790 = vunpack.c.l.b16 %v1720
    %v1791 = vunpack.c.h.b16 %v1720
    %v1792 = vunpack.c.l.b16 %v1721
    %v1793 = vunpack.c.h.b16 %v1721
    %v1794 = vunpack.c.l.b16 %v1722
    %v1795 = vunpack.c.h.b16 %v1722
    %v1796 = vunpack.c.l.b16 %v1723
    %v1797 = vunpack.c.h.b16 %v1723
    %v1798 = vunpack.c.l.b16 %v1724
    %v1799 = vunpack.c.h.b16 %v1724
    %v1800 = vunpack.c.l.b16 %v1725
    %v1801 = vunpack.c.h.b16 %v1725
    %v1802 = vunpack.c.l.b16 %v1726
    %v1803 = vunpack.c.h.b16 %v1726
    %v1804 = vunpack.c.l.b16 %v1727
    %v1805 = vunpack.c.h.b16 %v1727
    %v1806 = vunpack.c.l.b16 %v1728
    %v1807 = vunpack.c.h.b16 %v1728
    %v1808 = vunpack.c.l.b16 %v1729
    %v1809 = vunpack.c.h.b16 %v1729
    %v1810 = vunpack.c.l.b16 %v1730
    %v1811 = vunpack.c.h.b16 %v1730
    %v1812 = vunpack.c.l.b16 %v1731
    %v1813 = vunpack.c.h.b16 %v1731
    %v1814 = vunpack.c.l.b16 %v1732
    %v1815 = vunpack.c.h.b16 %v1732
    %v1816 = vunpack.c.l.b16 %v1733
    %v1817 = vunpack.c.h.b16 %v1733
    %v1818 = vpack.c.b16 %v1762, %v1762
    %v1819 = vpack.c.b16 %v1763, %v1763
    %v1820 = vpack.c.b16 %v1764, %v1764
    %v1821 = vpack.c.b16 %v1765, %v1765
    %v1822 = vpack.c.b16 %v1766, %v1766
    %v1823 = vpack.c.b16 %v1767, %v1767
    %v1824 = vpack.c.b16 %v1768, %v1768
    %v1825 = vpack.c.b16 %v1769, %v1769
    %v1826 = vpack.c.b16 %v1770, %v1770
    %v1827 = vpack.c.b16 %v1771, %v1771
    %v1828 = vpack.c.b16 %v1772, %v1772
    %v1829 = vpack.c.b16 %v1773, %v1773
    %v1830 = vpack.c.b16 %v1774, %v1774
    %v1831 = vpack.c.b16 %v1775, %v1775
    %v1832 = vpack.c.b16 %v1776, %v1776
    %v1833 = vpack.c.b16 %v1777, %v1777
    %v1834 = vpack.c.b16 %v1778, %v1778
    %v1835 = vpack.c.b16 %v1779, %v1779
    %v1836 = vpack.c.b16 %v1780, %v1780
    %v1837 = vpack.c.b16 %v1781, %v1781
    %v1838 = vpack.c.b16 %v1782, %v1782
    %v1839 = vpack.c.b16 %v1783, %v1783
    %v1840 = vpack.c.b16 %v1784, %v1784
    %v1841 = vpack.c.b16 %v1785, %v1785
    %v1842 = vpack.c.b16 %v1786, %v1786
    %v1843 = vpack.c.b16 %v1787, %v1787
    %v1844 = vpack.c.b16 %v1788, %v1788
    %v1845 = vpack.c.b16 %v1789, %v1789
    %v1846 = vpack.c.b16 %v1790, %v1790
    %v1847 = vpack.c.b16 %v1791, %v1791
    %v1848 = vpack.c.b16 %v1792, %v1792
    %v1849 = vpack.c.b16 %v1793, %v1793
    %v1850 = vpack.c.b16 %v1794, %v1794
    %v1851 = vpack.c.b16 %v1795, %v1795
    %v1852 = vpack.c.b16 %v1796, %v1796
    %v1853 = vpack.c.b16 %v1797, %v1797
    %v1854 = vpack.c.b16 %v1798, %v1798
    %v1855 = vpack.c.b16 %v1799, %v1799
    %v1856 = vpack.c.b16 %v1800, %v1800
    %v1857 = vpack.c.b16 %v1801, %v1801
    %v1858 = vpack.c.b16 %v1802, %v1802
    %v1859 = vpack.c.b16 %v1803, %v1803
    %v1860 = vpack.c.b16 %v1804, %v1804
    %v1861 = vpack.c.b16 %v1805, %v1805
    %v1862 = vpack.c.b16 %v1806, %v1806
    %v1863 = vpack.c.b16 %v1807, %v1807
    %v1864 = vpack.c.b16 %v1808, %v1808
    %v1865 = vpack.c.b16 %v1809, %v1809
    %v1866 = vpack.c.b16 %v1810, %v1810
    %v1867 = vpack.c.b16 %v1811, %v1811
    %v1868 = vpack.c.b16 %v1812, %v1812
    %v1869 = vpack.c.b16 %v1813, %v1813
    %v1870 = vpack.c.b16 %v1814, %v1814
    %v1871 = vpack.c.b16 %v1815, %v1815
    %v1872 = vpack.c.b16 %v1816, %v1816
    %v1873 = vpack.c.b16 %v1817, %v1817
    %vm1874 = vcmask 1042432
    %vm1875 = vcmask 1046532
    %vm1876 = vmor %vm1874, %vm1875
    %v1877 = vrot.slane %v1818, 5
    %v1878 = vrot.slane %v1877, 4
    %v1879 = vrot.slane %v1819, 5
    %v1880 = vsel %vm1876, %v1878, %v1879
    %v1881 = vrot.slane %v1879, 4
    %v1882 = vrot.slane %v1820, 5
    %v1883 = vrot.slane %v1882, 4
    %v1884 = vrot.slane %v1821, 5
    %v1885 = vsel %vm1876, %v1883, %v1884
    %v1886 = vrot.slane %v1884, 4
    %v1887 = vrot.slane %v1822, 5
    %v1888 = vrot.slane %v1887, 4
    %v1889 = vrot.slane %v1823, 5
    %v1890 = vsel %vm1876, %v1888, %v1889
    %v1891 = vrot.slane %v1889, 4
    %v1892 = vrot.slane %v1824, 5
    %v1893 = vrot.slane %v1892, 4
    %v1894 = vrot.slane %v1825, 5
    %v1895 = vsel %vm1876, %v1893, %v1894
    %v1896 = vrot.slane %v1894, 4
    %v1897 = vrot.slane %v1826, 5
    %v1898 = vrot.slane %v1897, 4
    %v1899 = vrot.slane %v1827, 5
    %v1900 = vsel %vm1876, %v1898, %v1899
    %v1901 = vrot.slane %v1899, 4
    %v1902 = vrot.slane %v1828, 5
    %v1903 = vrot.slane %v1902, 4
    %v1904 = vrot.slane %v1829, 5
    %v1905 = vsel %vm1876, %v1903, %v1904
    %v1906 = vrot.slane %v1904, 4
    %v1907 = vrot.slane %v1830, 5
    %v1908 = vrot.slane %v1907, 4
    %v1909 = vrot.slane %v1831, 5
    %v1910 = vsel %vm1876, %v1908, %v1909
    %v1911 = vrot.slane %v1909, 4
    %v1912 = vrot.slane %v1832, 5
    %v1913 = vrot.slane %v1912, 4
    %v1914 = vrot.slane %v1833, 5
    %v1915 = vsel %vm1876, %v1913, %v1914
    %v1916 = vrot.slane %v1914, 4
    %v1917 = vrot.slane %v1834, 5
    %v1918 = vrot.slane %v1917, 4
    %v1919 = vrot.slane %v1835, 5
    %v1920 = vsel %vm1876, %v1918, %v1919
    %v1921 = vrot.slane %v1919, 4
    %v1922 = vrot.slane %v1836, 5
    %v1923 = vrot.slane %v1922, 4
    %v1924 = vrot.slane %v1837, 5
    %v1925 = vsel %vm1876, %v1923, %v1924
    %v1926 = vrot.slane %v1924, 4
    %v1927 = vrot.slane %v1838, 5
    %v1928 = vrot.slane %v1927, 4
    %v1929 = vrot.slane %v1839, 5
    %v1930 = vsel %vm1876, %v1928, %v1929
    %v1931 = vrot.slane %v1929, 4
    %v1932 = vrot.slane %v1840, 5
    %v1933 = vrot.slane %v1932, 4
    %v1934 = vrot.slane %v1841, 5
    %v1935 = vsel %vm1876, %v1933, %v1934
    %v1936 = vrot.slane %v1934, 4
    %v1937 = vrot.slane %v1842, 5
    %v1938 = vrot.slane %v1937, 4
    %v1939 = vrot.slane %v1843, 5
    %v1940 = vsel %vm1876, %v1938, %v1939
    %v1941 = vrot.slane %v1939, 4
    %v1942 = vrot.slane %v1844, 5
    %v1943 = vrot.slane %v1942, 4
    %v1944 = vrot.slane %v1845, 5
    %v1945 = vsel %vm1876, %v1943, %v1944
    %v1946 = vrot.slane %v1944, 4
    %v1947 = vrot.slane %v1846, 5
    %v1948 = vrot.slane %v1947, 4
    %v1949 = vrot.slane %v1847, 5
    %v1950 = vsel %vm1876, %v1948, %v1949
    %v1951 = vrot.slane %v1949, 4
    %v1952 = vrot.slane %v1848, 5
    %v1953 = vrot.slane %v1952, 4
    %v1954 = vrot.slane %v1849, 5
    %v1955 = vsel %vm1876, %v1953, %v1954
    %v1956 = vrot.slane %v1954, 4
    %v1957 = vrot.slane %v1850, 5
    %v1958 = vrot.slane %v1957, 4
    %v1959 = vrot.slane %v1851, 5
    %v1960 = vsel %vm1876, %v1958, %v1959
    %v1961 = vrot.slane %v1959, 4
    %v1962 = vrot.slane %v1852, 5
    %v1963 = vrot.slane %v1962, 4
    %v1964 = vrot.slane %v1853, 5
    %v1965 = vsel %vm1876, %v1963, %v1964
    %v1966 = vrot.slane %v1964, 4
    %v1967 = vrot.slane %v1854, 5
    %v1968 = vrot.slane %v1967, 4
    %v1969 = vrot.slane %v1855, 5
    %v1970 = vsel %vm1876, %v1968, %v1969
    %v1971 = vrot.slane %v1969, 4
    %v1972 = vrot.slane %v1856, 5
    %v1973 = vrot.slane %v1972, 4
    %v1974 = vrot.slane %v1857, 5
    %v1975 = vsel %vm1876, %v1973, %v1974
    %v1976 = vrot.slane %v1974, 4
    %v1977 = vrot.slane %v1858, 5
    %v1978 = vrot.slane %v1977, 4
    %v1979 = vrot.slane %v1859, 5
    %v1980 = vsel %vm1876, %v1978, %v1979
    %v1981 = vrot.slane %v1979, 4
    %v1982 = vrot.slane %v1860, 5
    %v1983 = vrot.slane %v1982, 4
    %v1984 = vrot.slane %v1861, 5
    %v1985 = vsel %vm1876, %v1983, %v1984
    %v1986 = vrot.slane %v1984, 4
    %v1987 = vrot.slane %v1862, 5
    %v1988 = vrot.slane %v1987, 4
    %v1989 = vrot.slane %v1863, 5
    %v1990 = vsel %vm1876, %v1988, %v1989
    %v1991 = vrot.slane %v1989, 4
    %v1992 = vrot.slane %v1864, 5
    %v1993 = vrot.slane %v1992, 4
    %v1994 = vrot.slane %v1865, 5
    %v1995 = vsel %vm1876, %v1993, %v1994
    %v1996 = vrot.slane %v1994, 4
    %v1997 = vrot.slane %v1866, 5
    %v1998 = vrot.slane %v1997, 4
    %v1999 = vrot.slane %v1867, 5
    %v2000 = vsel %vm1876, %v1998, %v1999
    %v2001 = vrot.slane %v1999, 4
    %v2002 = vrot.slane %v1868, 5
    %v2003 = vrot.slane %v2002, 4
    %v2004 = vrot.slane %v1869, 5
    %v2005 = vsel %vm1876, %v2003, %v2004
    %v2006 = vrot.slane %v2004, 4
    %v2007 = vrot.slane %v1870, 5
    %v2008 = vrot.slane %v2007, 4
    %v2009 = vrot.slane %v1871, 5
    %v2010 = vsel %vm1876, %v2008, %v2009
    %v2011 = vrot.slane %v2009, 4
    %v2012 = vrot.slane %v1872, 5
    %v2013 = vrot.slane %v2012, 4
    %v2014 = vrot.slane %v1873, 5
    %v2015 = vsel %vm1876, %v2013, %v2014
    %v2016 = vrot.slane %v2014, 4
    %2017 = vrot.lane.b32.xlu0 %v1880, 6
    %v2018 = vpop.permute.xlu0 %2017
    %2019 = vrot.lane.b32.xlu0 %v1881, 6
    %v2020 = vpop.permute.xlu0 %2019
    %2021 = vrot.lane.b32.xlu0 %v1885, 6
    %v2022 = vpop.permute.xlu0 %2021
    %2023 = vrot.lane.b32.xlu0 %v1886, 6
    %v2024 = vpop.permute.xlu0 %2023
    %2025 = vrot.lane.b32.xlu0 %v1890, 6
    %v2026 = vpop.permute.xlu0 %2025
    %2027 = vrot.lane.b32.xlu0 %v1891, 6
    %v2028 = vpop.permute.xlu0 %2027
    %2029 = vrot.lane.b32.xlu0 %v1895, 6
    %v2030 = vpop.permute.xlu0 %2029
    %2031 = vrot.lane.b32.xlu0 %v1896, 6
    %v2032 = vpop.permute.xlu0 %2031
    %2033 = vrot.lane.b32.xlu0 %v1900, 6
    %v2034 = vpop.permute.xlu0 %2033
    %2035 = vrot.lane.b32.xlu0 %v1901, 6
    %v2036 = vpop.permute.xlu0 %2035
    %2037 = vrot.lane.b32.xlu0 %v1905, 6
    %v2038 = vpop.permute.xlu0 %2037
    %2039 = vrot.lane.b32.xlu0 %v1906, 6
    %v2040 = vpop.permute.xlu0 %2039
    %2041 = vrot.lane.b32.xlu0 %v1910, 6
    %v2042 = vpop.permute.xlu0 %2041
    %2043 = vrot.lane.b32.xlu0 %v1911, 6
    %v2044 = vpop.permute.xlu0 %2043
    %2045 = vrot.lane.b32.xlu0 %v1915, 6
    %v2046 = vpop.permute.xlu0 %2045
    %2047 = vrot.lane.b32.xlu0 %v1916, 6
    %v2048 = vpop.permute.xlu0 %2047
    %2049 = vrot.lane.b32.xlu0 %v1920, 6
    %v2050 = vpop.permute.xlu0 %2049
    %2051 = vrot.lane.b32.xlu0 %v1921, 6
    %v2052 = vpop.permute.xlu0 %2051
    %2053 = vrot.lane.b32.xlu0 %v1925, 6
    %v2054 = vpop.permute.xlu0 %2053
    %2055 = vrot.lane.b32.xlu0 %v1926, 6
    %v2056 = vpop.permute.xlu0 %2055
    %2057 = vrot.lane.b32.xlu0 %v1930, 6
    %v2058 = vpop.permute.xlu0 %2057
    %2059 = vrot.lane.b32.xlu0 %v1931, 6
    %v2060 = vpop.permute.xlu0 %2059
    %2061 = vrot.lane.b32.xlu0 %v1935, 6
    %v2062 = vpop.permute.xlu0 %2061
    %2063 = vrot.lane.b32.xlu0 %v1936, 6
    %v2064 = vpop.permute.xlu0 %2063
    %2065 = vrot.lane.b32.xlu0 %v1940, 6
    %v2066 = vpop.permute.xlu0 %2065
    %2067 = vrot.lane.b32.xlu0 %v1941, 6
    %v2068 = vpop.permute.xlu0 %2067
    %2069 = vrot.lane.b32.xlu0 %v1945, 6
    %v2070 = vpop.permute.xlu0 %2069
    %2071 = vrot.lane.b32.xlu0 %v1946, 6
    %v2072 = vpop.permute.xlu0 %2071
    %2073 = vrot.lane.b32.xlu0 %v1950, 6
    %v2074 = vpop.permute.xlu0 %2073
    %2075 = vrot.lane.b32.xlu0 %v1951, 6
    %v2076 = vpop.permute.xlu0 %2075
    %2077 = vrot.lane.b32.xlu0 %v1955, 6
    %v2078 = vpop.permute.xlu0 %2077
    %2079 = vrot.lane.b32.xlu0 %v1956, 6
    %v2080 = vpop.permute.xlu0 %2079
    %2081 = vrot.lane.b32.xlu0 %v1960, 6
    %v2082 = vpop.permute.xlu0 %2081
    %2083 = vrot.lane.b32.xlu0 %v1961, 6
    %v2084 = vpop.permute.xlu0 %2083
    %2085 = vrot.lane.b32.xlu0 %v1965, 6
    %v2086 = vpop.permute.xlu0 %2085
    %2087 = vrot.lane.b32.xlu0 %v1966, 6
    %v2088 = vpop.permute.xlu0 %2087
    %2089 = vrot.lane.b32.xlu0 %v1970, 6
    %v2090 = vpop.permute.xlu0 %2089
    %2091 = vrot.lane.b32.xlu0 %v1971, 6
    %v2092 = vpop.permute.xlu0 %2091
    %2093 = vrot.lane.b32.xlu0 %v1975, 6
    %v2094 = vpop.permute.xlu0 %2093
    %2095 = vrot.lane.b32.xlu0 %v1976, 6
    %v2096 = vpop.permute.xlu0 %2095
    %2097 = vrot.lane.b32.xlu0 %v1980, 6
    %v2098 = vpop.permute.xlu0 %2097
    %2099 = vrot.lane.b32.xlu0 %v1981, 6
    %v2100 = vpop.permute.xlu0 %2099
    %2101 = vrot.lane.b32.xlu0 %v1985, 6
    %v2102 = vpop.permute.xlu0 %2101
    %2103 = vrot.lane.b32.xlu0 %v1986, 6
    %v2104 = vpop.permute.xlu0 %2103
    %2105 = vrot.lane.b32.xlu0 %v1990, 6
    %v2106 = vpop.permute.xlu0 %2105
    %2107 = vrot.lane.b32.xlu0 %v1991, 6
    %v2108 = vpop.permute.xlu0 %2107
    %2109 = vrot.lane.b32.xlu0 %v1995, 6
    %v2110 = vpop.permute.xlu0 %2109
    %2111 = vrot.lane.b32.xlu0 %v1996, 6
    %v2112 = vpop.permute.xlu0 %2111
    %2113 = vrot.lane.b32.xlu0 %v2000, 6
    %v2114 = vpop.permute.xlu0 %2113
    %2115 = vrot.lane.b32.xlu0 %v2001, 6
    %v2116 = vpop.permute.xlu0 %2115
    %2117 = vrot.lane.b32.xlu0 %v2005, 6
    %v2118 = vpop.permute.xlu0 %2117
    %2119 = vrot.lane.b32.xlu0 %v2006, 6
    %v2120 = vpop.permute.xlu0 %2119
    %2121 = vrot.lane.b32.xlu0 %v2010, 6
    %v2122 = vpop.permute.xlu0 %2121
    %2123 = vrot.lane.b32.xlu0 %v2011, 6
    %v2124 = vpop.permute.xlu0 %2123
    %2125 = vrot.lane.b32.xlu0 %v2015, 6
    %v2126 = vpop.permute.xlu0 %2125
    %2127 = vrot.lane.b32.xlu0 %v2016, 6
    %v2128 = vpop.permute.xlu0 %2127
    %vm2185 = vcmask 68656
    %2186 = vst.msk [vmem:[#allocation3] sm:$0xf] %vm2185, %v2018
    %vm2187 = vcmask 67632
    %2188 = vst.msk [vmem:[#allocation3 + $0x4] sm:$0x7] %vm2187, %v2020
    %2189 = vst.msk [vmem:[#allocation3 + $0x8] sm:$0xf] %vm2185, %v2022
    %2190 = vst.msk [vmem:[#allocation3 + $0xc] sm:$0x7] %vm2187, %v2024
    %2191 = vst.msk [vmem:[#allocation3 + $0x10] sm:$0xf] %vm2185, %v2026
    %2192 = vst.msk [vmem:[#allocation3 + $0x14] sm:$0x7] %vm2187, %v2028
    %2193 = vst.msk [vmem:[#allocation3 + $0x18] sm:$0xf] %vm2185, %v2030
    %2194 = vst.msk [vmem:[#allocation3 + $0x1c] sm:$0x7] %vm2187, %v2032
    %2195 = vst.msk [vmem:[#allocation3 + $0x20] sm:$0xf] %vm2185, %v2034
    %2196 = vst.msk [vmem:[#allocation3 + $0x24] sm:$0x7] %vm2187, %v2036
    %2197 = vst.msk [vmem:[#allocation3 + $0x28] sm:$0xf] %vm2185, %v2038
    %2198 = vst.msk [vmem:[#allocation3 + $0x2c] sm:$0x7] %vm2187, %v2040
    %2199 = vst.msk [vmem:[#allocation3 + $0x30] sm:$0xf] %vm2185, %v2042
    %2200 = vst.msk [vmem:[#allocation3 + $0x34] sm:$0x7] %vm2187, %v2044
    %2201 = vst.msk [vmem:[#allocation3 + $0x38] sm:$0xf] %vm2185, %v2046
    %2202 = vst.msk [vmem:[#allocation3 + $0x3c] sm:$0x7] %vm2187, %v2048
    %2203 = vst.msk [vmem:[#allocation3 + $0x40] sm:$0xf] %vm2185, %v2050
    %2204 = vst.msk [vmem:[#allocation3 + $0x44] sm:$0x7] %vm2187, %v2052
    %2205 = vst.msk [vmem:[#allocation3 + $0x48] sm:$0xf] %vm2185, %v2054
    %2206 = vst.msk [vmem:[#allocation3 + $0x4c] sm:$0x7] %vm2187, %v2056
    %2207 = vst.msk [vmem:[#allocation3 + $0x50] sm:$0xf] %vm2185, %v2058
    %2208 = vst.msk [vmem:[#allocation3 + $0x54] sm:$0x7] %vm2187, %v2060
    %2209 = vst.msk [vmem:[#allocation3 + $0x58] sm:$0xf] %vm2185, %v2062
    %2210 = vst.msk [vmem:[#allocation3 + $0x5c] sm:$0x7] %vm2187, %v2064
    %2211 = vst.msk [vmem:[#allocation3 + $0x60] sm:$0xf] %vm2185, %v2066
    %2212 = vst.msk [vmem:[#allocation3 + $0x64] sm:$0x7] %vm2187, %v2068
    %2213 = vst.msk [vmem:[#allocation3 + $0x68] sm:$0xf] %vm2185, %v2070
    %2214 = vst.msk [vmem:[#allocation3 + $0x6c] sm:$0x7] %vm2187, %v2072
    %2215 = vst.msk [vmem:[#allocation3 + $0x70] sm:$0xf] %vm2185, %v2074
    %2216 = vst.msk [vmem:[#allocation3 + $0x74] sm:$0x7] %vm2187, %v2076
    %2217 = vst.msk [vmem:[#allocation3 + $0x78] sm:$0xf] %vm2185, %v2078
    %2218 = vst.msk [vmem:[#allocation3 + $0x7c] sm:$0x7] %vm2187, %v2080
    %2219 = vst.msk [vmem:[#allocation3 + $0x80] sm:$0xf] %vm2185, %v2082
    %2220 = vst.msk [vmem:[#allocation3 + $0x84] sm:$0x7] %vm2187, %v2084
    %2221 = vst.msk [vmem:[#allocation3 + $0x88] sm:$0xf] %vm2185, %v2086
    %2222 = vst.msk [vmem:[#allocation3 + $0x8c] sm:$0x7] %vm2187, %v2088
    %2223 = vst.msk [vmem:[#allocation3 + $0x90] sm:$0xf] %vm2185, %v2090
    %2224 = vst.msk [vmem:[#allocation3 + $0x94] sm:$0x7] %vm2187, %v2092
    %2225 = vst.msk [vmem:[#allocation3 + $0x98] sm:$0xf] %vm2185, %v2094
    %2226 = vst.msk [vmem:[#allocation3 + $0x9c] sm:$0x7] %vm2187, %v2096
    %2227 = vst.msk [vmem:[#allocation3 + $0xa0] sm:$0xf] %vm2185, %v2098
    %2228 = vst.msk [vmem:[#allocation3 + $0xa4] sm:$0x7] %vm2187, %v2100
    %2229 = vst.msk [vmem:[#allocation3 + $0xa8] sm:$0xf] %vm2185, %v2102
    %2230 = vst.msk [vmem:[#allocation3 + $0xac] sm:$0x7] %vm2187, %v2104
    %2231 = vst.msk [vmem:[#allocation3 + $0xb0] sm:$0xf] %vm2185, %v2106
    %2232 = vst.msk [vmem:[#allocation3 + $0xb4] sm:$0x7] %vm2187, %v2108
    %2233 = vst.msk [vmem:[#allocation3 + $0xb8] sm:$0xf] %vm2185, %v2110
    %2234 = vst.msk [vmem:[#allocation3 + $0xbc] sm:$0x7] %vm2187, %v2112
    %2235 = vst.msk [vmem:[#allocation3 + $0xc0] sm:$0xf] %vm2185, %v2114
    %2236 = vst.msk [vmem:[#allocation3 + $0xc4] sm:$0x7] %vm2187, %v2116
    %2237 = vst.msk [vmem:[#allocation3 + $0xc8] sm:$0xf] %vm2185, %v2118
    %2238 = vst.msk [vmem:[#allocation3 + $0xcc] sm:$0x7] %vm2187, %v2120
    %2239 = vst.msk [vmem:[#allocation3 + $0xd0] sm:$0xf] %vm2185, %v2122
    %2240 = vst.msk [vmem:[#allocation3 + $0xd4] sm:$0x7] %vm2187, %v2124
    %2241 = vst.msk [vmem:[#allocation3 + $0xd8] sm:$0xf] %vm2185, %v2126
    %2242 = vst.msk [vmem:[#allocation3 + $0xdc] sm:$0x7] %vm2187, %v2128
    %s2243 = scalar_lea.vmem [#allocation2], 8
    %v2244 = vld [vmem:[%s2243] sm:$0x7f]
    %v2245 = vld [vmem:[%s2243 + $0x8] sm:$0x7f]
    %v2246 = vld [vmem:[%s2243 + $0x10] sm:$0x7f]
    %v2247 = vld [vmem:[%s2243 + $0x18] sm:$0x7f]
    %v2248 = vld [vmem:[%s2243 + $0x20] sm:$0x7f]
    %v2249 = vld [vmem:[%s2243 + $0x28] sm:$0x7f]
    %v2250 = vld [vmem:[%s2243 + $0x30] sm:$0x7f]
    %v2251 = vld [vmem:[%s2243 + $0x38] sm:$0x7f]
    %v2252 = vld [vmem:[%s2243 + $0x40] sm:$0x7f]
    %v2253 = vld [vmem:[%s2243 + $0x48] sm:$0x7f]
    %v2254 = vld [vmem:[%s2243 + $0x50] sm:$0x7f]
    %v2255 = vld [vmem:[%s2243 + $0x58] sm:$0x7f]
    %v2256 = vld [vmem:[%s2243 + $0x60] sm:$0x7f]
    %v2257 = vld [vmem:[%s2243 + $0x68] sm:$0x7f]
    %v2258 = vld [vmem:[%s2243 + $0x80] sm:$0x7f]
    %v2259 = vld [vmem:[%s2243 + $0x88] sm:$0x7f]
    %v2260 = vld [vmem:[%s2243 + $0x90] sm:$0x7f]
    %v2261 = vld [vmem:[%s2243 + $0x98] sm:$0x7f]
    %v2262 = vld [vmem:[%s2243 + $0xa0] sm:$0x7f]
    %v2263 = vld [vmem:[%s2243 + $0xa8] sm:$0x7f]
    %v2264 = vld [vmem:[%s2243 + $0xb0] sm:$0x7f]
    %v2265 = vld [vmem:[%s2243 + $0xb8] sm:$0x7f]
    %v2266 = vld [vmem:[%s2243 + $0xc0] sm:$0x7f]
    %v2267 = vld [vmem:[%s2243 + $0xc8] sm:$0x7f]
    %v2268 = vld [vmem:[%s2243 + $0xd0] sm:$0x7f]
    %v2269 = vld [vmem:[%s2243 + $0xd8] sm:$0x7f]
    %v2270 = vld [vmem:[%s2243 + $0xe0] sm:$0x7f]
    %v2271 = vld [vmem:[%s2243 + $0xe8] sm:$0x7f]
    %v2300 = vunpack.c.l.b16 %v2244
    %v2301 = vunpack.c.h.b16 %v2244
    %v2302 = vunpack.c.l.b16 %v2245
    %v2303 = vunpack.c.h.b16 %v2245
    %v2304 = vunpack.c.l.b16 %v2246
    %v2305 = vunpack.c.h.b16 %v2246
    %v2306 = vunpack.c.l.b16 %v2247
    %v2307 = vunpack.c.h.b16 %v2247
    %v2308 = vunpack.c.l.b16 %v2248
    %v2309 = vunpack.c.h.b16 %v2248
    %v2310 = vunpack.c.l.b16 %v2249
    %v2311 = vunpack.c.h.b16 %v2249
    %v2312 = vunpack.c.l.b16 %v2250
    %v2313 = vunpack.c.h.b16 %v2250
    %v2314 = vunpack.c.l.b16 %v2251
    %v2315 = vunpack.c.h.b16 %v2251
    %v2316 = vunpack.c.l.b16 %v2252
    %v2317 = vunpack.c.h.b16 %v2252
    %v2318 = vunpack.c.l.b16 %v2253
    %v2319 = vunpack.c.h.b16 %v2253
    %v2320 = vunpack.c.l.b16 %v2254
    %v2321 = vunpack.c.h.b16 %v2254
    %v2322 = vunpack.c.l.b16 %v2255
    %v2323 = vunpack.c.h.b16 %v2255
    %v2324 = vunpack.c.l.b16 %v2256
    %v2325 = vunpack.c.h.b16 %v2256
    %v2326 = vunpack.c.l.b16 %v2257
    %v2327 = vunpack.c.h.b16 %v2257
    %v2328 = vunpack.c.l.b16 %v2258
    %v2329 = vunpack.c.h.b16 %v2258
    %v2330 = vunpack.c.l.b16 %v2259
    %v2331 = vunpack.c.h.b16 %v2259
    %v2332 = vunpack.c.l.b16 %v2260
    %v2333 = vunpack.c.h.b16 %v2260
    %v2334 = vunpack.c.l.b16 %v2261
    %v2335 = vunpack.c.h.b16 %v2261
    %v2336 = vunpack.c.l.b16 %v2262
    %v2337 = vunpack.c.h.b16 %v2262
    %v2338 = vunpack.c.l.b16 %v2263
    %v2339 = vunpack.c.h.b16 %v2263
    %v2340 = vunpack.c.l.b16 %v2264
    %v2341 = vunpack.c.h.b16 %v2264
    %v2342 = vunpack.c.l.b16 %v2265
    %v2343 = vunpack.c.h.b16 %v2265
    %v2344 = vunpack.c.l.b16 %v2266
    %v2345 = vunpack.c.h.b16 %v2266
    %v2346 = vunpack.c.l.b16 %v2267
    %v2347 = vunpack.c.h.b16 %v2267
    %v2348 = vunpack.c.l.b16 %v2268
    %v2349 = vunpack.c.h.b16 %v2268
    %v2350 = vunpack.c.l.b16 %v2269
    %v2351 = vunpack.c.h.b16 %v2269
    %v2352 = vunpack.c.l.b16 %v2270
    %v2353 = vunpack.c.h.b16 %v2270
    %v2354 = vunpack.c.l.b16 %v2271
    %v2355 = vunpack.c.h.b16 %v2271
    %v2356 = vpack.c.b16 %v2300, %v2300
    %v2357 = vpack.c.b16 %v2301, %v2301
    %v2358 = vpack.c.b16 %v2302, %v2302
    %v2359 = vpack.c.b16 %v2303, %v2303
    %v2360 = vpack.c.b16 %v2304, %v2304
    %v2361 = vpack.c.b16 %v2305, %v2305
    %v2362 = vpack.c.b16 %v2306, %v2306
    %v2363 = vpack.c.b16 %v2307, %v2307
    %v2364 = vpack.c.b16 %v2308, %v2308
    %v2365 = vpack.c.b16 %v2309, %v2309
    %v2366 = vpack.c.b16 %v2310, %v2310
    %v2367 = vpack.c.b16 %v2311, %v2311
    %v2368 = vpack.c.b16 %v2312, %v2312
    %v2369 = vpack.c.b16 %v2313, %v2313
    %v2370 = vpack.c.b16 %v2314, %v2314
    %v2371 = vpack.c.b16 %v2315, %v2315
    %v2372 = vpack.c.b16 %v2316, %v2316
    %v2373 = vpack.c.b16 %v2317, %v2317
    %v2374 = vpack.c.b16 %v2318, %v2318
    %v2375 = vpack.c.b16 %v2319, %v2319
    %v2376 = vpack.c.b16 %v2320, %v2320
    %v2377 = vpack.c.b16 %v2321, %v2321
    %v2378 = vpack.c.b16 %v2322, %v2322
    %v2379 = vpack.c.b16 %v2323, %v2323
    %v2380 = vpack.c.b16 %v2324, %v2324
    %v2381 = vpack.c.b16 %v2325, %v2325
    %v2382 = vpack.c.b16 %v2326, %v2326
    %v2383 = vpack.c.b16 %v2327, %v2327
    %v2384 = vpack.c.b16 %v2328, %v2328
    %v2385 = vpack.c.b16 %v2329, %v2329
    %v2386 = vpack.c.b16 %v2330, %v2330
    %v2387 = vpack.c.b16 %v2331, %v2331
    %v2388 = vpack.c.b16 %v2332, %v2332
    %v2389 = vpack.c.b16 %v2333, %v2333
    %v2390 = vpack.c.b16 %v2334, %v2334
    %v2391 = vpack.c.b16 %v2335, %v2335
    %v2392 = vpack.c.b16 %v2336, %v2336
    %v2393 = vpack.c.b16 %v2337, %v2337
    %v2394 = vpack.c.b16 %v2338, %v2338
    %v2395 = vpack.c.b16 %v2339, %v2339
    %v2396 = vpack.c.b16 %v2340, %v2340
    %v2397 = vpack.c.b16 %v2341, %v2341
    %v2398 = vpack.c.b16 %v2342, %v2342
    %v2399 = vpack.c.b16 %v2343, %v2343
    %v2400 = vpack.c.b16 %v2344, %v2344
    %v2401 = vpack.c.b16 %v2345, %v2345
    %v2402 = vpack.c.b16 %v2346, %v2346
    %v2403 = vpack.c.b16 %v2347, %v2347
    %v2404 = vpack.c.b16 %v2348, %v2348
    %v2405 = vpack.c.b16 %v2349, %v2349
    %v2406 = vpack.c.b16 %v2350, %v2350
    %v2407 = vpack.c.b16 %v2351, %v2351
    %v2408 = vpack.c.b16 %v2352, %v2352
    %v2409 = vpack.c.b16 %v2353, %v2353
    %v2410 = vpack.c.b16 %v2354, %v2354
    %v2411 = vpack.c.b16 %v2355, %v2355
    %2412 = vrot.lane.b32.xlu0 %v2356, 9
    %v2413 = vpop.permute.xlu0 %2412
    %2414 = vrot.lane.b32.xlu0 %v2357, 9
    %v2415 = vpop.permute.xlu0 %2414
    %2416 = vrot.lane.b32.xlu0 %v2358, 9
    %v2417 = vpop.permute.xlu0 %2416
    %2418 = vrot.lane.b32.xlu0 %v2359, 9
    %v2419 = vpop.permute.xlu0 %2418
    %2420 = vrot.lane.b32.xlu0 %v2360, 9
    %v2421 = vpop.permute.xlu0 %2420
    %2422 = vrot.lane.b32.xlu0 %v2361, 9
    %v2423 = vpop.permute.xlu0 %2422
    %2424 = vrot.lane.b32.xlu0 %v2362, 9
    %v2425 = vpop.permute.xlu0 %2424
    %2426 = vrot.lane.b32.xlu0 %v2363, 9
    %v2427 = vpop.permute.xlu0 %2426
    %2428 = vrot.lane.b32.xlu0 %v2364, 9
    %v2429 = vpop.permute.xlu0 %2428
    %2430 = vrot.lane.b32.xlu0 %v2365, 9
    %v2431 = vpop.permute.xlu0 %2430
    %2432 = vrot.lane.b32.xlu0 %v2366, 9
    %v2433 = vpop.permute.xlu0 %2432
    %2434 = vrot.lane.b32.xlu0 %v2367, 9
    %v2435 = vpop.permute.xlu0 %2434
    %2436 = vrot.lane.b32.xlu0 %v2368, 9
    %v2437 = vpop.permute.xlu0 %2436
    %2438 = vrot.lane.b32.xlu0 %v2369, 9
    %v2439 = vpop.permute.xlu0 %2438
    %2440 = vrot.lane.b32.xlu0 %v2370, 9
    %v2441 = vpop.permute.xlu0 %2440
    %2442 = vrot.lane.b32.xlu0 %v2371, 9
    %v2443 = vpop.permute.xlu0 %2442
    %2444 = vrot.lane.b32.xlu0 %v2372, 9
    %v2445 = vpop.permute.xlu0 %2444
    %2446 = vrot.lane.b32.xlu0 %v2373, 9
    %v2447 = vpop.permute.xlu0 %2446
    %2448 = vrot.lane.b32.xlu0 %v2374, 9
    %v2449 = vpop.permute.xlu0 %2448
    %2450 = vrot.lane.b32.xlu0 %v2375, 9
    %v2451 = vpop.permute.xlu0 %2450
    %2452 = vrot.lane.b32.xlu0 %v2376, 9
    %v2453 = vpop.permute.xlu0 %2452
    %2454 = vrot.lane.b32.xlu0 %v2377, 9
    %v2455 = vpop.permute.xlu0 %2454
    %2456 = vrot.lane.b32.xlu0 %v2378, 9
    %v2457 = vpop.permute.xlu0 %2456
    %2458 = vrot.lane.b32.xlu0 %v2379, 9
    %v2459 = vpop.permute.xlu0 %2458
    %2460 = vrot.lane.b32.xlu0 %v2380, 9
    %v2461 = vpop.permute.xlu0 %2460
    %2462 = vrot.lane.b32.xlu0 %v2381, 9
    %v2463 = vpop.permute.xlu0 %2462
    %2464 = vrot.lane.b32.xlu0 %v2382, 9
    %v2465 = vpop.permute.xlu0 %2464
    %2466 = vrot.lane.b32.xlu0 %v2383, 9
    %v2467 = vpop.permute.xlu0 %2466
    %2468 = vrot.lane.b32.xlu0 %v2384, 9
    %v2469 = vpop.permute.xlu0 %2468
    %2470 = vrot.lane.b32.xlu0 %v2385, 9
    %v2471 = vpop.permute.xlu0 %2470
    %2472 = vrot.lane.b32.xlu0 %v2386, 9
    %v2473 = vpop.permute.xlu0 %2472
    %2474 = vrot.lane.b32.xlu0 %v2387, 9
    %v2475 = vpop.permute.xlu0 %2474
    %2476 = vrot.lane.b32.xlu0 %v2388, 9
    %v2477 = vpop.permute.xlu0 %2476
    %2478 = vrot.lane.b32.xlu0 %v2389, 9
    %v2479 = vpop.permute.xlu0 %2478
    %2480 = vrot.lane.b32.xlu0 %v2390, 9
    %v2481 = vpop.permute.xlu0 %2480
    %2482 = vrot.lane.b32.xlu0 %v2391, 9
    %v2483 = vpop.permute.xlu0 %2482
    %2484 = vrot.lane.b32.xlu0 %v2392, 9
    %v2485 = vpop.permute.xlu0 %2484
    %2486 = vrot.lane.b32.xlu0 %v2393, 9
    %v2487 = vpop.permute.xlu0 %2486
    %2488 = vrot.lane.b32.xlu0 %v2394, 9
    %v2489 = vpop.permute.xlu0 %2488
    %2490 = vrot.lane.b32.xlu0 %v2395, 9
    %v2491 = vpop.permute.xlu0 %2490
    %2492 = vrot.lane.b32.xlu0 %v2396, 9
    %v2493 = vpop.permute.xlu0 %2492
    %2494 = vrot.lane.b32.xlu0 %v2397, 9
    %v2495 = vpop.permute.xlu0 %2494
    %2496 = vrot.lane.b32.xlu0 %v2398, 9
    %v2497 = vpop.permute.xlu0 %2496
    %2498 = vrot.lane.b32.xlu0 %v2399, 9
    %v2499 = vpop.permute.xlu0 %2498
    %2500 = vrot.lane.b32.xlu0 %v2400, 9
    %v2501 = vpop.permute.xlu0 %2500
    %2502 = vrot.lane.b32.xlu0 %v2401, 9
    %v2503 = vpop.permute.xlu0 %2502
    %2504 = vrot.lane.b32.xlu0 %v2402, 9
    %v2505 = vpop.permute.xlu0 %2504
    %2506 = vrot.lane.b32.xlu0 %v2403, 9
    %v2507 = vpop.permute.xlu0 %2506
    %2508 = vrot.lane.b32.xlu0 %v2404, 9
    %v2509 = vpop.permute.xlu0 %2508
    %2510 = vrot.lane.b32.xlu0 %v2405, 9
    %v2511 = vpop.permute.xlu0 %2510
    %2512 = vrot.lane.b32.xlu0 %v2406, 9
    %v2513 = vpop.permute.xlu0 %2512
    %2514 = vrot.lane.b32.xlu0 %v2407, 9
    %v2515 = vpop.permute.xlu0 %2514
    %2516 = vrot.lane.b32.xlu0 %v2408, 9
    %v2517 = vpop.permute.xlu0 %2516
    %2518 = vrot.lane.b32.xlu0 %v2409, 9
    %v2519 = vpop.permute.xlu0 %2518
    %2520 = vrot.lane.b32.xlu0 %v2410, 9
    %v2521 = vpop.permute.xlu0 %2520
    %2522 = vrot.lane.b32.xlu0 %v2411, 9
    %v2523 = vpop.permute.xlu0 %2522
    %vm2580 = vcmask 93256
    %2581 = vst.msk [vmem:[#allocation3] sm:$0xf] %vm2580, %v2413
    %vm2582 = vcmask 92232
    %2583 = vst.msk [vmem:[#allocation3 + $0x4] sm:$0x7] %vm2582, %v2415
    %2584 = vst.msk [vmem:[#allocation3 + $0x8] sm:$0xf] %vm2580, %v2417
    %2585 = vst.msk [vmem:[#allocation3 + $0xc] sm:$0x7] %vm2582, %v2419
    %2586 = vst.msk [vmem:[#allocation3 + $0x10] sm:$0xf] %vm2580, %v2421
    %2587 = vst.msk [vmem:[#allocation3 + $0x14] sm:$0x7] %vm2582, %v2423
    %2588 = vst.msk [vmem:[#allocation3 + $0x18] sm:$0xf] %vm2580, %v2425
    %2589 = vst.msk [vmem:[#allocation3 + $0x1c] sm:$0x7] %vm2582, %v2427
    %2590 = vst.msk [vmem:[#allocation3 + $0x20] sm:$0xf] %vm2580, %v2429
    %2591 = vst.msk [vmem:[#allocation3 + $0x24] sm:$0x7] %vm2582, %v2431
    %2592 = vst.msk [vmem:[#allocation3 + $0x28] sm:$0xf] %vm2580, %v2433
    %2593 = vst.msk [vmem:[#allocation3 + $0x2c] sm:$0x7] %vm2582, %v2435
    %2594 = vst.msk [vmem:[#allocation3 + $0x30] sm:$0xf] %vm2580, %v2437
    %2595 = vst.msk [vmem:[#allocation3 + $0x34] sm:$0x7] %vm2582, %v2439
    %2596 = vst.msk [vmem:[#allocation3 + $0x38] sm:$0xf] %vm2580, %v2441
    %2597 = vst.msk [vmem:[#allocation3 + $0x3c] sm:$0x7] %vm2582, %v2443
    %2598 = vst.msk [vmem:[#allocation3 + $0x40] sm:$0xf] %vm2580, %v2445
    %2599 = vst.msk [vmem:[#allocation3 + $0x44] sm:$0x7] %vm2582, %v2447
    %2600 = vst.msk [vmem:[#allocation3 + $0x48] sm:$0xf] %vm2580, %v2449
    %2601 = vst.msk [vmem:[#allocation3 + $0x4c] sm:$0x7] %vm2582, %v2451
    %2602 = vst.msk [vmem:[#allocation3 + $0x50] sm:$0xf] %vm2580, %v2453
    %2603 = vst.msk [vmem:[#allocation3 + $0x54] sm:$0x7] %vm2582, %v2455
    %2604 = vst.msk [vmem:[#allocation3 + $0x58] sm:$0xf] %vm2580, %v2457
    %2605 = vst.msk [vmem:[#allocation3 + $0x5c] sm:$0x7] %vm2582, %v2459
    %2606 = vst.msk [vmem:[#allocation3 + $0x60] sm:$0xf] %vm2580, %v2461
    %2607 = vst.msk [vmem:[#allocation3 + $0x64] sm:$0x7] %vm2582, %v2463
    %2608 = vst.msk [vmem:[#allocation3 + $0x68] sm:$0xf] %vm2580, %v2465
    %2609 = vst.msk [vmem:[#allocation3 + $0x6c] sm:$0x7] %vm2582, %v2467
    %2610 = vst.msk [vmem:[#allocation3 + $0x70] sm:$0xf] %vm2580, %v2469
    %2611 = vst.msk [vmem:[#allocation3 + $0x74] sm:$0x7] %vm2582, %v2471
    %2612 = vst.msk [vmem:[#allocation3 + $0x78] sm:$0xf] %vm2580, %v2473
    %2613 = vst.msk [vmem:[#allocation3 + $0x7c] sm:$0x7] %vm2582, %v2475
    %2614 = vst.msk [vmem:[#allocation3 + $0x80] sm:$0xf] %vm2580, %v2477
    %2615 = vst.msk [vmem:[#allocation3 + $0x84] sm:$0x7] %vm2582, %v2479
    %2616 = vst.msk [vmem:[#allocation3 + $0x88] sm:$0xf] %vm2580, %v2481
    %2617 = vst.msk [vmem:[#allocation3 + $0x8c] sm:$0x7] %vm2582, %v2483
    %2618 = vst.msk [vmem:[#allocation3 + $0x90] sm:$0xf] %vm2580, %v2485
    %2619 = vst.msk [vmem:[#allocation3 + $0x94] sm:$0x7] %vm2582, %v2487
    %2620 = vst.msk [vmem:[#allocation3 + $0x98] sm:$0xf] %vm2580, %v2489
    %2621 = vst.msk [vmem:[#allocation3 + $0x9c] sm:$0x7] %vm2582, %v2491
    %2622 = vst.msk [vmem:[#allocation3 + $0xa0] sm:$0xf] %vm2580, %v2493
    %2623 = vst.msk [vmem:[#allocation3 + $0xa4] sm:$0x7] %vm2582, %v2495
    %2624 = vst.msk [vmem:[#allocation3 + $0xa8] sm:$0xf] %vm2580, %v2497
    %2625 = vst.msk [vmem:[#allocation3 + $0xac] sm:$0x7] %vm2582, %v2499
    %2626 = vst.msk [vmem:[#allocation3 + $0xb0] sm:$0xf] %vm2580, %v2501
    %2627 = vst.msk [vmem:[#allocation3 + $0xb4] sm:$0x7] %vm2582, %v2503
    %2628 = vst.msk [vmem:[#allocation3 + $0xb8] sm:$0xf] %vm2580, %v2505
    %2629 = vst.msk [vmem:[#allocation3 + $0xbc] sm:$0x7] %vm2582, %v2507
    %2630 = vst.msk [vmem:[#allocation3 + $0xc0] sm:$0xf] %vm2580, %v2509
    %2631 = vst.msk [vmem:[#allocation3 + $0xc4] sm:$0x7] %vm2582, %v2511
    %2632 = vst.msk [vmem:[#allocation3 + $0xc8] sm:$0xf] %vm2580, %v2513
    %2633 = vst.msk [vmem:[#allocation3 + $0xcc] sm:$0x7] %vm2582, %v2515
    %2634 = vst.msk [vmem:[#allocation3 + $0xd0] sm:$0xf] %vm2580, %v2517
    %2635 = vst.msk [vmem:[#allocation3 + $0xd4] sm:$0x7] %vm2582, %v2519
    %2636 = vst.msk [vmem:[#allocation3 + $0xd8] sm:$0xf] %vm2580, %v2521
    %2637 = vst.msk [vmem:[#allocation3 + $0xdc] sm:$0x7] %vm2582, %v2523
    %v2638 = vld [vmem:[%s2243] sm:$0xff]
    %v2639 = vld [vmem:[%s2243 + $0x8] sm:$0xff]
    %v2640 = vld [vmem:[%s2243 + $0x10] sm:$0xff]
    %v2641 = vld [vmem:[%s2243 + $0x18] sm:$0xff]
    %v2642 = vld [vmem:[%s2243 + $0x20] sm:$0xff]
    %v2643 = vld [vmem:[%s2243 + $0x28] sm:$0xff]
    %v2644 = vld [vmem:[%s2243 + $0x30] sm:$0xff]
    %v2645 = vld [vmem:[%s2243 + $0x38] sm:$0xff]
    %v2646 = vld [vmem:[%s2243 + $0x40] sm:$0xff]
    %v2647 = vld [vmem:[%s2243 + $0x48] sm:$0xff]
    %v2648 = vld [vmem:[%s2243 + $0x50] sm:$0xff]
    %v2649 = vld [vmem:[%s2243 + $0x58] sm:$0xff]
    %v2650 = vld [vmem:[%s2243 + $0x60] sm:$0xff]
    %v2651 = vld [vmem:[%s2243 + $0x68] sm:$0xff]
    %v2652 = vld [vmem:[%s2243 + $0x80] sm:$0xff]
    %v2653 = vld [vmem:[%s2243 + $0x88] sm:$0xff]
    %v2654 = vld [vmem:[%s2243 + $0x90] sm:$0xff]
    %v2655 = vld [vmem:[%s2243 + $0x98] sm:$0xff]
    %v2656 = vld [vmem:[%s2243 + $0xa0] sm:$0xff]
    %v2657 = vld [vmem:[%s2243 + $0xa8] sm:$0xff]
    %v2658 = vld [vmem:[%s2243 + $0xb0] sm:$0xff]
    %v2659 = vld [vmem:[%s2243 + $0xb8] sm:$0xff]
    %v2660 = vld [vmem:[%s2243 + $0xc0] sm:$0xff]
    %v2661 = vld [vmem:[%s2243 + $0xc8] sm:$0xff]
    %v2662 = vld [vmem:[%s2243 + $0xd0] sm:$0xff]
    %v2663 = vld [vmem:[%s2243 + $0xd8] sm:$0xff]
    %v2664 = vld [vmem:[%s2243 + $0xe0] sm:$0xff]
    %v2665 = vld [vmem:[%s2243 + $0xe8] sm:$0xff]
    %v2694 = vunpack.c.l.b16 %v2638
    %v2695 = vunpack.c.h.b16 %v2638
    %v2696 = vunpack.c.l.b16 %v2639
    %v2697 = vunpack.c.h.b16 %v2639
    %v2698 = vunpack.c.l.b16 %v2640
    %v2699 = vunpack.c.h.b16 %v2640
    %v2700 = vunpack.c.l.b16 %v2641
    %v2701 = vunpack.c.h.b16 %v2641
    %v2702 = vunpack.c.l.b16 %v2642
    %v2703 = vunpack.c.h.b16 %v2642
    %v2704 = vunpack.c.l.b16 %v2643
    %v2705 = vunpack.c.h.b16 %v2643
    %v2706 = vunpack.c.l.b16 %v2644
    %v2707 = vunpack.c.h.b16 %v2644
    %v2708 = vunpack.c.l.b16 %v2645
    %v2709 = vunpack.c.h.b16 %v2645
    %v2710 = vunpack.c.l.b16 %v2646
    %v2711 = vunpack.c.h.b16 %v2646
    %v2712 = vunpack.c.l.b16 %v2647
    %v2713 = vunpack.c.h.b16 %v2647
    %v2714 = vunpack.c.l.b16 %v2648
    %v2715 = vunpack.c.h.b16 %v2648
    %v2716 = vunpack.c.l.b16 %v2649
    %v2717 = vunpack.c.h.b16 %v2649
    %v2718 = vunpack.c.l.b16 %v2650
    %v2719 = vunpack.c.h.b16 %v2650
    %v2720 = vunpack.c.l.b16 %v2651
    %v2721 = vunpack.c.h.b16 %v2651
    %v2722 = vunpack.c.l.b16 %v2652
    %v2723 = vunpack.c.h.b16 %v2652
    %v2724 = vunpack.c.l.b16 %v2653
    %v2725 = vunpack.c.h.b16 %v2653
    %v2726 = vunpack.c.l.b16 %v2654
    %v2727 = vunpack.c.h.b16 %v2654
    %v2728 = vunpack.c.l.b16 %v2655
    %v2729 = vunpack.c.h.b16 %v2655
    %v2730 = vunpack.c.l.b16 %v2656
    %v2731 = vunpack.c.h.b16 %v2656
    %v2732 = vunpack.c.l.b16 %v2657
    %v2733 = vunpack.c.h.b16 %v2657
    %v2734 = vunpack.c.l.b16 %v2658
    %v2735 = vunpack.c.h.b16 %v2658
    %v2736 = vunpack.c.l.b16 %v2659
    %v2737 = vunpack.c.h.b16 %v2659
    %v2738 = vunpack.c.l.b16 %v2660
    %v2739 = vunpack.c.h.b16 %v2660
    %v2740 = vunpack.c.l.b16 %v2661
    %v2741 = vunpack.c.h.b16 %v2661
    %v2742 = vunpack.c.l.b16 %v2662
    %v2743 = vunpack.c.h.b16 %v2662
    %v2744 = vunpack.c.l.b16 %v2663
    %v2745 = vunpack.c.h.b16 %v2663
    %v2746 = vunpack.c.l.b16 %v2664
    %v2747 = vunpack.c.h.b16 %v2664
    %v2748 = vunpack.c.l.b16 %v2665
    %v2749 = vunpack.c.h.b16 %v2665
    %v2750 = vpack.c.b16 %v2694, %v2694
    %v2751 = vpack.c.b16 %v2695, %v2695
    %v2752 = vpack.c.b16 %v2696, %v2696
    %v2753 = vpack.c.b16 %v2697, %v2697
    %v2754 = vpack.c.b16 %v2698, %v2698
    %v2755 = vpack.c.b16 %v2699, %v2699
    %v2756 = vpack.c.b16 %v2700, %v2700
    %v2757 = vpack.c.b16 %v2701, %v2701
    %v2758 = vpack.c.b16 %v2702, %v2702
    %v2759 = vpack.c.b16 %v2703, %v2703
    %v2760 = vpack.c.b16 %v2704, %v2704
    %v2761 = vpack.c.b16 %v2705, %v2705
    %v2762 = vpack.c.b16 %v2706, %v2706
    %v2763 = vpack.c.b16 %v2707, %v2707
    %v2764 = vpack.c.b16 %v2708, %v2708
    %v2765 = vpack.c.b16 %v2709, %v2709
    %v2766 = vpack.c.b16 %v2710, %v2710
    %v2767 = vpack.c.b16 %v2711, %v2711
    %v2768 = vpack.c.b16 %v2712, %v2712
    %v2769 = vpack.c.b16 %v2713, %v2713
    %v2770 = vpack.c.b16 %v2714, %v2714
    %v2771 = vpack.c.b16 %v2715, %v2715
    %v2772 = vpack.c.b16 %v2716, %v2716
    %v2773 = vpack.c.b16 %v2717, %v2717
    %v2774 = vpack.c.b16 %v2718, %v2718
    %v2775 = vpack.c.b16 %v2719, %v2719
    %v2776 = vpack.c.b16 %v2720, %v2720
    %v2777 = vpack.c.b16 %v2721, %v2721
    %v2778 = vpack.c.b16 %v2722, %v2722
    %v2779 = vpack.c.b16 %v2723, %v2723
    %v2780 = vpack.c.b16 %v2724, %v2724
    %v2781 = vpack.c.b16 %v2725, %v2725
    %v2782 = vpack.c.b16 %v2726, %v2726
    %v2783 = vpack.c.b16 %v2727, %v2727
    %v2784 = vpack.c.b16 %v2728, %v2728
    %v2785 = vpack.c.b16 %v2729, %v2729
    %v2786 = vpack.c.b16 %v2730, %v2730
    %v2787 = vpack.c.b16 %v2731, %v2731
    %v2788 = vpack.c.b16 %v2732, %v2732
    %v2789 = vpack.c.b16 %v2733, %v2733
    %v2790 = vpack.c.b16 %v2734, %v2734
    %v2791 = vpack.c.b16 %v2735, %v2735
    %v2792 = vpack.c.b16 %v2736, %v2736
    %v2793 = vpack.c.b16 %v2737, %v2737
    %v2794 = vpack.c.b16 %v2738, %v2738
    %v2795 = vpack.c.b16 %v2739, %v2739
    %v2796 = vpack.c.b16 %v2740, %v2740
    %v2797 = vpack.c.b16 %v2741, %v2741
    %v2798 = vpack.c.b16 %v2742, %v2742
    %v2799 = vpack.c.b16 %v2743, %v2743
    %v2800 = vpack.c.b16 %v2744, %v2744
    %v2801 = vpack.c.b16 %v2745, %v2745
    %v2802 = vpack.c.b16 %v2746, %v2746
    %v2803 = vpack.c.b16 %v2747, %v2747
    %v2804 = vpack.c.b16 %v2748, %v2748
    %v2805 = vpack.c.b16 %v2749, %v2749
    %v2807 = vshrl.u32 %v2750, 16
    %v2809 = vrot.slane %v2807, 4
    %v2810 = vshll.u32 %v2750, 16
    %v2812 = vrot.slane %v2810, 5
    %v2813 = vor.u32 %v2809, %v2812
    %v2814 = vrot.slane %v2813, 4
    %v2816 = vshll.u32 %v2751, 16
    %v2818 = vrot.slane %v2816, 5
    %v2819 = vsel %vm947, %v2814, %v2818
    %v2820 = vshrl.u32 %v2751, 16
    %v2822 = vrot.slane %v2820, 4
    %v2823 = vor.u32 %v2822, %v2818
    %v2824 = vrot.slane %v2823, 4
    %v2826 = vshrl.u32 %v2752, 16
    %v2828 = vrot.slane %v2826, 4
    %v2829 = vshll.u32 %v2752, 16
    %v2831 = vrot.slane %v2829, 5
    %v2832 = vor.u32 %v2828, %v2831
    %v2833 = vrot.slane %v2832, 4
    %v2835 = vshll.u32 %v2753, 16
    %v2837 = vrot.slane %v2835, 5
    %v2838 = vsel %vm947, %v2833, %v2837
    %v2839 = vshrl.u32 %v2753, 16
    %v2841 = vrot.slane %v2839, 4
    %v2842 = vor.u32 %v2841, %v2837
    %v2843 = vrot.slane %v2842, 4
    %v2845 = vshrl.u32 %v2754, 16
    %v2847 = vrot.slane %v2845, 4
    %v2848 = vshll.u32 %v2754, 16
    %v2850 = vrot.slane %v2848, 5
    %v2851 = vor.u32 %v2847, %v2850
    %v2852 = vrot.slane %v2851, 4
    %v2854 = vshll.u32 %v2755, 16
    %v2856 = vrot.slane %v2854, 5
    %v2857 = vsel %vm947, %v2852, %v2856
    %v2858 = vshrl.u32 %v2755, 16
    %v2860 = vrot.slane %v2858, 4
    %v2861 = vor.u32 %v2860, %v2856
    %v2862 = vrot.slane %v2861, 4
    %v2864 = vshrl.u32 %v2756, 16
    %v2866 = vrot.slane %v2864, 4
    %v2867 = vshll.u32 %v2756, 16
    %v2869 = vrot.slane %v2867, 5
    %v2870 = vor.u32 %v2866, %v2869
    %v2871 = vrot.slane %v2870, 4
    %v2873 = vshll.u32 %v2757, 16
    %v2875 = vrot.slane %v2873, 5
    %v2876 = vsel %vm947, %v2871, %v2875
    %v2877 = vshrl.u32 %v2757, 16
    %v2879 = vrot.slane %v2877, 4
    %v2880 = vor.u32 %v2879, %v2875
    %v2881 = vrot.slane %v2880, 4
    %v2883 = vshrl.u32 %v2758, 16
    %v2885 = vrot.slane %v2883, 4
    %v2886 = vshll.u32 %v2758, 16
    %v2888 = vrot.slane %v2886, 5
    %v2889 = vor.u32 %v2885, %v2888
    %v2890 = vrot.slane %v2889, 4
    %v2892 = vshll.u32 %v2759, 16
    %v2894 = vrot.slane %v2892, 5
    %v2895 = vsel %vm947, %v2890, %v2894
    %v2896 = vshrl.u32 %v2759, 16
    %v2898 = vrot.slane %v2896, 4
    %v2899 = vor.u32 %v2898, %v2894
    %v2900 = vrot.slane %v2899, 4
    %v2902 = vshrl.u32 %v2760, 16
    %v2904 = vrot.slane %v2902, 4
    %v2905 = vshll.u32 %v2760, 16
    %v2907 = vrot.slane %v2905, 5
    %v2908 = vor.u32 %v2904, %v2907
    %v2909 = vrot.slane %v2908, 4
    %v2911 = vshll.u32 %v2761, 16
    %v2913 = vrot.slane %v2911, 5
    %v2914 = vsel %vm947, %v2909, %v2913
    %v2915 = vshrl.u32 %v2761, 16
    %v2917 = vrot.slane %v2915, 4
    %v2918 = vor.u32 %v2917, %v2913
    %v2919 = vrot.slane %v2918, 4
    %v2921 = vshrl.u32 %v2762, 16
    %v2923 = vrot.slane %v2921, 4
    %v2924 = vshll.u32 %v2762, 16
    %v2926 = vrot.slane %v2924, 5
    %v2927 = vor.u32 %v2923, %v2926
    %v2928 = vrot.slane %v2927, 4
    %v2930 = vshll.u32 %v2763, 16
    %v2932 = vrot.slane %v2930, 5
    %v2933 = vsel %vm947, %v2928, %v2932
    %v2934 = vshrl.u32 %v2763, 16
    %v2936 = vrot.slane %v2934, 4
    %v2937 = vor.u32 %v2936, %v2932
    %v2938 = vrot.slane %v2937, 4
    %v2940 = vshrl.u32 %v2764, 16
    %v2942 = vrot.slane %v2940, 4
    %v2943 = vshll.u32 %v2764, 16
    %v2945 = vrot.slane %v2943, 5
    %v2946 = vor.u32 %v2942, %v2945
    %v2947 = vrot.slane %v2946, 4
    %v2949 = vshll.u32 %v2765, 16
    %v2951 = vrot.slane %v2949, 5
    %v2952 = vsel %vm947, %v2947, %v2951
    %v2953 = vshrl.u32 %v2765, 16
    %v2955 = vrot.slane %v2953, 4
    %v2956 = vor.u32 %v2955, %v2951
    %v2957 = vrot.slane %v2956, 4
    %v2959 = vshrl.u32 %v2766, 16
    %v2961 = vrot.slane %v2959, 4
    %v2962 = vshll.u32 %v2766, 16
    %v2964 = vrot.slane %v2962, 5
    %v2965 = vor.u32 %v2961, %v2964
    %v2966 = vrot.slane %v2965, 4
    %v2968 = vshll.u32 %v2767, 16
    %v2970 = vrot.slane %v2968, 5
    %v2971 = vsel %vm947, %v2966, %v2970
    %v2972 = vshrl.u32 %v2767, 16
    %v2974 = vrot.slane %v2972, 4
    %v2975 = vor.u32 %v2974, %v2970
    %v2976 = vrot.slane %v2975, 4
    %v2978 = vshrl.u32 %v2768, 16
    %v2980 = vrot.slane %v2978, 4
    %v2981 = vshll.u32 %v2768, 16
    %v2983 = vrot.slane %v2981, 5
    %v2984 = vor.u32 %v2980, %v2983
    %v2985 = vrot.slane %v2984, 4
    %v2987 = vshll.u32 %v2769, 16
    %v2989 = vrot.slane %v2987, 5
    %v2990 = vsel %vm947, %v2985, %v2989
    %v2991 = vshrl.u32 %v2769, 16
    %v2993 = vrot.slane %v2991, 4
    %v2994 = vor.u32 %v2993, %v2989
    %v2995 = vrot.slane %v2994, 4
    %v2997 = vshrl.u32 %v2770, 16
    %v2999 = vrot.slane %v2997, 4
    %v3000 = vshll.u32 %v2770, 16
    %v3002 = vrot.slane %v3000, 5
    %v3003 = vor.u32 %v2999, %v3002
    %v3004 = vrot.slane %v3003, 4
    %v3006 = vshll.u32 %v2771, 16
    %v3008 = vrot.slane %v3006, 5
    %v3009 = vsel %vm947, %v3004, %v3008
    %v3010 = vshrl.u32 %v2771, 16
    %v3012 = vrot.slane %v3010, 4
    %v3013 = vor.u32 %v3012, %v3008
    %v3014 = vrot.slane %v3013, 4
    %v3016 = vshrl.u32 %v2772, 16
    %v3018 = vrot.slane %v3016, 4
    %v3019 = vshll.u32 %v2772, 16
    %v3021 = vrot.slane %v3019, 5
    %v3022 = vor.u32 %v3018, %v3021
    %v3023 = vrot.slane %v3022, 4
    %v3025 = vshll.u32 %v2773, 16
    %v3027 = vrot.slane %v3025, 5
    %v3028 = vsel %vm947, %v3023, %v3027
    %v3029 = vshrl.u32 %v2773, 16
    %v3031 = vrot.slane %v3029, 4
    %v3032 = vor.u32 %v3031, %v3027
    %v3033 = vrot.slane %v3032, 4
    %v3035 = vshrl.u32 %v2774, 16
    %v3037 = vrot.slane %v3035, 4
    %v3038 = vshll.u32 %v2774, 16
    %v3040 = vrot.slane %v3038, 5
    %v3041 = vor.u32 %v3037, %v3040
    %v3042 = vrot.slane %v3041, 4
    %v3044 = vshll.u32 %v2775, 16
    %v3046 = vrot.slane %v3044, 5
    %v3047 = vsel %vm947, %v3042, %v3046
    %v3048 = vshrl.u32 %v2775, 16
    %v3050 = vrot.slane %v3048, 4
    %v3051 = vor.u32 %v3050, %v3046
    %v3052 = vrot.slane %v3051, 4
    %v3054 = vshrl.u32 %v2776, 16
    %v3056 = vrot.slane %v3054, 4
    %v3057 = vshll.u32 %v2776, 16
    %v3059 = vrot.slane %v3057, 5
    %v3060 = vor.u32 %v3056, %v3059
    %v3061 = vrot.slane %v3060, 4
    %v3063 = vshll.u32 %v2777, 16
    %v3065 = vrot.slane %v3063, 5
    %v3066 = vsel %vm947, %v3061, %v3065
    %v3067 = vshrl.u32 %v2777, 16
    %v3069 = vrot.slane %v3067, 4
    %v3070 = vor.u32 %v3069, %v3065
    %v3071 = vrot.slane %v3070, 4
    %v3073 = vshrl.u32 %v2778, 16
    %v3075 = vrot.slane %v3073, 4
    %v3076 = vshll.u32 %v2778, 16
    %v3078 = vrot.slane %v3076, 5
    %v3079 = vor.u32 %v3075, %v3078
    %v3080 = vrot.slane %v3079, 4
    %v3082 = vshll.u32 %v2779, 16
    %v3084 = vrot.slane %v3082, 5
    %v3085 = vsel %vm947, %v3080, %v3084
    %v3086 = vshrl.u32 %v2779, 16
    %v3088 = vrot.slane %v3086, 4
    %v3089 = vor.u32 %v3088, %v3084
    %v3090 = vrot.slane %v3089, 4
    %v3092 = vshrl.u32 %v2780, 16
    %v3094 = vrot.slane %v3092, 4
    %v3095 = vshll.u32 %v2780, 16
    %v3097 = vrot.slane %v3095, 5
    %v3098 = vor.u32 %v3094, %v3097
    %v3099 = vrot.slane %v3098, 4
    %v3101 = vshll.u32 %v2781, 16
    %v3103 = vrot.slane %v3101, 5
    %v3104 = vsel %vm947, %v3099, %v3103
    %v3105 = vshrl.u32 %v2781, 16
    %v3107 = vrot.slane %v3105, 4
    %v3108 = vor.u32 %v3107, %v3103
    %v3109 = vrot.slane %v3108, 4
    %v3111 = vshrl.u32 %v2782, 16
    %v3113 = vrot.slane %v3111, 4
    %v3114 = vshll.u32 %v2782, 16
    %v3116 = vrot.slane %v3114, 5
    %v3117 = vor.u32 %v3113, %v3116
    %v3118 = vrot.slane %v3117, 4
    %v3120 = vshll.u32 %v2783, 16
    %v3122 = vrot.slane %v3120, 5
    %v3123 = vsel %vm947, %v3118, %v3122
    %v3124 = vshrl.u32 %v2783, 16
    %v3126 = vrot.slane %v3124, 4
    %v3127 = vor.u32 %v3126, %v3122
    %v3128 = vrot.slane %v3127, 4
    %v3130 = vshrl.u32 %v2784, 16
    %v3132 = vrot.slane %v3130, 4
    %v3133 = vshll.u32 %v2784, 16
    %v3135 = vrot.slane %v3133, 5
    %v3136 = vor.u32 %v3132, %v3135
    %v3137 = vrot.slane %v3136, 4
    %v3139 = vshll.u32 %v2785, 16
    %v3141 = vrot.slane %v3139, 5
    %v3142 = vsel %vm947, %v3137, %v3141
    %v3143 = vshrl.u32 %v2785, 16
    %v3145 = vrot.slane %v3143, 4
    %v3146 = vor.u32 %v3145, %v3141
    %v3147 = vrot.slane %v3146, 4
    %v3149 = vshrl.u32 %v2786, 16
    %v3151 = vrot.slane %v3149, 4
    %v3152 = vshll.u32 %v2786, 16
    %v3154 = vrot.slane %v3152, 5
    %v3155 = vor.u32 %v3151, %v3154
    %v3156 = vrot.slane %v3155, 4
    %v3158 = vshll.u32 %v2787, 16
    %v3160 = vrot.slane %v3158, 5
    %v3161 = vsel %vm947, %v3156, %v3160
    %v3162 = vshrl.u32 %v2787, 16
    %v3164 = vrot.slane %v3162, 4
    %v3165 = vor.u32 %v3164, %v3160
    %v3166 = vrot.slane %v3165, 4
    %v3168 = vshrl.u32 %v2788, 16
    %v3170 = vrot.slane %v3168, 4
    %v3171 = vshll.u32 %v2788, 16
    %v3173 = vrot.slane %v3171, 5
    %v3174 = vor.u32 %v3170, %v3173
    %v3175 = vrot.slane %v3174, 4
    %v3177 = vshll.u32 %v2789, 16
    %v3179 = vrot.slane %v3177, 5
    %v3180 = vsel %vm947, %v3175, %v3179
    %v3181 = vshrl.u32 %v2789, 16
    %v3183 = vrot.slane %v3181, 4
    %v3184 = vor.u32 %v3183, %v3179
    %v3185 = vrot.slane %v3184, 4
    %v3187 = vshrl.u32 %v2790, 16
    %v3189 = vrot.slane %v3187, 4
    %v3190 = vshll.u32 %v2790, 16
    %v3192 = vrot.slane %v3190, 5
    %v3193 = vor.u32 %v3189, %v3192
    %v3194 = vrot.slane %v3193, 4
    %v3196 = vshll.u32 %v2791, 16
    %v3198 = vrot.slane %v3196, 5
    %v3199 = vsel %vm947, %v3194, %v3198
    %v3200 = vshrl.u32 %v2791, 16
    %v3202 = vrot.slane %v3200, 4
    %v3203 = vor.u32 %v3202, %v3198
    %v3204 = vrot.slane %v3203, 4
    %v3206 = vshrl.u32 %v2792, 16
    %v3208 = vrot.slane %v3206, 4
    %v3209 = vshll.u32 %v2792, 16
    %v3211 = vrot.slane %v3209, 5
    %v3212 = vor.u32 %v3208, %v3211
    %v3213 = vrot.slane %v3212, 4
    %v3215 = vshll.u32 %v2793, 16
    %v3217 = vrot.slane %v3215, 5
    %v3218 = vsel %vm947, %v3213, %v3217
    %v3219 = vshrl.u32 %v2793, 16
    %v3221 = vrot.slane %v3219, 4
    %v3222 = vor.u32 %v3221, %v3217
    %v3223 = vrot.slane %v3222, 4
    %v3225 = vshrl.u32 %v2794, 16
    %v3227 = vrot.slane %v3225, 4
    %v3228 = vshll.u32 %v2794, 16
    %v3230 = vrot.slane %v3228, 5
    %v3231 = vor.u32 %v3227, %v3230
    %v3232 = vrot.slane %v3231, 4
    %v3234 = vshll.u32 %v2795, 16
    %v3236 = vrot.slane %v3234, 5
    %v3237 = vsel %vm947, %v3232, %v3236
    %v3238 = vshrl.u32 %v2795, 16
    %v3240 = vrot.slane %v3238, 4
    %v3241 = vor.u32 %v3240, %v3236
    %v3242 = vrot.slane %v3241, 4
    %v3244 = vshrl.u32 %v2796, 16
    %v3246 = vrot.slane %v3244, 4
    %v3247 = vshll.u32 %v2796, 16
    %v3249 = vrot.slane %v3247, 5
    %v3250 = vor.u32 %v3246, %v3249
    %v3251 = vrot.slane %v3250, 4
    %v3253 = vshll.u32 %v2797, 16
    %v3255 = vrot.slane %v3253, 5
    %v3256 = vsel %vm947, %v3251, %v3255
    %v3257 = vshrl.u32 %v2797, 16
    %v3259 = vrot.slane %v3257, 4
    %v3260 = vor.u32 %v3259, %v3255
    %v3261 = vrot.slane %v3260, 4
    %v3263 = vshrl.u32 %v2798, 16
    %v3265 = vrot.slane %v3263, 4
    %v3266 = vshll.u32 %v2798, 16
    %v3268 = vrot.slane %v3266, 5
    %v3269 = vor.u32 %v3265, %v3268
    %v3270 = vrot.slane %v3269, 4
    %v3272 = vshll.u32 %v2799, 16
    %v3274 = vrot.slane %v3272, 5
    %v3275 = vsel %vm947, %v3270, %v3274
    %v3276 = vshrl.u32 %v2799, 16
    %v3278 = vrot.slane %v3276, 4
    %v3279 = vor.u32 %v3278, %v3274
    %v3280 = vrot.slane %v3279, 4
    %v3282 = vshrl.u32 %v2800, 16
    %v3284 = vrot.slane %v3282, 4
    %v3285 = vshll.u32 %v2800, 16
    %v3287 = vrot.slane %v3285, 5
    %v3288 = vor.u32 %v3284, %v3287
    %v3289 = vrot.slane %v3288, 4
    %v3291 = vshll.u32 %v2801, 16
    %v3293 = vrot.slane %v3291, 5
    %v3294 = vsel %vm947, %v3289, %v3293
    %v3295 = vshrl.u32 %v2801, 16
    %v3297 = vrot.slane %v3295, 4
    %v3298 = vor.u32 %v3297, %v3293
    %v3299 = vrot.slane %v3298, 4
    %v3301 = vshrl.u32 %v2802, 16
    %v3303 = vrot.slane %v3301, 4
    %v3304 = vshll.u32 %v2802, 16
    %v3306 = vrot.slane %v3304, 5
    %v3307 = vor.u32 %v3303, %v3306
    %v3308 = vrot.slane %v3307, 4
    %v3310 = vshll.u32 %v2803, 16
    %v3312 = vrot.slane %v3310, 5
    %v3313 = vsel %vm947, %v3308, %v3312
    %v3314 = vshrl.u32 %v2803, 16
    %v3316 = vrot.slane %v3314, 4
    %v3317 = vor.u32 %v3316, %v3312
    %v3318 = vrot.slane %v3317, 4
    %v3320 = vshrl.u32 %v2804, 16
    %v3322 = vrot.slane %v3320, 4
    %v3323 = vshll.u32 %v2804, 16
    %v3325 = vrot.slane %v3323, 5
    %v3326 = vor.u32 %v3322, %v3325
    %v3327 = vrot.slane %v3326, 4
    %v3329 = vshll.u32 %v2805, 16
    %v3331 = vrot.slane %v3329, 5
    %v3332 = vsel %vm947, %v3327, %v3331
    %v3333 = vshrl.u32 %v2805, 16
    %v3335 = vrot.slane %v3333, 4
    %v3336 = vor.u32 %v3335, %v3331
    %v3337 = vrot.slane %v3336, 4
    %3338 = vrot.lane.b32.xlu0 %v2819, 12
    %v3339 = vpop.permute.xlu0 %3338
    %3340 = vrot.lane.b32.xlu0 %v2824, 12
    %v3341 = vpop.permute.xlu0 %3340
    %3342 = vrot.lane.b32.xlu0 %v2838, 12
    %v3343 = vpop.permute.xlu0 %3342
    %3344 = vrot.lane.b32.xlu0 %v2843, 12
    %v3345 = vpop.permute.xlu0 %3344
    %3346 = vrot.lane.b32.xlu0 %v2857, 12
    %v3347 = vpop.permute.xlu0 %3346
    %3348 = vrot.lane.b32.xlu0 %v2862, 12
    %v3349 = vpop.permute.xlu0 %3348
    %3350 = vrot.lane.b32.xlu0 %v2876, 12
    %v3351 = vpop.permute.xlu0 %3350
    %3352 = vrot.lane.b32.xlu0 %v2881, 12
    %v3353 = vpop.permute.xlu0 %3352
    %3354 = vrot.lane.b32.xlu0 %v2895, 12
    %v3355 = vpop.permute.xlu0 %3354
    %3356 = vrot.lane.b32.xlu0 %v2900, 12
    %v3357 = vpop.permute.xlu0 %3356
    %3358 = vrot.lane.b32.xlu0 %v2914, 12
    %v3359 = vpop.permute.xlu0 %3358
    %3360 = vrot.lane.b32.xlu0 %v2919, 12
    %v3361 = vpop.permute.xlu0 %3360
    %3362 = vrot.lane.b32.xlu0 %v2933, 12
    %v3363 = vpop.permute.xlu0 %3362
    %3364 = vrot.lane.b32.xlu0 %v2938, 12
    %v3365 = vpop.permute.xlu0 %3364
    %3366 = vrot.lane.b32.xlu0 %v2952, 12
    %v3367 = vpop.permute.xlu0 %3366
    %3368 = vrot.lane.b32.xlu0 %v2957, 12
    %v3369 = vpop.permute.xlu0 %3368
    %3370 = vrot.lane.b32.xlu0 %v2971, 12
    %v3371 = vpop.permute.xlu0 %3370
    %3372 = vrot.lane.b32.xlu0 %v2976, 12
    %v3373 = vpop.permute.xlu0 %3372
    %3374 = vrot.lane.b32.xlu0 %v2990, 12
    %v3375 = vpop.permute.xlu0 %3374
    %3376 = vrot.lane.b32.xlu0 %v2995, 12
    %v3377 = vpop.permute.xlu0 %3376
    %3378 = vrot.lane.b32.xlu0 %v3009, 12
    %v3379 = vpop.permute.xlu0 %3378
    %3380 = vrot.lane.b32.xlu0 %v3014, 12
    %v3381 = vpop.permute.xlu0 %3380
    %3382 = vrot.lane.b32.xlu0 %v3028, 12
    %v3383 = vpop.permute.xlu0 %3382
    %3384 = vrot.lane.b32.xlu0 %v3033, 12
    %v3385 = vpop.permute.xlu0 %3384
    %3386 = vrot.lane.b32.xlu0 %v3047, 12
    %v3387 = vpop.permute.xlu0 %3386
    %3388 = vrot.lane.b32.xlu0 %v3052, 12
    %v3389 = vpop.permute.xlu0 %3388
    %3390 = vrot.lane.b32.xlu0 %v3066, 12
    %v3391 = vpop.permute.xlu0 %3390
    %3392 = vrot.lane.b32.xlu0 %v3071, 12
    %v3393 = vpop.permute.xlu0 %3392
    %3394 = vrot.lane.b32.xlu0 %v3085, 12
    %v3395 = vpop.permute.xlu0 %3394
    %3396 = vrot.lane.b32.xlu0 %v3090, 12
    %v3397 = vpop.permute.xlu0 %3396
    %3398 = vrot.lane.b32.xlu0 %v3104, 12
    %v3399 = vpop.permute.xlu0 %3398
    %3400 = vrot.lane.b32.xlu0 %v3109, 12
    %v3401 = vpop.permute.xlu0 %3400
    %3402 = vrot.lane.b32.xlu0 %v3123, 12
    %v3403 = vpop.permute.xlu0 %3402
    %3404 = vrot.lane.b32.xlu0 %v3128, 12
    %v3405 = vpop.permute.xlu0 %3404
    %3406 = vrot.lane.b32.xlu0 %v3142, 12
    %v3407 = vpop.permute.xlu0 %3406
    %3408 = vrot.lane.b32.xlu0 %v3147, 12
    %v3409 = vpop.permute.xlu0 %3408
    %3410 = vrot.lane.b32.xlu0 %v3161, 12
    %v3411 = vpop.permute.xlu0 %3410
    %3412 = vrot.lane.b32.xlu0 %v3166, 12
    %v3413 = vpop.permute.xlu0 %3412
    %3414 = vrot.lane.b32.xlu0 %v3180, 12
    %v3415 = vpop.permute.xlu0 %3414
    %3416 = vrot.lane.b32.xlu0 %v3185, 12
    %v3417 = vpop.permute.xlu0 %3416
    %3418 = vrot.lane.b32.xlu0 %v3199, 12
    %v3419 = vpop.permute.xlu0 %3418
    %3420 = vrot.lane.b32.xlu0 %v3204, 12
    %v3421 = vpop.permute.xlu0 %3420
    %3422 = vrot.lane.b32.xlu0 %v3218, 12
    %v3423 = vpop.permute.xlu0 %3422
    %3424 = vrot.lane.b32.xlu0 %v3223, 12
    %v3425 = vpop.permute.xlu0 %3424
    %3426 = vrot.lane.b32.xlu0 %v3237, 12
    %v3427 = vpop.permute.xlu0 %3426
    %3428 = vrot.lane.b32.xlu0 %v3242, 12
    %v3429 = vpop.permute.xlu0 %3428
    %3430 = vrot.lane.b32.xlu0 %v3256, 12
    %v3431 = vpop.permute.xlu0 %3430
    %3432 = vrot.lane.b32.xlu0 %v3261, 12
    %v3433 = vpop.permute.xlu0 %3432
    %3434 = vrot.lane.b32.xlu0 %v3275, 12
    %v3435 = vpop.permute.xlu0 %3434
    %3436 = vrot.lane.b32.xlu0 %v3280, 12
    %v3437 = vpop.permute.xlu0 %3436
    %3438 = vrot.lane.b32.xlu0 %v3294, 12
    %v3439 = vpop.permute.xlu0 %3438
    %3440 = vrot.lane.b32.xlu0 %v3299, 12
    %v3441 = vpop.permute.xlu0 %3440
    %3442 = vrot.lane.b32.xlu0 %v3313, 12
    %v3443 = vpop.permute.xlu0 %3442
    %3444 = vrot.lane.b32.xlu0 %v3318, 12
    %v3445 = vpop.permute.xlu0 %3444
    %3446 = vrot.lane.b32.xlu0 %v3332, 12
    %v3447 = vpop.permute.xlu0 %3446
    %3448 = vrot.lane.b32.xlu0 %v3337, 12
    %v3449 = vpop.permute.xlu0 %3448
    %vm3506 = vcmask 117856
    %3507 = vst.msk [vmem:[#allocation3] sm:$0xf] %vm3506, %v3339
    %vm3508 = vcmask 116832
    %3509 = vst.msk [vmem:[#allocation3 + $0x4] sm:$0x7] %vm3508, %v3341
    %3510 = vst.msk [vmem:[#allocation3 + $0x8] sm:$0xf] %vm3506, %v3343
    %3511 = vst.msk [vmem:[#allocation3 + $0xc] sm:$0x7] %vm3508, %v3345
    %3512 = vst.msk [vmem:[#allocation3 + $0x10] sm:$0xf] %vm3506, %v3347
    %3513 = vst.msk [vmem:[#allocation3 + $0x14] sm:$0x7] %vm3508, %v3349
    %3514 = vst.msk [vmem:[#allocation3 + $0x18] sm:$0xf] %vm3506, %v3351
    %3515 = vst.msk [vmem:[#allocation3 + $0x1c] sm:$0x7] %vm3508, %v3353
    %3516 = vst.msk [vmem:[#allocation3 + $0x20] sm:$0xf] %vm3506, %v3355
    %3517 = vst.msk [vmem:[#allocation3 + $0x24] sm:$0x7] %vm3508, %v3357
    %3518 = vst.msk [vmem:[#allocation3 + $0x28] sm:$0xf] %vm3506, %v3359
    %3519 = vst.msk [vmem:[#allocation3 + $0x2c] sm:$0x7] %vm3508, %v3361
    %3520 = vst.msk [vmem:[#allocation3 + $0x30] sm:$0xf] %vm3506, %v3363
    %3521 = vst.msk [vmem:[#allocation3 + $0x34] sm:$0x7] %vm3508, %v3365
    %3522 = vst.msk [vmem:[#allocation3 + $0x38] sm:$0xf] %vm3506, %v3367
    %3523 = vst.msk [vmem:[#allocation3 + $0x3c] sm:$0x7] %vm3508, %v3369
    %3524 = vst.msk [vmem:[#allocation3 + $0x40] sm:$0xf] %vm3506, %v3371
    %3525 = vst.msk [vmem:[#allocation3 + $0x44] sm:$0x7] %vm3508, %v3373
    %3526 = vst.msk [vmem:[#allocation3 + $0x48] sm:$0xf] %vm3506, %v3375
    %3527 = vst.msk [vmem:[#allocation3 + $0x4c] sm:$0x7] %vm3508, %v3377
    %3528 = vst.msk [vmem:[#allocation3 + $0x50] sm:$0xf] %vm3506, %v3379
    %3529 = vst.msk [vmem:[#allocation3 + $0x54] sm:$0x7] %vm3508, %v3381
    %3530 = vst.msk [vmem:[#allocation3 + $0x58] sm:$0xf] %vm3506, %v3383
    %3531 = vst.msk [vmem:[#allocation3 + $0x5c] sm:$0x7] %vm3508, %v3385
    %3532 = vst.msk [vmem:[#allocation3 + $0x60] sm:$0xf] %vm3506, %v3387
    %3533 = vst.msk [vmem:[#allocation3 + $0x64] sm:$0x7] %vm3508, %v3389
    %3534 = vst.msk [vmem:[#allocation3 + $0x68] sm:$0xf] %vm3506, %v3391
    %3535 = vst.msk [vmem:[#allocation3 + $0x6c] sm:$0x7] %vm3508, %v3393
    %3536 = vst.msk [vmem:[#allocation3 + $0x70] sm:$0xf] %vm3506, %v3395
    %3537 = vst.msk [vmem:[#allocation3 + $0x74] sm:$0x7] %vm3508, %v3397
    %3538 = vst.msk [vmem:[#allocation3 + $0x78] sm:$0xf] %vm3506, %v3399
    %3539 = vst.msk [vmem:[#allocation3 + $0x7c] sm:$0x7] %vm3508, %v3401
    %3540 = vst.msk [vmem:[#allocation3 + $0x80] sm:$0xf] %vm3506, %v3403
    %3541 = vst.msk [vmem:[#allocation3 + $0x84] sm:$0x7] %vm3508, %v3405
    %3542 = vst.msk [vmem:[#allocation3 + $0x88] sm:$0xf] %vm3506, %v3407
    %3543 = vst.msk [vmem:[#allocation3 + $0x8c] sm:$0x7] %vm3508, %v3409
    %3544 = vst.msk [vmem:[#allocation3 + $0x90] sm:$0xf] %vm3506, %v3411
    %3545 = vst.msk [vmem:[#allocation3 + $0x94] sm:$0x7] %vm3508, %v3413
    %3546 = vst.msk [vmem:[#allocation3 + $0x98] sm:$0xf] %vm3506, %v3415
    %3547 = vst.msk [vmem:[#allocation3 + $0x9c] sm:$0x7] %vm3508, %v3417
    %3548 = vst.msk [vmem:[#allocation3 + $0xa0] sm:$0xf] %vm3506, %v3419
    %3549 = vst.msk [vmem:[#allocation3 + $0xa4] sm:$0x7] %vm3508, %v3421
    %3550 = vst.msk [vmem:[#allocation3 + $0xa8] sm:$0xf] %vm3506, %v3423
    %3551 = vst.msk [vmem:[#allocation3 + $0xac] sm:$0x7] %vm3508, %v3425
    %3552 = vst.msk [vmem:[#allocation3 + $0xb0] sm:$0xf] %vm3506, %v3427
    %3553 = vst.msk [vmem:[#allocation3 + $0xb4] sm:$0x7] %vm3508, %v3429
    %3554 = vst.msk [vmem:[#allocation3 + $0xb8] sm:$0xf] %vm3506, %v3431
    %3555 = vst.msk [vmem:[#allocation3 + $0xbc] sm:$0x7] %vm3508, %v3433
    %3556 = vst.msk [vmem:[#allocation3 + $0xc0] sm:$0xf] %vm3506, %v3435
    %3557 = vst.msk [vmem:[#allocation3 + $0xc4] sm:$0x7] %vm3508, %v3437
    %3558 = vst.msk [vmem:[#allocation3 + $0xc8] sm:$0xf] %vm3506, %v3439
    %3559 = vst.msk [vmem:[#allocation3 + $0xcc] sm:$0x7] %vm3508, %v3441
    %3560 = vst.msk [vmem:[#allocation3 + $0xd0] sm:$0xf] %vm3506, %v3443
    %3561 = vst.msk [vmem:[#allocation3 + $0xd4] sm:$0x7] %vm3508, %v3445
    %3562 = vst.msk [vmem:[#allocation3 + $0xd8] sm:$0xf] %vm3506, %v3447
    %3563 = vst.msk [vmem:[#allocation3 + $0xdc] sm:$0x7] %vm3508, %v3449
    %v3564 = vld [vmem:[%s2243] sm:$0xfe]
    %v3565 = vld [vmem:[%s2243 + $0x8] sm:$0xfe]
    %v3566 = vld [vmem:[%s2243 + $0x10] sm:$0xfe]
    %v3567 = vld [vmem:[%s2243 + $0x18] sm:$0xfe]
    %v3568 = vld [vmem:[%s2243 + $0x20] sm:$0xfe]
    %v3569 = vld [vmem:[%s2243 + $0x28] sm:$0xfe]
    %v3570 = vld [vmem:[%s2243 + $0x30] sm:$0xfe]
    %v3571 = vld [vmem:[%s2243 + $0x38] sm:$0xfe]
    %v3572 = vld [vmem:[%s2243 + $0x40] sm:$0xfe]
    %v3573 = vld [vmem:[%s2243 + $0x48] sm:$0xfe]
    %v3574 = vld [vmem:[%s2243 + $0x50] sm:$0xfe]
    %v3575 = vld [vmem:[%s2243 + $0x58] sm:$0xfe]
    %v3576 = vld [vmem:[%s2243 + $0x60] sm:$0xfe]
    %v3577 = vld [vmem:[%s2243 + $0x68] sm:$0xfe]
    %v3578 = vld [vmem:[%s2243 + $0x80] sm:$0xfe]
    %v3579 = vld [vmem:[%s2243 + $0x88] sm:$0xfe]
    %v3580 = vld [vmem:[%s2243 + $0x90] sm:$0xfe]
    %v3581 = vld [vmem:[%s2243 + $0x98] sm:$0xfe]
    %v3582 = vld [vmem:[%s2243 + $0xa0] sm:$0xfe]
    %v3583 = vld [vmem:[%s2243 + $0xa8] sm:$0xfe]
    %v3584 = vld [vmem:[%s2243 + $0xb0] sm:$0xfe]
    %v3585 = vld [vmem:[%s2243 + $0xb8] sm:$0xfe]
    %v3586 = vld [vmem:[%s2243 + $0xc0] sm:$0xfe]
    %v3587 = vld [vmem:[%s2243 + $0xc8] sm:$0xfe]
    %v3588 = vld [vmem:[%s2243 + $0xd0] sm:$0xfe]
    %v3589 = vld [vmem:[%s2243 + $0xd8] sm:$0xfe]
    %v3590 = vld [vmem:[%s2243 + $0xe0] sm:$0xfe]
    %v3591 = vld [vmem:[%s2243 + $0xe8] sm:$0xfe]
    %v3620 = vunpack.c.l.b16 %v3564
    %v3621 = vunpack.c.h.b16 %v3564
    %v3622 = vunpack.c.l.b16 %v3565
    %v3623 = vunpack.c.h.b16 %v3565
    %v3624 = vunpack.c.l.b16 %v3566
    %v3625 = vunpack.c.h.b16 %v3566
    %v3626 = vunpack.c.l.b16 %v3567
    %v3627 = vunpack.c.h.b16 %v3567
    %v3628 = vunpack.c.l.b16 %v3568
    %v3629 = vunpack.c.h.b16 %v3568
    %v3630 = vunpack.c.l.b16 %v3569
    %v3631 = vunpack.c.h.b16 %v3569
    %v3632 = vunpack.c.l.b16 %v3570
    %v3633 = vunpack.c.h.b16 %v3570
    %v3634 = vunpack.c.l.b16 %v3571
    %v3635 = vunpack.c.h.b16 %v3571
    %v3636 = vunpack.c.l.b16 %v3572
    %v3637 = vunpack.c.h.b16 %v3572
    %v3638 = vunpack.c.l.b16 %v3573
    %v3639 = vunpack.c.h.b16 %v3573
    %v3640 = vunpack.c.l.b16 %v3574
    %v3641 = vunpack.c.h.b16 %v3574
    %v3642 = vunpack.c.l.b16 %v3575
    %v3643 = vunpack.c.h.b16 %v3575
    %v3644 = vunpack.c.l.b16 %v3576
    %v3645 = vunpack.c.h.b16 %v3576
    %v3646 = vunpack.c.l.b16 %v3577
    %v3647 = vunpack.c.h.b16 %v3577
    %v3648 = vunpack.c.l.b16 %v3578
    %v3649 = vunpack.c.h.b16 %v3578
    %v3650 = vunpack.c.l.b16 %v3579
    %v3651 = vunpack.c.h.b16 %v3579
    %v3652 = vunpack.c.l.b16 %v3580
    %v3653 = vunpack.c.h.b16 %v3580
    %v3654 = vunpack.c.l.b16 %v3581
    %v3655 = vunpack.c.h.b16 %v3581
    %v3656 = vunpack.c.l.b16 %v3582
    %v3657 = vunpack.c.h.b16 %v3582
    %v3658 = vunpack.c.l.b16 %v3583
    %v3659 = vunpack.c.h.b16 %v3583
    %v3660 = vunpack.c.l.b16 %v3584
    %v3661 = vunpack.c.h.b16 %v3584
    %v3662 = vunpack.c.l.b16 %v3585
    %v3663 = vunpack.c.h.b16 %v3585
    %v3664 = vunpack.c.l.b16 %v3586
    %v3665 = vunpack.c.h.b16 %v3586
    %v3666 = vunpack.c.l.b16 %v3587
    %v3667 = vunpack.c.h.b16 %v3587
    %v3668 = vunpack.c.l.b16 %v3588
    %v3669 = vunpack.c.h.b16 %v3588
    %v3670 = vunpack.c.l.b16 %v3589
    %v3671 = vunpack.c.h.b16 %v3589
    %v3672 = vunpack.c.l.b16 %v3590
    %v3673 = vunpack.c.h.b16 %v3590
    %v3674 = vunpack.c.l.b16 %v3591
    %v3675 = vunpack.c.h.b16 %v3591
    %v3676 = vpack.c.b16 %v3620, %v3620
    %v3677 = vpack.c.b16 %v3621, %v3621
    %v3678 = vpack.c.b16 %v3622, %v3622
    %v3679 = vpack.c.b16 %v3623, %v3623
    %v3680 = vpack.c.b16 %v3624, %v3624
    %v3681 = vpack.c.b16 %v3625, %v3625
    %v3682 = vpack.c.b16 %v3626, %v3626
    %v3683 = vpack.c.b16 %v3627, %v3627
    %v3684 = vpack.c.b16 %v3628, %v3628
    %v3685 = vpack.c.b16 %v3629, %v3629
    %v3686 = vpack.c.b16 %v3630, %v3630
    %v3687 = vpack.c.b16 %v3631, %v3631
    %v3688 = vpack.c.b16 %v3632, %v3632
    %v3689 = vpack.c.b16 %v3633, %v3633
    %v3690 = vpack.c.b16 %v3634, %v3634
    %v3691 = vpack.c.b16 %v3635, %v3635
    %v3692 = vpack.c.b16 %v3636, %v3636
    %v3693 = vpack.c.b16 %v3637, %v3637
    %v3694 = vpack.c.b16 %v3638, %v3638
    %v3695 = vpack.c.b16 %v3639, %v3639
    %v3696 = vpack.c.b16 %v3640, %v3640
    %v3697 = vpack.c.b16 %v3641, %v3641
    %v3698 = vpack.c.b16 %v3642, %v3642
    %v3699 = vpack.c.b16 %v3643, %v3643
    %v3700 = vpack.c.b16 %v3644, %v3644
    %v3701 = vpack.c.b16 %v3645, %v3645
    %v3702 = vpack.c.b16 %v3646, %v3646
    %v3703 = vpack.c.b16 %v3647, %v3647
    %v3704 = vpack.c.b16 %v3648, %v3648
    %v3705 = vpack.c.b16 %v3649, %v3649
    %v3706 = vpack.c.b16 %v3650, %v3650
    %v3707 = vpack.c.b16 %v3651, %v3651
    %v3708 = vpack.c.b16 %v3652, %v3652
    %v3709 = vpack.c.b16 %v3653, %v3653
    %v3710 = vpack.c.b16 %v3654, %v3654
    %v3711 = vpack.c.b16 %v3655, %v3655
    %v3712 = vpack.c.b16 %v3656, %v3656
    %v3713 = vpack.c.b16 %v3657, %v3657
    %v3714 = vpack.c.b16 %v3658, %v3658
    %v3715 = vpack.c.b16 %v3659, %v3659
    %v3716 = vpack.c.b16 %v3660, %v3660
    %v3717 = vpack.c.b16 %v3661, %v3661
    %v3718 = vpack.c.b16 %v3662, %v3662
    %v3719 = vpack.c.b16 %v3663, %v3663
    %v3720 = vpack.c.b16 %v3664, %v3664
    %v3721 = vpack.c.b16 %v3665, %v3665
    %v3722 = vpack.c.b16 %v3666, %v3666
    %v3723 = vpack.c.b16 %v3667, %v3667
    %v3724 = vpack.c.b16 %v3668, %v3668
    %v3725 = vpack.c.b16 %v3669, %v3669
    %v3726 = vpack.c.b16 %v3670, %v3670
    %v3727 = vpack.c.b16 %v3671, %v3671
    %v3728 = vpack.c.b16 %v3672, %v3672
    %v3729 = vpack.c.b16 %v3673, %v3673
    %v3730 = vpack.c.b16 %v3674, %v3674
    %v3731 = vpack.c.b16 %v3675, %v3675
    %v3732 = vrot.slane %v3676, 5
    %v3733 = vrot.slane %v3732, 4
    %v3734 = vrot.slane %v3677, 5
    %v3735 = vsel %vm1876, %v3733, %v3734
    %v3736 = vrot.slane %v3734, 4
    %v3737 = vrot.slane %v3678, 5
    %v3738 = vrot.slane %v3737, 4
    %v3739 = vrot.slane %v3679, 5
    %v3740 = vsel %vm1876, %v3738, %v3739
    %v3741 = vrot.slane %v3739, 4
    %v3742 = vrot.slane %v3680, 5
    %v3743 = vrot.slane %v3742, 4
    %v3744 = vrot.slane %v3681, 5
    %v3745 = vsel %vm1876, %v3743, %v3744
    %v3746 = vrot.slane %v3744, 4
    %v3747 = vrot.slane %v3682, 5
    %v3748 = vrot.slane %v3747, 4
    %v3749 = vrot.slane %v3683, 5
    %v3750 = vsel %vm1876, %v3748, %v3749
    %v3751 = vrot.slane %v3749, 4
    %v3752 = vrot.slane %v3684, 5
    %v3753 = vrot.slane %v3752, 4
    %v3754 = vrot.slane %v3685, 5
    %v3755 = vsel %vm1876, %v3753, %v3754
    %v3756 = vrot.slane %v3754, 4
    %v3757 = vrot.slane %v3686, 5
    %v3758 = vrot.slane %v3757, 4
    %v3759 = vrot.slane %v3687, 5
    %v3760 = vsel %vm1876, %v3758, %v3759
    %v3761 = vrot.slane %v3759, 4
    %v3762 = vrot.slane %v3688, 5
    %v3763 = vrot.slane %v3762, 4
    %v3764 = vrot.slane %v3689, 5
    %v3765 = vsel %vm1876, %v3763, %v3764
    %v3766 = vrot.slane %v3764, 4
    %v3767 = vrot.slane %v3690, 5
    %v3768 = vrot.slane %v3767, 4
    %v3769 = vrot.slane %v3691, 5
    %v3770 = vsel %vm1876, %v3768, %v3769
    %v3771 = vrot.slane %v3769, 4
    %v3772 = vrot.slane %v3692, 5
    %v3773 = vrot.slane %v3772, 4
    %v3774 = vrot.slane %v3693, 5
    %v3775 = vsel %vm1876, %v3773, %v3774
    %v3776 = vrot.slane %v3774, 4
    %v3777 = vrot.slane %v3694, 5
    %v3778 = vrot.slane %v3777, 4
    %v3779 = vrot.slane %v3695, 5
    %v3780 = vsel %vm1876, %v3778, %v3779
    %v3781 = vrot.slane %v3779, 4
    %v3782 = vrot.slane %v3696, 5
    %v3783 = vrot.slane %v3782, 4
    %v3784 = vrot.slane %v3697, 5
    %v3785 = vsel %vm1876, %v3783, %v3784
    %v3786 = vrot.slane %v3784, 4
    %v3787 = vrot.slane %v3698, 5
    %v3788 = vrot.slane %v3787, 4
    %v3789 = vrot.slane %v3699, 5
    %v3790 = vsel %vm1876, %v3788, %v3789
    %v3791 = vrot.slane %v3789, 4
    %v3792 = vrot.slane %v3700, 5
    %v3793 = vrot.slane %v3792, 4
    %v3794 = vrot.slane %v3701, 5
    %v3795 = vsel %vm1876, %v3793, %v3794
    %v3796 = vrot.slane %v3794, 4
    %v3797 = vrot.slane %v3702, 5
    %v3798 = vrot.slane %v3797, 4
    %v3799 = vrot.slane %v3703, 5
    %v3800 = vsel %vm1876, %v3798, %v3799
    %v3801 = vrot.slane %v3799, 4
    %v3802 = vrot.slane %v3704, 5
    %v3803 = vrot.slane %v3802, 4
    %v3804 = vrot.slane %v3705, 5
    %v3805 = vsel %vm1876, %v3803, %v3804
    %v3806 = vrot.slane %v3804, 4
    %v3807 = vrot.slane %v3706, 5
    %v3808 = vrot.slane %v3807, 4
    %v3809 = vrot.slane %v3707, 5
    %v3810 = vsel %vm1876, %v3808, %v3809
    %v3811 = vrot.slane %v3809, 4
    %v3812 = vrot.slane %v3708, 5
    %v3813 = vrot.slane %v3812, 4
    %v3814 = vrot.slane %v3709, 5
    %v3815 = vsel %vm1876, %v3813, %v3814
    %v3816 = vrot.slane %v3814, 4
    %v3817 = vrot.slane %v3710, 5
    %v3818 = vrot.slane %v3817, 4
    %v3819 = vrot.slane %v3711, 5
    %v3820 = vsel %vm1876, %v3818, %v3819
    %v3821 = vrot.slane %v3819, 4
    %v3822 = vrot.slane %v3712, 5
    %v3823 = vrot.slane %v3822, 4
    %v3824 = vrot.slane %v3713, 5
    %v3825 = vsel %vm1876, %v3823, %v3824
    %v3826 = vrot.slane %v3824, 4
    %v3827 = vrot.slane %v3714, 5
    %v3828 = vrot.slane %v3827, 4
    %v3829 = vrot.slane %v3715, 5
    %v3830 = vsel %vm1876, %v3828, %v3829
    %v3831 = vrot.slane %v3829, 4
    %v3832 = vrot.slane %v3716, 5
    %v3833 = vrot.slane %v3832, 4
    %v3834 = vrot.slane %v3717, 5
    %v3835 = vsel %vm1876, %v3833, %v3834
    %v3836 = vrot.slane %v3834, 4
    %v3837 = vrot.slane %v3718, 5
    %v3838 = vrot.slane %v3837, 4
    %v3839 = vrot.slane %v3719, 5
    %v3840 = vsel %vm1876, %v3838, %v3839
    %v3841 = vrot.slane %v3839, 4
    %v3842 = vrot.slane %v3720, 5
    %v3843 = vrot.slane %v3842, 4
    %v3844 = vrot.slane %v3721, 5
    %v3845 = vsel %vm1876, %v3843, %v3844
    %v3846 = vrot.slane %v3844, 4
    %v3847 = vrot.slane %v3722, 5
    %v3848 = vrot.slane %v3847, 4
    %v3849 = vrot.slane %v3723, 5
    %v3850 = vsel %vm1876, %v3848, %v3849
    %v3851 = vrot.slane %v3849, 4
    %v3852 = vrot.slane %v3724, 5
    %v3853 = vrot.slane %v3852, 4
    %v3854 = vrot.slane %v3725, 5
    %v3855 = vsel %vm1876, %v3853, %v3854
    %v3856 = vrot.slane %v3854, 4
    %v3857 = vrot.slane %v3726, 5
    %v3858 = vrot.slane %v3857, 4
    %v3859 = vrot.slane %v3727, 5
    %v3860 = vsel %vm1876, %v3858, %v3859
    %v3861 = vrot.slane %v3859, 4
    %v3862 = vrot.slane %v3728, 5
    %v3863 = vrot.slane %v3862, 4
    %v3864 = vrot.slane %v3729, 5
    %v3865 = vsel %vm1876, %v3863, %v3864
    %v3866 = vrot.slane %v3864, 4
    %v3867 = vrot.slane %v3730, 5
    %v3868 = vrot.slane %v3867, 4
    %v3869 = vrot.slane %v3731, 5
    %v3870 = vsel %vm1876, %v3868, %v3869
    %v3871 = vrot.slane %v3869, 4
    %3872 = vrot.lane.b32.xlu0 %v3735, 15
    %v3873 = vpop.permute.xlu0 %3872
    %3874 = vrot.lane.b32.xlu0 %v3736, 15
    %v3875 = vpop.permute.xlu0 %3874
    %3876 = vrot.lane.b32.xlu0 %v3740, 15
    %v3877 = vpop.permute.xlu0 %3876
    %3878 = vrot.lane.b32.xlu0 %v3741, 15
    %v3879 = vpop.permute.xlu0 %3878
    %3880 = vrot.lane.b32.xlu0 %v3745, 15
    %v3881 = vpop.permute.xlu0 %3880
    %3882 = vrot.lane.b32.xlu0 %v3746, 15
    %v3883 = vpop.permute.xlu0 %3882
    %3884 = vrot.lane.b32.xlu0 %v3750, 15
    %v3885 = vpop.permute.xlu0 %3884
    %3886 = vrot.lane.b32.xlu0 %v3751, 15
    %v3887 = vpop.permute.xlu0 %3886
    %3888 = vrot.lane.b32.xlu0 %v3755, 15
    %v3889 = vpop.permute.xlu0 %3888
    %3890 = vrot.lane.b32.xlu0 %v3756, 15
    %v3891 = vpop.permute.xlu0 %3890
    %3892 = vrot.lane.b32.xlu0 %v3760, 15
    %v3893 = vpop.permute.xlu0 %3892
    %3894 = vrot.lane.b32.xlu0 %v3761, 15
    %v3895 = vpop.permute.xlu0 %3894
    %3896 = vrot.lane.b32.xlu0 %v3765, 15
    %v3897 = vpop.permute.xlu0 %3896
    %3898 = vrot.lane.b32.xlu0 %v3766, 15
    %v3899 = vpop.permute.xlu0 %3898
    %3900 = vrot.lane.b32.xlu0 %v3770, 15
    %v3901 = vpop.permute.xlu0 %3900
    %3902 = vrot.lane.b32.xlu0 %v3771, 15
    %v3903 = vpop.permute.xlu0 %3902
    %3904 = vrot.lane.b32.xlu0 %v3775, 15
    %v3905 = vpop.permute.xlu0 %3904
    %3906 = vrot.lane.b32.xlu0 %v3776, 15
    %v3907 = vpop.permute.xlu0 %3906
    %3908 = vrot.lane.b32.xlu0 %v3780, 15
    %v3909 = vpop.permute.xlu0 %3908
    %3910 = vrot.lane.b32.xlu0 %v3781, 15
    %v3911 = vpop.permute.xlu0 %3910
    %3912 = vrot.lane.b32.xlu0 %v3785, 15
    %v3913 = vpop.permute.xlu0 %3912
    %3914 = vrot.lane.b32.xlu0 %v3786, 15
    %v3915 = vpop.permute.xlu0 %3914
    %3916 = vrot.lane.b32.xlu0 %v3790, 15
    %v3917 = vpop.permute.xlu0 %3916
    %3918 = vrot.lane.b32.xlu0 %v3791, 15
    %v3919 = vpop.permute.xlu0 %3918
    %3920 = vrot.lane.b32.xlu0 %v3795, 15
    %v3921 = vpop.permute.xlu0 %3920
    %3922 = vrot.lane.b32.xlu0 %v3796, 15
    %v3923 = vpop.permute.xlu0 %3922
    %3924 = vrot.lane.b32.xlu0 %v3800, 15
    %v3925 = vpop.permute.xlu0 %3924
    %3926 = vrot.lane.b32.xlu0 %v3801, 15
    %v3927 = vpop.permute.xlu0 %3926
    %3928 = vrot.lane.b32.xlu0 %v3805, 15
    %v3929 = vpop.permute.xlu0 %3928
    %3930 = vrot.lane.b32.xlu0 %v3806, 15
    %v3931 = vpop.permute.xlu0 %3930
    %3932 = vrot.lane.b32.xlu0 %v3810, 15
    %v3933 = vpop.permute.xlu0 %3932
    %3934 = vrot.lane.b32.xlu0 %v3811, 15
    %v3935 = vpop.permute.xlu0 %3934
    %3936 = vrot.lane.b32.xlu0 %v3815, 15
    %v3937 = vpop.permute.xlu0 %3936
    %3938 = vrot.lane.b32.xlu0 %v3816, 15
    %v3939 = vpop.permute.xlu0 %3938
    %3940 = vrot.lane.b32.xlu0 %v3820, 15
    %v3941 = vpop.permute.xlu0 %3940
    %3942 = vrot.lane.b32.xlu0 %v3821, 15
    %v3943 = vpop.permute.xlu0 %3942
    %3944 = vrot.lane.b32.xlu0 %v3825, 15
    %v3945 = vpop.permute.xlu0 %3944
    %3946 = vrot.lane.b32.xlu0 %v3826, 15
    %v3947 = vpop.permute.xlu0 %3946
    %3948 = vrot.lane.b32.xlu0 %v3830, 15
    %v3949 = vpop.permute.xlu0 %3948
    %3950 = vrot.lane.b32.xlu0 %v3831, 15
    %v3951 = vpop.permute.xlu0 %3950
    %3952 = vrot.lane.b32.xlu0 %v3835, 15
    %v3953 = vpop.permute.xlu0 %3952
    %3954 = vrot.lane.b32.xlu0 %v3836, 15
    %v3955 = vpop.permute.xlu0 %3954
    %3956 = vrot.lane.b32.xlu0 %v3840, 15
    %v3957 = vpop.permute.xlu0 %3956
    %3958 = vrot.lane.b32.xlu0 %v3841, 15
    %v3959 = vpop.permute.xlu0 %3958
    %3960 = vrot.lane.b32.xlu0 %v3845, 15
    %v3961 = vpop.permute.xlu0 %3960
    %3962 = vrot.lane.b32.xlu0 %v3846, 15
    %v3963 = vpop.permute.xlu0 %3962
    %3964 = vrot.lane.b32.xlu0 %v3850, 15
    %v3965 = vpop.permute.xlu0 %3964
    %3966 = vrot.lane.b32.xlu0 %v3851, 15
    %v3967 = vpop.permute.xlu0 %3966
    %3968 = vrot.lane.b32.xlu0 %v3855, 15
    %v3969 = vpop.permute.xlu0 %3968
    %3970 = vrot.lane.b32.xlu0 %v3856, 15
    %v3971 = vpop.permute.xlu0 %3970
    %3972 = vrot.lane.b32.xlu0 %v3860, 15
    %v3973 = vpop.permute.xlu0 %3972
    %3974 = vrot.lane.b32.xlu0 %v3861, 15
    %v3975 = vpop.permute.xlu0 %3974
    %3976 = vrot.lane.b32.xlu0 %v3865, 15
    %v3977 = vpop.permute.xlu0 %3976
    %3978 = vrot.lane.b32.xlu0 %v3866, 15
    %v3979 = vpop.permute.xlu0 %3978
    %3980 = vrot.lane.b32.xlu0 %v3870, 15
    %v3981 = vpop.permute.xlu0 %3980
    %3982 = vrot.lane.b32.xlu0 %v3871, 15
    %v3983 = vpop.permute.xlu0 %3982
    %vm4040 = vcmask 142456
    %4041 = vst.msk [vmem:[#allocation3] sm:$0xf] %vm4040, %v3873
    %vm4042 = vcmask 141432
    %4043 = vst.msk [vmem:[#allocation3 + $0x4] sm:$0x7] %vm4042, %v3875
    %4044 = vst.msk [vmem:[#allocation3 + $0x8] sm:$0xf] %vm4040, %v3877
    %4045 = vst.msk [vmem:[#allocation3 + $0xc] sm:$0x7] %vm4042, %v3879
    %4046 = vst.msk [vmem:[#allocation3 + $0x10] sm:$0xf] %vm4040, %v3881
    %4047 = vst.msk [vmem:[#allocation3 + $0x14] sm:$0x7] %vm4042, %v3883
    %4048 = vst.msk [vmem:[#allocation3 + $0x18] sm:$0xf] %vm4040, %v3885
    %4049 = vst.msk [vmem:[#allocation3 + $0x1c] sm:$0x7] %vm4042, %v3887
    %4050 = vst.msk [vmem:[#allocation3 + $0x20] sm:$0xf] %vm4040, %v3889
    %4051 = vst.msk [vmem:[#allocation3 + $0x24] sm:$0x7] %vm4042, %v3891
    %4052 = vst.msk [vmem:[#allocation3 + $0x28] sm:$0xf] %vm4040, %v3893
    %4053 = vst.msk [vmem:[#allocation3 + $0x2c] sm:$0x7] %vm4042, %v3895
    %4054 = vst.msk [vmem:[#allocation3 + $0x30] sm:$0xf] %vm4040, %v3897
    %4055 = vst.msk [vmem:[#allocation3 + $0x34] sm:$0x7] %vm4042, %v3899
    %4056 = vst.msk [vmem:[#allocation3 + $0x38] sm:$0xf] %vm4040, %v3901
    %4057 = vst.msk [vmem:[#allocation3 + $0x3c] sm:$0x7] %vm4042, %v3903
    %4058 = vst.msk [vmem:[#allocation3 + $0x40] sm:$0xf] %vm4040, %v3905
    %4059 = vst.msk [vmem:[#allocation3 + $0x44] sm:$0x7] %vm4042, %v3907
    %4060 = vst.msk [vmem:[#allocation3 + $0x48] sm:$0xf] %vm4040, %v3909
    %4061 = vst.msk [vmem:[#allocation3 + $0x4c] sm:$0x7] %vm4042, %v3911
    %4062 = vst.msk [vmem:[#allocation3 + $0x50] sm:$0xf] %vm4040, %v3913
    %4063 = vst.msk [vmem:[#allocation3 + $0x54] sm:$0x7] %vm4042, %v3915
    %4064 = vst.msk [vmem:[#allocation3 + $0x58] sm:$0xf] %vm4040, %v3917
    %4065 = vst.msk [vmem:[#allocation3 + $0x5c] sm:$0x7] %vm4042, %v3919
    %4066 = vst.msk [vmem:[#allocation3 + $0x60] sm:$0xf] %vm4040, %v3921
    %4067 = vst.msk [vmem:[#allocation3 + $0x64] sm:$0x7] %vm4042, %v3923
    %4068 = vst.msk [vmem:[#allocation3 + $0x68] sm:$0xf] %vm4040, %v3925
    %4069 = vst.msk [vmem:[#allocation3 + $0x6c] sm:$0x7] %vm4042, %v3927
    %4070 = vst.msk [vmem:[#allocation3 + $0x70] sm:$0xf] %vm4040, %v3929
    %4071 = vst.msk [vmem:[#allocation3 + $0x74] sm:$0x7] %vm4042, %v3931
    %4072 = vst.msk [vmem:[#allocation3 + $0x78] sm:$0xf] %vm4040, %v3933
    %4073 = vst.msk [vmem:[#allocation3 + $0x7c] sm:$0x7] %vm4042, %v3935
    %4074 = vst.msk [vmem:[#allocation3 + $0x80] sm:$0xf] %vm4040, %v3937
    %4075 = vst.msk [vmem:[#allocation3 + $0x84] sm:$0x7] %vm4042, %v3939
    %4076 = vst.msk [vmem:[#allocation3 + $0x88] sm:$0xf] %vm4040, %v3941
    %4077 = vst.msk [vmem:[#allocation3 + $0x8c] sm:$0x7] %vm4042, %v3943
    %4078 = vst.msk [vmem:[#allocation3 + $0x90] sm:$0xf] %vm4040, %v3945
    %4079 = vst.msk [vmem:[#allocation3 + $0x94] sm:$0x7] %vm4042, %v3947
    %4080 = vst.msk [vmem:[#allocation3 + $0x98] sm:$0xf] %vm4040, %v3949
    %4081 = vst.msk [vmem:[#allocation3 + $0x9c] sm:$0x7] %vm4042, %v3951
    %4082 = vst.msk [vmem:[#allocation3 + $0xa0] sm:$0xf] %vm4040, %v3953
    %4083 = vst.msk [vmem:[#allocation3 + $0xa4] sm:$0x7] %vm4042, %v3955
    %4084 = vst.msk [vmem:[#allocation3 + $0xa8] sm:$0xf] %vm4040, %v3957
    %4085 = vst.msk [vmem:[#allocation3 + $0xac] sm:$0x7] %vm4042, %v3959
    %4086 = vst.msk [vmem:[#allocation3 + $0xb0] sm:$0xf] %vm4040, %v3961
    %4087 = vst.msk [vmem:[#allocation3 + $0xb4] sm:$0x7] %vm4042, %v3963
    %4088 = vst.msk [vmem:[#allocation3 + $0xb8] sm:$0xf] %vm4040, %v3965
    %4089 = vst.msk [vmem:[#allocation3 + $0xbc] sm:$0x7] %vm4042, %v3967
    %4090 = vst.msk [vmem:[#allocation3 + $0xc0] sm:$0xf] %vm4040, %v3969
    %4091 = vst.msk [vmem:[#allocation3 + $0xc4] sm:$0x7] %vm4042, %v3971
    %4092 = vst.msk [vmem:[#allocation3 + $0xc8] sm:$0xf] %vm4040, %v3973
    %4093 = vst.msk [vmem:[#allocation3 + $0xcc] sm:$0x7] %vm4042, %v3975
    %4094 = vst.msk [vmem:[#allocation3 + $0xd0] sm:$0xf] %vm4040, %v3977
    %4095 = vst.msk [vmem:[#allocation3 + $0xd4] sm:$0x7] %vm4042, %v3979
    %4096 = vst.msk [vmem:[#allocation3 + $0xd8] sm:$0xf] %vm4040, %v3981
    %4097 = vst.msk [vmem:[#allocation3 + $0xdc] sm:$0x7] %vm4042, %v3983
    %s4098 = scalar_lea.vmem [#allocation2], 16
    %v4099 = vld [vmem:[%s4098] sm:$0x7f]
    %v4100 = vld [vmem:[%s4098 + $0x8] sm:$0x7f]
    %v4101 = vld [vmem:[%s4098 + $0x10] sm:$0x7f]
    %v4102 = vld [vmem:[%s4098 + $0x18] sm:$0x7f]
    %v4103 = vld [vmem:[%s4098 + $0x20] sm:$0x7f]
    %v4104 = vld [vmem:[%s4098 + $0x28] sm:$0x7f]
    %v4105 = vld [vmem:[%s4098 + $0x30] sm:$0x7f]
    %v4106 = vld [vmem:[%s4098 + $0x38] sm:$0x7f]
    %v4107 = vld [vmem:[%s4098 + $0x40] sm:$0x7f]
    %v4108 = vld [vmem:[%s4098 + $0x48] sm:$0x7f]
    %v4109 = vld [vmem:[%s4098 + $0x50] sm:$0x7f]
    %v4110 = vld [vmem:[%s4098 + $0x58] sm:$0x7f]
    %v4111 = vld [vmem:[%s4098 + $0x60] sm:$0x7f]
    %v4112 = vld [vmem:[%s4098 + $0x68] sm:$0x7f]
    %v4113 = vld [vmem:[%s4098 + $0x80] sm:$0x7f]
    %v4114 = vld [vmem:[%s4098 + $0x88] sm:$0x7f]
    %v4115 = vld [vmem:[%s4098 + $0x90] sm:$0x7f]
    %v4116 = vld [vmem:[%s4098 + $0x98] sm:$0x7f]
    %v4117 = vld [vmem:[%s4098 + $0xa0] sm:$0x7f]
    %v4118 = vld [vmem:[%s4098 + $0xa8] sm:$0x7f]
    %v4119 = vld [vmem:[%s4098 + $0xb0] sm:$0x7f]
    %v4120 = vld [vmem:[%s4098 + $0xb8] sm:$0x7f]
    %v4121 = vld [vmem:[%s4098 + $0xc0] sm:$0x7f]
    %v4122 = vld [vmem:[%s4098 + $0xc8] sm:$0x7f]
    %v4123 = vld [vmem:[%s4098 + $0xd0] sm:$0x7f]
    %v4124 = vld [vmem:[%s4098 + $0xd8] sm:$0x7f]
    %v4125 = vld [vmem:[%s4098 + $0xe0] sm:$0x7f]
    %v4126 = vld [vmem:[%s4098 + $0xe8] sm:$0x7f]
    %v4155 = vunpack.c.l.b16 %v4099
    %v4156 = vunpack.c.h.b16 %v4099
    %v4157 = vunpack.c.l.b16 %v4100
    %v4158 = vunpack.c.h.b16 %v4100
    %v4159 = vunpack.c.l.b16 %v4101
    %v4160 = vunpack.c.h.b16 %v4101
    %v4161 = vunpack.c.l.b16 %v4102
    %v4162 = vunpack.c.h.b16 %v4102
    %v4163 = vunpack.c.l.b16 %v4103
    %v4164 = vunpack.c.h.b16 %v4103
    %v4165 = vunpack.c.l.b16 %v4104
    %v4166 = vunpack.c.h.b16 %v4104
    %v4167 = vunpack.c.l.b16 %v4105
    %v4168 = vunpack.c.h.b16 %v4105
    %v4169 = vunpack.c.l.b16 %v4106
    %v4170 = vunpack.c.h.b16 %v4106
    %v4171 = vunpack.c.l.b16 %v4107
    %v4172 = vunpack.c.h.b16 %v4107
    %v4173 = vunpack.c.l.b16 %v4108
    %v4174 = vunpack.c.h.b16 %v4108
    %v4175 = vunpack.c.l.b16 %v4109
    %v4176 = vunpack.c.h.b16 %v4109
    %v4177 = vunpack.c.l.b16 %v4110
    %v4178 = vunpack.c.h.b16 %v4110
    %v4179 = vunpack.c.l.b16 %v4111
    %v4180 = vunpack.c.h.b16 %v4111
    %v4181 = vunpack.c.l.b16 %v4112
    %v4182 = vunpack.c.h.b16 %v4112
    %v4183 = vunpack.c.l.b16 %v4113
    %v4184 = vunpack.c.h.b16 %v4113
    %v4185 = vunpack.c.l.b16 %v4114
    %v4186 = vunpack.c.h.b16 %v4114
    %v4187 = vunpack.c.l.b16 %v4115
    %v4188 = vunpack.c.h.b16 %v4115
    %v4189 = vunpack.c.l.b16 %v4116
    %v4190 = vunpack.c.h.b16 %v4116
    %v4191 = vunpack.c.l.b16 %v4117
    %v4192 = vunpack.c.h.b16 %v4117
    %v4193 = vunpack.c.l.b16 %v4118
    %v4194 = vunpack.c.h.b16 %v4118
    %v4195 = vunpack.c.l.b16 %v4119
    %v4196 = vunpack.c.h.b16 %v4119
    %v4197 = vunpack.c.l.b16 %v4120
    %v4198 = vunpack.c.h.b16 %v4120
    %v4199 = vunpack.c.l.b16 %v4121
    %v4200 = vunpack.c.h.b16 %v4121
    %v4201 = vunpack.c.l.b16 %v4122
    %v4202 = vunpack.c.h.b16 %v4122
    %v4203 = vunpack.c.l.b16 %v4123
    %v4204 = vunpack.c.h.b16 %v4123
    %v4205 = vunpack.c.l.b16 %v4124
    %v4206 = vunpack.c.h.b16 %v4124
    %v4207 = vunpack.c.l.b16 %v4125
    %v4208 = vunpack.c.h.b16 %v4125
    %v4209 = vunpack.c.l.b16 %v4126
    %v4210 = vunpack.c.h.b16 %v4126
    %v4211 = vpack.c.b16 %v4155, %v4155
    %v4212 = vpack.c.b16 %v4156, %v4156
    %v4213 = vpack.c.b16 %v4157, %v4157
    %v4214 = vpack.c.b16 %v4158, %v4158
    %v4215 = vpack.c.b16 %v4159, %v4159
    %v4216 = vpack.c.b16 %v4160, %v4160
    %v4217 = vpack.c.b16 %v4161, %v4161
    %v4218 = vpack.c.b16 %v4162, %v4162
    %v4219 = vpack.c.b16 %v4163, %v4163
    %v4220 = vpack.c.b16 %v4164, %v4164
    %v4221 = vpack.c.b16 %v4165, %v4165
    %v4222 = vpack.c.b16 %v4166, %v4166
    %v4223 = vpack.c.b16 %v4167, %v4167
    %v4224 = vpack.c.b16 %v4168, %v4168
    %v4225 = vpack.c.b16 %v4169, %v4169
    %v4226 = vpack.c.b16 %v4170, %v4170
    %v4227 = vpack.c.b16 %v4171, %v4171
    %v4228 = vpack.c.b16 %v4172, %v4172
    %v4229 = vpack.c.b16 %v4173, %v4173
    %v4230 = vpack.c.b16 %v4174, %v4174
    %v4231 = vpack.c.b16 %v4175, %v4175
    %v4232 = vpack.c.b16 %v4176, %v4176
    %v4233 = vpack.c.b16 %v4177, %v4177
    %v4234 = vpack.c.b16 %v4178, %v4178
    %v4235 = vpack.c.b16 %v4179, %v4179
    %v4236 = vpack.c.b16 %v4180, %v4180
    %v4237 = vpack.c.b16 %v4181, %v4181
    %v4238 = vpack.c.b16 %v4182, %v4182
    %v4239 = vpack.c.b16 %v4183, %v4183
    %v4240 = vpack.c.b16 %v4184, %v4184
    %v4241 = vpack.c.b16 %v4185, %v4185
    %v4242 = vpack.c.b16 %v4186, %v4186
    %v4243 = vpack.c.b16 %v4187, %v4187
    %v4244 = vpack.c.b16 %v4188, %v4188
    %v4245 = vpack.c.b16 %v4189, %v4189
    %v4246 = vpack.c.b16 %v4190, %v4190
    %v4247 = vpack.c.b16 %v4191, %v4191
    %v4248 = vpack.c.b16 %v4192, %v4192
    %v4249 = vpack.c.b16 %v4193, %v4193
    %v4250 = vpack.c.b16 %v4194, %v4194
    %v4251 = vpack.c.b16 %v4195, %v4195
    %v4252 = vpack.c.b16 %v4196, %v4196
    %v4253 = vpack.c.b16 %v4197, %v4197
    %v4254 = vpack.c.b16 %v4198, %v4198
    %v4255 = vpack.c.b16 %v4199, %v4199
    %v4256 = vpack.c.b16 %v4200, %v4200
    %v4257 = vpack.c.b16 %v4201, %v4201
    %v4258 = vpack.c.b16 %v4202, %v4202
    %v4259 = vpack.c.b16 %v4203, %v4203
    %v4260 = vpack.c.b16 %v4204, %v4204
    %v4261 = vpack.c.b16 %v4205, %v4205
    %v4262 = vpack.c.b16 %v4206, %v4206
    %v4263 = vpack.c.b16 %v4207, %v4207
    %v4264 = vpack.c.b16 %v4208, %v4208
    %v4265 = vpack.c.b16 %v4209, %v4209
    %v4266 = vpack.c.b16 %v4210, %v4210
    %4267 = vrot.lane.b32.xlu0 %v4211, 18
    %v4268 = vpop.permute.xlu0 %4267
    %4269 = vrot.lane.b32.xlu0 %v4212, 18
    %v4270 = vpop.permute.xlu0 %4269
    %4271 = vrot.lane.b32.xlu0 %v4213, 18
    %v4272 = vpop.permute.xlu0 %4271
    %4273 = vrot.lane.b32.xlu0 %v4214, 18
    %v4274 = vpop.permute.xlu0 %4273
    %4275 = vrot.lane.b32.xlu0 %v4215, 18
    %v4276 = vpop.permute.xlu0 %4275
    %4277 = vrot.lane.b32.xlu0 %v4216, 18
    %v4278 = vpop.permute.xlu0 %4277
    %4279 = vrot.lane.b32.xlu0 %v4217, 18
    %v4280 = vpop.permute.xlu0 %4279
    %4281 = vrot.lane.b32.xlu0 %v4218, 18
    %v4282 = vpop.permute.xlu0 %4281
    %4283 = vrot.lane.b32.xlu0 %v4219, 18
    %v4284 = vpop.permute.xlu0 %4283
    %4285 = vrot.lane.b32.xlu0 %v4220, 18
    %v4286 = vpop.permute.xlu0 %4285
    %4287 = vrot.lane.b32.xlu0 %v4221, 18
    %v4288 = vpop.permute.xlu0 %4287
    %4289 = vrot.lane.b32.xlu0 %v4222, 18
    %v4290 = vpop.permute.xlu0 %4289
    %4291 = vrot.lane.b32.xlu0 %v4223, 18
    %v4292 = vpop.permute.xlu0 %4291
    %4293 = vrot.lane.b32.xlu0 %v4224, 18
    %v4294 = vpop.permute.xlu0 %4293
    %4295 = vrot.lane.b32.xlu0 %v4225, 18
    %v4296 = vpop.permute.xlu0 %4295
    %4297 = vrot.lane.b32.xlu0 %v4226, 18
    %v4298 = vpop.permute.xlu0 %4297
    %4299 = vrot.lane.b32.xlu0 %v4227, 18
    %v4300 = vpop.permute.xlu0 %4299
    %4301 = vrot.lane.b32.xlu0 %v4228, 18
    %v4302 = vpop.permute.xlu0 %4301
    %4303 = vrot.lane.b32.xlu0 %v4229, 18
    %v4304 = vpop.permute.xlu0 %4303
    %4305 = vrot.lane.b32.xlu0 %v4230, 18
    %v4306 = vpop.permute.xlu0 %4305
    %4307 = vrot.lane.b32.xlu0 %v4231, 18
    %v4308 = vpop.permute.xlu0 %4307
    %4309 = vrot.lane.b32.xlu0 %v4232, 18
    %v4310 = vpop.permute.xlu0 %4309
    %4311 = vrot.lane.b32.xlu0 %v4233, 18
    %v4312 = vpop.permute.xlu0 %4311
    %4313 = vrot.lane.b32.xlu0 %v4234, 18
    %v4314 = vpop.permute.xlu0 %4313
    %4315 = vrot.lane.b32.xlu0 %v4235, 18
    %v4316 = vpop.permute.xlu0 %4315
    %4317 = vrot.lane.b32.xlu0 %v4236, 18
    %v4318 = vpop.permute.xlu0 %4317
    %4319 = vrot.lane.b32.xlu0 %v4237, 18
    %v4320 = vpop.permute.xlu0 %4319
    %4321 = vrot.lane.b32.xlu0 %v4238, 18
    %v4322 = vpop.permute.xlu0 %4321
    %4323 = vrot.lane.b32.xlu0 %v4239, 18
    %v4324 = vpop.permute.xlu0 %4323
    %4325 = vrot.lane.b32.xlu0 %v4240, 18
    %v4326 = vpop.permute.xlu0 %4325
    %4327 = vrot.lane.b32.xlu0 %v4241, 18
    %v4328 = vpop.permute.xlu0 %4327
    %4329 = vrot.lane.b32.xlu0 %v4242, 18
    %v4330 = vpop.permute.xlu0 %4329
    %4331 = vrot.lane.b32.xlu0 %v4243, 18
    %v4332 = vpop.permute.xlu0 %4331
    %4333 = vrot.lane.b32.xlu0 %v4244, 18
    %v4334 = vpop.permute.xlu0 %4333
    %4335 = vrot.lane.b32.xlu0 %v4245, 18
    %v4336 = vpop.permute.xlu0 %4335
    %4337 = vrot.lane.b32.xlu0 %v4246, 18
    %v4338 = vpop.permute.xlu0 %4337
    %4339 = vrot.lane.b32.xlu0 %v4247, 18
    %v4340 = vpop.permute.xlu0 %4339
    %4341 = vrot.lane.b32.xlu0 %v4248, 18
    %v4342 = vpop.permute.xlu0 %4341
    %4343 = vrot.lane.b32.xlu0 %v4249, 18
    %v4344 = vpop.permute.xlu0 %4343
    %4345 = vrot.lane.b32.xlu0 %v4250, 18
    %v4346 = vpop.permute.xlu0 %4345
    %4347 = vrot.lane.b32.xlu0 %v4251, 18
    %v4348 = vpop.permute.xlu0 %4347
    %4349 = vrot.lane.b32.xlu0 %v4252, 18
    %v4350 = vpop.permute.xlu0 %4349
    %4351 = vrot.lane.b32.xlu0 %v4253, 18
    %v4352 = vpop.permute.xlu0 %4351
    %4353 = vrot.lane.b32.xlu0 %v4254, 18
    %v4354 = vpop.permute.xlu0 %4353
    %4355 = vrot.lane.b32.xlu0 %v4255, 18
    %v4356 = vpop.permute.xlu0 %4355
    %4357 = vrot.lane.b32.xlu0 %v4256, 18
    %v4358 = vpop.permute.xlu0 %4357
    %4359 = vrot.lane.b32.xlu0 %v4257, 18
    %v4360 = vpop.permute.xlu0 %4359
    %4361 = vrot.lane.b32.xlu0 %v4258, 18
    %v4362 = vpop.permute.xlu0 %4361
    %4363 = vrot.lane.b32.xlu0 %v4259, 18
    %v4364 = vpop.permute.xlu0 %4363
    %4365 = vrot.lane.b32.xlu0 %v4260, 18
    %v4366 = vpop.permute.xlu0 %4365
    %4367 = vrot.lane.b32.xlu0 %v4261, 18
    %v4368 = vpop.permute.xlu0 %4367
    %4369 = vrot.lane.b32.xlu0 %v4262, 18
    %v4370 = vpop.permute.xlu0 %4369
    %4371 = vrot.lane.b32.xlu0 %v4263, 18
    %v4372 = vpop.permute.xlu0 %4371
    %4373 = vrot.lane.b32.xlu0 %v4264, 18
    %v4374 = vpop.permute.xlu0 %4373
    %4375 = vrot.lane.b32.xlu0 %v4265, 18
    %v4376 = vpop.permute.xlu0 %4375
    %4377 = vrot.lane.b32.xlu0 %v4266, 18
    %v4378 = vpop.permute.xlu0 %4377
    %vm4435 = vcmask 167056
    %4436 = vst.msk [vmem:[#allocation3] sm:$0xf] %vm4435, %v4268
    %vm4437 = vcmask 166032
    %4438 = vst.msk [vmem:[#allocation3 + $0x4] sm:$0x7] %vm4437, %v4270
    %4439 = vst.msk [vmem:[#allocation3 + $0x8] sm:$0xf] %vm4435, %v4272
    %4440 = vst.msk [vmem:[#allocation3 + $0xc] sm:$0x7] %vm4437, %v4274
    %4441 = vst.msk [vmem:[#allocation3 + $0x10] sm:$0xf] %vm4435, %v4276
    %4442 = vst.msk [vmem:[#allocation3 + $0x14] sm:$0x7] %vm4437, %v4278
    %4443 = vst.msk [vmem:[#allocation3 + $0x18] sm:$0xf] %vm4435, %v4280
    %4444 = vst.msk [vmem:[#allocation3 + $0x1c] sm:$0x7] %vm4437, %v4282
    %4445 = vst.msk [vmem:[#allocation3 + $0x20] sm:$0xf] %vm4435, %v4284
    %4446 = vst.msk [vmem:[#allocation3 + $0x24] sm:$0x7] %vm4437, %v4286
    %4447 = vst.msk [vmem:[#allocation3 + $0x28] sm:$0xf] %vm4435, %v4288
    %4448 = vst.msk [vmem:[#allocation3 + $0x2c] sm:$0x7] %vm4437, %v4290
    %4449 = vst.msk [vmem:[#allocation3 + $0x30] sm:$0xf] %vm4435, %v4292
    %4450 = vst.msk [vmem:[#allocation3 + $0x34] sm:$0x7] %vm4437, %v4294
    %4451 = vst.msk [vmem:[#allocation3 + $0x38] sm:$0xf] %vm4435, %v4296
    %4452 = vst.msk [vmem:[#allocation3 + $0x3c] sm:$0x7] %vm4437, %v4298
    %4453 = vst.msk [vmem:[#allocation3 + $0x40] sm:$0xf] %vm4435, %v4300
    %4454 = vst.msk [vmem:[#allocation3 + $0x44] sm:$0x7] %vm4437, %v4302
    %4455 = vst.msk [vmem:[#allocation3 + $0x48] sm:$0xf] %vm4435, %v4304
    %4456 = vst.msk [vmem:[#allocation3 + $0x4c] sm:$0x7] %vm4437, %v4306
    %4457 = vst.msk [vmem:[#allocation3 + $0x50] sm:$0xf] %vm4435, %v4308
    %4458 = vst.msk [vmem:[#allocation3 + $0x54] sm:$0x7] %vm4437, %v4310
    %4459 = vst.msk [vmem:[#allocation3 + $0x58] sm:$0xf] %vm4435, %v4312
    %4460 = vst.msk [vmem:[#allocation3 + $0x5c] sm:$0x7] %vm4437, %v4314
    %4461 = vst.msk [vmem:[#allocation3 + $0x60] sm:$0xf] %vm4435, %v4316
    %4462 = vst.msk [vmem:[#allocation3 + $0x64] sm:$0x7] %vm4437, %v4318
    %4463 = vst.msk [vmem:[#allocation3 + $0x68] sm:$0xf] %vm4435, %v4320
    %4464 = vst.msk [vmem:[#allocation3 + $0x6c] sm:$0x7] %vm4437, %v4322
    %4465 = vst.msk [vmem:[#allocation3 + $0x70] sm:$0xf] %vm4435, %v4324
    %4466 = vst.msk [vmem:[#allocation3 + $0x74] sm:$0x7] %vm4437, %v4326
    %4467 = vst.msk [vmem:[#allocation3 + $0x78] sm:$0xf] %vm4435, %v4328
    %4468 = vst.msk [vmem:[#allocation3 + $0x7c] sm:$0x7] %vm4437, %v4330
    %4469 = vst.msk [vmem:[#allocation3 + $0x80] sm:$0xf] %vm4435, %v4332
    %4470 = vst.msk [vmem:[#allocation3 + $0x84] sm:$0x7] %vm4437, %v4334
    %4471 = vst.msk [vmem:[#allocation3 + $0x88] sm:$0xf] %vm4435, %v4336
    %4472 = vst.msk [vmem:[#allocation3 + $0x8c] sm:$0x7] %vm4437, %v4338
    %4473 = vst.msk [vmem:[#allocation3 + $0x90] sm:$0xf] %vm4435, %v4340
    %4474 = vst.msk [vmem:[#allocation3 + $0x94] sm:$0x7] %vm4437, %v4342
    %4475 = vst.msk [vmem:[#allocation3 + $0x98] sm:$0xf] %vm4435, %v4344
    %4476 = vst.msk [vmem:[#allocation3 + $0x9c] sm:$0x7] %vm4437, %v4346
    %4477 = vst.msk [vmem:[#allocation3 + $0xa0] sm:$0xf] %vm4435, %v4348
    %4478 = vst.msk [vmem:[#allocation3 + $0xa4] sm:$0x7] %vm4437, %v4350
    %4479 = vst.msk [vmem:[#allocation3 + $0xa8] sm:$0xf] %vm4435, %v4352
    %4480 = vst.msk [vmem:[#allocation3 + $0xac] sm:$0x7] %vm4437, %v4354
    %4481 = vst.msk [vmem:[#allocation3 + $0xb0] sm:$0xf] %vm4435, %v4356
    %4482 = vst.msk [vmem:[#allocation3 + $0xb4] sm:$0x7] %vm4437, %v4358
    %4483 = vst.msk [vmem:[#allocation3 + $0xb8] sm:$0xf] %vm4435, %v4360
    %4484 = vst.msk [vmem:[#allocation3 + $0xbc] sm:$0x7] %vm4437, %v4362
    %4485 = vst.msk [vmem:[#allocation3 + $0xc0] sm:$0xf] %vm4435, %v4364
    %4486 = vst.msk [vmem:[#allocation3 + $0xc4] sm:$0x7] %vm4437, %v4366
    %4487 = vst.msk [vmem:[#allocation3 + $0xc8] sm:$0xf] %vm4435, %v4368
    %4488 = vst.msk [vmem:[#allocation3 + $0xcc] sm:$0x7] %vm4437, %v4370
    %4489 = vst.msk [vmem:[#allocation3 + $0xd0] sm:$0xf] %vm4435, %v4372
    %4490 = vst.msk [vmem:[#allocation3 + $0xd4] sm:$0x7] %vm4437, %v4374
    %4491 = vst.msk [vmem:[#allocation3 + $0xd8] sm:$0xf] %vm4435, %v4376
    %4492 = vst.msk [vmem:[#allocation3 + $0xdc] sm:$0x7] %vm4437, %v4378
    %v4493 = vld [vmem:[%s4098] sm:$0xff]
    %v4494 = vld [vmem:[%s4098 + $0x8] sm:$0xff]
    %v4495 = vld [vmem:[%s4098 + $0x10] sm:$0xff]
    %v4496 = vld [vmem:[%s4098 + $0x18] sm:$0xff]
    %v4497 = vld [vmem:[%s4098 + $0x20] sm:$0xff]
    %v4498 = vld [vmem:[%s4098 + $0x28] sm:$0xff]
    %v4499 = vld [vmem:[%s4098 + $0x30] sm:$0xff]
    %v4500 = vld [vmem:[%s4098 + $0x38] sm:$0xff]
    %v4501 = vld [vmem:[%s4098 + $0x40] sm:$0xff]
    %v4502 = vld [vmem:[%s4098 + $0x48] sm:$0xff]
    %v4503 = vld [vmem:[%s4098 + $0x50] sm:$0xff]
    %v4504 = vld [vmem:[%s4098 + $0x58] sm:$0xff]
    %v4505 = vld [vmem:[%s4098 + $0x60] sm:$0xff]
    %v4506 = vld [vmem:[%s4098 + $0x68] sm:$0xff]
    %v4507 = vld [vmem:[%s4098 + $0x80] sm:$0xff]
    %v4508 = vld [vmem:[%s4098 + $0x88] sm:$0xff]
    %v4509 = vld [vmem:[%s4098 + $0x90] sm:$0xff]
    %v4510 = vld [vmem:[%s4098 + $0x98] sm:$0xff]
    %v4511 = vld [vmem:[%s4098 + $0xa0] sm:$0xff]
    %v4512 = vld [vmem:[%s4098 + $0xa8] sm:$0xff]
    %v4513 = vld [vmem:[%s4098 + $0xb0] sm:$0xff]
    %v4514 = vld [vmem:[%s4098 + $0xb8] sm:$0xff]
    %v4515 = vld [vmem:[%s4098 + $0xc0] sm:$0xff]
    %v4516 = vld [vmem:[%s4098 + $0xc8] sm:$0xff]
    %v4517 = vld [vmem:[%s4098 + $0xd0] sm:$0xff]
    %v4518 = vld [vmem:[%s4098 + $0xd8] sm:$0xff]
    %v4519 = vld [vmem:[%s4098 + $0xe0] sm:$0xff]
    %v4520 = vld [vmem:[%s4098 + $0xe8] sm:$0xff]
    %v4549 = vunpack.c.l.b16 %v4493
    %v4550 = vunpack.c.h.b16 %v4493
    %v4551 = vunpack.c.l.b16 %v4494
    %v4552 = vunpack.c.h.b16 %v4494
    %v4553 = vunpack.c.l.b16 %v4495
    %v4554 = vunpack.c.h.b16 %v4495
    %v4555 = vunpack.c.l.b16 %v4496
    %v4556 = vunpack.c.h.b16 %v4496
    %v4557 = vunpack.c.l.b16 %v4497
    %v4558 = vunpack.c.h.b16 %v4497
    %v4559 = vunpack.c.l.b16 %v4498
    %v4560 = vunpack.c.h.b16 %v4498
    %v4561 = vunpack.c.l.b16 %v4499
    %v4562 = vunpack.c.h.b16 %v4499
    %v4563 = vunpack.c.l.b16 %v4500
    %v4564 = vunpack.c.h.b16 %v4500
    %v4565 = vunpack.c.l.b16 %v4501
    %v4566 = vunpack.c.h.b16 %v4501
    %v4567 = vunpack.c.l.b16 %v4502
    %v4568 = vunpack.c.h.b16 %v4502
    %v4569 = vunpack.c.l.b16 %v4503
    %v4570 = vunpack.c.h.b16 %v4503
    %v4571 = vunpack.c.l.b16 %v4504
    %v4572 = vunpack.c.h.b16 %v4504
    %v4573 = vunpack.c.l.b16 %v4505
    %v4574 = vunpack.c.h.b16 %v4505
    %v4575 = vunpack.c.l.b16 %v4506
    %v4576 = vunpack.c.h.b16 %v4506
    %v4577 = vunpack.c.l.b16 %v4507
    %v4578 = vunpack.c.h.b16 %v4507
    %v4579 = vunpack.c.l.b16 %v4508
    %v4580 = vunpack.c.h.b16 %v4508
    %v4581 = vunpack.c.l.b16 %v4509
    %v4582 = vunpack.c.h.b16 %v4509
    %v4583 = vunpack.c.l.b16 %v4510
    %v4584 = vunpack.c.h.b16 %v4510
    %v4585 = vunpack.c.l.b16 %v4511
    %v4586 = vunpack.c.h.b16 %v4511
    %v4587 = vunpack.c.l.b16 %v4512
    %v4588 = vunpack.c.h.b16 %v4512
    %v4589 = vunpack.c.l.b16 %v4513
    %v4590 = vunpack.c.h.b16 %v4513
    %v4591 = vunpack.c.l.b16 %v4514
    %v4592 = vunpack.c.h.b16 %v4514
    %v4593 = vunpack.c.l.b16 %v4515
    %v4594 = vunpack.c.h.b16 %v4515
    %v4595 = vunpack.c.l.b16 %v4516
    %v4596 = vunpack.c.h.b16 %v4516
    %v4597 = vunpack.c.l.b16 %v4517
    %v4598 = vunpack.c.h.b16 %v4517
    %v4599 = vunpack.c.l.b16 %v4518
    %v4600 = vunpack.c.h.b16 %v4518
    %v4601 = vunpack.c.l.b16 %v4519
    %v4602 = vunpack.c.h.b16 %v4519
    %v4603 = vunpack.c.l.b16 %v4520
    %v4604 = vunpack.c.h.b16 %v4520
    %v4605 = vpack.c.b16 %v4549, %v4549
    %v4606 = vpack.c.b16 %v4550, %v4550
    %v4607 = vpack.c.b16 %v4551, %v4551
    %v4608 = vpack.c.b16 %v4552, %v4552
    %v4609 = vpack.c.b16 %v4553, %v4553
    %v4610 = vpack.c.b16 %v4554, %v4554
    %v4611 = vpack.c.b16 %v4555, %v4555
    %v4612 = vpack.c.b16 %v4556, %v4556
    %v4613 = vpack.c.b16 %v4557, %v4557
    %v4614 = vpack.c.b16 %v4558, %v4558
    %v4615 = vpack.c.b16 %v4559, %v4559
    %v4616 = vpack.c.b16 %v4560, %v4560
    %v4617 = vpack.c.b16 %v4561, %v4561
    %v4618 = vpack.c.b16 %v4562, %v4562
    %v4619 = vpack.c.b16 %v4563, %v4563
    %v4620 = vpack.c.b16 %v4564, %v4564
    %v4621 = vpack.c.b16 %v4565, %v4565
    %v4622 = vpack.c.b16 %v4566, %v4566
    %v4623 = vpack.c.b16 %v4567, %v4567
    %v4624 = vpack.c.b16 %v4568, %v4568
    %v4625 = vpack.c.b16 %v4569, %v4569
    %v4626 = vpack.c.b16 %v4570, %v4570
    %v4627 = vpack.c.b16 %v4571, %v4571
    %v4628 = vpack.c.b16 %v4572, %v4572
    %v4629 = vpack.c.b16 %v4573, %v4573
    %v4630 = vpack.c.b16 %v4574, %v4574
    %v4631 = vpack.c.b16 %v4575, %v4575
    %v4632 = vpack.c.b16 %v4576, %v4576
    %v4633 = vpack.c.b16 %v4577, %v4577
    %v4634 = vpack.c.b16 %v4578, %v4578
    %v4635 = vpack.c.b16 %v4579, %v4579
    %v4636 = vpack.c.b16 %v4580, %v4580
    %v4637 = vpack.c.b16 %v4581, %v4581
    %v4638 = vpack.c.b16 %v4582, %v4582
    %v4639 = vpack.c.b16 %v4583, %v4583
    %v4640 = vpack.c.b16 %v4584, %v4584
    %v4641 = vpack.c.b16 %v4585, %v4585
    %v4642 = vpack.c.b16 %v4586, %v4586
    %v4643 = vpack.c.b16 %v4587, %v4587
    %v4644 = vpack.c.b16 %v4588, %v4588
    %v4645 = vpack.c.b16 %v4589, %v4589
    %v4646 = vpack.c.b16 %v4590, %v4590
    %v4647 = vpack.c.b16 %v4591, %v4591
    %v4648 = vpack.c.b16 %v4592, %v4592
    %v4649 = vpack.c.b16 %v4593, %v4593
    %v4650 = vpack.c.b16 %v4594, %v4594
    %v4651 = vpack.c.b16 %v4595, %v4595
    %v4652 = vpack.c.b16 %v4596, %v4596
    %v4653 = vpack.c.b16 %v4597, %v4597
    %v4654 = vpack.c.b16 %v4598, %v4598
    %v4655 = vpack.c.b16 %v4599, %v4599
    %v4656 = vpack.c.b16 %v4600, %v4600
    %v4657 = vpack.c.b16 %v4601, %v4601
    %v4658 = vpack.c.b16 %v4602, %v4602
    %v4659 = vpack.c.b16 %v4603, %v4603
    %v4660 = vpack.c.b16 %v4604, %v4604
    %v4662 = vshrl.u32 %v4605, 16
    %v4664 = vrot.slane %v4662, 4
    %v4665 = vshll.u32 %v4605, 16
    %v4667 = vrot.slane %v4665, 5
    %v4668 = vor.u32 %v4664, %v4667
    %v4669 = vrot.slane %v4668, 4
    %v4671 = vshll.u32 %v4606, 16
    %v4673 = vrot.slane %v4671, 5
    %v4674 = vsel %vm947, %v4669, %v4673
    %v4675 = vshrl.u32 %v4606, 16
    %v4677 = vrot.slane %v4675, 4
    %v4678 = vor.u32 %v4677, %v4673
    %v4679 = vrot.slane %v4678, 4
    %v4681 = vshrl.u32 %v4607, 16
    %v4683 = vrot.slane %v4681, 4
    %v4684 = vshll.u32 %v4607, 16
    %v4686 = vrot.slane %v4684, 5
    %v4687 = vor.u32 %v4683, %v4686
    %v4688 = vrot.slane %v4687, 4
    %v4690 = vshll.u32 %v4608, 16
    %v4692 = vrot.slane %v4690, 5
    %v4693 = vsel %vm947, %v4688, %v4692
    %v4694 = vshrl.u32 %v4608, 16
    %v4696 = vrot.slane %v4694, 4
    %v4697 = vor.u32 %v4696, %v4692
    %v4698 = vrot.slane %v4697, 4
    %v4700 = vshrl.u32 %v4609, 16
    %v4702 = vrot.slane %v4700, 4
    %v4703 = vshll.u32 %v4609, 16
    %v4705 = vrot.slane %v4703, 5
    %v4706 = vor.u32 %v4702, %v4705
    %v4707 = vrot.slane %v4706, 4
    %v4709 = vshll.u32 %v4610, 16
    %v4711 = vrot.slane %v4709, 5
    %v4712 = vsel %vm947, %v4707, %v4711
    %v4713 = vshrl.u32 %v4610, 16
    %v4715 = vrot.slane %v4713, 4
    %v4716 = vor.u32 %v4715, %v4711
    %v4717 = vrot.slane %v4716, 4
    %v4719 = vshrl.u32 %v4611, 16
    %v4721 = vrot.slane %v4719, 4
    %v4722 = vshll.u32 %v4611, 16
    %v4724 = vrot.slane %v4722, 5
    %v4725 = vor.u32 %v4721, %v4724
    %v4726 = vrot.slane %v4725, 4
    %v4728 = vshll.u32 %v4612, 16
    %v4730 = vrot.slane %v4728, 5
    %v4731 = vsel %vm947, %v4726, %v4730
    %v4732 = vshrl.u32 %v4612, 16
    %v4734 = vrot.slane %v4732, 4
    %v4735 = vor.u32 %v4734, %v4730
    %v4736 = vrot.slane %v4735, 4
    %v4738 = vshrl.u32 %v4613, 16
    %v4740 = vrot.slane %v4738, 4
    %v4741 = vshll.u32 %v4613, 16
    %v4743 = vrot.slane %v4741, 5
    %v4744 = vor.u32 %v4740, %v4743
    %v4745 = vrot.slane %v4744, 4
    %v4747 = vshll.u32 %v4614, 16
    %v4749 = vrot.slane %v4747, 5
    %v4750 = vsel %vm947, %v4745, %v4749
    %v4751 = vshrl.u32 %v4614, 16
    %v4753 = vrot.slane %v4751, 4
    %v4754 = vor.u32 %v4753, %v4749
    %v4755 = vrot.slane %v4754, 4
    %v4757 = vshrl.u32 %v4615, 16
    %v4759 = vrot.slane %v4757, 4
    %v4760 = vshll.u32 %v4615, 16
    %v4762 = vrot.slane %v4760, 5
    %v4763 = vor.u32 %v4759, %v4762
    %v4764 = vrot.slane %v4763, 4
    %v4766 = vshll.u32 %v4616, 16
    %v4768 = vrot.slane %v4766, 5
    %v4769 = vsel %vm947, %v4764, %v4768
    %v4770 = vshrl.u32 %v4616, 16
    %v4772 = vrot.slane %v4770, 4
    %v4773 = vor.u32 %v4772, %v4768
    %v4774 = vrot.slane %v4773, 4
    %v4776 = vshrl.u32 %v4617, 16
    %v4778 = vrot.slane %v4776, 4
    %v4779 = vshll.u32 %v4617, 16
    %v4781 = vrot.slane %v4779, 5
    %v4782 = vor.u32 %v4778, %v4781
    %v4783 = vrot.slane %v4782, 4
    %v4785 = vshll.u32 %v4618, 16
    %v4787 = vrot.slane %v4785, 5
    %v4788 = vsel %vm947, %v4783, %v4787
    %v4789 = vshrl.u32 %v4618, 16
    %v4791 = vrot.slane %v4789, 4
    %v4792 = vor.u32 %v4791, %v4787
    %v4793 = vrot.slane %v4792, 4
    %v4795 = vshrl.u32 %v4619, 16
    %v4797 = vrot.slane %v4795, 4
    %v4798 = vshll.u32 %v4619, 16
    %v4800 = vrot.slane %v4798, 5
    %v4801 = vor.u32 %v4797, %v4800
    %v4802 = vrot.slane %v4801, 4
    %v4804 = vshll.u32 %v4620, 16
    %v4806 = vrot.slane %v4804, 5
    %v4807 = vsel %vm947, %v4802, %v4806
    %v4808 = vshrl.u32 %v4620, 16
    %v4810 = vrot.slane %v4808, 4
    %v4811 = vor.u32 %v4810, %v4806
    %v4812 = vrot.slane %v4811, 4
    %v4814 = vshrl.u32 %v4621, 16
    %v4816 = vrot.slane %v4814, 4
    %v4817 = vshll.u32 %v4621, 16
    %v4819 = vrot.slane %v4817, 5
    %v4820 = vor.u32 %v4816, %v4819
    %v4821 = vrot.slane %v4820, 4
    %v4823 = vshll.u32 %v4622, 16
    %v4825 = vrot.slane %v4823, 5
    %v4826 = vsel %vm947, %v4821, %v4825
    %v4827 = vshrl.u32 %v4622, 16
    %v4829 = vrot.slane %v4827, 4
    %v4830 = vor.u32 %v4829, %v4825
    %v4831 = vrot.slane %v4830, 4
    %v4833 = vshrl.u32 %v4623, 16
    %v4835 = vrot.slane %v4833, 4
    %v4836 = vshll.u32 %v4623, 16
    %v4838 = vrot.slane %v4836, 5
    %v4839 = vor.u32 %v4835, %v4838
    %v4840 = vrot.slane %v4839, 4
    %v4842 = vshll.u32 %v4624, 16
    %v4844 = vrot.slane %v4842, 5
    %v4845 = vsel %vm947, %v4840, %v4844
    %v4846 = vshrl.u32 %v4624, 16
    %v4848 = vrot.slane %v4846, 4
    %v4849 = vor.u32 %v4848, %v4844
    %v4850 = vrot.slane %v4849, 4
    %v4852 = vshrl.u32 %v4625, 16
    %v4854 = vrot.slane %v4852, 4
    %v4855 = vshll.u32 %v4625, 16
    %v4857 = vrot.slane %v4855, 5
    %v4858 = vor.u32 %v4854, %v4857
    %v4859 = vrot.slane %v4858, 4
    %v4861 = vshll.u32 %v4626, 16
    %v4863 = vrot.slane %v4861, 5
    %v4864 = vsel %vm947, %v4859, %v4863
    %v4865 = vshrl.u32 %v4626, 16
    %v4867 = vrot.slane %v4865, 4
    %v4868 = vor.u32 %v4867, %v4863
    %v4869 = vrot.slane %v4868, 4
    %v4871 = vshrl.u32 %v4627, 16
    %v4873 = vrot.slane %v4871, 4
    %v4874 = vshll.u32 %v4627, 16
    %v4876 = vrot.slane %v4874, 5
    %v4877 = vor.u32 %v4873, %v4876
    %v4878 = vrot.slane %v4877, 4
    %v4880 = vshll.u32 %v4628, 16
    %v4882 = vrot.slane %v4880, 5
    %v4883 = vsel %vm947, %v4878, %v4882
    %v4884 = vshrl.u32 %v4628, 16
    %v4886 = vrot.slane %v4884, 4
    %v4887 = vor.u32 %v4886, %v4882
    %v4888 = vrot.slane %v4887, 4
    %v4890 = vshrl.u32 %v4629, 16
    %v4892 = vrot.slane %v4890, 4
    %v4893 = vshll.u32 %v4629, 16
    %v4895 = vrot.slane %v4893, 5
    %v4896 = vor.u32 %v4892, %v4895
    %v4897 = vrot.slane %v4896, 4
    %v4899 = vshll.u32 %v4630, 16
    %v4901 = vrot.slane %v4899, 5
    %v4902 = vsel %vm947, %v4897, %v4901
    %v4903 = vshrl.u32 %v4630, 16
    %v4905 = vrot.slane %v4903, 4
    %v4906 = vor.u32 %v4905, %v4901
    %v4907 = vrot.slane %v4906, 4
    %v4909 = vshrl.u32 %v4631, 16
    %v4911 = vrot.slane %v4909, 4
    %v4912 = vshll.u32 %v4631, 16
    %v4914 = vrot.slane %v4912, 5
    %v4915 = vor.u32 %v4911, %v4914
    %v4916 = vrot.slane %v4915, 4
    %v4918 = vshll.u32 %v4632, 16
    %v4920 = vrot.slane %v4918, 5
    %v4921 = vsel %vm947, %v4916, %v4920
    %v4922 = vshrl.u32 %v4632, 16
    %v4924 = vrot.slane %v4922, 4
    %v4925 = vor.u32 %v4924, %v4920
    %v4926 = vrot.slane %v4925, 4
    %v4928 = vshrl.u32 %v4633, 16
    %v4930 = vrot.slane %v4928, 4
    %v4931 = vshll.u32 %v4633, 16
    %v4933 = vrot.slane %v4931, 5
    %v4934 = vor.u32 %v4930, %v4933
    %v4935 = vrot.slane %v4934, 4
    %v4937 = vshll.u32 %v4634, 16
    %v4939 = vrot.slane %v4937, 5
    %v4940 = vsel %vm947, %v4935, %v4939
    %v4941 = vshrl.u32 %v4634, 16
    %v4943 = vrot.slane %v4941, 4
    %v4944 = vor.u32 %v4943, %v4939
    %v4945 = vrot.slane %v4944, 4
    %v4947 = vshrl.u32 %v4635, 16
    %v4949 = vrot.slane %v4947, 4
    %v4950 = vshll.u32 %v4635, 16
    %v4952 = vrot.slane %v4950, 5
    %v4953 = vor.u32 %v4949, %v4952
    %v4954 = vrot.slane %v4953, 4
    %v4956 = vshll.u32 %v4636, 16
    %v4958 = vrot.slane %v4956, 5
    %v4959 = vsel %vm947, %v4954, %v4958
    %v4960 = vshrl.u32 %v4636, 16
    %v4962 = vrot.slane %v4960, 4
    %v4963 = vor.u32 %v4962, %v4958
    %v4964 = vrot.slane %v4963, 4
    %v4966 = vshrl.u32 %v4637, 16
    %v4968 = vrot.slane %v4966, 4
    %v4969 = vshll.u32 %v4637, 16
    %v4971 = vrot.slane %v4969, 5
    %v4972 = vor.u32 %v4968, %v4971
    %v4973 = vrot.slane %v4972, 4
    %v4975 = vshll.u32 %v4638, 16
    %v4977 = vrot.slane %v4975, 5
    %v4978 = vsel %vm947, %v4973, %v4977
    %v4979 = vshrl.u32 %v4638, 16
    %v4981 = vrot.slane %v4979, 4
    %v4982 = vor.u32 %v4981, %v4977
    %v4983 = vrot.slane %v4982, 4
    %v4985 = vshrl.u32 %v4639, 16
    %v4987 = vrot.slane %v4985, 4
    %v4988 = vshll.u32 %v4639, 16
    %v4990 = vrot.slane %v4988, 5
    %v4991 = vor.u32 %v4987, %v4990
    %v4992 = vrot.slane %v4991, 4
    %v4994 = vshll.u32 %v4640, 16
    %v4996 = vrot.slane %v4994, 5
    %v4997 = vsel %vm947, %v4992, %v4996
    %v4998 = vshrl.u32 %v4640, 16
    %v5000 = vrot.slane %v4998, 4
    %v5001 = vor.u32 %v5000, %v4996
    %v5002 = vrot.slane %v5001, 4
    %v5004 = vshrl.u32 %v4641, 16
    %v5006 = vrot.slane %v5004, 4
    %v5007 = vshll.u32 %v4641, 16
    %v5009 = vrot.slane %v5007, 5
    %v5010 = vor.u32 %v5006, %v5009
    %v5011 = vrot.slane %v5010, 4
    %v5013 = vshll.u32 %v4642, 16
    %v5015 = vrot.slane %v5013, 5
    %v5016 = vsel %vm947, %v5011, %v5015
    %v5017 = vshrl.u32 %v4642, 16
    %v5019 = vrot.slane %v5017, 4
    %v5020 = vor.u32 %v5019, %v5015
    %v5021 = vrot.slane %v5020, 4
    %v5023 = vshrl.u32 %v4643, 16
    %v5025 = vrot.slane %v5023, 4
    %v5026 = vshll.u32 %v4643, 16
    %v5028 = vrot.slane %v5026, 5
    %v5029 = vor.u32 %v5025, %v5028
    %v5030 = vrot.slane %v5029, 4
    %v5032 = vshll.u32 %v4644, 16
    %v5034 = vrot.slane %v5032, 5
    %v5035 = vsel %vm947, %v5030, %v5034
    %v5036 = vshrl.u32 %v4644, 16
    %v5038 = vrot.slane %v5036, 4
    %v5039 = vor.u32 %v5038, %v5034
    %v5040 = vrot.slane %v5039, 4
    %v5042 = vshrl.u32 %v4645, 16
    %v5044 = vrot.slane %v5042, 4
    %v5045 = vshll.u32 %v4645, 16
    %v5047 = vrot.slane %v5045, 5
    %v5048 = vor.u32 %v5044, %v5047
    %v5049 = vrot.slane %v5048, 4
    %v5051 = vshll.u32 %v4646, 16
    %v5053 = vrot.slane %v5051, 5
    %v5054 = vsel %vm947, %v5049, %v5053
    %v5055 = vshrl.u32 %v4646, 16
    %v5057 = vrot.slane %v5055, 4
    %v5058 = vor.u32 %v5057, %v5053
    %v5059 = vrot.slane %v5058, 4
    %v5061 = vshrl.u32 %v4647, 16
    %v5063 = vrot.slane %v5061, 4
    %v5064 = vshll.u32 %v4647, 16
    %v5066 = vrot.slane %v5064, 5
    %v5067 = vor.u32 %v5063, %v5066
    %v5068 = vrot.slane %v5067, 4
    %v5070 = vshll.u32 %v4648, 16
    %v5072 = vrot.slane %v5070, 5
    %v5073 = vsel %vm947, %v5068, %v5072
    %v5074 = vshrl.u32 %v4648, 16
    %v5076 = vrot.slane %v5074, 4
    %v5077 = vor.u32 %v5076, %v5072
    %v5078 = vrot.slane %v5077, 4
    %v5080 = vshrl.u32 %v4649, 16
    %v5082 = vrot.slane %v5080, 4
    %v5083 = vshll.u32 %v4649, 16
    %v5085 = vrot.slane %v5083, 5
    %v5086 = vor.u32 %v5082, %v5085
    %v5087 = vrot.slane %v5086, 4
    %v5089 = vshll.u32 %v4650, 16
    %v5091 = vrot.slane %v5089, 5
    %v5092 = vsel %vm947, %v5087, %v5091
    %v5093 = vshrl.u32 %v4650, 16
    %v5095 = vrot.slane %v5093, 4
    %v5096 = vor.u32 %v5095, %v5091
    %v5097 = vrot.slane %v5096, 4
    %v5099 = vshrl.u32 %v4651, 16
    %v5101 = vrot.slane %v5099, 4
    %v5102 = vshll.u32 %v4651, 16
    %v5104 = vrot.slane %v5102, 5
    %v5105 = vor.u32 %v5101, %v5104
    %v5106 = vrot.slane %v5105, 4
    %v5108 = vshll.u32 %v4652, 16
    %v5110 = vrot.slane %v5108, 5
    %v5111 = vsel %vm947, %v5106, %v5110
    %v5112 = vshrl.u32 %v4652, 16
    %v5114 = vrot.slane %v5112, 4
    %v5115 = vor.u32 %v5114, %v5110
    %v5116 = vrot.slane %v5115, 4
    %v5118 = vshrl.u32 %v4653, 16
    %v5120 = vrot.slane %v5118, 4
    %v5121 = vshll.u32 %v4653, 16
    %v5123 = vrot.slane %v5121, 5
    %v5124 = vor.u32 %v5120, %v5123
    %v5125 = vrot.slane %v5124, 4
    %v5127 = vshll.u32 %v4654, 16
    %v5129 = vrot.slane %v5127, 5
    %v5130 = vsel %vm947, %v5125, %v5129
    %v5131 = vshrl.u32 %v4654, 16
    %v5133 = vrot.slane %v5131, 4
    %v5134 = vor.u32 %v5133, %v5129
    %v5135 = vrot.slane %v5134, 4
    %v5137 = vshrl.u32 %v4655, 16
    %v5139 = vrot.slane %v5137, 4
    %v5140 = vshll.u32 %v4655, 16
    %v5142 = vrot.slane %v5140, 5
    %v5143 = vor.u32 %v5139, %v5142
    %v5144 = vrot.slane %v5143, 4
    %v5146 = vshll.u32 %v4656, 16
    %v5148 = vrot.slane %v5146, 5
    %v5149 = vsel %vm947, %v5144, %v5148
    %v5150 = vshrl.u32 %v4656, 16
    %v5152 = vrot.slane %v5150, 4
    %v5153 = vor.u32 %v5152, %v5148
    %v5154 = vrot.slane %v5153, 4
    %v5156 = vshrl.u32 %v4657, 16
    %v5158 = vrot.slane %v5156, 4
    %v5159 = vshll.u32 %v4657, 16
    %v5161 = vrot.slane %v5159, 5
    %v5162 = vor.u32 %v5158, %v5161
    %v5163 = vrot.slane %v5162, 4
    %v5165 = vshll.u32 %v4658, 16
    %v5167 = vrot.slane %v5165, 5
    %v5168 = vsel %vm947, %v5163, %v5167
    %v5169 = vshrl.u32 %v4658, 16
    %v5171 = vrot.slane %v5169, 4
    %v5172 = vor.u32 %v5171, %v5167
    %v5173 = vrot.slane %v5172, 4
    %v5175 = vshrl.u32 %v4659, 16
    %v5177 = vrot.slane %v5175, 4
    %v5178 = vshll.u32 %v4659, 16
    %v5180 = vrot.slane %v5178, 5
    %v5181 = vor.u32 %v5177, %v5180
    %v5182 = vrot.slane %v5181, 4
    %v5184 = vshll.u32 %v4660, 16
    %v5186 = vrot.slane %v5184, 5
    %v5187 = vsel %vm947, %v5182, %v5186
    %v5188 = vshrl.u32 %v4660, 16
    %v5190 = vrot.slane %v5188, 4
    %v5191 = vor.u32 %v5190, %v5186
    %v5192 = vrot.slane %v5191, 4
    %5193 = vrot.lane.b32.xlu0 %v4674, 21
    %v5194 = vpop.permute.xlu0 %5193
    %5195 = vrot.lane.b32.xlu0 %v4679, 21
    %v5196 = vpop.permute.xlu0 %5195
    %5197 = vrot.lane.b32.xlu0 %v4693, 21
    %v5198 = vpop.permute.xlu0 %5197
    %5199 = vrot.lane.b32.xlu0 %v4698, 21
    %v5200 = vpop.permute.xlu0 %5199
    %5201 = vrot.lane.b32.xlu0 %v4712, 21
    %v5202 = vpop.permute.xlu0 %5201
    %5203 = vrot.lane.b32.xlu0 %v4717, 21
    %v5204 = vpop.permute.xlu0 %5203
    %5205 = vrot.lane.b32.xlu0 %v4731, 21
    %v5206 = vpop.permute.xlu0 %5205
    %5207 = vrot.lane.b32.xlu0 %v4736, 21
    %v5208 = vpop.permute.xlu0 %5207
    %5209 = vrot.lane.b32.xlu0 %v4750, 21
    %v5210 = vpop.permute.xlu0 %5209
    %5211 = vrot.lane.b32.xlu0 %v4755, 21
    %v5212 = vpop.permute.xlu0 %5211
    %5213 = vrot.lane.b32.xlu0 %v4769, 21
    %v5214 = vpop.permute.xlu0 %5213
    %5215 = vrot.lane.b32.xlu0 %v4774, 21
    %v5216 = vpop.permute.xlu0 %5215
    %5217 = vrot.lane.b32.xlu0 %v4788, 21
    %v5218 = vpop.permute.xlu0 %5217
    %5219 = vrot.lane.b32.xlu0 %v4793, 21
    %v5220 = vpop.permute.xlu0 %5219
    %5221 = vrot.lane.b32.xlu0 %v4807, 21
    %v5222 = vpop.permute.xlu0 %5221
    %5223 = vrot.lane.b32.xlu0 %v4812, 21
    %v5224 = vpop.permute.xlu0 %5223
    %5225 = vrot.lane.b32.xlu0 %v4826, 21
    %v5226 = vpop.permute.xlu0 %5225
    %5227 = vrot.lane.b32.xlu0 %v4831, 21
    %v5228 = vpop.permute.xlu0 %5227
    %5229 = vrot.lane.b32.xlu0 %v4845, 21
    %v5230 = vpop.permute.xlu0 %5229
    %5231 = vrot.lane.b32.xlu0 %v4850, 21
    %v5232 = vpop.permute.xlu0 %5231
    %5233 = vrot.lane.b32.xlu0 %v4864, 21
    %v5234 = vpop.permute.xlu0 %5233
    %5235 = vrot.lane.b32.xlu0 %v4869, 21
    %v5236 = vpop.permute.xlu0 %5235
    %5237 = vrot.lane.b32.xlu0 %v4883, 21
    %v5238 = vpop.permute.xlu0 %5237
    %5239 = vrot.lane.b32.xlu0 %v4888, 21
    %v5240 = vpop.permute.xlu0 %5239
    %5241 = vrot.lane.b32.xlu0 %v4902, 21
    %v5242 = vpop.permute.xlu0 %5241
    %5243 = vrot.lane.b32.xlu0 %v4907, 21
    %v5244 = vpop.permute.xlu0 %5243
    %5245 = vrot.lane.b32.xlu0 %v4921, 21
    %v5246 = vpop.permute.xlu0 %5245
    %5247 = vrot.lane.b32.xlu0 %v4926, 21
    %v5248 = vpop.permute.xlu0 %5247
    %5249 = vrot.lane.b32.xlu0 %v4940, 21
    %v5250 = vpop.permute.xlu0 %5249
    %5251 = vrot.lane.b32.xlu0 %v4945, 21
    %v5252 = vpop.permute.xlu0 %5251
    %5253 = vrot.lane.b32.xlu0 %v4959, 21
    %v5254 = vpop.permute.xlu0 %5253
    %5255 = vrot.lane.b32.xlu0 %v4964, 21
    %v5256 = vpop.permute.xlu0 %5255
    %5257 = vrot.lane.b32.xlu0 %v4978, 21
    %v5258 = vpop.permute.xlu0 %5257
    %5259 = vrot.lane.b32.xlu0 %v4983, 21
    %v5260 = vpop.permute.xlu0 %5259
    %5261 = vrot.lane.b32.xlu0 %v4997, 21
    %v5262 = vpop.permute.xlu0 %5261
    %5263 = vrot.lane.b32.xlu0 %v5002, 21
    %v5264 = vpop.permute.xlu0 %5263
    %5265 = vrot.lane.b32.xlu0 %v5016, 21
    %v5266 = vpop.permute.xlu0 %5265
    %5267 = vrot.lane.b32.xlu0 %v5021, 21
    %v5268 = vpop.permute.xlu0 %5267
    %5269 = vrot.lane.b32.xlu0 %v5035, 21
    %v5270 = vpop.permute.xlu0 %5269
    %5271 = vrot.lane.b32.xlu0 %v5040, 21
    %v5272 = vpop.permute.xlu0 %5271
    %5273 = vrot.lane.b32.xlu0 %v5054, 21
    %v5274 = vpop.permute.xlu0 %5273
    %5275 = vrot.lane.b32.xlu0 %v5059, 21
    %v5276 = vpop.permute.xlu0 %5275
    %5277 = vrot.lane.b32.xlu0 %v5073, 21
    %v5278 = vpop.permute.xlu0 %5277
    %5279 = vrot.lane.b32.xlu0 %v5078, 21
    %v5280 = vpop.permute.xlu0 %5279
    %5281 = vrot.lane.b32.xlu0 %v5092, 21
    %v5282 = vpop.permute.xlu0 %5281
    %5283 = vrot.lane.b32.xlu0 %v5097, 21
    %v5284 = vpop.permute.xlu0 %5283
    %5285 = vrot.lane.b32.xlu0 %v5111, 21
    %v5286 = vpop.permute.xlu0 %5285
    %5287 = vrot.lane.b32.xlu0 %v5116, 21
    %v5288 = vpop.permute.xlu0 %5287
    %5289 = vrot.lane.b32.xlu0 %v5130, 21
    %v5290 = vpop.permute.xlu0 %5289
    %5291 = vrot.lane.b32.xlu0 %v5135, 21
    %v5292 = vpop.permute.xlu0 %5291
    %5293 = vrot.lane.b32.xlu0 %v5149, 21
    %v5294 = vpop.permute.xlu0 %5293
    %5295 = vrot.lane.b32.xlu0 %v5154, 21
    %v5296 = vpop.permute.xlu0 %5295
    %5297 = vrot.lane.b32.xlu0 %v5168, 21
    %v5298 = vpop.permute.xlu0 %5297
    %5299 = vrot.lane.b32.xlu0 %v5173, 21
    %v5300 = vpop.permute.xlu0 %5299
    %5301 = vrot.lane.b32.xlu0 %v5187, 21
    %v5302 = vpop.permute.xlu0 %5301
    %5303 = vrot.lane.b32.xlu0 %v5192, 21
    %v5304 = vpop.permute.xlu0 %5303
    %vm5361 = vcmask 191656
    %5362 = vst.msk [vmem:[#allocation3] sm:$0xf] %vm5361, %v5194
    %vm5363 = vcmask 190632
    %5364 = vst.msk [vmem:[#allocation3 + $0x4] sm:$0x7] %vm5363, %v5196
    %5365 = vst.msk [vmem:[#allocation3 + $0x8] sm:$0xf] %vm5361, %v5198
    %5366 = vst.msk [vmem:[#allocation3 + $0xc] sm:$0x7] %vm5363, %v5200
    %5367 = vst.msk [vmem:[#allocation3 + $0x10] sm:$0xf] %vm5361, %v5202
    %5368 = vst.msk [vmem:[#allocation3 + $0x14] sm:$0x7] %vm5363, %v5204
    %5369 = vst.msk [vmem:[#allocation3 + $0x18] sm:$0xf] %vm5361, %v5206
    %5370 = vst.msk [vmem:[#allocation3 + $0x1c] sm:$0x7] %vm5363, %v5208
    %5371 = vst.msk [vmem:[#allocation3 + $0x20] sm:$0xf] %vm5361, %v5210
    %5372 = vst.msk [vmem:[#allocation3 + $0x24] sm:$0x7] %vm5363, %v5212
    %5373 = vst.msk [vmem:[#allocation3 + $0x28] sm:$0xf] %vm5361, %v5214
    %5374 = vst.msk [vmem:[#allocation3 + $0x2c] sm:$0x7] %vm5363, %v5216
    %5375 = vst.msk [vmem:[#allocation3 + $0x30] sm:$0xf] %vm5361, %v5218
    %5376 = vst.msk [vmem:[#allocation3 + $0x34] sm:$0x7] %vm5363, %v5220
    %5377 = vst.msk [vmem:[#allocation3 + $0x38] sm:$0xf] %vm5361, %v5222
    %5378 = vst.msk [vmem:[#allocation3 + $0x3c] sm:$0x7] %vm5363, %v5224
    %5379 = vst.msk [vmem:[#allocation3 + $0x40] sm:$0xf] %vm5361, %v5226
    %5380 = vst.msk [vmem:[#allocation3 + $0x44] sm:$0x7] %vm5363, %v5228
    %5381 = vst.msk [vmem:[#allocation3 + $0x48] sm:$0xf] %vm5361, %v5230
    %5382 = vst.msk [vmem:[#allocation3 + $0x4c] sm:$0x7] %vm5363, %v5232
    %5383 = vst.msk [vmem:[#allocation3 + $0x50] sm:$0xf] %vm5361, %v5234
    %5384 = vst.msk [vmem:[#allocation3 + $0x54] sm:$0x7] %vm5363, %v5236
    %5385 = vst.msk [vmem:[#allocation3 + $0x58] sm:$0xf] %vm5361, %v5238
    %5386 = vst.msk [vmem:[#allocation3 + $0x5c] sm:$0x7] %vm5363, %v5240
    %5387 = vst.msk [vmem:[#allocation3 + $0x60] sm:$0xf] %vm5361, %v5242
    %5388 = vst.msk [vmem:[#allocation3 + $0x64] sm:$0x7] %vm5363, %v5244
    %5389 = vst.msk [vmem:[#allocation3 + $0x68] sm:$0xf] %vm5361, %v5246
    %5390 = vst.msk [vmem:[#allocation3 + $0x6c] sm:$0x7] %vm5363, %v5248
    %5391 = vst.msk [vmem:[#allocation3 + $0x70] sm:$0xf] %vm5361, %v5250
    %5392 = vst.msk [vmem:[#allocation3 + $0x74] sm:$0x7] %vm5363, %v5252
    %5393 = vst.msk [vmem:[#allocation3 + $0x78] sm:$0xf] %vm5361, %v5254
    %5394 = vst.msk [vmem:[#allocation3 + $0x7c] sm:$0x7] %vm5363, %v5256
    %5395 = vst.msk [vmem:[#allocation3 + $0x80] sm:$0xf] %vm5361, %v5258
    %5396 = vst.msk [vmem:[#allocation3 + $0x84] sm:$0x7] %vm5363, %v5260
    %5397 = vst.msk [vmem:[#allocation3 + $0x88] sm:$0xf] %vm5361, %v5262
    %5398 = vst.msk [vmem:[#allocation3 + $0x8c] sm:$0x7] %vm5363, %v5264
    %5399 = vst.msk [vmem:[#allocation3 + $0x90] sm:$0xf] %vm5361, %v5266
    %5400 = vst.msk [vmem:[#allocation3 + $0x94] sm:$0x7] %vm5363, %v5268
    %5401 = vst.msk [vmem:[#allocation3 + $0x98] sm:$0xf] %vm5361, %v5270
    %5402 = vst.msk [vmem:[#allocation3 + $0x9c] sm:$0x7] %vm5363, %v5272
    %5403 = vst.msk [vmem:[#allocation3 + $0xa0] sm:$0xf] %vm5361, %v5274
    %5404 = vst.msk [vmem:[#allocation3 + $0xa4] sm:$0x7] %vm5363, %v5276
    %5405 = vst.msk [vmem:[#allocation3 + $0xa8] sm:$0xf] %vm5361, %v5278
    %5406 = vst.msk [vmem:[#allocation3 + $0xac] sm:$0x7] %vm5363, %v5280
    %5407 = vst.msk [vmem:[#allocation3 + $0xb0] sm:$0xf] %vm5361, %v5282
    %5408 = vst.msk [vmem:[#allocation3 + $0xb4] sm:$0x7] %vm5363, %v5284
    %5409 = vst.msk [vmem:[#allocation3 + $0xb8] sm:$0xf] %vm5361, %v5286
    %5410 = vst.msk [vmem:[#allocation3 + $0xbc] sm:$0x7] %vm5363, %v5288
    %5411 = vst.msk [vmem:[#allocation3 + $0xc0] sm:$0xf] %vm5361, %v5290
    %5412 = vst.msk [vmem:[#allocation3 + $0xc4] sm:$0x7] %vm5363, %v5292
    %5413 = vst.msk [vmem:[#allocation3 + $0xc8] sm:$0xf] %vm5361, %v5294
    %5414 = vst.msk [vmem:[#allocation3 + $0xcc] sm:$0x7] %vm5363, %v5296
    %5415 = vst.msk [vmem:[#allocation3 + $0xd0] sm:$0xf] %vm5361, %v5298
    %5416 = vst.msk [vmem:[#allocation3 + $0xd4] sm:$0x7] %vm5363, %v5300
    %5417 = vst.msk [vmem:[#allocation3 + $0xd8] sm:$0xf] %vm5361, %v5302
    %5418 = vst.msk [vmem:[#allocation3 + $0xdc] sm:$0x7] %vm5363, %v5304
    %v5419 = vld [vmem:[%s4098] sm:$0xfe]
    %v5420 = vld [vmem:[%s4098 + $0x8] sm:$0xfe]
    %v5421 = vld [vmem:[%s4098 + $0x10] sm:$0xfe]
    %v5422 = vld [vmem:[%s4098 + $0x18] sm:$0xfe]
    %v5423 = vld [vmem:[%s4098 + $0x20] sm:$0xfe]
    %v5424 = vld [vmem:[%s4098 + $0x28] sm:$0xfe]
    %v5425 = vld [vmem:[%s4098 + $0x30] sm:$0xfe]
    %v5426 = vld [vmem:[%s4098 + $0x38] sm:$0xfe]
    %v5427 = vld [vmem:[%s4098 + $0x40] sm:$0xfe]
    %v5428 = vld [vmem:[%s4098 + $0x48] sm:$0xfe]
    %v5429 = vld [vmem:[%s4098 + $0x50] sm:$0xfe]
    %v5430 = vld [vmem:[%s4098 + $0x58] sm:$0xfe]
    %v5431 = vld [vmem:[%s4098 + $0x60] sm:$0xfe]
    %v5432 = vld [vmem:[%s4098 + $0x68] sm:$0xfe]
    %v5433 = vld [vmem:[%s4098 + $0x80] sm:$0xfe]
    %v5434 = vld [vmem:[%s4098 + $0x88] sm:$0xfe]
    %v5435 = vld [vmem:[%s4098 + $0x90] sm:$0xfe]
    %v5436 = vld [vmem:[%s4098 + $0x98] sm:$0xfe]
    %v5437 = vld [vmem:[%s4098 + $0xa0] sm:$0xfe]
    %v5438 = vld [vmem:[%s4098 + $0xa8] sm:$0xfe]
    %v5439 = vld [vmem:[%s4098 + $0xb0] sm:$0xfe]
    %v5440 = vld [vmem:[%s4098 + $0xb8] sm:$0xfe]
    %v5441 = vld [vmem:[%s4098 + $0xc0] sm:$0xfe]
    %v5442 = vld [vmem:[%s4098 + $0xc8] sm:$0xfe]
    %v5443 = vld [vmem:[%s4098 + $0xd0] sm:$0xfe]
    %v5444 = vld [vmem:[%s4098 + $0xd8] sm:$0xfe]
    %v5445 = vld [vmem:[%s4098 + $0xe0] sm:$0xfe]
    %v5446 = vld [vmem:[%s4098 + $0xe8] sm:$0xfe]
    %v5475 = vunpack.c.l.b16 %v5419
    %v5476 = vunpack.c.h.b16 %v5419
    %v5477 = vunpack.c.l.b16 %v5420
    %v5478 = vunpack.c.h.b16 %v5420
    %v5479 = vunpack.c.l.b16 %v5421
    %v5480 = vunpack.c.h.b16 %v5421
    %v5481 = vunpack.c.l.b16 %v5422
    %v5482 = vunpack.c.h.b16 %v5422
    %v5483 = vunpack.c.l.b16 %v5423
    %v5484 = vunpack.c.h.b16 %v5423
    %v5485 = vunpack.c.l.b16 %v5424
    %v5486 = vunpack.c.h.b16 %v5424
    %v5487 = vunpack.c.l.b16 %v5425
    %v5488 = vunpack.c.h.b16 %v5425
    %v5489 = vunpack.c.l.b16 %v5426
    %v5490 = vunpack.c.h.b16 %v5426
    %v5491 = vunpack.c.l.b16 %v5427
    %v5492 = vunpack.c.h.b16 %v5427
    %v5493 = vunpack.c.l.b16 %v5428
    %v5494 = vunpack.c.h.b16 %v5428
    %v5495 = vunpack.c.l.b16 %v5429
    %v5496 = vunpack.c.h.b16 %v5429
    %v5497 = vunpack.c.l.b16 %v5430
    %v5498 = vunpack.c.h.b16 %v5430
    %v5499 = vunpack.c.l.b16 %v5431
    %v5500 = vunpack.c.h.b16 %v5431
    %v5501 = vunpack.c.l.b16 %v5432
    %v5502 = vunpack.c.h.b16 %v5432
    %v5503 = vunpack.c.l.b16 %v5433
    %v5504 = vunpack.c.h.b16 %v5433
    %v5505 = vunpack.c.l.b16 %v5434
    %v5506 = vunpack.c.h.b16 %v5434
    %v5507 = vunpack.c.l.b16 %v5435
    %v5508 = vunpack.c.h.b16 %v5435
    %v5509 = vunpack.c.l.b16 %v5436
    %v5510 = vunpack.c.h.b16 %v5436
    %v5511 = vunpack.c.l.b16 %v5437
    %v5512 = vunpack.c.h.b16 %v5437
    %v5513 = vunpack.c.l.b16 %v5438
    %v5514 = vunpack.c.h.b16 %v5438
    %v5515 = vunpack.c.l.b16 %v5439
    %v5516 = vunpack.c.h.b16 %v5439
    %v5517 = vunpack.c.l.b16 %v5440
    %v5518 = vunpack.c.h.b16 %v5440
    %v5519 = vunpack.c.l.b16 %v5441
    %v5520 = vunpack.c.h.b16 %v5441
    %v5521 = vunpack.c.l.b16 %v5442
    %v5522 = vunpack.c.h.b16 %v5442
    %v5523 = vunpack.c.l.b16 %v5443
    %v5524 = vunpack.c.h.b16 %v5443
    %v5525 = vunpack.c.l.b16 %v5444
    %v5526 = vunpack.c.h.b16 %v5444
    %v5527 = vunpack.c.l.b16 %v5445
    %v5528 = vunpack.c.h.b16 %v5445
    %v5529 = vunpack.c.l.b16 %v5446
    %v5530 = vunpack.c.h.b16 %v5446
    %v5531 = vpack.c.b16 %v5475, %v5475
    %v5532 = vpack.c.b16 %v5476, %v5476
    %v5533 = vpack.c.b16 %v5477, %v5477
    %v5534 = vpack.c.b16 %v5478, %v5478
    %v5535 = vpack.c.b16 %v5479, %v5479
    %v5536 = vpack.c.b16 %v5480, %v5480
    %v5537 = vpack.c.b16 %v5481, %v5481
    %v5538 = vpack.c.b16 %v5482, %v5482
    %v5539 = vpack.c.b16 %v5483, %v5483
    %v5540 = vpack.c.b16 %v5484, %v5484
    %v5541 = vpack.c.b16 %v5485, %v5485
    %v5542 = vpack.c.b16 %v5486, %v5486
    %v5543 = vpack.c.b16 %v5487, %v5487
    %v5544 = vpack.c.b16 %v5488, %v5488
    %v5545 = vpack.c.b16 %v5489, %v5489
    %v5546 = vpack.c.b16 %v5490, %v5490
    %v5547 = vpack.c.b16 %v5491, %v5491
    %v5548 = vpack.c.b16 %v5492, %v5492
    %v5549 = vpack.c.b16 %v5493, %v5493
    %v5550 = vpack.c.b16 %v5494, %v5494
    %v5551 = vpack.c.b16 %v5495, %v5495
    %v5552 = vpack.c.b16 %v5496, %v5496
    %v5553 = vpack.c.b16 %v5497, %v5497
    %v5554 = vpack.c.b16 %v5498, %v5498
    %v5555 = vpack.c.b16 %v5499, %v5499
    %v5556 = vpack.c.b16 %v5500, %v5500
    %v5557 = vpack.c.b16 %v5501, %v5501
    %v5558 = vpack.c.b16 %v5502, %v5502
    %v5559 = vpack.c.b16 %v5503, %v5503
    %v5560 = vpack.c.b16 %v5504, %v5504
    %v5561 = vpack.c.b16 %v5505, %v5505
    %v5562 = vpack.c.b16 %v5506, %v5506
    %v5563 = vpack.c.b16 %v5507, %v5507
    %v5564 = vpack.c.b16 %v5508, %v5508
    %v5565 = vpack.c.b16 %v5509, %v5509
    %v5566 = vpack.c.b16 %v5510, %v5510
    %v5567 = vpack.c.b16 %v5511, %v5511
    %v5568 = vpack.c.b16 %v5512, %v5512
    %v5569 = vpack.c.b16 %v5513, %v5513
    %v5570 = vpack.c.b16 %v5514, %v5514
    %v5571 = vpack.c.b16 %v5515, %v5515
    %v5572 = vpack.c.b16 %v5516, %v5516
    %v5573 = vpack.c.b16 %v5517, %v5517
    %v5574 = vpack.c.b16 %v5518, %v5518
    %v5575 = vpack.c.b16 %v5519, %v5519
    %v5576 = vpack.c.b16 %v5520, %v5520
    %v5577 = vpack.c.b16 %v5521, %v5521
    %v5578 = vpack.c.b16 %v5522, %v5522
    %v5579 = vpack.c.b16 %v5523, %v5523
    %v5580 = vpack.c.b16 %v5524, %v5524
    %v5581 = vpack.c.b16 %v5525, %v5525
    %v5582 = vpack.c.b16 %v5526, %v5526
    %v5583 = vpack.c.b16 %v5527, %v5527
    %v5584 = vpack.c.b16 %v5528, %v5528
    %v5585 = vpack.c.b16 %v5529, %v5529
    %v5586 = vpack.c.b16 %v5530, %v5530
    %v5587 = vrot.slane %v5531, 5
    %v5588 = vrot.slane %v5587, 4
    %v5589 = vrot.slane %v5532, 5
    %v5590 = vsel %vm1876, %v5588, %v5589
    %v5591 = vrot.slane %v5589, 4
    %v5592 = vrot.slane %v5533, 5
    %v5593 = vrot.slane %v5592, 4
    %v5594 = vrot.slane %v5534, 5
    %v5595 = vsel %vm1876, %v5593, %v5594
    %v5596 = vrot.slane %v5594, 4
    %v5597 = vrot.slane %v5535, 5
    %v5598 = vrot.slane %v5597, 4
    %v5599 = vrot.slane %v5536, 5
    %v5600 = vsel %vm1876, %v5598, %v5599
    %v5601 = vrot.slane %v5599, 4
    %v5602 = vrot.slane %v5537, 5
    %v5603 = vrot.slane %v5602, 4
    %v5604 = vrot.slane %v5538, 5
    %v5605 = vsel %vm1876, %v5603, %v5604
    %v5606 = vrot.slane %v5604, 4
    %v5607 = vrot.slane %v5539, 5
    %v5608 = vrot.slane %v5607, 4
    %v5609 = vrot.slane %v5540, 5
    %v5610 = vsel %vm1876, %v5608, %v5609
    %v5611 = vrot.slane %v5609, 4
    %v5612 = vrot.slane %v5541, 5
    %v5613 = vrot.slane %v5612, 4
    %v5614 = vrot.slane %v5542, 5
    %v5615 = vsel %vm1876, %v5613, %v5614
    %v5616 = vrot.slane %v5614, 4
    %v5617 = vrot.slane %v5543, 5
    %v5618 = vrot.slane %v5617, 4
    %v5619 = vrot.slane %v5544, 5
    %v5620 = vsel %vm1876, %v5618, %v5619
    %v5621 = vrot.slane %v5619, 4
    %v5622 = vrot.slane %v5545, 5
    %v5623 = vrot.slane %v5622, 4
    %v5624 = vrot.slane %v5546, 5
    %v5625 = vsel %vm1876, %v5623, %v5624
    %v5626 = vrot.slane %v5624, 4
    %v5627 = vrot.slane %v5547, 5
    %v5628 = vrot.slane %v5627, 4
    %v5629 = vrot.slane %v5548, 5
    %v5630 = vsel %vm1876, %v5628, %v5629
    %v5631 = vrot.slane %v5629, 4
    %v5632 = vrot.slane %v5549, 5
    %v5633 = vrot.slane %v5632, 4
    %v5634 = vrot.slane %v5550, 5
    %v5635 = vsel %vm1876, %v5633, %v5634
    %v5636 = vrot.slane %v5634, 4
    %v5637 = vrot.slane %v5551, 5
    %v5638 = vrot.slane %v5637, 4
    %v5639 = vrot.slane %v5552, 5
    %v5640 = vsel %vm1876, %v5638, %v5639
    %v5641 = vrot.slane %v5639, 4
    %v5642 = vrot.slane %v5553, 5
    %v5643 = vrot.slane %v5642, 4
    %v5644 = vrot.slane %v5554, 5
    %v5645 = vsel %vm1876, %v5643, %v5644
    %v5646 = vrot.slane %v5644, 4
    %v5647 = vrot.slane %v5555, 5
    %v5648 = vrot.slane %v5647, 4
    %v5649 = vrot.slane %v5556, 5
    %v5650 = vsel %vm1876, %v5648, %v5649
    %v5651 = vrot.slane %v5649, 4
    %v5652 = vrot.slane %v5557, 5
    %v5653 = vrot.slane %v5652, 4
    %v5654 = vrot.slane %v5558, 5
    %v5655 = vsel %vm1876, %v5653, %v5654
    %v5656 = vrot.slane %v5654, 4
    %v5657 = vrot.slane %v5559, 5
    %v5658 = vrot.slane %v5657, 4
    %v5659 = vrot.slane %v5560, 5
    %v5660 = vsel %vm1876, %v5658, %v5659
    %v5661 = vrot.slane %v5659, 4
    %v5662 = vrot.slane %v5561, 5
    %v5663 = vrot.slane %v5662, 4
    %v5664 = vrot.slane %v5562, 5
    %v5665 = vsel %vm1876, %v5663, %v5664
    %v5666 = vrot.slane %v5664, 4
    %v5667 = vrot.slane %v5563, 5
    %v5668 = vrot.slane %v5667, 4
    %v5669 = vrot.slane %v5564, 5
    %v5670 = vsel %vm1876, %v5668, %v5669
    %v5671 = vrot.slane %v5669, 4
    %v5672 = vrot.slane %v5565, 5
    %v5673 = vrot.slane %v5672, 4
    %v5674 = vrot.slane %v5566, 5
    %v5675 = vsel %vm1876, %v5673, %v5674
    %v5676 = vrot.slane %v5674, 4
    %v5677 = vrot.slane %v5567, 5
    %v5678 = vrot.slane %v5677, 4
    %v5679 = vrot.slane %v5568, 5
    %v5680 = vsel %vm1876, %v5678, %v5679
    %v5681 = vrot.slane %v5679, 4
    %v5682 = vrot.slane %v5569, 5
    %v5683 = vrot.slane %v5682, 4
    %v5684 = vrot.slane %v5570, 5
    %v5685 = vsel %vm1876, %v5683, %v5684
    %v5686 = vrot.slane %v5684, 4
    %v5687 = vrot.slane %v5571, 5
    %v5688 = vrot.slane %v5687, 4
    %v5689 = vrot.slane %v5572, 5
    %v5690 = vsel %vm1876, %v5688, %v5689
    %v5691 = vrot.slane %v5689, 4
    %v5692 = vrot.slane %v5573, 5
    %v5693 = vrot.slane %v5692, 4
    %v5694 = vrot.slane %v5574, 5
    %v5695 = vsel %vm1876, %v5693, %v5694
    %v5696 = vrot.slane %v5694, 4
    %v5697 = vrot.slane %v5575, 5
    %v5698 = vrot.slane %v5697, 4
    %v5699 = vrot.slane %v5576, 5
    %v5700 = vsel %vm1876, %v5698, %v5699
    %v5701 = vrot.slane %v5699, 4
    %v5702 = vrot.slane %v5577, 5
    %v5703 = vrot.slane %v5702, 4
    %v5704 = vrot.slane %v5578, 5
    %v5705 = vsel %vm1876, %v5703, %v5704
    %v5706 = vrot.slane %v5704, 4
    %v5707 = vrot.slane %v5579, 5
    %v5708 = vrot.slane %v5707, 4
    %v5709 = vrot.slane %v5580, 5
    %v5710 = vsel %vm1876, %v5708, %v5709
    %v5711 = vrot.slane %v5709, 4
    %v5712 = vrot.slane %v5581, 5
    %v5713 = vrot.slane %v5712, 4
    %v5714 = vrot.slane %v5582, 5
    %v5715 = vsel %vm1876, %v5713, %v5714
    %v5716 = vrot.slane %v5714, 4
    %v5717 = vrot.slane %v5583, 5
    %v5718 = vrot.slane %v5717, 4
    %v5719 = vrot.slane %v5584, 5
    %v5720 = vsel %vm1876, %v5718, %v5719
    %v5721 = vrot.slane %v5719, 4
    %v5722 = vrot.slane %v5585, 5
    %v5723 = vrot.slane %v5722, 4
    %v5724 = vrot.slane %v5586, 5
    %v5725 = vsel %vm1876, %v5723, %v5724
    %v5726 = vrot.slane %v5724, 4
    %5727 = vrot.lane.b32.xlu0 %v5590, 24
    %v5728 = vpop.permute.xlu0 %5727
    %5729 = vrot.lane.b32.xlu0 %v5591, 24
    %v5730 = vpop.permute.xlu0 %5729
    %5731 = vrot.lane.b32.xlu0 %v5595, 24
    %v5732 = vpop.permute.xlu0 %5731
    %5733 = vrot.lane.b32.xlu0 %v5596, 24
    %v5734 = vpop.permute.xlu0 %5733
    %5735 = vrot.lane.b32.xlu0 %v5600, 24
    %v5736 = vpop.permute.xlu0 %5735
    %5737 = vrot.lane.b32.xlu0 %v5601, 24
    %v5738 = vpop.permute.xlu0 %5737
    %5739 = vrot.lane.b32.xlu0 %v5605, 24
    %v5740 = vpop.permute.xlu0 %5739
    %5741 = vrot.lane.b32.xlu0 %v5606, 24
    %v5742 = vpop.permute.xlu0 %5741
    %5743 = vrot.lane.b32.xlu0 %v5610, 24
    %v5744 = vpop.permute.xlu0 %5743
    %5745 = vrot.lane.b32.xlu0 %v5611, 24
    %v5746 = vpop.permute.xlu0 %5745
    %5747 = vrot.lane.b32.xlu0 %v5615, 24
    %v5748 = vpop.permute.xlu0 %5747
    %5749 = vrot.lane.b32.xlu0 %v5616, 24
    %v5750 = vpop.permute.xlu0 %5749
    %5751 = vrot.lane.b32.xlu0 %v5620, 24
    %v5752 = vpop.permute.xlu0 %5751
    %5753 = vrot.lane.b32.xlu0 %v5621, 24
    %v5754 = vpop.permute.xlu0 %5753
    %5755 = vrot.lane.b32.xlu0 %v5625, 24
    %v5756 = vpop.permute.xlu0 %5755
    %5757 = vrot.lane.b32.xlu0 %v5626, 24
    %v5758 = vpop.permute.xlu0 %5757
    %5759 = vrot.lane.b32.xlu0 %v5630, 24
    %v5760 = vpop.permute.xlu0 %5759
    %5761 = vrot.lane.b32.xlu0 %v5631, 24
    %v5762 = vpop.permute.xlu0 %5761
    %5763 = vrot.lane.b32.xlu0 %v5635, 24
    %v5764 = vpop.permute.xlu0 %5763
    %5765 = vrot.lane.b32.xlu0 %v5636, 24
    %v5766 = vpop.permute.xlu0 %5765
    %5767 = vrot.lane.b32.xlu0 %v5640, 24
    %v5768 = vpop.permute.xlu0 %5767
    %5769 = vrot.lane.b32.xlu0 %v5641, 24
    %v5770 = vpop.permute.xlu0 %5769
    %5771 = vrot.lane.b32.xlu0 %v5645, 24
    %v5772 = vpop.permute.xlu0 %5771
    %5773 = vrot.lane.b32.xlu0 %v5646, 24
    %v5774 = vpop.permute.xlu0 %5773
    %5775 = vrot.lane.b32.xlu0 %v5650, 24
    %v5776 = vpop.permute.xlu0 %5775
    %5777 = vrot.lane.b32.xlu0 %v5651, 24
    %v5778 = vpop.permute.xlu0 %5777
    %5779 = vrot.lane.b32.xlu0 %v5655, 24
    %v5780 = vpop.permute.xlu0 %5779
    %5781 = vrot.lane.b32.xlu0 %v5656, 24
    %v5782 = vpop.permute.xlu0 %5781
    %5783 = vrot.lane.b32.xlu0 %v5660, 24
    %v5784 = vpop.permute.xlu0 %5783
    %5785 = vrot.lane.b32.xlu0 %v5661, 24
    %v5786 = vpop.permute.xlu0 %5785
    %5787 = vrot.lane.b32.xlu0 %v5665, 24
    %v5788 = vpop.permute.xlu0 %5787
    %5789 = vrot.lane.b32.xlu0 %v5666, 24
    %v5790 = vpop.permute.xlu0 %5789
    %5791 = vrot.lane.b32.xlu0 %v5670, 24
    %v5792 = vpop.permute.xlu0 %5791
    %5793 = vrot.lane.b32.xlu0 %v5671, 24
    %v5794 = vpop.permute.xlu0 %5793
    %5795 = vrot.lane.b32.xlu0 %v5675, 24
    %v5796 = vpop.permute.xlu0 %5795
    %5797 = vrot.lane.b32.xlu0 %v5676, 24
    %v5798 = vpop.permute.xlu0 %5797
    %5799 = vrot.lane.b32.xlu0 %v5680, 24
    %v5800 = vpop.permute.xlu0 %5799
    %5801 = vrot.lane.b32.xlu0 %v5681, 24
    %v5802 = vpop.permute.xlu0 %5801
    %5803 = vrot.lane.b32.xlu0 %v5685, 24
    %v5804 = vpop.permute.xlu0 %5803
    %5805 = vrot.lane.b32.xlu0 %v5686, 24
    %v5806 = vpop.permute.xlu0 %5805
    %5807 = vrot.lane.b32.xlu0 %v5690, 24
    %v5808 = vpop.permute.xlu0 %5807
    %5809 = vrot.lane.b32.xlu0 %v5691, 24
    %v5810 = vpop.permute.xlu0 %5809
    %5811 = vrot.lane.b32.xlu0 %v5695, 24
    %v5812 = vpop.permute.xlu0 %5811
    %5813 = vrot.lane.b32.xlu0 %v5696, 24
    %v5814 = vpop.permute.xlu0 %5813
    %5815 = vrot.lane.b32.xlu0 %v5700, 24
    %v5816 = vpop.permute.xlu0 %5815
    %5817 = vrot.lane.b32.xlu0 %v5701, 24
    %v5818 = vpop.permute.xlu0 %5817
    %5819 = vrot.lane.b32.xlu0 %v5705, 24
    %v5820 = vpop.permute.xlu0 %5819
    %5821 = vrot.lane.b32.xlu0 %v5706, 24
    %v5822 = vpop.permute.xlu0 %5821
    %5823 = vrot.lane.b32.xlu0 %v5710, 24
    %v5824 = vpop.permute.xlu0 %5823
    %5825 = vrot.lane.b32.xlu0 %v5711, 24
    %v5826 = vpop.permute.xlu0 %5825
    %5827 = vrot.lane.b32.xlu0 %v5715, 24
    %v5828 = vpop.permute.xlu0 %5827
    %5829 = vrot.lane.b32.xlu0 %v5716, 24
    %v5830 = vpop.permute.xlu0 %5829
    %5831 = vrot.lane.b32.xlu0 %v5720, 24
    %v5832 = vpop.permute.xlu0 %5831
    %5833 = vrot.lane.b32.xlu0 %v5721, 24
    %v5834 = vpop.permute.xlu0 %5833
    %5835 = vrot.lane.b32.xlu0 %v5725, 24
    %v5836 = vpop.permute.xlu0 %5835
    %5837 = vrot.lane.b32.xlu0 %v5726, 24
    %v5838 = vpop.permute.xlu0 %5837
    %vm5895 = vcmask 216256
    %5896 = vst.msk [vmem:[#allocation3] sm:$0xf] %vm5895, %v5728
    %vm5897 = vcmask 215232
    %5898 = vst.msk [vmem:[#allocation3 + $0x4] sm:$0x7] %vm5897, %v5730
    %5899 = vst.msk [vmem:[#allocation3 + $0x8] sm:$0xf] %vm5895, %v5732
    %5900 = vst.msk [vmem:[#allocation3 + $0xc] sm:$0x7] %vm5897, %v5734
    %5901 = vst.msk [vmem:[#allocation3 + $0x10] sm:$0xf] %vm5895, %v5736
    %5902 = vst.msk [vmem:[#allocation3 + $0x14] sm:$0x7] %vm5897, %v5738
    %5903 = vst.msk [vmem:[#allocation3 + $0x18] sm:$0xf] %vm5895, %v5740
    %5904 = vst.msk [vmem:[#allocation3 + $0x1c] sm:$0x7] %vm5897, %v5742
    %5905 = vst.msk [vmem:[#allocation3 + $0x20] sm:$0xf] %vm5895, %v5744
    %5906 = vst.msk [vmem:[#allocation3 + $0x24] sm:$0x7] %vm5897, %v5746
    %5907 = vst.msk [vmem:[#allocation3 + $0x28] sm:$0xf] %vm5895, %v5748
    %5908 = vst.msk [vmem:[#allocation3 + $0x2c] sm:$0x7] %vm5897, %v5750
    %5909 = vst.msk [vmem:[#allocation3 + $0x30] sm:$0xf] %vm5895, %v5752
    %5910 = vst.msk [vmem:[#allocation3 + $0x34] sm:$0x7] %vm5897, %v5754
    %5911 = vst.msk [vmem:[#allocation3 + $0x38] sm:$0xf] %vm5895, %v5756
    %5912 = vst.msk [vmem:[#allocation3 + $0x3c] sm:$0x7] %vm5897, %v5758
    %5913 = vst.msk [vmem:[#allocation3 + $0x40] sm:$0xf] %vm5895, %v5760
    %5914 = vst.msk [vmem:[#allocation3 + $0x44] sm:$0x7] %vm5897, %v5762
    %5915 = vst.msk [vmem:[#allocation3 + $0x48] sm:$0xf] %vm5895, %v5764
    %5916 = vst.msk [vmem:[#allocation3 + $0x4c] sm:$0x7] %vm5897, %v5766
    %5917 = vst.msk [vmem:[#allocation3 + $0x50] sm:$0xf] %vm5895, %v5768
    %5918 = vst.msk [vmem:[#allocation3 + $0x54] sm:$0x7] %vm5897, %v5770
    %5919 = vst.msk [vmem:[#allocation3 + $0x58] sm:$0xf] %vm5895, %v5772
    %5920 = vst.msk [vmem:[#allocation3 + $0x5c] sm:$0x7] %vm5897, %v5774
    %5921 = vst.msk [vmem:[#allocation3 + $0x60] sm:$0xf] %vm5895, %v5776
    %5922 = vst.msk [vmem:[#allocation3 + $0x64] sm:$0x7] %vm5897, %v5778
    %5923 = vst.msk [vmem:[#allocation3 + $0x68] sm:$0xf] %vm5895, %v5780
    %5924 = vst.msk [vmem:[#allocation3 + $0x6c] sm:$0x7] %vm5897, %v5782
    %5925 = vst.msk [vmem:[#allocation3 + $0x70] sm:$0xf] %vm5895, %v5784
    %5926 = vst.msk [vmem:[#allocation3 + $0x74] sm:$0x7] %vm5897, %v5786
    %5927 = vst.msk [vmem:[#allocation3 + $0x78] sm:$0xf] %vm5895, %v5788
    %5928 = vst.msk [vmem:[#allocation3 + $0x7c] sm:$0x7] %vm5897, %v5790
    %5929 = vst.msk [vmem:[#allocation3 + $0x80] sm:$0xf] %vm5895, %v5792
    %5930 = vst.msk [vmem:[#allocation3 + $0x84] sm:$0x7] %vm5897, %v5794
    %5931 = vst.msk [vmem:[#allocation3 + $0x88] sm:$0xf] %vm5895, %v5796
    %5932 = vst.msk [vmem:[#allocation3 + $0x8c] sm:$0x7] %vm5897, %v5798
    %5933 = vst.msk [vmem:[#allocation3 + $0x90] sm:$0xf] %vm5895, %v5800
    %5934 = vst.msk [vmem:[#allocation3 + $0x94] sm:$0x7] %vm5897, %v5802
    %5935 = vst.msk [vmem:[#allocation3 + $0x98] sm:$0xf] %vm5895, %v5804
    %5936 = vst.msk [vmem:[#allocation3 + $0x9c] sm:$0x7] %vm5897, %v5806
    %5937 = vst.msk [vmem:[#allocation3 + $0xa0] sm:$0xf] %vm5895, %v5808
    %5938 = vst.msk [vmem:[#allocation3 + $0xa4] sm:$0x7] %vm5897, %v5810
    %5939 = vst.msk [vmem:[#allocation3 + $0xa8] sm:$0xf] %vm5895, %v5812
    %5940 = vst.msk [vmem:[#allocation3 + $0xac] sm:$0x7] %vm5897, %v5814
    %5941 = vst.msk [vmem:[#allocation3 + $0xb0] sm:$0xf] %vm5895, %v5816
    %5942 = vst.msk [vmem:[#allocation3 + $0xb4] sm:$0x7] %vm5897, %v5818
    %5943 = vst.msk [vmem:[#allocation3 + $0xb8] sm:$0xf] %vm5895, %v5820
    %5944 = vst.msk [vmem:[#allocation3 + $0xbc] sm:$0x7] %vm5897, %v5822
    %5945 = vst.msk [vmem:[#allocation3 + $0xc0] sm:$0xf] %vm5895, %v5824
    %5946 = vst.msk [vmem:[#allocation3 + $0xc4] sm:$0x7] %vm5897, %v5826
    %5947 = vst.msk [vmem:[#allocation3 + $0xc8] sm:$0xf] %vm5895, %v5828
    %5948 = vst.msk [vmem:[#allocation3 + $0xcc] sm:$0x7] %vm5897, %v5830
    %5949 = vst.msk [vmem:[#allocation3 + $0xd0] sm:$0xf] %vm5895, %v5832
    %5950 = vst.msk [vmem:[#allocation3 + $0xd4] sm:$0x7] %vm5897, %v5834
    %5951 = vst.msk [vmem:[#allocation3 + $0xd8] sm:$0xf] %vm5895, %v5836
    %5952 = vst.msk [vmem:[#allocation3 + $0xdc] sm:$0x7] %vm5897, %v5838
    %v5953 = vld [vmem:[#allocation3] sm:$0xf]
    %v5954 = vld [vmem:[#allocation3 + $0x4] sm:$0x7]
    %v5955 = vld [vmem:[#allocation3 + $0x8] sm:$0xf]
    %v5956 = vld [vmem:[#allocation3 + $0xc] sm:$0x7]
    %v5957 = vld [vmem:[#allocation3 + $0x10] sm:$0xf]
    %v5958 = vld [vmem:[#allocation3 + $0x14] sm:$0x7]
    %v5959 = vld [vmem:[#allocation3 + $0x18] sm:$0xf]
    %v5960 = vld [vmem:[#allocation3 + $0x1c] sm:$0x7]
    %v5961 = vld [vmem:[#allocation3 + $0x20] sm:$0xf]
    %v5962 = vld [vmem:[#allocation3 + $0x24] sm:$0x7]
    %v5963 = vld [vmem:[#allocation3 + $0x28] sm:$0xf]
    %v5964 = vld [vmem:[#allocation3 + $0x2c] sm:$0x7]
    %v5965 = vld [vmem:[#allocation3 + $0x30] sm:$0xf]
    %v5966 = vld [vmem:[#allocation3 + $0x34] sm:$0x7]
    %v5967 = vld [vmem:[#allocation3 + $0x38] sm:$0xf]
    %v5968 = vld [vmem:[#allocation3 + $0x3c] sm:$0x7]
    %v5969 = vld [vmem:[#allocation3 + $0x40] sm:$0xf]
    %v5970 = vld [vmem:[#allocation3 + $0x44] sm:$0x7]
    %v5971 = vld [vmem:[#allocation3 + $0x48] sm:$0xf]
    %v5972 = vld [vmem:[#allocation3 + $0x4c] sm:$0x7]
    %v5973 = vld [vmem:[#allocation3 + $0x50] sm:$0xf]
    %v5974 = vld [vmem:[#allocation3 + $0x54] sm:$0x7]
    %v5975 = vld [vmem:[#allocation3 + $0x58] sm:$0xf]
    %v5976 = vld [vmem:[#allocation3 + $0x5c] sm:$0x7]
    %v5977 = vld [vmem:[#allocation3 + $0x60] sm:$0xf]
    %v5978 = vld [vmem:[#allocation3 + $0x64] sm:$0x7]
    %v5979 = vld [vmem:[#allocation3 + $0x68] sm:$0xf]
    %v5980 = vld [vmem:[#allocation3 + $0x6c] sm:$0x7]
    %v5981 = vld [vmem:[#allocation3 + $0x70] sm:$0xf]
    %v5982 = vld [vmem:[#allocation3 + $0x74] sm:$0x7]
    %v5983 = vld [vmem:[#allocation3 + $0x78] sm:$0xf]
    %v5984 = vld [vmem:[#allocation3 + $0x7c] sm:$0x7]
    %v5985 = vld [vmem:[#allocation3 + $0x80] sm:$0xf]
    %v5986 = vld [vmem:[#allocation3 + $0x84] sm:$0x7]
    %v5987 = vld [vmem:[#allocation3 + $0x88] sm:$0xf]
    %v5988 = vld [vmem:[#allocation3 + $0x8c] sm:$0x7]
    %v5989 = vld [vmem:[#allocation3 + $0x90] sm:$0xf]
    %v5990 = vld [vmem:[#allocation3 + $0x94] sm:$0x7]
    %v5991 = vld [vmem:[#allocation3 + $0x98] sm:$0xf]
    %v5992 = vld [vmem:[#allocation3 + $0x9c] sm:$0x7]
    %v5993 = vld [vmem:[#allocation3 + $0xa0] sm:$0xf]
    %v5994 = vld [vmem:[#allocation3 + $0xa4] sm:$0x7]
    %v5995 = vld [vmem:[#allocation3 + $0xa8] sm:$0xf]
    %v5996 = vld [vmem:[#allocation3 + $0xac] sm:$0x7]
    %v5997 = vld [vmem:[#allocation3 + $0xb0] sm:$0xf]
    %v5998 = vld [vmem:[#allocation3 + $0xb4] sm:$0x7]
    %v5999 = vld [vmem:[#allocation3 + $0xb8] sm:$0xf]
    %v6000 = vld [vmem:[#allocation3 + $0xbc] sm:$0x7]
    %v6001 = vld [vmem:[#allocation3 + $0xc0] sm:$0xf]
    %v6002 = vld [vmem:[#allocation3 + $0xc4] sm:$0x7]
    %v6003 = vld [vmem:[#allocation3 + $0xc8] sm:$0xf]
    %v6004 = vld [vmem:[#allocation3 + $0xcc] sm:$0x7]
    %v6005 = vld [vmem:[#allocation3 + $0xd0] sm:$0xf]
    %v6006 = vld [vmem:[#allocation3 + $0xd4] sm:$0x7]
    %v6007 = vld [vmem:[#allocation3 + $0xd8] sm:$0xf]
    %v6008 = vld [vmem:[#allocation3 + $0xdc] sm:$0x7]
    %v6009 = vld [vmem:[%s1] sm:$0xf]
    %v6010 = vld [vmem:[%s1 + $0x4] sm:$0xf]
    %v6011 = vld [vmem:[%s1 + $0x8] sm:$0xf]
    %v6012 = vld [vmem:[%s1 + $0xc] sm:$0x3]
    %v6015 = vunpack.c.l.b16 %v5953
    %v6016 = vunpack.c.l.b16 %v5954
    %v6017 = vpack.c.b16 %v6016, %v6015
    %v6022 = vunpack.c.l.b16 %v6009
    %v6023 = vunpack.c.l.b16 %v6010
    %v6024 = vunpack.c.l.b16 %v6011
    %v6025 = vunpack.c.l.b16 %v6012
    %v6026 = vpack.c.b16 %v6023, %v6022
    %v6027 = vpack.c.b16 %v6025, %v6024
    %vm6029 = vcmask 220160
    %v6031 = vsel %vm6029, %v6017, 0
    %vm6033 = vcmask 1044480
    %vm6034 = vcmask 1045504
    %v6035 = vsel %vm6033, 4294967295, 65535
    %v6036 = vsel %vm6034, %v6035, 0
    %v6038 = vand.u32 %v6027, %v6036
    %6040 = vmatprep.subr.bf16.mxu0 0
    %6041 = vmatpush1.bf16.msra.mxu0 %v6026
    %6042 = vmatprep.subr.bf16.mxu0 0
    %6043 = vmatpush1.bf16.msra.mxu0 %v6038
    %6044 = vmatprep.subr.bf16.mxu0 0
    %6045 = vmatpush1.bf16.msra.mxu0 0
    %6046 = vmatprep.subr.bf16.mxu0 0
    %6047 = vmatpush1.bf16.msra.mxu0 0
    %6048 = vmatprep.subr.bf16.mxu0 0
    %6049 = vmatpush1.bf16.msra.mxu0 0
    %6050 = vmatprep.subr.bf16.mxu0 0
    %6051 = vmatpush1.bf16.msra.mxu0 0
    %6052 = vmatprep.subr.bf16.mxu0 0
    %6053 = vmatpush1.bf16.msra.mxu0 0
    %6054 = vmatprep.subr.bf16.mxu0 0
    %6055 = vmatpush1.bf16.msra.mxu0 0
    %6056 = vmatprep.subr.bf16.mxu0 0
    %6057 = vmatpush1.bf16.msra.mxu0 0
    %6058 = vmatprep.subr.bf16.mxu0 0
    %6059 = vmatpush1.bf16.msra.mxu0 0
    %6060 = vmatprep.subr.bf16.mxu0 0
    %6061 = vmatpush1.bf16.msra.mxu0 0
    %6062 = vmatprep.subr.bf16.mxu0 0
    %6063 = vmatpush1.bf16.msra.mxu0 0
    %6064 = vmatprep.subr.bf16.mxu0 0
    %6065 = vmatpush1.bf16.msra.mxu0 0
    %6066 = vmatprep.subr.bf16.mxu0 0
    %6067 = vmatpush1.bf16.msra.mxu0 0
    %6068 = vmatprep.subr.bf16.mxu0 0
    %6069 = vmatpush1.bf16.msra.mxu0 0
    %6070 = vmatprep.subr.bf16.mxu0 0
    %6071 = vmatpush1.bf16.msra.mxu0 0
    %6072 = vmatprep.mubr.bf16.mxu0 0
    %6073 = vmatmul.mubr.bf16.gmra.mrb[0].mxu0 %v6031
    %v6074 = vpop.f32.mrb[0].mxu0
    %v6075 = vadd.f32 0.0, %v6074
    %v6076 = vpop.f32.mrb[0].mxu0
    %v6077 = vpop.f32.mrb[0].mxu0
    %v6078 = vadd.f32 0.0, %v6077
    %v6079 = vpop.f32.mrb[0].mxu0
    %6080 = vdwg.mxu0
    %v6083 = vunpack.c.l.b16 %v5955
    %v6084 = vunpack.c.l.b16 %v5956
    %v6085 = vpack.c.b16 %v6084, %v6083
    %v6087 = vsel %vm6029, %v6085, 0
    %6089 = vmatprep.subr.bf16.mxu0 0
    %6090 = vmatpush1.bf16.msra.mxu0 %v6026
    %6091 = vmatprep.subr.bf16.mxu0 0
    %6092 = vmatpush1.bf16.msra.mxu0 %v6038
    %6093 = vmatprep.subr.bf16.mxu0 0
    %6094 = vmatpush1.bf16.msra.mxu0 0
    %6095 = vmatprep.subr.bf16.mxu0 0
    %6096 = vmatpush1.bf16.msra.mxu0 0
    %6097 = vmatprep.subr.bf16.mxu0 0
    %6098 = vmatpush1.bf16.msra.mxu0 0
    %6099 = vmatprep.subr.bf16.mxu0 0
    %6100 = vmatpush1.bf16.msra.mxu0 0
    %6101 = vmatprep.subr.bf16.mxu0 0
    %6102 = vmatpush1.bf16.msra.mxu0 0
    %6103 = vmatprep.subr.bf16.mxu0 0
    %6104 = vmatpush1.bf16.msra.mxu0 0
    %6105 = vmatprep.subr.bf16.mxu0 0
    %6106 = vmatpush1.bf16.msra.mxu0 0
    %6107 = vmatprep.subr.bf16.mxu0 0
    %6108 = vmatpush1.bf16.msra.mxu0 0
    %6109 = vmatprep.subr.bf16.mxu0 0
    %6110 = vmatpush1.bf16.msra.mxu0 0
    %6111 = vmatprep.subr.bf16.mxu0 0
    %6112 = vmatpush1.bf16.msra.mxu0 0
    %6113 = vmatprep.subr.bf16.mxu0 0
    %6114 = vmatpush1.bf16.msra.mxu0 0
    %6115 = vmatprep.subr.bf16.mxu0 0
    %6116 = vmatpush1.bf16.msra.mxu0 0
    %6117 = vmatprep.subr.bf16.mxu0 0
    %6118 = vmatpush1.bf16.msra.mxu0 0
    %6119 = vmatprep.subr.bf16.mxu0 0
    %6120 = vmatpush1.bf16.msra.mxu0 0
    %6121 = vmatprep.mubr.bf16.mxu0 0
    %6122 = vmatmul.mubr.bf16.gmra.mrb[0].mxu0 %v6087
    %v6123 = vpop.f32.mrb[0].mxu0
    %v6124 = vadd.f32 0.0, %v6123
    %v6125 = vpop.f32.mrb[0].mxu0
    %v6126 = vpop.f32.mrb[0].mxu0
    %v6127 = vadd.f32 0.0, %v6126
    %v6128 = vpop.f32.mrb[0].mxu0
    %6129 = vdwg.mxu0
    %v6132 = vunpack.c.l.b16 %v5957
    %v6133 = vunpack.c.l.b16 %v5958
    %v6134 = vpack.c.b16 %v6133, %v6132
    %v6136 = vsel %vm6029, %v6134, 0
    %6138 = vmatprep.subr.bf16.mxu0 0
    %6139 = vmatpush1.bf16.msra.mxu0 %v6026
    %6140 = vmatprep.subr.bf16.mxu0 0
    %6141 = vmatpush1.bf16.msra.mxu0 %v6038
    %6142 = vmatprep.subr.bf16.mxu0 0
    %6143 = vmatpush1.bf16.msra.mxu0 0
    %6144 = vmatprep.subr.bf16.mxu0 0
    %6145 = vmatpush1.bf16.msra.mxu0 0
    %6146 = vmatprep.subr.bf16.mxu0 0
    %6147 = vmatpush1.bf16.msra.mxu0 0
    %6148 = vmatprep.subr.bf16.mxu0 0
    %6149 = vmatpush1.bf16.msra.mxu0 0
    %6150 = vmatprep.subr.bf16.mxu0 0
    %6151 = vmatpush1.bf16.msra.mxu0 0
    %6152 = vmatprep.subr.bf16.mxu0 0
    %6153 = vmatpush1.bf16.msra.mxu0 0
    %6154 = vmatprep.subr.bf16.mxu0 0
    %6155 = vmatpush1.bf16.msra.mxu0 0
    %6156 = vmatprep.subr.bf16.mxu0 0
    %6157 = vmatpush1.bf16.msra.mxu0 0
    %6158 = vmatprep.subr.bf16.mxu0 0
    %6159 = vmatpush1.bf16.msra.mxu0 0
    %6160 = vmatprep.subr.bf16.mxu0 0
    %6161 = vmatpush1.bf16.msra.mxu0 0
    %6162 = vmatprep.subr.bf16.mxu0 0
    %6163 = vmatpush1.bf16.msra.mxu0 0
    %6164 = vmatprep.subr.bf16.mxu0 0
    %6165 = vmatpush1.bf16.msra.mxu0 0
    %6166 = vmatprep.subr.bf16.mxu0 0
    %6167 = vmatpush1.bf16.msra.mxu0 0
    %6168 = vmatprep.subr.bf16.mxu0 0
    %6169 = vmatpush1.bf16.msra.mxu0 0
    %6170 = vmatprep.mubr.bf16.mxu0 0
    %6171 = vmatmul.mubr.bf16.gmra.mrb[0].mxu0 %v6136
    %v6172 = vpop.f32.mrb[0].mxu0
    %v6173 = vadd.f32 0.0, %v6172
    %v6174 = vpop.f32.mrb[0].mxu0
    %v6175 = vpop.f32.mrb[0].mxu0
    %v6176 = vadd.f32 0.0, %v6175
    %v6177 = vpop.f32.mrb[0].mxu0
    %6178 = vdwg.mxu0
    %v6181 = vunpack.c.l.b16 %v5959
    %v6182 = vunpack.c.l.b16 %v5960
    %v6183 = vpack.c.b16 %v6182, %v6181
    %v6185 = vsel %vm6029, %v6183, 0
    %6187 = vmatprep.subr.bf16.mxu0 0
    %6188 = vmatpush1.bf16.msra.mxu0 %v6026
    %6189 = vmatprep.subr.bf16.mxu0 0
    %6190 = vmatpush1.bf16.msra.mxu0 %v6038
    %6191 = vmatprep.subr.bf16.mxu0 0
    %6192 = vmatpush1.bf16.msra.mxu0 0
    %6193 = vmatprep.subr.bf16.mxu0 0
    %6194 = vmatpush1.bf16.msra.mxu0 0
    %6195 = vmatprep.subr.bf16.mxu0 0
    %6196 = vmatpush1.bf16.msra.mxu0 0
    %6197 = vmatprep.subr.bf16.mxu0 0
    %6198 = vmatpush1.bf16.msra.mxu0 0
    %6199 = vmatprep.subr.bf16.mxu0 0
    %6200 = vmatpush1.bf16.msra.mxu0 0
    %6201 = vmatprep.subr.bf16.mxu0 0
    %6202 = vmatpush1.bf16.msra.mxu0 0
    %6203 = vmatprep.subr.bf16.mxu0 0
    %6204 = vmatpush1.bf16.msra.mxu0 0
    %6205 = vmatprep.subr.bf16.mxu0 0
    %6206 = vmatpush1.bf16.msra.mxu0 0
    %6207 = vmatprep.subr.bf16.mxu0 0
    %6208 = vmatpush1.bf16.msra.mxu0 0
    %6209 = vmatprep.subr.bf16.mxu0 0
    %6210 = vmatpush1.bf16.msra.mxu0 0
    %6211 = vmatprep.subr.bf16.mxu0 0
    %6212 = vmatpush1.bf16.msra.mxu0 0
    %6213 = vmatprep.subr.bf16.mxu0 0
    %6214 = vmatpush1.bf16.msra.mxu0 0
    %6215 = vmatprep.subr.bf16.mxu0 0
    %6216 = vmatpush1.bf16.msra.mxu0 0
    %6217 = vmatprep.subr.bf16.mxu0 0
    %6218 = vmatpush1.bf16.msra.mxu0 0
    %6219 = vmatprep.mubr.bf16.mxu0 0
    %6220 = vmatmul.mubr.bf16.gmra.mrb[0].mxu0 %v6185
    %v6221 = vpop.f32.mrb[0].mxu0
    %v6222 = vadd.f32 0.0, %v6221
    %v6223 = vpop.f32.mrb[0].mxu0
    %v6224 = vpop.f32.mrb[0].mxu0
    %v6225 = vadd.f32 0.0, %v6224
    %v6226 = vpop.f32.mrb[0].mxu0
    %6227 = vdwg.mxu0
    %v6230 = vunpack.c.l.b16 %v5961
    %v6231 = vunpack.c.l.b16 %v5962
    %v6232 = vpack.c.b16 %v6231, %v6230
    %v6234 = vsel %vm6029, %v6232, 0
    %6236 = vmatprep.subr.bf16.mxu0 0
    %6237 = vmatpush1.bf16.msra.mxu0 %v6026
    %6238 = vmatprep.subr.bf16.mxu0 0
    %6239 = vmatpush1.bf16.msra.mxu0 %v6038
    %6240 = vmatprep.subr.bf16.mxu0 0
    %6241 = vmatpush1.bf16.msra.mxu0 0
    %6242 = vmatprep.subr.bf16.mxu0 0
    %6243 = vmatpush1.bf16.msra.mxu0 0
    %6244 = vmatprep.subr.bf16.mxu0 0
    %6245 = vmatpush1.bf16.msra.mxu0 0
    %6246 = vmatprep.subr.bf16.mxu0 0
    %6247 = vmatpush1.bf16.msra.mxu0 0
    %6248 = vmatprep.subr.bf16.mxu0 0
    %6249 = vmatpush1.bf16.msra.mxu0 0
    %6250 = vmatprep.subr.bf16.mxu0 0
    %6251 = vmatpush1.bf16.msra.mxu0 0
    %6252 = vmatprep.subr.bf16.mxu0 0
    %6253 = vmatpush1.bf16.msra.mxu0 0
    %6254 = vmatprep.subr.bf16.mxu0 0
    %6255 = vmatpush1.bf16.msra.mxu0 0
    %6256 = vmatprep.subr.bf16.mxu0 0
    %6257 = vmatpush1.bf16.msra.mxu0 0
    %6258 = vmatprep.subr.bf16.mxu0 0
    %6259 = vmatpush1.bf16.msra.mxu0 0
    %6260 = vmatprep.subr.bf16.mxu0 0
    %6261 = vmatpush1.bf16.msra.mxu0 0
    %6262 = vmatprep.subr.bf16.mxu0 0
    %6263 = vmatpush1.bf16.msra.mxu0 0
    %6264 = vmatprep.subr.bf16.mxu0 0
    %6265 = vmatpush1.bf16.msra.mxu0 0
    %6266 = vmatprep.subr.bf16.mxu0 0
    %6267 = vmatpush1.bf16.msra.mxu0 0
    %6268 = vmatprep.mubr.bf16.mxu0 0
    %6269 = vmatmul.mubr.bf16.gmra.mrb[0].mxu0 %v6234
    %v6270 = vpop.f32.mrb[0].mxu0
    %v6271 = vadd.f32 0.0, %v6270
    %v6272 = vpop.f32.mrb[0].mxu0
    %v6273 = vpop.f32.mrb[0].mxu0
    %v6274 = vadd.f32 0.0, %v6273
    %v6275 = vpop.f32.mrb[0].mxu0
    %6276 = vdwg.mxu0
    %v6279 = vunpack.c.l.b16 %v5963
    %v6280 = vunpack.c.l.b16 %v5964
    %v6281 = vpack.c.b16 %v6280, %v6279
    %v6283 = vsel %vm6029, %v6281, 0
    %6285 = vmatprep.subr.bf16.mxu0 0
    %6286 = vmatpush1.bf16.msra.mxu0 %v6026
    %6287 = vmatprep.subr.bf16.mxu0 0
    %6288 = vmatpush1.bf16.msra.mxu0 %v6038
    %6289 = vmatprep.subr.bf16.mxu0 0
    %6290 = vmatpush1.bf16.msra.mxu0 0
    %6291 = vmatprep.subr.bf16.mxu0 0
    %6292 = vmatpush1.bf16.msra.mxu0 0
    %6293 = vmatprep.subr.bf16.mxu0 0
    %6294 = vmatpush1.bf16.msra.mxu0 0
    %6295 = vmatprep.subr.bf16.mxu0 0
    %6296 = vmatpush1.bf16.msra.mxu0 0
    %6297 = vmatprep.subr.bf16.mxu0 0
    %6298 = vmatpush1.bf16.msra.mxu0 0
    %6299 = vmatprep.subr.bf16.mxu0 0
    %6300 = vmatpush1.bf16.msra.mxu0 0
    %6301 = vmatprep.subr.bf16.mxu0 0
    %6302 = vmatpush1.bf16.msra.mxu0 0
    %6303 = vmatprep.subr.bf16.mxu0 0
    %6304 = vmatpush1.bf16.msra.mxu0 0
    %6305 = vmatprep.subr.bf16.mxu0 0
    %6306 = vmatpush1.bf16.msra.mxu0 0
    %6307 = vmatprep.subr.bf16.mxu0 0
    %6308 = vmatpush1.bf16.msra.mxu0 0
    %6309 = vmatprep.subr.bf16.mxu0 0
    %6310 = vmatpush1.bf16.msra.mxu0 0
    %6311 = vmatprep.subr.bf16.mxu0 0
    %6312 = vmatpush1.bf16.msra.mxu0 0
    %6313 = vmatprep.subr.bf16.mxu0 0
    %6314 = vmatpush1.bf16.msra.mxu0 0
    %6315 = vmatprep.subr.bf16.mxu0 0
    %6316 = vmatpush1.bf16.msra.mxu0 0
    %6317 = vmatprep.mubr.bf16.mxu0 0
    %6318 = vmatmul.mubr.bf16.gmra.mrb[0].mxu0 %v6283
    %v6319 = vpop.f32.mrb[0].mxu0
    %v6320 = vadd.f32 0.0, %v6319
    %v6321 = vpop.f32.mrb[0].mxu0
    %v6322 = vpop.f32.mrb[0].mxu0
    %v6323 = vadd.f32 0.0, %v6322
    %v6324 = vpop.f32.mrb[0].mxu0
    %6325 = vdwg.mxu0
    %v6328 = vunpack.c.l.b16 %v5965
    %v6329 = vunpack.c.l.b16 %v5966
    %v6330 = vpack.c.b16 %v6329, %v6328
    %v6332 = vsel %vm6029, %v6330, 0
    %6334 = vmatprep.subr.bf16.mxu0 0
    %6335 = vmatpush1.bf16.msra.mxu0 %v6026
    %6336 = vmatprep.subr.bf16.mxu0 0
    %6337 = vmatpush1.bf16.msra.mxu0 %v6038
    %6338 = vmatprep.subr.bf16.mxu0 0
    %6339 = vmatpush1.bf16.msra.mxu0 0
    %6340 = vmatprep.subr.bf16.mxu0 0
    %6341 = vmatpush1.bf16.msra.mxu0 0
    %6342 = vmatprep.subr.bf16.mxu0 0
    %6343 = vmatpush1.bf16.msra.mxu0 0
    %6344 = vmatprep.subr.bf16.mxu0 0
    %6345 = vmatpush1.bf16.msra.mxu0 0
    %6346 = vmatprep.subr.bf16.mxu0 0
    %6347 = vmatpush1.bf16.msra.mxu0 0
    %6348 = vmatprep.subr.bf16.mxu0 0
    %6349 = vmatpush1.bf16.msra.mxu0 0
    %6350 = vmatprep.subr.bf16.mxu0 0
    %6351 = vmatpush1.bf16.msra.mxu0 0
    %6352 = vmatprep.subr.bf16.mxu0 0
    %6353 = vmatpush1.bf16.msra.mxu0 0
    %6354 = vmatprep.subr.bf16.mxu0 0
    %6355 = vmatpush1.bf16.msra.mxu0 0
    %6356 = vmatprep.subr.bf16.mxu0 0
    %6357 = vmatpush1.bf16.msra.mxu0 0
    %6358 = vmatprep.subr.bf16.mxu0 0
    %6359 = vmatpush1.bf16.msra.mxu0 0
    %6360 = vmatprep.subr.bf16.mxu0 0
    %6361 = vmatpush1.bf16.msra.mxu0 0
    %6362 = vmatprep.subr.bf16.mxu0 0
    %6363 = vmatpush1.bf16.msra.mxu0 0
    %6364 = vmatprep.subr.bf16.mxu0 0
    %6365 = vmatpush1.bf16.msra.mxu0 0
    %6366 = vmatprep.mubr.bf16.mxu0 0
    %6367 = vmatmul.mubr.bf16.gmra.mrb[0].mxu0 %v6332
    %v6368 = vpop.f32.mrb[0].mxu0
    %v6369 = vadd.f32 0.0, %v6368
    %v6370 = vpop.f32.mrb[0].mxu0
    %v6371 = vpop.f32.mrb[0].mxu0
    %v6372 = vadd.f32 0.0, %v6371
    %v6373 = vpop.f32.mrb[0].mxu0
    %6374 = vdwg.mxu0
    %v6377 = vunpack.c.l.b16 %v5967
    %v6378 = vunpack.c.l.b16 %v5968
    %v6379 = vpack.c.b16 %v6378, %v6377
    %v6381 = vsel %vm6029, %v6379, 0
    %6383 = vmatprep.subr.bf16.mxu0 0
    %6384 = vmatpush1.bf16.msra.mxu0 %v6026
    %6385 = vmatprep.subr.bf16.mxu0 0
    %6386 = vmatpush1.bf16.msra.mxu0 %v6038
    %6387 = vmatprep.subr.bf16.mxu0 0
    %6388 = vmatpush1.bf16.msra.mxu0 0
    %6389 = vmatprep.subr.bf16.mxu0 0
    %6390 = vmatpush1.bf16.msra.mxu0 0
    %6391 = vmatprep.subr.bf16.mxu0 0
    %6392 = vmatpush1.bf16.msra.mxu0 0
    %6393 = vmatprep.subr.bf16.mxu0 0
    %6394 = vmatpush1.bf16.msra.mxu0 0
    %6395 = vmatprep.subr.bf16.mxu0 0
    %6396 = vmatpush1.bf16.msra.mxu0 0
    %6397 = vmatprep.subr.bf16.mxu0 0
    %6398 = vmatpush1.bf16.msra.mxu0 0
    %6399 = vmatprep.subr.bf16.mxu0 0
    %6400 = vmatpush1.bf16.msra.mxu0 0
    %6401 = vmatprep.subr.bf16.mxu0 0
    %6402 = vmatpush1.bf16.msra.mxu0 0
    %6403 = vmatprep.subr.bf16.mxu0 0
    %6404 = vmatpush1.bf16.msra.mxu0 0
    %6405 = vmatprep.subr.bf16.mxu0 0
    %6406 = vmatpush1.bf16.msra.mxu0 0
    %6407 = vmatprep.subr.bf16.mxu0 0
    %6408 = vmatpush1.bf16.msra.mxu0 0
    %6409 = vmatprep.subr.bf16.mxu0 0
    %6410 = vmatpush1.bf16.msra.mxu0 0
    %6411 = vmatprep.subr.bf16.mxu0 0
    %6412 = vmatpush1.bf16.msra.mxu0 0
    %6413 = vmatprep.subr.bf16.mxu0 0
    %6414 = vmatpush1.bf16.msra.mxu0 0
    %6415 = vmatprep.mubr.bf16.mxu0 0
    %6416 = vmatmul.mubr.bf16.gmra.mrb[0].mxu0 %v6381
    %v6417 = vpop.f32.mrb[0].mxu0
    %v6418 = vadd.f32 0.0, %v6417
    %v6419 = vpop.f32.mrb[0].mxu0
    %v6420 = vpop.f32.mrb[0].mxu0
    %v6421 = vadd.f32 0.0, %v6420
    %v6422 = vpop.f32.mrb[0].mxu0
    %6423 = vdwg.mxu0
    %v6426 = vunpack.c.l.b16 %v5969
    %v6427 = vunpack.c.l.b16 %v5970
    %v6428 = vpack.c.b16 %v6427, %v6426
    %v6430 = vsel %vm6029, %v6428, 0
    %6432 = vmatprep.subr.bf16.mxu0 0
    %6433 = vmatpush1.bf16.msra.mxu0 %v6026
    %6434 = vmatprep.subr.bf16.mxu0 0
    %6435 = vmatpush1.bf16.msra.mxu0 %v6038
    %6436 = vmatprep.subr.bf16.mxu0 0
    %6437 = vmatpush1.bf16.msra.mxu0 0
    %6438 = vmatprep.subr.bf16.mxu0 0
    %6439 = vmatpush1.bf16.msra.mxu0 0
    %6440 = vmatprep.subr.bf16.mxu0 0
    %6441 = vmatpush1.bf16.msra.mxu0 0
    %6442 = vmatprep.subr.bf16.mxu0 0
    %6443 = vmatpush1.bf16.msra.mxu0 0
    %6444 = vmatprep.subr.bf16.mxu0 0
    %6445 = vmatpush1.bf16.msra.mxu0 0
    %6446 = vmatprep.subr.bf16.mxu0 0
    %6447 = vmatpush1.bf16.msra.mxu0 0
    %6448 = vmatprep.subr.bf16.mxu0 0
    %6449 = vmatpush1.bf16.msra.mxu0 0
    %6450 = vmatprep.subr.bf16.mxu0 0
    %6451 = vmatpush1.bf16.msra.mxu0 0
    %6452 = vmatprep.subr.bf16.mxu0 0
    %6453 = vmatpush1.bf16.msra.mxu0 0
    %6454 = vmatprep.subr.bf16.mxu0 0
    %6455 = vmatpush1.bf16.msra.mxu0 0
    %6456 = vmatprep.subr.bf16.mxu0 0
    %6457 = vmatpush1.bf16.msra.mxu0 0
    %6458 = vmatprep.subr.bf16.mxu0 0
    %6459 = vmatpush1.bf16.msra.mxu0 0
    %6460 = vmatprep.subr.bf16.mxu0 0
    %6461 = vmatpush1.bf16.msra.mxu0 0
    %6462 = vmatprep.subr.bf16.mxu0 0
    %6463 = vmatpush1.bf16.msra.mxu0 0
    %6464 = vmatprep.mubr.bf16.mxu0 0
    %6465 = vmatmul.mubr.bf16.gmra.mrb[0].mxu0 %v6430
    %v6466 = vpop.f32.mrb[0].mxu0
    %v6467 = vadd.f32 0.0, %v6466
    %v6468 = vpop.f32.mrb[0].mxu0
    %v6469 = vpop.f32.mrb[0].mxu0
    %v6470 = vadd.f32 0.0, %v6469
    %v6471 = vpop.f32.mrb[0].mxu0
    %6472 = vdwg.mxu0
    %v6475 = vunpack.c.l.b16 %v5971
    %v6476 = vunpack.c.l.b16 %v5972
    %v6477 = vpack.c.b16 %v6476, %v6475
    %v6479 = vsel %vm6029, %v6477, 0
    %6481 = vmatprep.subr.bf16.mxu0 0
    %6482 = vmatpush1.bf16.msra.mxu0 %v6026
    %6483 = vmatprep.subr.bf16.mxu0 0
    %6484 = vmatpush1.bf16.msra.mxu0 %v6038
    %6485 = vmatprep.subr.bf16.mxu0 0
    %6486 = vmatpush1.bf16.msra.mxu0 0
    %6487 = vmatprep.subr.bf16.mxu0 0
    %6488 = vmatpush1.bf16.msra.mxu0 0
    %6489 = vmatprep.subr.bf16.mxu0 0
    %6490 = vmatpush1.bf16.msra.mxu0 0
    %6491 = vmatprep.subr.bf16.mxu0 0
    %6492 = vmatpush1.bf16.msra.mxu0 0
    %6493 = vmatprep.subr.bf16.mxu0 0
    %6494 = vmatpush1.bf16.msra.mxu0 0
    %6495 = vmatprep.subr.bf16.mxu0 0
    %6496 = vmatpush1.bf16.msra.mxu0 0
    %6497 = vmatprep.subr.bf16.mxu0 0
    %6498 = vmatpush1.bf16.msra.mxu0 0
    %6499 = vmatprep.subr.bf16.mxu0 0
    %6500 = vmatpush1.bf16.msra.mxu0 0
    %6501 = vmatprep.subr.bf16.mxu0 0
    %6502 = vmatpush1.bf16.msra.mxu0 0
    %6503 = vmatprep.subr.bf16.mxu0 0
    %6504 = vmatpush1.bf16.msra.mxu0 0
    %6505 = vmatprep.subr.bf16.mxu0 0
    %6506 = vmatpush1.bf16.msra.mxu0 0
    %6507 = vmatprep.subr.bf16.mxu0 0
    %6508 = vmatpush1.bf16.msra.mxu0 0
    %6509 = vmatprep.subr.bf16.mxu0 0
    %6510 = vmatpush1.bf16.msra.mxu0 0
    %6511 = vmatprep.subr.bf16.mxu0 0
    %6512 = vmatpush1.bf16.msra.mxu0 0
    %6513 = vmatprep.mubr.bf16.mxu0 0
    %6514 = vmatmul.mubr.bf16.gmra.mrb[0].mxu0 %v6479
    %v6515 = vpop.f32.mrb[0].mxu0
    %v6516 = vadd.f32 0.0, %v6515
    %v6517 = vpop.f32.mrb[0].mxu0
    %v6518 = vpop.f32.mrb[0].mxu0
    %v6519 = vadd.f32 0.0, %v6518
    %v6520 = vpop.f32.mrb[0].mxu0
    %6521 = vdwg.mxu0
    %v6524 = vunpack.c.l.b16 %v5973
    %v6525 = vunpack.c.l.b16 %v5974
    %v6526 = vpack.c.b16 %v6525, %v6524
    %v6528 = vsel %vm6029, %v6526, 0
    %6530 = vmatprep.subr.bf16.mxu0 0
    %6531 = vmatpush1.bf16.msra.mxu0 %v6026
    %6532 = vmatprep.subr.bf16.mxu0 0
    %6533 = vmatpush1.bf16.msra.mxu0 %v6038
    %6534 = vmatprep.subr.bf16.mxu0 0
    %6535 = vmatpush1.bf16.msra.mxu0 0
    %6536 = vmatprep.subr.bf16.mxu0 0
    %6537 = vmatpush1.bf16.msra.mxu0 0
    %6538 = vmatprep.subr.bf16.mxu0 0
    %6539 = vmatpush1.bf16.msra.mxu0 0
    %6540 = vmatprep.subr.bf16.mxu0 0
    %6541 = vmatpush1.bf16.msra.mxu0 0
    %6542 = vmatprep.subr.bf16.mxu0 0
    %6543 = vmatpush1.bf16.msra.mxu0 0
    %6544 = vmatprep.subr.bf16.mxu0 0
    %6545 = vmatpush1.bf16.msra.mxu0 0
    %6546 = vmatprep.subr.bf16.mxu0 0
    %6547 = vmatpush1.bf16.msra.mxu0 0
    %6548 = vmatprep.subr.bf16.mxu0 0
    %6549 = vmatpush1.bf16.msra.mxu0 0
    %6550 = vmatprep.subr.bf16.mxu0 0
    %6551 = vmatpush1.bf16.msra.mxu0 0
    %6552 = vmatprep.subr.bf16.mxu0 0
    %6553 = vmatpush1.bf16.msra.mxu0 0
    %6554 = vmatprep.subr.bf16.mxu0 0
    %6555 = vmatpush1.bf16.msra.mxu0 0
    %6556 = vmatprep.subr.bf16.mxu0 0
    %6557 = vmatpush1.bf16.msra.mxu0 0
    %6558 = vmatprep.subr.bf16.mxu0 0
    %6559 = vmatpush1.bf16.msra.mxu0 0
    %6560 = vmatprep.subr.bf16.mxu0 0
    %6561 = vmatpush1.bf16.msra.mxu0 0
    %6562 = vmatprep.mubr.bf16.mxu0 0
    %6563 = vmatmul.mubr.bf16.gmra.mrb[0].mxu0 %v6528
    %v6564 = vpop.f32.mrb[0].mxu0
    %v6565 = vadd.f32 0.0, %v6564
    %v6566 = vpop.f32.mrb[0].mxu0
    %v6567 = vpop.f32.mrb[0].mxu0
    %v6568 = vadd.f32 0.0, %v6567
    %v6569 = vpop.f32.mrb[0].mxu0
    %6570 = vdwg.mxu0
    %v6573 = vunpack.c.l.b16 %v5975
    %v6574 = vunpack.c.l.b16 %v5976
    %v6575 = vpack.c.b16 %v6574, %v6573
    %v6577 = vsel %vm6029, %v6575, 0
    %6579 = vmatprep.subr.bf16.mxu0 0
    %6580 = vmatpush1.bf16.msra.mxu0 %v6026
    %6581 = vmatprep.subr.bf16.mxu0 0
    %6582 = vmatpush1.bf16.msra.mxu0 %v6038
    %6583 = vmatprep.subr.bf16.mxu0 0
    %6584 = vmatpush1.bf16.msra.mxu0 0
    %6585 = vmatprep.subr.bf16.mxu0 0
    %6586 = vmatpush1.bf16.msra.mxu0 0
    %6587 = vmatprep.subr.bf16.mxu0 0
    %6588 = vmatpush1.bf16.msra.mxu0 0
    %6589 = vmatprep.subr.bf16.mxu0 0
    %6590 = vmatpush1.bf16.msra.mxu0 0
    %6591 = vmatprep.subr.bf16.mxu0 0
    %6592 = vmatpush1.bf16.msra.mxu0 0
    %6593 = vmatprep.subr.bf16.mxu0 0
    %6594 = vmatpush1.bf16.msra.mxu0 0
    %6595 = vmatprep.subr.bf16.mxu0 0
    %6596 = vmatpush1.bf16.msra.mxu0 0
    %6597 = vmatprep.subr.bf16.mxu0 0
    %6598 = vmatpush1.bf16.msra.mxu0 0
    %6599 = vmatprep.subr.bf16.mxu0 0
    %6600 = vmatpush1.bf16.msra.mxu0 0
    %6601 = vmatprep.subr.bf16.mxu0 0
    %6602 = vmatpush1.bf16.msra.mxu0 0
    %6603 = vmatprep.subr.bf16.mxu0 0
    %6604 = vmatpush1.bf16.msra.mxu0 0
    %6605 = vmatprep.subr.bf16.mxu0 0
    %6606 = vmatpush1.bf16.msra.mxu0 0
    %6607 = vmatprep.subr.bf16.mxu0 0
    %6608 = vmatpush1.bf16.msra.mxu0 0
    %6609 = vmatprep.subr.bf16.mxu0 0
    %6610 = vmatpush1.bf16.msra.mxu0 0
    %6611 = vmatprep.mubr.bf16.mxu0 0
    %6612 = vmatmul.mubr.bf16.gmra.mrb[0].mxu0 %v6577
    %v6613 = vpop.f32.mrb[0].mxu0
    %v6614 = vadd.f32 0.0, %v6613
    %v6615 = vpop.f32.mrb[0].mxu0
    %v6616 = vpop.f32.mrb[0].mxu0
    %v6617 = vadd.f32 0.0, %v6616
    %v6618 = vpop.f32.mrb[0].mxu0
    %6619 = vdwg.mxu0
    %v6622 = vunpack.c.l.b16 %v5977
    %v6623 = vunpack.c.l.b16 %v5978
    %v6624 = vpack.c.b16 %v6623, %v6622
    %v6626 = vsel %vm6029, %v6624, 0
    %6628 = vmatprep.subr.bf16.mxu0 0
    %6629 = vmatpush1.bf16.msra.mxu0 %v6026
    %6630 = vmatprep.subr.bf16.mxu0 0
    %6631 = vmatpush1.bf16.msra.mxu0 %v6038
    %6632 = vmatprep.subr.bf16.mxu0 0
    %6633 = vmatpush1.bf16.msra.mxu0 0
    %6634 = vmatprep.subr.bf16.mxu0 0
    %6635 = vmatpush1.bf16.msra.mxu0 0
    %6636 = vmatprep.subr.bf16.mxu0 0
    %6637 = vmatpush1.bf16.msra.mxu0 0
    %6638 = vmatprep.subr.bf16.mxu0 0
    %6639 = vmatpush1.bf16.msra.mxu0 0
    %6640 = vmatprep.subr.bf16.mxu0 0
    %6641 = vmatpush1.bf16.msra.mxu0 0
    %6642 = vmatprep.subr.bf16.mxu0 0
    %6643 = vmatpush1.bf16.msra.mxu0 0
    %6644 = vmatprep.subr.bf16.mxu0 0
    %6645 = vmatpush1.bf16.msra.mxu0 0
    %6646 = vmatprep.subr.bf16.mxu0 0
    %6647 = vmatpush1.bf16.msra.mxu0 0
    %6648 = vmatprep.subr.bf16.mxu0 0
    %6649 = vmatpush1.bf16.msra.mxu0 0
    %6650 = vmatprep.subr.bf16.mxu0 0
    %6651 = vmatpush1.bf16.msra.mxu0 0
    %6652 = vmatprep.subr.bf16.mxu0 0
    %6653 = vmatpush1.bf16.msra.mxu0 0
    %6654 = vmatprep.subr.bf16.mxu0 0
    %6655 = vmatpush1.bf16.msra.mxu0 0
    %6656 = vmatprep.subr.bf16.mxu0 0
    %6657 = vmatpush1.bf16.msra.mxu0 0
    %6658 = vmatprep.subr.bf16.mxu0 0
    %6659 = vmatpush1.bf16.msra.mxu0 0
    %6660 = vmatprep.mubr.bf16.mxu0 0
    %6661 = vmatmul.mubr.bf16.gmra.mrb[0].mxu0 %v6626
    %v6662 = vpop.f32.mrb[0].mxu0
    %v6663 = vadd.f32 0.0, %v6662
    %v6664 = vpop.f32.mrb[0].mxu0
    %v6665 = vpop.f32.mrb[0].mxu0
    %v6666 = vadd.f32 0.0, %v6665
    %v6667 = vpop.f32.mrb[0].mxu0
    %6668 = vdwg.mxu0
    %v6671 = vunpack.c.l.b16 %v5979
    %v6672 = vunpack.c.l.b16 %v5980
    %v6673 = vpack.c.b16 %v6672, %v6671
    %v6675 = vsel %vm6029, %v6673, 0
    %6677 = vmatprep.subr.bf16.mxu0 0
    %6678 = vmatpush1.bf16.msra.mxu0 %v6026
    %6679 = vmatprep.subr.bf16.mxu0 0
    %6680 = vmatpush1.bf16.msra.mxu0 %v6038
    %6681 = vmatprep.subr.bf16.mxu0 0
    %6682 = vmatpush1.bf16.msra.mxu0 0
    %6683 = vmatprep.subr.bf16.mxu0 0
    %6684 = vmatpush1.bf16.msra.mxu0 0
    %6685 = vmatprep.subr.bf16.mxu0 0
    %6686 = vmatpush1.bf16.msra.mxu0 0
    %6687 = vmatprep.subr.bf16.mxu0 0
    %6688 = vmatpush1.bf16.msra.mxu0 0
    %6689 = vmatprep.subr.bf16.mxu0 0
    %6690 = vmatpush1.bf16.msra.mxu0 0
    %6691 = vmatprep.subr.bf16.mxu0 0
    %6692 = vmatpush1.bf16.msra.mxu0 0
    %6693 = vmatprep.subr.bf16.mxu0 0
    %6694 = vmatpush1.bf16.msra.mxu0 0
    %6695 = vmatprep.subr.bf16.mxu0 0
    %6696 = vmatpush1.bf16.msra.mxu0 0
    %6697 = vmatprep.subr.bf16.mxu0 0
    %6698 = vmatpush1.bf16.msra.mxu0 0
    %6699 = vmatprep.subr.bf16.mxu0 0
    %6700 = vmatpush1.bf16.msra.mxu0 0
    %6701 = vmatprep.subr.bf16.mxu0 0
    %6702 = vmatpush1.bf16.msra.mxu0 0
    %6703 = vmatprep.subr.bf16.mxu0 0
    %6704 = vmatpush1.bf16.msra.mxu0 0
    %6705 = vmatprep.subr.bf16.mxu0 0
    %6706 = vmatpush1.bf16.msra.mxu0 0
    %6707 = vmatprep.subr.bf16.mxu0 0
    %6708 = vmatpush1.bf16.msra.mxu0 0
    %6709 = vmatprep.mubr.bf16.mxu0 0
    %6710 = vmatmul.mubr.bf16.gmra.mrb[0].mxu0 %v6675
    %v6711 = vpop.f32.mrb[0].mxu0
    %v6712 = vadd.f32 0.0, %v6711
    %v6713 = vpop.f32.mrb[0].mxu0
    %v6714 = vpop.f32.mrb[0].mxu0
    %v6715 = vadd.f32 0.0, %v6714
    %v6716 = vpop.f32.mrb[0].mxu0
    %6717 = vdwg.mxu0
    %v6720 = vunpack.c.l.b16 %v5981
    %v6721 = vunpack.c.l.b16 %v5982
    %v6722 = vpack.c.b16 %v6721, %v6720
    %v6724 = vsel %vm6029, %v6722, 0
    %6726 = vmatprep.subr.bf16.mxu0 0
    %6727 = vmatpush1.bf16.msra.mxu0 %v6026
    %6728 = vmatprep.subr.bf16.mxu0 0
    %6729 = vmatpush1.bf16.msra.mxu0 %v6038
    %6730 = vmatprep.subr.bf16.mxu0 0
    %6731 = vmatpush1.bf16.msra.mxu0 0
    %6732 = vmatprep.subr.bf16.mxu0 0
    %6733 = vmatpush1.bf16.msra.mxu0 0
    %6734 = vmatprep.subr.bf16.mxu0 0
    %6735 = vmatpush1.bf16.msra.mxu0 0
    %6736 = vmatprep.subr.bf16.mxu0 0
    %6737 = vmatpush1.bf16.msra.mxu0 0
    %6738 = vmatprep.subr.bf16.mxu0 0
    %6739 = vmatpush1.bf16.msra.mxu0 0
    %6740 = vmatprep.subr.bf16.mxu0 0
    %6741 = vmatpush1.bf16.msra.mxu0 0
    %6742 = vmatprep.subr.bf16.mxu0 0
    %6743 = vmatpush1.bf16.msra.mxu0 0
    %6744 = vmatprep.subr.bf16.mxu0 0
    %6745 = vmatpush1.bf16.msra.mxu0 0
    %6746 = vmatprep.subr.bf16.mxu0 0
    %6747 = vmatpush1.bf16.msra.mxu0 0
    %6748 = vmatprep.subr.bf16.mxu0 0
    %6749 = vmatpush1.bf16.msra.mxu0 0
    %6750 = vmatprep.subr.bf16.mxu0 0
    %6751 = vmatpush1.bf16.msra.mxu0 0
    %6752 = vmatprep.subr.bf16.mxu0 0
    %6753 = vmatpush1.bf16.msra.mxu0 0
    %6754 = vmatprep.subr.bf16.mxu0 0
    %6755 = vmatpush1.bf16.msra.mxu0 0
    %6756 = vmatprep.subr.bf16.mxu0 0
    %6757 = vmatpush1.bf16.msra.mxu0 0
    %6758 = vmatprep.mubr.bf16.mxu0 0
    %6759 = vmatmul.mubr.bf16.gmra.mrb[0].mxu0 %v6724
    %v6760 = vpop.f32.mrb[0].mxu0
    %v6761 = vadd.f32 0.0, %v6760
    %v6762 = vpop.f32.mrb[0].mxu0
    %v6763 = vpop.f32.mrb[0].mxu0
    %v6764 = vadd.f32 0.0, %v6763
    %v6765 = vpop.f32.mrb[0].mxu0
    %6766 = vdwg.mxu0
    %v6769 = vunpack.c.l.b16 %v5983
    %v6770 = vunpack.c.l.b16 %v5984
    %v6771 = vpack.c.b16 %v6770, %v6769
    %v6773 = vsel %vm6029, %v6771, 0
    %6775 = vmatprep.subr.bf16.mxu0 0
    %6776 = vmatpush1.bf16.msra.mxu0 %v6026
    %6777 = vmatprep.subr.bf16.mxu0 0
    %6778 = vmatpush1.bf16.msra.mxu0 %v6038
    %6779 = vmatprep.subr.bf16.mxu0 0
    %6780 = vmatpush1.bf16.msra.mxu0 0
    %6781 = vmatprep.subr.bf16.mxu0 0
    %6782 = vmatpush1.bf16.msra.mxu0 0
    %6783 = vmatprep.subr.bf16.mxu0 0
    %6784 = vmatpush1.bf16.msra.mxu0 0
    %6785 = vmatprep.subr.bf16.mxu0 0
    %6786 = vmatpush1.bf16.msra.mxu0 0
    %6787 = vmatprep.subr.bf16.mxu0 0
    %6788 = vmatpush1.bf16.msra.mxu0 0
    %6789 = vmatprep.subr.bf16.mxu0 0
    %6790 = vmatpush1.bf16.msra.mxu0 0
    %6791 = vmatprep.subr.bf16.mxu0 0
    %6792 = vmatpush1.bf16.msra.mxu0 0
    %6793 = vmatprep.subr.bf16.mxu0 0
    %6794 = vmatpush1.bf16.msra.mxu0 0
    %6795 = vmatprep.subr.bf16.mxu0 0
    %6796 = vmatpush1.bf16.msra.mxu0 0
    %6797 = vmatprep.subr.bf16.mxu0 0
    %6798 = vmatpush1.bf16.msra.mxu0 0
    %6799 = vmatprep.subr.bf16.mxu0 0
    %6800 = vmatpush1.bf16.msra.mxu0 0
    %6801 = vmatprep.subr.bf16.mxu0 0
    %6802 = vmatpush1.bf16.msra.mxu0 0
    %6803 = vmatprep.subr.bf16.mxu0 0
    %6804 = vmatpush1.bf16.msra.mxu0 0
    %6805 = vmatprep.subr.bf16.mxu0 0
    %6806 = vmatpush1.bf16.msra.mxu0 0
    %6807 = vmatprep.mubr.bf16.mxu0 0
    %6808 = vmatmul.mubr.bf16.gmra.mrb[0].mxu0 %v6773
    %v6809 = vpop.f32.mrb[0].mxu0
    %v6810 = vadd.f32 0.0, %v6809
    %v6811 = vpop.f32.mrb[0].mxu0
    %v6812 = vpop.f32.mrb[0].mxu0
    %v6813 = vadd.f32 0.0, %v6812
    %v6814 = vpop.f32.mrb[0].mxu0
    %6815 = vdwg.mxu0
    %v6818 = vunpack.c.l.b16 %v5985
    %v6819 = vunpack.c.l.b16 %v5986
    %v6820 = vpack.c.b16 %v6819, %v6818
    %v6822 = vsel %vm6029, %v6820, 0
    %6824 = vmatprep.subr.bf16.mxu0 0
    %6825 = vmatpush1.bf16.msra.mxu0 %v6026
    %6826 = vmatprep.subr.bf16.mxu0 0
    %6827 = vmatpush1.bf16.msra.mxu0 %v6038
    %6828 = vmatprep.subr.bf16.mxu0 0
    %6829 = vmatpush1.bf16.msra.mxu0 0
    %6830 = vmatprep.subr.bf16.mxu0 0
    %6831 = vmatpush1.bf16.msra.mxu0 0
    %6832 = vmatprep.subr.bf16.mxu0 0
    %6833 = vmatpush1.bf16.msra.mxu0 0
    %6834 = vmatprep.subr.bf16.mxu0 0
    %6835 = vmatpush1.bf16.msra.mxu0 0
    %6836 = vmatprep.subr.bf16.mxu0 0
    %6837 = vmatpush1.bf16.msra.mxu0 0
    %6838 = vmatprep.subr.bf16.mxu0 0
    %6839 = vmatpush1.bf16.msra.mxu0 0
    %6840 = vmatprep.subr.bf16.mxu0 0
    %6841 = vmatpush1.bf16.msra.mxu0 0
    %6842 = vmatprep.subr.bf16.mxu0 0
    %6843 = vmatpush1.bf16.msra.mxu0 0
    %6844 = vmatprep.subr.bf16.mxu0 0
    %6845 = vmatpush1.bf16.msra.mxu0 0
    %6846 = vmatprep.subr.bf16.mxu0 0
    %6847 = vmatpush1.bf16.msra.mxu0 0
    %6848 = vmatprep.subr.bf16.mxu0 0
    %6849 = vmatpush1.bf16.msra.mxu0 0
    %6850 = vmatprep.subr.bf16.mxu0 0
    %6851 = vmatpush1.bf16.msra.mxu0 0
    %6852 = vmatprep.subr.bf16.mxu0 0
    %6853 = vmatpush1.bf16.msra.mxu0 0
    %6854 = vmatprep.subr.bf16.mxu0 0
    %6855 = vmatpush1.bf16.msra.mxu0 0
    %6856 = vmatprep.mubr.bf16.mxu0 0
    %6857 = vmatmul.mubr.bf16.gmra.mrb[0].mxu0 %v6822
    %v6858 = vpop.f32.mrb[0].mxu0
    %v6859 = vadd.f32 0.0, %v6858
    %v6860 = vpop.f32.mrb[0].mxu0
    %v6861 = vpop.f32.mrb[0].mxu0
    %v6862 = vadd.f32 0.0, %v6861
    %v6863 = vpop.f32.mrb[0].mxu0
    %6864 = vdwg.mxu0
    %v6867 = vunpack.c.l.b16 %v5987
    %v6868 = vunpack.c.l.b16 %v5988
    %v6869 = vpack.c.b16 %v6868, %v6867
    %v6871 = vsel %vm6029, %v6869, 0
    %6873 = vmatprep.subr.bf16.mxu0 0
    %6874 = vmatpush1.bf16.msra.mxu0 %v6026
    %6875 = vmatprep.subr.bf16.mxu0 0
    %6876 = vmatpush1.bf16.msra.mxu0 %v6038
    %6877 = vmatprep.subr.bf16.mxu0 0
    %6878 = vmatpush1.bf16.msra.mxu0 0
    %6879 = vmatprep.subr.bf16.mxu0 0
    %6880 = vmatpush1.bf16.msra.mxu0 0
    %6881 = vmatprep.subr.bf16.mxu0 0
    %6882 = vmatpush1.bf16.msra.mxu0 0
    %6883 = vmatprep.subr.bf16.mxu0 0
    %6884 = vmatpush1.bf16.msra.mxu0 0
    %6885 = vmatprep.subr.bf16.mxu0 0
    %6886 = vmatpush1.bf16.msra.mxu0 0
    %6887 = vmatprep.subr.bf16.mxu0 0
    %6888 = vmatpush1.bf16.msra.mxu0 0
    %6889 = vmatprep.subr.bf16.mxu0 0
    %6890 = vmatpush1.bf16.msra.mxu0 0
    %6891 = vmatprep.subr.bf16.mxu0 0
    %6892 = vmatpush1.bf16.msra.mxu0 0
    %6893 = vmatprep.subr.bf16.mxu0 0
    %6894 = vmatpush1.bf16.msra.mxu0 0
    %6895 = vmatprep.subr.bf16.mxu0 0
    %6896 = vmatpush1.bf16.msra.mxu0 0
    %6897 = vmatprep.subr.bf16.mxu0 0
    %6898 = vmatpush1.bf16.msra.mxu0 0
    %6899 = vmatprep.subr.bf16.mxu0 0
    %6900 = vmatpush1.bf16.msra.mxu0 0
    %6901 = vmatprep.subr.bf16.mxu0 0
    %6902 = vmatpush1.bf16.msra.mxu0 0
    %6903 = vmatprep.subr.bf16.mxu0 0
    %6904 = vmatpush1.bf16.msra.mxu0 0
    %6905 = vmatprep.mubr.bf16.mxu0 0
    %6906 = vmatmul.mubr.bf16.gmra.mrb[0].mxu0 %v6871
    %v6907 = vpop.f32.mrb[0].mxu0
    %v6908 = vadd.f32 0.0, %v6907
    %v6909 = vpop.f32.mrb[0].mxu0
    %v6910 = vpop.f32.mrb[0].mxu0
    %v6911 = vadd.f32 0.0, %v6910
    %v6912 = vpop.f32.mrb[0].mxu0
    %6913 = vdwg.mxu0
    %v6916 = vunpack.c.l.b16 %v5989
    %v6917 = vunpack.c.l.b16 %v5990
    %v6918 = vpack.c.b16 %v6917, %v6916
    %v6920 = vsel %vm6029, %v6918, 0
    %6922 = vmatprep.subr.bf16.mxu0 0
    %6923 = vmatpush1.bf16.msra.mxu0 %v6026
    %6924 = vmatprep.subr.bf16.mxu0 0
    %6925 = vmatpush1.bf16.msra.mxu0 %v6038
    %6926 = vmatprep.subr.bf16.mxu0 0
    %6927 = vmatpush1.bf16.msra.mxu0 0
    %6928 = vmatprep.subr.bf16.mxu0 0
    %6929 = vmatpush1.bf16.msra.mxu0 0
    %6930 = vmatprep.subr.bf16.mxu0 0
    %6931 = vmatpush1.bf16.msra.mxu0 0
    %6932 = vmatprep.subr.bf16.mxu0 0
    %6933 = vmatpush1.bf16.msra.mxu0 0
    %6934 = vmatprep.subr.bf16.mxu0 0
    %6935 = vmatpush1.bf16.msra.mxu0 0
    %6936 = vmatprep.subr.bf16.mxu0 0
    %6937 = vmatpush1.bf16.msra.mxu0 0
    %6938 = vmatprep.subr.bf16.mxu0 0
    %6939 = vmatpush1.bf16.msra.mxu0 0
    %6940 = vmatprep.subr.bf16.mxu0 0
    %6941 = vmatpush1.bf16.msra.mxu0 0
    %6942 = vmatprep.subr.bf16.mxu0 0
    %6943 = vmatpush1.bf16.msra.mxu0 0
    %6944 = vmatprep.subr.bf16.mxu0 0
    %6945 = vmatpush1.bf16.msra.mxu0 0
    %6946 = vmatprep.subr.bf16.mxu0 0
    %6947 = vmatpush1.bf16.msra.mxu0 0
    %6948 = vmatprep.subr.bf16.mxu0 0
    %6949 = vmatpush1.bf16.msra.mxu0 0
    %6950 = vmatprep.subr.bf16.mxu0 0
    %6951 = vmatpush1.bf16.msra.mxu0 0
    %6952 = vmatprep.subr.bf16.mxu0 0
    %6953 = vmatpush1.bf16.msra.mxu0 0
    %6954 = vmatprep.mubr.bf16.mxu0 0
    %6955 = vmatmul.mubr.bf16.gmra.mrb[0].mxu0 %v6920
    %v6956 = vpop.f32.mrb[0].mxu0
    %v6957 = vadd.f32 0.0, %v6956
    %v6958 = vpop.f32.mrb[0].mxu0
    %v6959 = vpop.f32.mrb[0].mxu0
    %v6960 = vadd.f32 0.0, %v6959
    %v6961 = vpop.f32.mrb[0].mxu0
    %6962 = vdwg.mxu0
    %v6965 = vunpack.c.l.b16 %v5991
    %v6966 = vunpack.c.l.b16 %v5992
    %v6967 = vpack.c.b16 %v6966, %v6965
    %v6969 = vsel %vm6029, %v6967, 0
    %6971 = vmatprep.subr.bf16.mxu0 0
    %6972 = vmatpush1.bf16.msra.mxu0 %v6026
    %6973 = vmatprep.subr.bf16.mxu0 0
    %6974 = vmatpush1.bf16.msra.mxu0 %v6038
    %6975 = vmatprep.subr.bf16.mxu0 0
    %6976 = vmatpush1.bf16.msra.mxu0 0
    %6977 = vmatprep.subr.bf16.mxu0 0
    %6978 = vmatpush1.bf16.msra.mxu0 0
    %6979 = vmatprep.subr.bf16.mxu0 0
    %6980 = vmatpush1.bf16.msra.mxu0 0
    %6981 = vmatprep.subr.bf16.mxu0 0
    %6982 = vmatpush1.bf16.msra.mxu0 0
    %6983 = vmatprep.subr.bf16.mxu0 0
    %6984 = vmatpush1.bf16.msra.mxu0 0
    %6985 = vmatprep.subr.bf16.mxu0 0
    %6986 = vmatpush1.bf16.msra.mxu0 0
    %6987 = vmatprep.subr.bf16.mxu0 0
    %6988 = vmatpush1.bf16.msra.mxu0 0
    %6989 = vmatprep.subr.bf16.mxu0 0
    %6990 = vmatpush1.bf16.msra.mxu0 0
    %6991 = vmatprep.subr.bf16.mxu0 0
    %6992 = vmatpush1.bf16.msra.mxu0 0
    %6993 = vmatprep.subr.bf16.mxu0 0
    %6994 = vmatpush1.bf16.msra.mxu0 0
    %6995 = vmatprep.subr.bf16.mxu0 0
    %6996 = vmatpush1.bf16.msra.mxu0 0
    %6997 = vmatprep.subr.bf16.mxu0 0
    %6998 = vmatpush1.bf16.msra.mxu0 0
    %6999 = vmatprep.subr.bf16.mxu0 0
    %7000 = vmatpush1.bf16.msra.mxu0 0
    %7001 = vmatprep.subr.bf16.mxu0 0
    %7002 = vmatpush1.bf16.msra.mxu0 0
    %7003 = vmatprep.mubr.bf16.mxu0 0
    %7004 = vmatmul.mubr.bf16.gmra.mrb[0].mxu0 %v6969
    %v7005 = vpop.f32.mrb[0].mxu0
    %v7006 = vadd.f32 0.0, %v7005
    %v7007 = vpop.f32.mrb[0].mxu0
    %v7008 = vpop.f32.mrb[0].mxu0
    %v7009 = vadd.f32 0.0, %v7008
    %v7010 = vpop.f32.mrb[0].mxu0
    %7011 = vdwg.mxu0
    %v7014 = vunpack.c.l.b16 %v5993
    %v7015 = vunpack.c.l.b16 %v5994
    %v7016 = vpack.c.b16 %v7015, %v7014
    %v7018 = vsel %vm6029, %v7016, 0
    %7020 = vmatprep.subr.bf16.mxu0 0
    %7021 = vmatpush1.bf16.msra.mxu0 %v6026
    %7022 = vmatprep.subr.bf16.mxu0 0
    %7023 = vmatpush1.bf16.msra.mxu0 %v6038
    %7024 = vmatprep.subr.bf16.mxu0 0
    %7025 = vmatpush1.bf16.msra.mxu0 0
    %7026 = vmatprep.subr.bf16.mxu0 0
    %7027 = vmatpush1.bf16.msra.mxu0 0
    %7028 = vmatprep.subr.bf16.mxu0 0
    %7029 = vmatpush1.bf16.msra.mxu0 0
    %7030 = vmatprep.subr.bf16.mxu0 0
    %7031 = vmatpush1.bf16.msra.mxu0 0
    %7032 = vmatprep.subr.bf16.mxu0 0
    %7033 = vmatpush1.bf16.msra.mxu0 0
    %7034 = vmatprep.subr.bf16.mxu0 0
    %7035 = vmatpush1.bf16.msra.mxu0 0
    %7036 = vmatprep.subr.bf16.mxu0 0
    %7037 = vmatpush1.bf16.msra.mxu0 0
    %7038 = vmatprep.subr.bf16.mxu0 0
    %7039 = vmatpush1.bf16.msra.mxu0 0
    %7040 = vmatprep.subr.bf16.mxu0 0
    %7041 = vmatpush1.bf16.msra.mxu0 0
    %7042 = vmatprep.subr.bf16.mxu0 0
    %7043 = vmatpush1.bf16.msra.mxu0 0
    %7044 = vmatprep.subr.bf16.mxu0 0
    %7045 = vmatpush1.bf16.msra.mxu0 0
    %7046 = vmatprep.subr.bf16.mxu0 0
    %7047 = vmatpush1.bf16.msra.mxu0 0
    %7048 = vmatprep.subr.bf16.mxu0 0
    %7049 = vmatpush1.bf16.msra.mxu0 0
    %7050 = vmatprep.subr.bf16.mxu0 0
    %7051 = vmatpush1.bf16.msra.mxu0 0
    %7052 = vmatprep.mubr.bf16.mxu0 0
    %7053 = vmatmul.mubr.bf16.gmra.mrb[0].mxu0 %v7018
    %v7054 = vpop.f32.mrb[0].mxu0
    %v7055 = vadd.f32 0.0, %v7054
    %v7056 = vpop.f32.mrb[0].mxu0
    %v7057 = vpop.f32.mrb[0].mxu0
    %v7058 = vadd.f32 0.0, %v7057
    %v7059 = vpop.f32.mrb[0].mxu0
    %7060 = vdwg.mxu0
    %v7063 = vunpack.c.l.b16 %v5995
    %v7064 = vunpack.c.l.b16 %v5996
    %v7065 = vpack.c.b16 %v7064, %v7063
    %v7067 = vsel %vm6029, %v7065, 0
    %7069 = vmatprep.subr.bf16.mxu0 0
    %7070 = vmatpush1.bf16.msra.mxu0 %v6026
    %7071 = vmatprep.subr.bf16.mxu0 0
    %7072 = vmatpush1.bf16.msra.mxu0 %v6038
    %7073 = vmatprep.subr.bf16.mxu0 0
    %7074 = vmatpush1.bf16.msra.mxu0 0
    %7075 = vmatprep.subr.bf16.mxu0 0
    %7076 = vmatpush1.bf16.msra.mxu0 0
    %7077 = vmatprep.subr.bf16.mxu0 0
    %7078 = vmatpush1.bf16.msra.mxu0 0
    %7079 = vmatprep.subr.bf16.mxu0 0
    %7080 = vmatpush1.bf16.msra.mxu0 0
    %7081 = vmatprep.subr.bf16.mxu0 0
    %7082 = vmatpush1.bf16.msra.mxu0 0
    %7083 = vmatprep.subr.bf16.mxu0 0
    %7084 = vmatpush1.bf16.msra.mxu0 0
    %7085 = vmatprep.subr.bf16.mxu0 0
    %7086 = vmatpush1.bf16.msra.mxu0 0
    %7087 = vmatprep.subr.bf16.mxu0 0
    %7088 = vmatpush1.bf16.msra.mxu0 0
    %7089 = vmatprep.subr.bf16.mxu0 0
    %7090 = vmatpush1.bf16.msra.mxu0 0
    %7091 = vmatprep.subr.bf16.mxu0 0
    %7092 = vmatpush1.bf16.msra.mxu0 0
    %7093 = vmatprep.subr.bf16.mxu0 0
    %7094 = vmatpush1.bf16.msra.mxu0 0
    %7095 = vmatprep.subr.bf16.mxu0 0
    %7096 = vmatpush1.bf16.msra.mxu0 0
    %7097 = vmatprep.subr.bf16.mxu0 0
    %7098 = vmatpush1.bf16.msra.mxu0 0
    %7099 = vmatprep.subr.bf16.mxu0 0
    %7100 = vmatpush1.bf16.msra.mxu0 0
    %7101 = vmatprep.mubr.bf16.mxu0 0
    %7102 = vmatmul.mubr.bf16.gmra.mrb[0].mxu0 %v7067
    %v7103 = vpop.f32.mrb[0].mxu0
    %v7104 = vadd.f32 0.0, %v7103
    %v7105 = vpop.f32.mrb[0].mxu0
    %v7106 = vpop.f32.mrb[0].mxu0
    %v7107 = vadd.f32 0.0, %v7106
    %v7108 = vpop.f32.mrb[0].mxu0
    %7109 = vdwg.mxu0
    %v7112 = vunpack.c.l.b16 %v5997
    %v7113 = vunpack.c.l.b16 %v5998
    %v7114 = vpack.c.b16 %v7113, %v7112
    %v7116 = vsel %vm6029, %v7114, 0
    %7118 = vmatprep.subr.bf16.mxu0 0
    %7119 = vmatpush1.bf16.msra.mxu0 %v6026
    %7120 = vmatprep.subr.bf16.mxu0 0
    %7121 = vmatpush1.bf16.msra.mxu0 %v6038
    %7122 = vmatprep.subr.bf16.mxu0 0
    %7123 = vmatpush1.bf16.msra.mxu0 0
    %7124 = vmatprep.subr.bf16.mxu0 0
    %7125 = vmatpush1.bf16.msra.mxu0 0
    %7126 = vmatprep.subr.bf16.mxu0 0
    %7127 = vmatpush1.bf16.msra.mxu0 0
    %7128 = vmatprep.subr.bf16.mxu0 0
    %7129 = vmatpush1.bf16.msra.mxu0 0
    %7130 = vmatprep.subr.bf16.mxu0 0
    %7131 = vmatpush1.bf16.msra.mxu0 0
    %7132 = vmatprep.subr.bf16.mxu0 0
    %7133 = vmatpush1.bf16.msra.mxu0 0
    %7134 = vmatprep.subr.bf16.mxu0 0
    %7135 = vmatpush1.bf16.msra.mxu0 0
    %7136 = vmatprep.subr.bf16.mxu0 0
    %7137 = vmatpush1.bf16.msra.mxu0 0
    %7138 = vmatprep.subr.bf16.mxu0 0
    %7139 = vmatpush1.bf16.msra.mxu0 0
    %7140 = vmatprep.subr.bf16.mxu0 0
    %7141 = vmatpush1.bf16.msra.mxu0 0
    %7142 = vmatprep.subr.bf16.mxu0 0
    %7143 = vmatpush1.bf16.msra.mxu0 0
    %7144 = vmatprep.subr.bf16.mxu0 0
    %7145 = vmatpush1.bf16.msra.mxu0 0
    %7146 = vmatprep.subr.bf16.mxu0 0
    %7147 = vmatpush1.bf16.msra.mxu0 0
    %7148 = vmatprep.subr.bf16.mxu0 0
    %7149 = vmatpush1.bf16.msra.mxu0 0
    %7150 = vmatprep.mubr.bf16.mxu0 0
    %7151 = vmatmul.mubr.bf16.gmra.mrb[0].mxu0 %v7116
    %v7152 = vpop.f32.mrb[0].mxu0
    %v7153 = vadd.f32 0.0, %v7152
    %v7154 = vpop.f32.mrb[0].mxu0
    %v7155 = vpop.f32.mrb[0].mxu0
    %v7156 = vadd.f32 0.0, %v7155
    %v7157 = vpop.f32.mrb[0].mxu0
    %7158 = vdwg.mxu0
    %v7161 = vunpack.c.l.b16 %v5999
    %v7162 = vunpack.c.l.b16 %v6000
    %v7163 = vpack.c.b16 %v7162, %v7161
    %v7165 = vsel %vm6029, %v7163, 0
    %7167 = vmatprep.subr.bf16.mxu0 0
    %7168 = vmatpush1.bf16.msra.mxu0 %v6026
    %7169 = vmatprep.subr.bf16.mxu0 0
    %7170 = vmatpush1.bf16.msra.mxu0 %v6038
    %7171 = vmatprep.subr.bf16.mxu0 0
    %7172 = vmatpush1.bf16.msra.mxu0 0
    %7173 = vmatprep.subr.bf16.mxu0 0
    %7174 = vmatpush1.bf16.msra.mxu0 0
    %7175 = vmatprep.subr.bf16.mxu0 0
    %7176 = vmatpush1.bf16.msra.mxu0 0
    %7177 = vmatprep.subr.bf16.mxu0 0
    %7178 = vmatpush1.bf16.msra.mxu0 0
    %7179 = vmatprep.subr.bf16.mxu0 0
    %7180 = vmatpush1.bf16.msra.mxu0 0
    %7181 = vmatprep.subr.bf16.mxu0 0
    %7182 = vmatpush1.bf16.msra.mxu0 0
    %7183 = vmatprep.subr.bf16.mxu0 0
    %7184 = vmatpush1.bf16.msra.mxu0 0
    %7185 = vmatprep.subr.bf16.mxu0 0
    %7186 = vmatpush1.bf16.msra.mxu0 0
    %7187 = vmatprep.subr.bf16.mxu0 0
    %7188 = vmatpush1.bf16.msra.mxu0 0
    %7189 = vmatprep.subr.bf16.mxu0 0
    %7190 = vmatpush1.bf16.msra.mxu0 0
    %7191 = vmatprep.subr.bf16.mxu0 0
    %7192 = vmatpush1.bf16.msra.mxu0 0
    %7193 = vmatprep.subr.bf16.mxu0 0
    %7194 = vmatpush1.bf16.msra.mxu0 0
    %7195 = vmatprep.subr.bf16.mxu0 0
    %7196 = vmatpush1.bf16.msra.mxu0 0
    %7197 = vmatprep.subr.bf16.mxu0 0
    %7198 = vmatpush1.bf16.msra.mxu0 0
    %7199 = vmatprep.mubr.bf16.mxu0 0
    %7200 = vmatmul.mubr.bf16.gmra.mrb[0].mxu0 %v7165
    %v7201 = vpop.f32.mrb[0].mxu0
    %v7202 = vadd.f32 0.0, %v7201
    %v7203 = vpop.f32.mrb[0].mxu0
    %v7204 = vpop.f32.mrb[0].mxu0
    %v7205 = vadd.f32 0.0, %v7204
    %v7206 = vpop.f32.mrb[0].mxu0
    %7207 = vdwg.mxu0
    %v7210 = vunpack.c.l.b16 %v6001
    %v7211 = vunpack.c.l.b16 %v6002
    %v7212 = vpack.c.b16 %v7211, %v7210
    %v7214 = vsel %vm6029, %v7212, 0
    %7216 = vmatprep.subr.bf16.mxu0 0
    %7217 = vmatpush1.bf16.msra.mxu0 %v6026
    %7218 = vmatprep.subr.bf16.mxu0 0
    %7219 = vmatpush1.bf16.msra.mxu0 %v6038
    %7220 = vmatprep.subr.bf16.mxu0 0
    %7221 = vmatpush1.bf16.msra.mxu0 0
    %7222 = vmatprep.subr.bf16.mxu0 0
    %7223 = vmatpush1.bf16.msra.mxu0 0
    %7224 = vmatprep.subr.bf16.mxu0 0
    %7225 = vmatpush1.bf16.msra.mxu0 0
    %7226 = vmatprep.subr.bf16.mxu0 0
    %7227 = vmatpush1.bf16.msra.mxu0 0
    %7228 = vmatprep.subr.bf16.mxu0 0
    %7229 = vmatpush1.bf16.msra.mxu0 0
    %7230 = vmatprep.subr.bf16.mxu0 0
    %7231 = vmatpush1.bf16.msra.mxu0 0
    %7232 = vmatprep.subr.bf16.mxu0 0
    %7233 = vmatpush1.bf16.msra.mxu0 0
    %7234 = vmatprep.subr.bf16.mxu0 0
    %7235 = vmatpush1.bf16.msra.mxu0 0
    %7236 = vmatprep.subr.bf16.mxu0 0
    %7237 = vmatpush1.bf16.msra.mxu0 0
    %7238 = vmatprep.subr.bf16.mxu0 0
    %7239 = vmatpush1.bf16.msra.mxu0 0
    %7240 = vmatprep.subr.bf16.mxu0 0
    %7241 = vmatpush1.bf16.msra.mxu0 0
    %7242 = vmatprep.subr.bf16.mxu0 0
    %7243 = vmatpush1.bf16.msra.mxu0 0
    %7244 = vmatprep.subr.bf16.mxu0 0
    %7245 = vmatpush1.bf16.msra.mxu0 0
    %7246 = vmatprep.subr.bf16.mxu0 0
    %7247 = vmatpush1.bf16.msra.mxu0 0
    %7248 = vmatprep.mubr.bf16.mxu0 0
    %7249 = vmatmul.mubr.bf16.gmra.mrb[0].mxu0 %v7214
    %v7250 = vpop.f32.mrb[0].mxu0
    %v7251 = vadd.f32 0.0, %v7250
    %v7252 = vpop.f32.mrb[0].mxu0
    %v7253 = vpop.f32.mrb[0].mxu0
    %v7254 = vadd.f32 0.0, %v7253
    %v7255 = vpop.f32.mrb[0].mxu0
    %7256 = vdwg.mxu0
    %v7259 = vunpack.c.l.b16 %v6003
    %v7260 = vunpack.c.l.b16 %v6004
    %v7261 = vpack.c.b16 %v7260, %v7259
    %v7263 = vsel %vm6029, %v7261, 0
    %7265 = vmatprep.subr.bf16.mxu0 0
    %7266 = vmatpush1.bf16.msra.mxu0 %v6026
    %7267 = vmatprep.subr.bf16.mxu0 0
    %7268 = vmatpush1.bf16.msra.mxu0 %v6038
    %7269 = vmatprep.subr.bf16.mxu0 0
    %7270 = vmatpush1.bf16.msra.mxu0 0
    %7271 = vmatprep.subr.bf16.mxu0 0
    %7272 = vmatpush1.bf16.msra.mxu0 0
    %7273 = vmatprep.subr.bf16.mxu0 0
    %7274 = vmatpush1.bf16.msra.mxu0 0
    %7275 = vmatprep.subr.bf16.mxu0 0
    %7276 = vmatpush1.bf16.msra.mxu0 0
    %7277 = vmatprep.subr.bf16.mxu0 0
    %7278 = vmatpush1.bf16.msra.mxu0 0
    %7279 = vmatprep.subr.bf16.mxu0 0
    %7280 = vmatpush1.bf16.msra.mxu0 0
    %7281 = vmatprep.subr.bf16.mxu0 0
    %7282 = vmatpush1.bf16.msra.mxu0 0
    %7283 = vmatprep.subr.bf16.mxu0 0
    %7284 = vmatpush1.bf16.msra.mxu0 0
    %7285 = vmatprep.subr.bf16.mxu0 0
    %7286 = vmatpush1.bf16.msra.mxu0 0
    %7287 = vmatprep.subr.bf16.mxu0 0
    %7288 = vmatpush1.bf16.msra.mxu0 0
    %7289 = vmatprep.subr.bf16.mxu0 0
    %7290 = vmatpush1.bf16.msra.mxu0 0
    %7291 = vmatprep.subr.bf16.mxu0 0
    %7292 = vmatpush1.bf16.msra.mxu0 0
    %7293 = vmatprep.subr.bf16.mxu0 0
    %7294 = vmatpush1.bf16.msra.mxu0 0
    %7295 = vmatprep.subr.bf16.mxu0 0
    %7296 = vmatpush1.bf16.msra.mxu0 0
    %7297 = vmatprep.mubr.bf16.mxu0 0
    %7298 = vmatmul.mubr.bf16.gmra.mrb[0].mxu0 %v7263
    %v7299 = vpop.f32.mrb[0].mxu0
    %v7300 = vadd.f32 0.0, %v7299
    %v7301 = vpop.f32.mrb[0].mxu0
    %v7302 = vpop.f32.mrb[0].mxu0
    %v7303 = vadd.f32 0.0, %v7302
    %v7304 = vpop.f32.mrb[0].mxu0
    %7305 = vdwg.mxu0
    %v7308 = vunpack.c.l.b16 %v6005
    %v7309 = vunpack.c.l.b16 %v6006
    %v7310 = vpack.c.b16 %v7309, %v7308
    %v7312 = vsel %vm6029, %v7310, 0
    %7314 = vmatprep.subr.bf16.mxu0 0
    %7315 = vmatpush1.bf16.msra.mxu0 %v6026
    %7316 = vmatprep.subr.bf16.mxu0 0
    %7317 = vmatpush1.bf16.msra.mxu0 %v6038
    %7318 = vmatprep.subr.bf16.mxu0 0
    %7319 = vmatpush1.bf16.msra.mxu0 0
    %7320 = vmatprep.subr.bf16.mxu0 0
    %7321 = vmatpush1.bf16.msra.mxu0 0
    %7322 = vmatprep.subr.bf16.mxu0 0
    %7323 = vmatpush1.bf16.msra.mxu0 0
    %7324 = vmatprep.subr.bf16.mxu0 0
    %7325 = vmatpush1.bf16.msra.mxu0 0
    %7326 = vmatprep.subr.bf16.mxu0 0
    %7327 = vmatpush1.bf16.msra.mxu0 0
    %7328 = vmatprep.subr.bf16.mxu0 0
    %7329 = vmatpush1.bf16.msra.mxu0 0
    %7330 = vmatprep.subr.bf16.mxu0 0
    %7331 = vmatpush1.bf16.msra.mxu0 0
    %7332 = vmatprep.subr.bf16.mxu0 0
    %7333 = vmatpush1.bf16.msra.mxu0 0
    %7334 = vmatprep.subr.bf16.mxu0 0
    %7335 = vmatpush1.bf16.msra.mxu0 0
    %7336 = vmatprep.subr.bf16.mxu0 0
    %7337 = vmatpush1.bf16.msra.mxu0 0
    %7338 = vmatprep.subr.bf16.mxu0 0
    %7339 = vmatpush1.bf16.msra.mxu0 0
    %7340 = vmatprep.subr.bf16.mxu0 0
    %7341 = vmatpush1.bf16.msra.mxu0 0
    %7342 = vmatprep.subr.bf16.mxu0 0
    %7343 = vmatpush1.bf16.msra.mxu0 0
    %7344 = vmatprep.subr.bf16.mxu0 0
    %7345 = vmatpush1.bf16.msra.mxu0 0
    %7346 = vmatprep.mubr.bf16.mxu0 0
    %7347 = vmatmul.mubr.bf16.gmra.mrb[0].mxu0 %v7312
    %v7348 = vpop.f32.mrb[0].mxu0
    %v7349 = vadd.f32 0.0, %v7348
    %v7350 = vpop.f32.mrb[0].mxu0
    %v7351 = vpop.f32.mrb[0].mxu0
    %v7352 = vadd.f32 0.0, %v7351
    %v7353 = vpop.f32.mrb[0].mxu0
    %7354 = vdwg.mxu0
    %v7357 = vunpack.c.l.b16 %v6007
    %v7358 = vunpack.c.l.b16 %v6008
    %v7359 = vpack.c.b16 %v7358, %v7357
    %v7361 = vsel %vm6029, %v7359, 0
    %7363 = vmatprep.subr.bf16.mxu0 0
    %7364 = vmatpush1.bf16.msra.mxu0 %v6026
    %7365 = vmatprep.subr.bf16.mxu0 0
    %7366 = vmatpush1.bf16.msra.mxu0 %v6038
    %7367 = vmatprep.subr.bf16.mxu0 0
    %7368 = vmatpush1.bf16.msra.mxu0 0
    %7369 = vmatprep.subr.bf16.mxu0 0
    %7370 = vmatpush1.bf16.msra.mxu0 0
    %7371 = vmatprep.subr.bf16.mxu0 0
    %7372 = vmatpush1.bf16.msra.mxu0 0
    %7373 = vmatprep.subr.bf16.mxu0 0
    %7374 = vmatpush1.bf16.msra.mxu0 0
    %7375 = vmatprep.subr.bf16.mxu0 0
    %7376 = vmatpush1.bf16.msra.mxu0 0
    %7377 = vmatprep.subr.bf16.mxu0 0
    %7378 = vmatpush1.bf16.msra.mxu0 0
    %7379 = vmatprep.subr.bf16.mxu0 0
    %7380 = vmatpush1.bf16.msra.mxu0 0
    %7381 = vmatprep.subr.bf16.mxu0 0
    %7382 = vmatpush1.bf16.msra.mxu0 0
    %7383 = vmatprep.subr.bf16.mxu0 0
    %7384 = vmatpush1.bf16.msra.mxu0 0
    %7385 = vmatprep.subr.bf16.mxu0 0
    %7386 = vmatpush1.bf16.msra.mxu0 0
    %7387 = vmatprep.subr.bf16.mxu0 0
    %7388 = vmatpush1.bf16.msra.mxu0 0
    %7389 = vmatprep.subr.bf16.mxu0 0
    %7390 = vmatpush1.bf16.msra.mxu0 0
    %7391 = vmatprep.subr.bf16.mxu0 0
    %7392 = vmatpush1.bf16.msra.mxu0 0
    %7393 = vmatprep.subr.bf16.mxu0 0
    %7394 = vmatpush1.bf16.msra.mxu0 0
    %7395 = vmatprep.mubr.bf16.mxu0 0
    %7396 = vmatmul.mubr.bf16.gmra.mrb[0].mxu0 %v7361
    %v7397 = vpop.f32.mrb[0].mxu0
    %v7398 = vadd.f32 0.0, %v7397
    %v7399 = vpop.f32.mrb[0].mxu0
    %v7400 = vpop.f32.mrb[0].mxu0
    %v7401 = vadd.f32 0.0, %v7400
    %v7402 = vpop.f32.mrb[0].mxu0
    %7403 = vdwg.mxu0
    %v7404 = vld [vmem:[%s2] sm:$0x1]
    %v7406 = vlaneseq
    %v7407 = vshrl.u32 %v7406, 7
    %v7408 = vsub.s32 0, %v7407
    %v7409 = vrot.slane %v7404, %v7408
    %v7411 = vmul.f32 %v6075, %v7409
    %v7412 = vmul.f32 %v6078, %v7409
    %v7413 = vmul.f32 %v6124, %v7409
    %v7414 = vmul.f32 %v6127, %v7409
    %v7415 = vmul.f32 %v6173, %v7409
    %v7416 = vmul.f32 %v6176, %v7409
    %v7417 = vmul.f32 %v6222, %v7409
    %v7418 = vmul.f32 %v6225, %v7409
    %v7419 = vmul.f32 %v6271, %v7409
    %v7420 = vmul.f32 %v6274, %v7409
    %v7421 = vmul.f32 %v6320, %v7409
    %v7422 = vmul.f32 %v6323, %v7409
    %v7423 = vmul.f32 %v6369, %v7409
    %v7424 = vmul.f32 %v6372, %v7409
    %v7425 = vmul.f32 %v6418, %v7409
    %v7426 = vmul.f32 %v6421, %v7409
    %v7427 = vmul.f32 %v6467, %v7409
    %v7428 = vmul.f32 %v6470, %v7409
    %v7429 = vmul.f32 %v6516, %v7409
    %v7430 = vmul.f32 %v6519, %v7409
    %v7431 = vmul.f32 %v6565, %v7409
    %v7432 = vmul.f32 %v6568, %v7409
    %v7433 = vmul.f32 %v6614, %v7409
    %v7434 = vmul.f32 %v6617, %v7409
    %v7435 = vmul.f32 %v6663, %v7409
    %v7436 = vmul.f32 %v6666, %v7409
    %v7437 = vmul.f32 %v6712, %v7409
    %v7438 = vmul.f32 %v6715, %v7409
    %v7439 = vmul.f32 %v6761, %v7409
    %v7440 = vmul.f32 %v6764, %v7409
    %v7441 = vmul.f32 %v6810, %v7409
    %v7442 = vmul.f32 %v6813, %v7409
    %v7443 = vmul.f32 %v6859, %v7409
    %v7444 = vmul.f32 %v6862, %v7409
    %v7445 = vmul.f32 %v6908, %v7409
    %v7446 = vmul.f32 %v6911, %v7409
    %v7447 = vmul.f32 %v6957, %v7409
    %v7448 = vmul.f32 %v6960, %v7409
    %v7449 = vmul.f32 %v7006, %v7409
    %v7450 = vmul.f32 %v7009, %v7409
    %v7451 = vmul.f32 %v7055, %v7409
    %v7452 = vmul.f32 %v7058, %v7409
    %v7453 = vmul.f32 %v7104, %v7409
    %v7454 = vmul.f32 %v7107, %v7409
    %v7455 = vmul.f32 %v7153, %v7409
    %v7456 = vmul.f32 %v7156, %v7409
    %v7457 = vmul.f32 %v7202, %v7409
    %v7458 = vmul.f32 %v7205, %v7409
    %v7459 = vmul.f32 %v7251, %v7409
    %v7460 = vmul.f32 %v7254, %v7409
    %v7461 = vmul.f32 %v7300, %v7409
    %v7462 = vmul.f32 %v7303, %v7409
    %v7463 = vmul.f32 %v7349, %v7409
    %v7464 = vmul.f32 %v7352, %v7409
    %v7465 = vmul.f32 %v7398, %v7409
    %v7466 = vmul.f32 %v7401, %v7409
    %v7467 = vld [vmem:[%s3] sm:$0x1]
    %v7469 = vlaneseq
    %v7470 = vshrl.u32 %v7469, 7
    %v7471 = vsub.s32 0, %v7470
    %v7472 = vrot.slane %v7467, %v7471
    %v7474 = vadd.f32 %v7411, %v7472
    %v7475 = vadd.f32 %v7412, %v7472
    %v7476 = vadd.f32 %v7413, %v7472
    %v7477 = vadd.f32 %v7414, %v7472
    %v7478 = vadd.f32 %v7415, %v7472
    %v7479 = vadd.f32 %v7416, %v7472
    %v7480 = vadd.f32 %v7417, %v7472
    %v7481 = vadd.f32 %v7418, %v7472
    %v7482 = vadd.f32 %v7419, %v7472
    %v7483 = vadd.f32 %v7420, %v7472
    %v7484 = vadd.f32 %v7421, %v7472
    %v7485 = vadd.f32 %v7422, %v7472
    %v7486 = vadd.f32 %v7423, %v7472
    %v7487 = vadd.f32 %v7424, %v7472
    %v7488 = vadd.f32 %v7425, %v7472
    %v7489 = vadd.f32 %v7426, %v7472
    %v7490 = vadd.f32 %v7427, %v7472
    %v7491 = vadd.f32 %v7428, %v7472
    %v7492 = vadd.f32 %v7429, %v7472
    %v7493 = vadd.f32 %v7430, %v7472
    %v7494 = vadd.f32 %v7431, %v7472
    %v7495 = vadd.f32 %v7432, %v7472
    %v7496 = vadd.f32 %v7433, %v7472
    %v7497 = vadd.f32 %v7434, %v7472
    %v7498 = vadd.f32 %v7435, %v7472
    %v7499 = vadd.f32 %v7436, %v7472
    %v7500 = vadd.f32 %v7437, %v7472
    %v7501 = vadd.f32 %v7438, %v7472
    %v7502 = vadd.f32 %v7439, %v7472
    %v7503 = vadd.f32 %v7440, %v7472
    %v7504 = vadd.f32 %v7441, %v7472
    %v7505 = vadd.f32 %v7442, %v7472
    %v7506 = vadd.f32 %v7443, %v7472
    %v7507 = vadd.f32 %v7444, %v7472
    %v7508 = vadd.f32 %v7445, %v7472
    %v7509 = vadd.f32 %v7446, %v7472
    %v7510 = vadd.f32 %v7447, %v7472
    %v7511 = vadd.f32 %v7448, %v7472
    %v7512 = vadd.f32 %v7449, %v7472
    %v7513 = vadd.f32 %v7450, %v7472
    %v7514 = vadd.f32 %v7451, %v7472
    %v7515 = vadd.f32 %v7452, %v7472
    %v7516 = vadd.f32 %v7453, %v7472
    %v7517 = vadd.f32 %v7454, %v7472
    %v7518 = vadd.f32 %v7455, %v7472
    %v7519 = vadd.f32 %v7456, %v7472
    %v7520 = vadd.f32 %v7457, %v7472
    %v7521 = vadd.f32 %v7458, %v7472
    %v7522 = vadd.f32 %v7459, %v7472
    %v7523 = vadd.f32 %v7460, %v7472
    %v7524 = vadd.f32 %v7461, %v7472
    %v7525 = vadd.f32 %v7462, %v7472
    %v7526 = vadd.f32 %v7463, %v7472
    %v7527 = vadd.f32 %v7464, %v7472
    %v7528 = vadd.f32 %v7465, %v7472
    %v7529 = vadd.f32 %v7466, %v7472
    %vm7530 = vcmp.ge.f32.partialorder %v7474, 0.0
    %vm7531 = vcmp.ge.f32.partialorder %v7475, 0.0
    %vm7532 = vcmp.ge.f32.partialorder %v7476, 0.0
    %vm7533 = vcmp.ge.f32.partialorder %v7477, 0.0
    %vm7534 = vcmp.ge.f32.partialorder %v7478, 0.0
    %vm7535 = vcmp.ge.f32.partialorder %v7479, 0.0
    %vm7536 = vcmp.ge.f32.partialorder %v7480, 0.0
    %vm7537 = vcmp.ge.f32.partialorder %v7481, 0.0
    %vm7538 = vcmp.ge.f32.partialorder %v7482, 0.0
    %vm7539 = vcmp.ge.f32.partialorder %v7483, 0.0
    %vm7540 = vcmp.ge.f32.partialorder %v7484, 0.0
    %vm7541 = vcmp.ge.f32.partialorder %v7485, 0.0
    %vm7542 = vcmp.ge.f32.partialorder %v7486, 0.0
    %vm7543 = vcmp.ge.f32.partialorder %v7487, 0.0
    %vm7544 = vcmp.ge.f32.partialorder %v7488, 0.0
    %vm7545 = vcmp.ge.f32.partialorder %v7489, 0.0
    %vm7546 = vcmp.ge.f32.partialorder %v7490, 0.0
    %vm7547 = vcmp.ge.f32.partialorder %v7491, 0.0
    %vm7548 = vcmp.ge.f32.partialorder %v7492, 0.0
    %vm7549 = vcmp.ge.f32.partialorder %v7493, 0.0
    %vm7550 = vcmp.ge.f32.partialorder %v7494, 0.0
    %vm7551 = vcmp.ge.f32.partialorder %v7495, 0.0
    %vm7552 = vcmp.ge.f32.partialorder %v7496, 0.0
    %vm7553 = vcmp.ge.f32.partialorder %v7497, 0.0
    %vm7554 = vcmp.ge.f32.partialorder %v7498, 0.0
    %vm7555 = vcmp.ge.f32.partialorder %v7499, 0.0
    %vm7556 = vcmp.ge.f32.partialorder %v7500, 0.0
    %vm7557 = vcmp.ge.f32.partialorder %v7501, 0.0
    %vm7558 = vcmp.ge.f32.partialorder %v7502, 0.0
    %vm7559 = vcmp.ge.f32.partialorder %v7503, 0.0
    %vm7560 = vcmp.ge.f32.partialorder %v7504, 0.0
    %vm7561 = vcmp.ge.f32.partialorder %v7505, 0.0
    %vm7562 = vcmp.ge.f32.partialorder %v7506, 0.0
    %vm7563 = vcmp.ge.f32.partialorder %v7507, 0.0
    %vm7564 = vcmp.ge.f32.partialorder %v7508, 0.0
    %vm7565 = vcmp.ge.f32.partialorder %v7509, 0.0
    %vm7566 = vcmp.ge.f32.partialorder %v7510, 0.0
    %vm7567 = vcmp.ge.f32.partialorder %v7511, 0.0
    %vm7568 = vcmp.ge.f32.partialorder %v7512, 0.0
    %vm7569 = vcmp.ge.f32.partialorder %v7513, 0.0
    %vm7570 = vcmp.ge.f32.partialorder %v7514, 0.0
    %vm7571 = vcmp.ge.f32.partialorder %v7515, 0.0
    %vm7572 = vcmp.ge.f32.partialorder %v7516, 0.0
    %vm7573 = vcmp.ge.f32.partialorder %v7517, 0.0
    %vm7574 = vcmp.ge.f32.partialorder %v7518, 0.0
    %vm7575 = vcmp.ge.f32.partialorder %v7519, 0.0
    %vm7576 = vcmp.ge.f32.partialorder %v7520, 0.0
    %vm7577 = vcmp.ge.f32.partialorder %v7521, 0.0
    %vm7578 = vcmp.ge.f32.partialorder %v7522, 0.0
    %vm7579 = vcmp.ge.f32.partialorder %v7523, 0.0
    %vm7580 = vcmp.ge.f32.partialorder %v7524, 0.0
    %vm7581 = vcmp.ge.f32.partialorder %v7525, 0.0
    %vm7582 = vcmp.ge.f32.partialorder %v7526, 0.0
    %vm7583 = vcmp.ge.f32.partialorder %v7527, 0.0
    %vm7584 = vcmp.ge.f32.partialorder %v7528, 0.0
    %vm7585 = vcmp.ge.f32.partialorder %v7529, 0.0
    %v7586 = vsel %vm7530, 1.0, -1.0
    %v7587 = vsel %vm7531, 1.0, -1.0
    %v7588 = vsel %vm7532, 1.0, -1.0
    %v7589 = vsel %vm7533, 1.0, -1.0
    %v7590 = vsel %vm7534, 1.0, -1.0
    %v7591 = vsel %vm7535, 1.0, -1.0
    %v7592 = vsel %vm7536, 1.0, -1.0
    %v7593 = vsel %vm7537, 1.0, -1.0
    %v7594 = vsel %vm7538, 1.0, -1.0
    %v7595 = vsel %vm7539, 1.0, -1.0
    %v7596 = vsel %vm7540, 1.0, -1.0
    %v7597 = vsel %vm7541, 1.0, -1.0
    %v7598 = vsel %vm7542, 1.0, -1.0
    %v7599 = vsel %vm7543, 1.0, -1.0
    %v7600 = vsel %vm7544, 1.0, -1.0
    %v7601 = vsel %vm7545, 1.0, -1.0
    %v7602 = vsel %vm7546, 1.0, -1.0
    %v7603 = vsel %vm7547, 1.0, -1.0
    %v7604 = vsel %vm7548, 1.0, -1.0
    %v7605 = vsel %vm7549, 1.0, -1.0
    %v7606 = vsel %vm7550, 1.0, -1.0
    %v7607 = vsel %vm7551, 1.0, -1.0
    %v7608 = vsel %vm7552, 1.0, -1.0
    %v7609 = vsel %vm7553, 1.0, -1.0
    %v7610 = vsel %vm7554, 1.0, -1.0
    %v7611 = vsel %vm7555, 1.0, -1.0
    %v7612 = vsel %vm7556, 1.0, -1.0
    %v7613 = vsel %vm7557, 1.0, -1.0
    %v7614 = vsel %vm7558, 1.0, -1.0
    %v7615 = vsel %vm7559, 1.0, -1.0
    %v7616 = vsel %vm7560, 1.0, -1.0
    %v7617 = vsel %vm7561, 1.0, -1.0
    %v7618 = vsel %vm7562, 1.0, -1.0
    %v7619 = vsel %vm7563, 1.0, -1.0
    %v7620 = vsel %vm7564, 1.0, -1.0
    %v7621 = vsel %vm7565, 1.0, -1.0
    %v7622 = vsel %vm7566, 1.0, -1.0
    %v7623 = vsel %vm7567, 1.0, -1.0
    %v7624 = vsel %vm7568, 1.0, -1.0
    %v7625 = vsel %vm7569, 1.0, -1.0
    %v7626 = vsel %vm7570, 1.0, -1.0
    %v7627 = vsel %vm7571, 1.0, -1.0
    %v7628 = vsel %vm7572, 1.0, -1.0
    %v7629 = vsel %vm7573, 1.0, -1.0
    %v7630 = vsel %vm7574, 1.0, -1.0
    %v7631 = vsel %vm7575, 1.0, -1.0
    %v7632 = vsel %vm7576, 1.0, -1.0
    %v7633 = vsel %vm7577, 1.0, -1.0
    %v7634 = vsel %vm7578, 1.0, -1.0
    %v7635 = vsel %vm7579, 1.0, -1.0
    %v7636 = vsel %vm7580, 1.0, -1.0
    %v7637 = vsel %vm7581, 1.0, -1.0
    %v7638 = vsel %vm7582, 1.0, -1.0
    %v7639 = vsel %vm7583, 1.0, -1.0
    %v7640 = vsel %vm7584, 1.0, -1.0
    %v7641 = vsel %vm7585, 1.0, -1.0
    %v7642 = vmax.f32 %v7586, %v7588
    %v7643 = vmax.f32 %v7587, %v7589
    %v7644 = vmax.f32 %v7590, %v7592
    %v7645 = vmax.f32 %v7591, %v7593
    %v7646 = vmax.f32 %v7594, %v7596
    %v7647 = vmax.f32 %v7595, %v7597
    %v7648 = vmax.f32 %v7598, %v7600
    %v7649 = vmax.f32 %v7599, %v7601
    %v7650 = vmax.f32 %v7602, %v7604
    %v7651 = vmax.f32 %v7603, %v7605
    %v7652 = vmax.f32 %v7606, %v7608
    %v7653 = vmax.f32 %v7607, %v7609
    %v7654 = vmax.f32 %v7610, %v7612
    %v7655 = vmax.f32 %v7611, %v7613
    %v7656 = vmax.f32 %v7614, %v7616
    %v7657 = vmax.f32 %v7615, %v7617
    %v7658 = vmax.f32 %v7618, %v7620
    %v7659 = vmax.f32 %v7619, %v7621
    %v7660 = vmax.f32 %v7622, %v7624
    %v7661 = vmax.f32 %v7623, %v7625
    %v7662 = vmax.f32 %v7626, %v7628
    %v7663 = vmax.f32 %v7627, %v7629
    %v7664 = vmax.f32 %v7630, %v7632
    %v7665 = vmax.f32 %v7631, %v7633
    %v7666 = vmax.f32 %v7634, %v7636
    %v7667 = vmax.f32 %v7635, %v7637
    %v7668 = vmax.f32 %v7638, %v7640
    %v7669 = vmax.f32 %v7639, %v7641
    %v7670 = vlaneseq
    %v7671 = vshrl.u32 %v7670, 7
    %v7672 = vlaneseq
    %v7673 = vand.u32 %v7672, 127
    %v7674 = vmul.u32 %v7671, 2
    %vm7675 = vcmp.eq.s32.totalorder %v7673, %v7674
    %v7676 = vsel %vm7675, 1, 0
    %v7677 = vcvt.s32.f32 %v7676
    %v7678 = vadd.s32 %v7674, 1
    %vm7679 = vcmp.eq.s32.totalorder %v7673, %v7678
    %v7680 = vsel %vm7679, 1, 0
    %v7681 = vcvt.s32.f32 %v7680
    %vm7682 = vcmask 113664
    %v7684 = vsel %vm7682, %v7677, 0
    %v7687 = vsel %vm6034, %v7643, 0
    %7689 = vmatprep.subr.mxu0 0.0
    %7690 = vmatpush1.msra.mxu0 %v7642
    %7691 = vmatprep.subr.mxu0 0.0
    %7692 = vmatpush1.msra.mxu0 %v7687
    %7693 = vmatprep.subr.mxu0 0.0
    %7694 = vmatpush1.msra.mxu0 0.0
    %7695 = vmatprep.subr.mxu0 0.0
    %7696 = vmatpush1.msra.mxu0 0.0
    %7697 = vmatprep.subr.mxu0 0.0
    %7698 = vmatpush1.msra.mxu0 0.0
    %7699 = vmatprep.subr.mxu0 0.0
    %7700 = vmatpush1.msra.mxu0 0.0
    %7701 = vmatprep.subr.mxu0 0.0
    %7702 = vmatpush1.msra.mxu0 0.0
    %7703 = vmatprep.subr.mxu0 0.0
    %7704 = vmatpush1.msra.mxu0 0.0
    %7705 = vmatprep.subr.mxu0 0.0
    %7706 = vmatpush1.msra.mxu0 0.0
    %7707 = vmatprep.subr.mxu0 0.0
    %7708 = vmatpush1.msra.mxu0 0.0
    %7709 = vmatprep.subr.mxu0 0.0
    %7710 = vmatpush1.msra.mxu0 0.0
    %7711 = vmatprep.subr.mxu0 0.0
    %7712 = vmatpush1.msra.mxu0 0.0
    %7713 = vmatprep.subr.mxu0 0.0
    %7714 = vmatpush1.msra.mxu0 0.0
    %7715 = vmatprep.subr.mxu0 0.0
    %7716 = vmatpush1.msra.mxu0 0.0
    %7717 = vmatprep.subr.mxu0 0.0
    %7718 = vmatpush1.msra.mxu0 0.0
    %7719 = vmatprep.subr.mxu0 0.0
    %7720 = vmatpush1.msra.mxu0 0.0
    %7721 = vmatprep.subr.mxu0 0.0
    %7722 = vmatpush1.msra.mxu0 0.0
    %7723 = vmatprep.subr.mxu0 0.0
    %7724 = vmatpush1.msra.mxu0 0.0
    %7725 = vmatprep.subr.mxu0 0.0
    %7726 = vmatpush1.msra.mxu0 0.0
    %7727 = vmatprep.subr.mxu0 0.0
    %7728 = vmatpush1.msra.mxu0 0.0
    %7729 = vmatprep.subr.mxu0 0.0
    %7730 = vmatpush1.msra.mxu0 0.0
    %7731 = vmatprep.subr.mxu0 0.0
    %7732 = vmatpush1.msra.mxu0 0.0
    %7733 = vmatprep.subr.mxu0 0.0
    %7734 = vmatpush1.msra.mxu0 0.0
    %7735 = vmatprep.subr.mxu0 0.0
    %7736 = vmatpush1.msra.mxu0 0.0
    %7737 = vmatprep.subr.mxu0 0.0
    %7738 = vmatpush1.msra.mxu0 0.0
    %7739 = vmatprep.subr.mxu0 0.0
    %7740 = vmatpush1.msra.mxu0 0.0
    %7741 = vmatprep.subr.mxu0 0.0
    %7742 = vmatpush1.msra.mxu0 0.0
    %7743 = vmatprep.subr.mxu0 0.0
    %7744 = vmatpush1.msra.mxu0 0.0
    %7745 = vmatprep.subr.mxu0 0.0
    %7746 = vmatpush1.msra.mxu0 0.0
    %7747 = vmatprep.subr.mxu0 0.0
    %7748 = vmatpush1.msra.mxu0 0.0
    %7749 = vmatprep.subr.mxu0 0.0
    %7750 = vmatpush1.msra.mxu0 0.0
    %7751 = vmatprep.subr.mxu0 0.0
    %7752 = vmatpush1.msra.mxu0 0.0
    %7753 = vmatprep.mubr.f32.mxu0 0.0
    %7754 = vmatmul.mubr.f32.gmra.mrb[0].mxu0 %v7684
    %v7755 = vpop.f32.mrb[0].mxu0
    %v7756 = vadd.f32 0.0, %v7755
    %v7757 = vpop.f32.mrb[0].mxu0
    %7758 = vdwg.mxu0
    %v7760 = vsel %vm6034, %v7645, 0
    %7762 = vmatprep.subr.mxu0 0.0
    %7763 = vmatpush1.msra.mxu0 %v7644
    %7764 = vmatprep.subr.mxu0 0.0
    %7765 = vmatpush1.msra.mxu0 %v7760
    %7766 = vmatprep.subr.mxu0 0.0
    %7767 = vmatpush1.msra.mxu0 0.0
    %7768 = vmatprep.subr.mxu0 0.0
    %7769 = vmatpush1.msra.mxu0 0.0
    %7770 = vmatprep.subr.mxu0 0.0
    %7771 = vmatpush1.msra.mxu0 0.0
    %7772 = vmatprep.subr.mxu0 0.0
    %7773 = vmatpush1.msra.mxu0 0.0
    %7774 = vmatprep.subr.mxu0 0.0
    %7775 = vmatpush1.msra.mxu0 0.0
    %7776 = vmatprep.subr.mxu0 0.0
    %7777 = vmatpush1.msra.mxu0 0.0
    %7778 = vmatprep.subr.mxu0 0.0
    %7779 = vmatpush1.msra.mxu0 0.0
    %7780 = vmatprep.subr.mxu0 0.0
    %7781 = vmatpush1.msra.mxu0 0.0
    %7782 = vmatprep.subr.mxu0 0.0
    %7783 = vmatpush1.msra.mxu0 0.0
    %7784 = vmatprep.subr.mxu0 0.0
    %7785 = vmatpush1.msra.mxu0 0.0
    %7786 = vmatprep.subr.mxu0 0.0
    %7787 = vmatpush1.msra.mxu0 0.0
    %7788 = vmatprep.subr.mxu0 0.0
    %7789 = vmatpush1.msra.mxu0 0.0
    %7790 = vmatprep.subr.mxu0 0.0
    %7791 = vmatpush1.msra.mxu0 0.0
    %7792 = vmatprep.subr.mxu0 0.0
    %7793 = vmatpush1.msra.mxu0 0.0
    %7794 = vmatprep.subr.mxu0 0.0
    %7795 = vmatpush1.msra.mxu0 0.0
    %7796 = vmatprep.subr.mxu0 0.0
    %7797 = vmatpush1.msra.mxu0 0.0
    %7798 = vmatprep.subr.mxu0 0.0
    %7799 = vmatpush1.msra.mxu0 0.0
    %7800 = vmatprep.subr.mxu0 0.0
    %7801 = vmatpush1.msra.mxu0 0.0
    %7802 = vmatprep.subr.mxu0 0.0
    %7803 = vmatpush1.msra.mxu0 0.0
    %7804 = vmatprep.subr.mxu0 0.0
    %7805 = vmatpush1.msra.mxu0 0.0
    %7806 = vmatprep.subr.mxu0 0.0
    %7807 = vmatpush1.msra.mxu0 0.0
    %7808 = vmatprep.subr.mxu0 0.0
    %7809 = vmatpush1.msra.mxu0 0.0
    %7810 = vmatprep.subr.mxu0 0.0
    %7811 = vmatpush1.msra.mxu0 0.0
    %7812 = vmatprep.subr.mxu0 0.0
    %7813 = vmatpush1.msra.mxu0 0.0
    %7814 = vmatprep.subr.mxu0 0.0
    %7815 = vmatpush1.msra.mxu0 0.0
    %7816 = vmatprep.subr.mxu0 0.0
    %7817 = vmatpush1.msra.mxu0 0.0
    %7818 = vmatprep.subr.mxu0 0.0
    %7819 = vmatpush1.msra.mxu0 0.0
    %7820 = vmatprep.subr.mxu0 0.0
    %7821 = vmatpush1.msra.mxu0 0.0
    %7822 = vmatprep.subr.mxu0 0.0
    %7823 = vmatpush1.msra.mxu0 0.0
    %7824 = vmatprep.subr.mxu0 0.0
    %7825 = vmatpush1.msra.mxu0 0.0
    %7826 = vmatprep.mubr.f32.mxu0 0.0
    %7827 = vmatmul.mubr.f32.gmra.mrb[0].mxu0 %v7684
    %v7828 = vpop.f32.mrb[0].mxu0
    %v7829 = vadd.f32 0.0, %v7828
    %v7830 = vpop.f32.mrb[0].mxu0
    %7831 = vdwg.mxu0
    %v7833 = vsel %vm6034, %v7647, 0
    %7835 = vmatprep.subr.mxu0 0.0
    %7836 = vmatpush1.msra.mxu0 %v7646
    %7837 = vmatprep.subr.mxu0 0.0
    %7838 = vmatpush1.msra.mxu0 %v7833
    %7839 = vmatprep.subr.mxu0 0.0
    %7840 = vmatpush1.msra.mxu0 0.0
    %7841 = vmatprep.subr.mxu0 0.0
    %7842 = vmatpush1.msra.mxu0 0.0
    %7843 = vmatprep.subr.mxu0 0.0
    %7844 = vmatpush1.msra.mxu0 0.0
    %7845 = vmatprep.subr.mxu0 0.0
    %7846 = vmatpush1.msra.mxu0 0.0
    %7847 = vmatprep.subr.mxu0 0.0
    %7848 = vmatpush1.msra.mxu0 0.0
    %7849 = vmatprep.subr.mxu0 0.0
    %7850 = vmatpush1.msra.mxu0 0.0
    %7851 = vmatprep.subr.mxu0 0.0
    %7852 = vmatpush1.msra.mxu0 0.0
    %7853 = vmatprep.subr.mxu0 0.0
    %7854 = vmatpush1.msra.mxu0 0.0
    %7855 = vmatprep.subr.mxu0 0.0
    %7856 = vmatpush1.msra.mxu0 0.0
    %7857 = vmatprep.subr.mxu0 0.0
    %7858 = vmatpush1.msra.mxu0 0.0
    %7859 = vmatprep.subr.mxu0 0.0
    %7860 = vmatpush1.msra.mxu0 0.0
    %7861 = vmatprep.subr.mxu0 0.0
    %7862 = vmatpush1.msra.mxu0 0.0
    %7863 = vmatprep.subr.mxu0 0.0
    %7864 = vmatpush1.msra.mxu0 0.0
    %7865 = vmatprep.subr.mxu0 0.0
    %7866 = vmatpush1.msra.mxu0 0.0
    %7867 = vmatprep.subr.mxu0 0.0
    %7868 = vmatpush1.msra.mxu0 0.0
    %7869 = vmatprep.subr.mxu0 0.0
    %7870 = vmatpush1.msra.mxu0 0.0
    %7871 = vmatprep.subr.mxu0 0.0
    %7872 = vmatpush1.msra.mxu0 0.0
    %7873 = vmatprep.subr.mxu0 0.0
    %7874 = vmatpush1.msra.mxu0 0.0
    %7875 = vmatprep.subr.mxu0 0.0
    %7876 = vmatpush1.msra.mxu0 0.0
    %7877 = vmatprep.subr.mxu0 0.0
    %7878 = vmatpush1.msra.mxu0 0.0
    %7879 = vmatprep.subr.mxu0 0.0
    %7880 = vmatpush1.msra.mxu0 0.0
    %7881 = vmatprep.subr.mxu0 0.0
    %7882 = vmatpush1.msra.mxu0 0.0
    %7883 = vmatprep.subr.mxu0 0.0
    %7884 = vmatpush1.msra.mxu0 0.0
    %7885 = vmatprep.subr.mxu0 0.0
    %7886 = vmatpush1.msra.mxu0 0.0
    %7887 = vmatprep.subr.mxu0 0.0
    %7888 = vmatpush1.msra.mxu0 0.0
    %7889 = vmatprep.subr.mxu0 0.0
    %7890 = vmatpush1.msra.mxu0 0.0
    %7891 = vmatprep.subr.mxu0 0.0
    %7892 = vmatpush1.msra.mxu0 0.0
    %7893 = vmatprep.subr.mxu0 0.0
    %7894 = vmatpush1.msra.mxu0 0.0
    %7895 = vmatprep.subr.mxu0 0.0
    %7896 = vmatpush1.msra.mxu0 0.0
    %7897 = vmatprep.subr.mxu0 0.0
    %7898 = vmatpush1.msra.mxu0 0.0
    %7899 = vmatprep.mubr.f32.mxu0 0.0
    %7900 = vmatmul.mubr.f32.gmra.mrb[0].mxu0 %v7684
    %v7901 = vpop.f32.mrb[0].mxu0
    %v7902 = vadd.f32 0.0, %v7901
    %v7903 = vpop.f32.mrb[0].mxu0
    %7904 = vdwg.mxu0
    %v7906 = vsel %vm6034, %v7649, 0
    %7908 = vmatprep.subr.mxu0 0.0
    %7909 = vmatpush1.msra.mxu0 %v7648
    %7910 = vmatprep.subr.mxu0 0.0
    %7911 = vmatpush1.msra.mxu0 %v7906
    %7912 = vmatprep.subr.mxu0 0.0
    %7913 = vmatpush1.msra.mxu0 0.0
    %7914 = vmatprep.subr.mxu0 0.0
    %7915 = vmatpush1.msra.mxu0 0.0
    %7916 = vmatprep.subr.mxu0 0.0
    %7917 = vmatpush1.msra.mxu0 0.0
    %7918 = vmatprep.subr.mxu0 0.0
    %7919 = vmatpush1.msra.mxu0 0.0
    %7920 = vmatprep.subr.mxu0 0.0
    %7921 = vmatpush1.msra.mxu0 0.0
    %7922 = vmatprep.subr.mxu0 0.0
    %7923 = vmatpush1.msra.mxu0 0.0
    %7924 = vmatprep.subr.mxu0 0.0
    %7925 = vmatpush1.msra.mxu0 0.0
    %7926 = vmatprep.subr.mxu0 0.0
    %7927 = vmatpush1.msra.mxu0 0.0
    %7928 = vmatprep.subr.mxu0 0.0
    %7929 = vmatpush1.msra.mxu0 0.0
    %7930 = vmatprep.subr.mxu0 0.0
    %7931 = vmatpush1.msra.mxu0 0.0
    %7932 = vmatprep.subr.mxu0 0.0
    %7933 = vmatpush1.msra.mxu0 0.0
    %7934 = vmatprep.subr.mxu0 0.0
    %7935 = vmatpush1.msra.mxu0 0.0
    %7936 = vmatprep.subr.mxu0 0.0
    %7937 = vmatpush1.msra.mxu0 0.0
    %7938 = vmatprep.subr.mxu0 0.0
    %7939 = vmatpush1.msra.mxu0 0.0
    %7940 = vmatprep.subr.mxu0 0.0
    %7941 = vmatpush1.msra.mxu0 0.0
    %7942 = vmatprep.subr.mxu0 0.0
    %7943 = vmatpush1.msra.mxu0 0.0
    %7944 = vmatprep.subr.mxu0 0.0
    %7945 = vmatpush1.msra.mxu0 0.0
    %7946 = vmatprep.subr.mxu0 0.0
    %7947 = vmatpush1.msra.mxu0 0.0
    %7948 = vmatprep.subr.mxu0 0.0
    %7949 = vmatpush1.msra.mxu0 0.0
    %7950 = vmatprep.subr.mxu0 0.0
    %7951 = vmatpush1.msra.mxu0 0.0
    %7952 = vmatprep.subr.mxu0 0.0
    %7953 = vmatpush1.msra.mxu0 0.0
    %7954 = vmatprep.subr.mxu0 0.0
    %7955 = vmatpush1.msra.mxu0 0.0
    %7956 = vmatprep.subr.mxu0 0.0
    %7957 = vmatpush1.msra.mxu0 0.0
    %7958 = vmatprep.subr.mxu0 0.0
    %7959 = vmatpush1.msra.mxu0 0.0
    %7960 = vmatprep.subr.mxu0 0.0
    %7961 = vmatpush1.msra.mxu0 0.0
    %7962 = vmatprep.subr.mxu0 0.0
    %7963 = vmatpush1.msra.mxu0 0.0
    %7964 = vmatprep.subr.mxu0 0.0
    %7965 = vmatpush1.msra.mxu0 0.0
    %7966 = vmatprep.subr.mxu0 0.0
    %7967 = vmatpush1.msra.mxu0 0.0
    %7968 = vmatprep.subr.mxu0 0.0
    %7969 = vmatpush1.msra.mxu0 0.0
    %7970 = vmatprep.subr.mxu0 0.0
    %7971 = vmatpush1.msra.mxu0 0.0
    %7972 = vmatprep.mubr.f32.mxu0 0.0
    %7973 = vmatmul.mubr.f32.gmra.mrb[0].mxu0 %v7684
    %v7974 = vpop.f32.mrb[0].mxu0
    %v7975 = vadd.f32 0.0, %v7974
    %v7976 = vpop.f32.mrb[0].mxu0
    %7977 = vdwg.mxu0
    %v7979 = vsel %vm6034, %v7651, 0
    %7981 = vmatprep.subr.mxu0 0.0
    %7982 = vmatpush1.msra.mxu0 %v7650
    %7983 = vmatprep.subr.mxu0 0.0
    %7984 = vmatpush1.msra.mxu0 %v7979
    %7985 = vmatprep.subr.mxu0 0.0
    %7986 = vmatpush1.msra.mxu0 0.0
    %7987 = vmatprep.subr.mxu0 0.0
    %7988 = vmatpush1.msra.mxu0 0.0
    %7989 = vmatprep.subr.mxu0 0.0
    %7990 = vmatpush1.msra.mxu0 0.0
    %7991 = vmatprep.subr.mxu0 0.0
    %7992 = vmatpush1.msra.mxu0 0.0
    %7993 = vmatprep.subr.mxu0 0.0
    %7994 = vmatpush1.msra.mxu0 0.0
    %7995 = vmatprep.subr.mxu0 0.0
    %7996 = vmatpush1.msra.mxu0 0.0
    %7997 = vmatprep.subr.mxu0 0.0
    %7998 = vmatpush1.msra.mxu0 0.0
    %7999 = vmatprep.subr.mxu0 0.0
    %8000 = vmatpush1.msra.mxu0 0.0
    %8001 = vmatprep.subr.mxu0 0.0
    %8002 = vmatpush1.msra.mxu0 0.0
    %8003 = vmatprep.subr.mxu0 0.0
    %8004 = vmatpush1.msra.mxu0 0.0
    %8005 = vmatprep.subr.mxu0 0.0
    %8006 = vmatpush1.msra.mxu0 0.0
    %8007 = vmatprep.subr.mxu0 0.0
    %8008 = vmatpush1.msra.mxu0 0.0
    %8009 = vmatprep.subr.mxu0 0.0
    %8010 = vmatpush1.msra.mxu0 0.0
    %8011 = vmatprep.subr.mxu0 0.0
    %8012 = vmatpush1.msra.mxu0 0.0
    %8013 = vmatprep.subr.mxu0 0.0
    %8014 = vmatpush1.msra.mxu0 0.0
    %8015 = vmatprep.subr.mxu0 0.0
    %8016 = vmatpush1.msra.mxu0 0.0
    %8017 = vmatprep.subr.mxu0 0.0
    %8018 = vmatpush1.msra.mxu0 0.0
    %8019 = vmatprep.subr.mxu0 0.0
    %8020 = vmatpush1.msra.mxu0 0.0
    %8021 = vmatprep.subr.mxu0 0.0
    %8022 = vmatpush1.msra.mxu0 0.0
    %8023 = vmatprep.subr.mxu0 0.0
    %8024 = vmatpush1.msra.mxu0 0.0
    %8025 = vmatprep.subr.mxu0 0.0
    %8026 = vmatpush1.msra.mxu0 0.0
    %8027 = vmatprep.subr.mxu0 0.0
    %8028 = vmatpush1.msra.mxu0 0.0
    %8029 = vmatprep.subr.mxu0 0.0
    %8030 = vmatpush1.msra.mxu0 0.0
    %8031 = vmatprep.subr.mxu0 0.0
    %8032 = vmatpush1.msra.mxu0 0.0
    %8033 = vmatprep.subr.mxu0 0.0
    %8034 = vmatpush1.msra.mxu0 0.0
    %8035 = vmatprep.subr.mxu0 0.0
    %8036 = vmatpush1.msra.mxu0 0.0
    %8037 = vmatprep.subr.mxu0 0.0
    %8038 = vmatpush1.msra.mxu0 0.0
    %8039 = vmatprep.subr.mxu0 0.0
    %8040 = vmatpush1.msra.mxu0 0.0
    %8041 = vmatprep.subr.mxu0 0.0
    %8042 = vmatpush1.msra.mxu0 0.0
    %8043 = vmatprep.subr.mxu0 0.0
    %8044 = vmatpush1.msra.mxu0 0.0
    %8045 = vmatprep.mubr.f32.mxu0 0.0
    %8046 = vmatmul.mubr.f32.gmra.mrb[0].mxu0 %v7684
    %v8047 = vpop.f32.mrb[0].mxu0
    %v8048 = vadd.f32 0.0, %v8047
    %v8049 = vpop.f32.mrb[0].mxu0
    %8050 = vdwg.mxu0
    %v8052 = vsel %vm6034, %v7653, 0
    %8054 = vmatprep.subr.mxu0 0.0
    %8055 = vmatpush1.msra.mxu0 %v7652
    %8056 = vmatprep.subr.mxu0 0.0
    %8057 = vmatpush1.msra.mxu0 %v8052
    %8058 = vmatprep.subr.mxu0 0.0
    %8059 = vmatpush1.msra.mxu0 0.0
    %8060 = vmatprep.subr.mxu0 0.0
    %8061 = vmatpush1.msra.mxu0 0.0
    %8062 = vmatprep.subr.mxu0 0.0
    %8063 = vmatpush1.msra.mxu0 0.0
    %8064 = vmatprep.subr.mxu0 0.0
    %8065 = vmatpush1.msra.mxu0 0.0
    %8066 = vmatprep.subr.mxu0 0.0
    %8067 = vmatpush1.msra.mxu0 0.0
    %8068 = vmatprep.subr.mxu0 0.0
    %8069 = vmatpush1.msra.mxu0 0.0
    %8070 = vmatprep.subr.mxu0 0.0
    %8071 = vmatpush1.msra.mxu0 0.0
    %8072 = vmatprep.subr.mxu0 0.0
    %8073 = vmatpush1.msra.mxu0 0.0
    %8074 = vmatprep.subr.mxu0 0.0
    %8075 = vmatpush1.msra.mxu0 0.0
    %8076 = vmatprep.subr.mxu0 0.0
    %8077 = vmatpush1.msra.mxu0 0.0
    %8078 = vmatprep.subr.mxu0 0.0
    %8079 = vmatpush1.msra.mxu0 0.0
    %8080 = vmatprep.subr.mxu0 0.0
    %8081 = vmatpush1.msra.mxu0 0.0
    %8082 = vmatprep.subr.mxu0 0.0
    %8083 = vmatpush1.msra.mxu0 0.0
    %8084 = vmatprep.subr.mxu0 0.0
    %8085 = vmatpush1.msra.mxu0 0.0
    %8086 = vmatprep.subr.mxu0 0.0
    %8087 = vmatpush1.msra.mxu0 0.0
    %8088 = vmatprep.subr.mxu0 0.0
    %8089 = vmatpush1.msra.mxu0 0.0
    %8090 = vmatprep.subr.mxu0 0.0
    %8091 = vmatpush1.msra.mxu0 0.0
    %8092 = vmatprep.subr.mxu0 0.0
    %8093 = vmatpush1.msra.mxu0 0.0
    %8094 = vmatprep.subr.mxu0 0.0
    %8095 = vmatpush1.msra.mxu0 0.0
    %8096 = vmatprep.subr.mxu0 0.0
    %8097 = vmatpush1.msra.mxu0 0.0
    %8098 = vmatprep.subr.mxu0 0.0
    %8099 = vmatpush1.msra.mxu0 0.0
    %8100 = vmatprep.subr.mxu0 0.0
    %8101 = vmatpush1.msra.mxu0 0.0
    %8102 = vmatprep.subr.mxu0 0.0
    %8103 = vmatpush1.msra.mxu0 0.0
    %8104 = vmatprep.subr.mxu0 0.0
    %8105 = vmatpush1.msra.mxu0 0.0
    %8106 = vmatprep.subr.mxu0 0.0
    %8107 = vmatpush1.msra.mxu0 0.0
    %8108 = vmatprep.subr.mxu0 0.0
    %8109 = vmatpush1.msra.mxu0 0.0
    %8110 = vmatprep.subr.mxu0 0.0
    %8111 = vmatpush1.msra.mxu0 0.0
    %8112 = vmatprep.subr.mxu0 0.0
    %8113 = vmatpush1.msra.mxu0 0.0
    %8114 = vmatprep.subr.mxu0 0.0
    %8115 = vmatpush1.msra.mxu0 0.0
    %8116 = vmatprep.subr.mxu0 0.0
    %8117 = vmatpush1.msra.mxu0 0.0
    %8118 = vmatprep.mubr.f32.mxu0 0.0
    %8119 = vmatmul.mubr.f32.gmra.mrb[0].mxu0 %v7684
    %v8120 = vpop.f32.mrb[0].mxu0
    %v8121 = vadd.f32 0.0, %v8120
    %v8122 = vpop.f32.mrb[0].mxu0
    %8123 = vdwg.mxu0
    %v8125 = vsel %vm6034, %v7655, 0
    %8127 = vmatprep.subr.mxu0 0.0
    %8128 = vmatpush1.msra.mxu0 %v7654
    %8129 = vmatprep.subr.mxu0 0.0
    %8130 = vmatpush1.msra.mxu0 %v8125
    %8131 = vmatprep.subr.mxu0 0.0
    %8132 = vmatpush1.msra.mxu0 0.0
    %8133 = vmatprep.subr.mxu0 0.0
    %8134 = vmatpush1.msra.mxu0 0.0
    %8135 = vmatprep.subr.mxu0 0.0
    %8136 = vmatpush1.msra.mxu0 0.0
    %8137 = vmatprep.subr.mxu0 0.0
    %8138 = vmatpush1.msra.mxu0 0.0
    %8139 = vmatprep.subr.mxu0 0.0
    %8140 = vmatpush1.msra.mxu0 0.0
    %8141 = vmatprep.subr.mxu0 0.0
    %8142 = vmatpush1.msra.mxu0 0.0
    %8143 = vmatprep.subr.mxu0 0.0
    %8144 = vmatpush1.msra.mxu0 0.0
    %8145 = vmatprep.subr.mxu0 0.0
    %8146 = vmatpush1.msra.mxu0 0.0
    %8147 = vmatprep.subr.mxu0 0.0
    %8148 = vmatpush1.msra.mxu0 0.0
    %8149 = vmatprep.subr.mxu0 0.0
    %8150 = vmatpush1.msra.mxu0 0.0
    %8151 = vmatprep.subr.mxu0 0.0
    %8152 = vmatpush1.msra.mxu0 0.0
    %8153 = vmatprep.subr.mxu0 0.0
    %8154 = vmatpush1.msra.mxu0 0.0
    %8155 = vmatprep.subr.mxu0 0.0
    %8156 = vmatpush1.msra.mxu0 0.0
    %8157 = vmatprep.subr.mxu0 0.0
    %8158 = vmatpush1.msra.mxu0 0.0
    %8159 = vmatprep.subr.mxu0 0.0
    %8160 = vmatpush1.msra.mxu0 0.0
    %8161 = vmatprep.subr.mxu0 0.0
    %8162 = vmatpush1.msra.mxu0 0.0
    %8163 = vmatprep.subr.mxu0 0.0
    %8164 = vmatpush1.msra.mxu0 0.0
    %8165 = vmatprep.subr.mxu0 0.0
    %8166 = vmatpush1.msra.mxu0 0.0
    %8167 = vmatprep.subr.mxu0 0.0
    %8168 = vmatpush1.msra.mxu0 0.0
    %8169 = vmatprep.subr.mxu0 0.0
    %8170 = vmatpush1.msra.mxu0 0.0
    %8171 = vmatprep.subr.mxu0 0.0
    %8172 = vmatpush1.msra.mxu0 0.0
    %8173 = vmatprep.subr.mxu0 0.0
    %8174 = vmatpush1.msra.mxu0 0.0
    %8175 = vmatprep.subr.mxu0 0.0
    %8176 = vmatpush1.msra.mxu0 0.0
    %8177 = vmatprep.subr.mxu0 0.0
    %8178 = vmatpush1.msra.mxu0 0.0
    %8179 = vmatprep.subr.mxu0 0.0
    %8180 = vmatpush1.msra.mxu0 0.0
    %8181 = vmatprep.subr.mxu0 0.0
    %8182 = vmatpush1.msra.mxu0 0.0
    %8183 = vmatprep.subr.mxu0 0.0
    %8184 = vmatpush1.msra.mxu0 0.0
    %8185 = vmatprep.subr.mxu0 0.0
    %8186 = vmatpush1.msra.mxu0 0.0
    %8187 = vmatprep.subr.mxu0 0.0
    %8188 = vmatpush1.msra.mxu0 0.0
    %8189 = vmatprep.subr.mxu0 0.0
    %8190 = vmatpush1.msra.mxu0 0.0
    %8191 = vmatprep.mubr.f32.mxu0 0.0
    %8192 = vmatmul.mubr.f32.gmra.mrb[0].mxu0 %v7684
    %v8193 = vpop.f32.mrb[0].mxu0
    %v8194 = vadd.f32 0.0, %v8193
    %v8195 = vpop.f32.mrb[0].mxu0
    %8196 = vdwg.mxu0
    %v8198 = vsel %vm6034, %v7657, 0
    %8200 = vmatprep.subr.mxu0 0.0
    %8201 = vmatpush1.msra.mxu0 %v7656
    %8202 = vmatprep.subr.mxu0 0.0
    %8203 = vmatpush1.msra.mxu0 %v8198
    %8204 = vmatprep.subr.mxu0 0.0
    %8205 = vmatpush1.msra.mxu0 0.0
    %8206 = vmatprep.subr.mxu0 0.0
    %8207 = vmatpush1.msra.mxu0 0.0
    %8208 = vmatprep.subr.mxu0 0.0
    %8209 = vmatpush1.msra.mxu0 0.0
    %8210 = vmatprep.subr.mxu0 0.0
    %8211 = vmatpush1.msra.mxu0 0.0
    %8212 = vmatprep.subr.mxu0 0.0
    %8213 = vmatpush1.msra.mxu0 0.0
    %8214 = vmatprep.subr.mxu0 0.0
    %8215 = vmatpush1.msra.mxu0 0.0
    %8216 = vmatprep.subr.mxu0 0.0
    %8217 = vmatpush1.msra.mxu0 0.0
    %8218 = vmatprep.subr.mxu0 0.0
    %8219 = vmatpush1.msra.mxu0 0.0
    %8220 = vmatprep.subr.mxu0 0.0
    %8221 = vmatpush1.msra.mxu0 0.0
    %8222 = vmatprep.subr.mxu0 0.0
    %8223 = vmatpush1.msra.mxu0 0.0
    %8224 = vmatprep.subr.mxu0 0.0
    %8225 = vmatpush1.msra.mxu0 0.0
    %8226 = vmatprep.subr.mxu0 0.0
    %8227 = vmatpush1.msra.mxu0 0.0
    %8228 = vmatprep.subr.mxu0 0.0
    %8229 = vmatpush1.msra.mxu0 0.0
    %8230 = vmatprep.subr.mxu0 0.0
    %8231 = vmatpush1.msra.mxu0 0.0
    %8232 = vmatprep.subr.mxu0 0.0
    %8233 = vmatpush1.msra.mxu0 0.0
    %8234 = vmatprep.subr.mxu0 0.0
    %8235 = vmatpush1.msra.mxu0 0.0
    %8236 = vmatprep.subr.mxu0 0.0
    %8237 = vmatpush1.msra.mxu0 0.0
    %8238 = vmatprep.subr.mxu0 0.0
    %8239 = vmatpush1.msra.mxu0 0.0
    %8240 = vmatprep.subr.mxu0 0.0
    %8241 = vmatpush1.msra.mxu0 0.0
    %8242 = vmatprep.subr.mxu0 0.0
    %8243 = vmatpush1.msra.mxu0 0.0
    %8244 = vmatprep.subr.mxu0 0.0
    %8245 = vmatpush1.msra.mxu0 0.0
    %8246 = vmatprep.subr.mxu0 0.0
    %8247 = vmatpush1.msra.mxu0 0.0
    %8248 = vmatprep.subr.mxu0 0.0
    %8249 = vmatpush1.msra.mxu0 0.0
    %8250 = vmatprep.subr.mxu0 0.0
    %8251 = vmatpush1.msra.mxu0 0.0
    %8252 = vmatprep.subr.mxu0 0.0
    %8253 = vmatpush1.msra.mxu0 0.0
    %8254 = vmatprep.subr.mxu0 0.0
    %8255 = vmatpush1.msra.mxu0 0.0
    %8256 = vmatprep.subr.mxu0 0.0
    %8257 = vmatpush1.msra.mxu0 0.0
    %8258 = vmatprep.subr.mxu0 0.0
    %8259 = vmatpush1.msra.mxu0 0.0
    %8260 = vmatprep.subr.mxu0 0.0
    %8261 = vmatpush1.msra.mxu0 0.0
    %8262 = vmatprep.subr.mxu0 0.0
    %8263 = vmatpush1.msra.mxu0 0.0
    %8264 = vmatprep.mubr.f32.mxu0 0.0
    %8265 = vmatmul.mubr.f32.gmra.mrb[0].mxu0 %v7684
    %v8266 = vpop.f32.mrb[0].mxu0
    %v8267 = vadd.f32 0.0, %v8266
    %v8268 = vpop.f32.mrb[0].mxu0
    %8269 = vdwg.mxu0
    %v8271 = vsel %vm6034, %v7659, 0
    %8273 = vmatprep.subr.mxu0 0.0
    %8274 = vmatpush1.msra.mxu0 %v7658
    %8275 = vmatprep.subr.mxu0 0.0
    %8276 = vmatpush1.msra.mxu0 %v8271
    %8277 = vmatprep.subr.mxu0 0.0
    %8278 = vmatpush1.msra.mxu0 0.0
    %8279 = vmatprep.subr.mxu0 0.0
    %8280 = vmatpush1.msra.mxu0 0.0
    %8281 = vmatprep.subr.mxu0 0.0
    %8282 = vmatpush1.msra.mxu0 0.0
    %8283 = vmatprep.subr.mxu0 0.0
    %8284 = vmatpush1.msra.mxu0 0.0
    %8285 = vmatprep.subr.mxu0 0.0
    %8286 = vmatpush1.msra.mxu0 0.0
    %8287 = vmatprep.subr.mxu0 0.0
    %8288 = vmatpush1.msra.mxu0 0.0
    %8289 = vmatprep.subr.mxu0 0.0
    %8290 = vmatpush1.msra.mxu0 0.0
    %8291 = vmatprep.subr.mxu0 0.0
    %8292 = vmatpush1.msra.mxu0 0.0
    %8293 = vmatprep.subr.mxu0 0.0
    %8294 = vmatpush1.msra.mxu0 0.0
    %8295 = vmatprep.subr.mxu0 0.0
    %8296 = vmatpush1.msra.mxu0 0.0
    %8297 = vmatprep.subr.mxu0 0.0
    %8298 = vmatpush1.msra.mxu0 0.0
    %8299 = vmatprep.subr.mxu0 0.0
    %8300 = vmatpush1.msra.mxu0 0.0
    %8301 = vmatprep.subr.mxu0 0.0
    %8302 = vmatpush1.msra.mxu0 0.0
    %8303 = vmatprep.subr.mxu0 0.0
    %8304 = vmatpush1.msra.mxu0 0.0
    %8305 = vmatprep.subr.mxu0 0.0
    %8306 = vmatpush1.msra.mxu0 0.0
    %8307 = vmatprep.subr.mxu0 0.0
    %8308 = vmatpush1.msra.mxu0 0.0
    %8309 = vmatprep.subr.mxu0 0.0
    %8310 = vmatpush1.msra.mxu0 0.0
    %8311 = vmatprep.subr.mxu0 0.0
    %8312 = vmatpush1.msra.mxu0 0.0
    %8313 = vmatprep.subr.mxu0 0.0
    %8314 = vmatpush1.msra.mxu0 0.0
    %8315 = vmatprep.subr.mxu0 0.0
    %8316 = vmatpush1.msra.mxu0 0.0
    %8317 = vmatprep.subr.mxu0 0.0
    %8318 = vmatpush1.msra.mxu0 0.0
    %8319 = vmatprep.subr.mxu0 0.0
    %8320 = vmatpush1.msra.mxu0 0.0
    %8321 = vmatprep.subr.mxu0 0.0
    %8322 = vmatpush1.msra.mxu0 0.0
    %8323 = vmatprep.subr.mxu0 0.0
    %8324 = vmatpush1.msra.mxu0 0.0
    %8325 = vmatprep.subr.mxu0 0.0
    %8326 = vmatpush1.msra.mxu0 0.0
    %8327 = vmatprep.subr.mxu0 0.0
    %8328 = vmatpush1.msra.mxu0 0.0
    %8329 = vmatprep.subr.mxu0 0.0
    %8330 = vmatpush1.msra.mxu0 0.0
    %8331 = vmatprep.subr.mxu0 0.0
    %8332 = vmatpush1.msra.mxu0 0.0
    %8333 = vmatprep.subr.mxu0 0.0
    %8334 = vmatpush1.msra.mxu0 0.0
    %8335 = vmatprep.subr.mxu0 0.0
    %8336 = vmatpush1.msra.mxu0 0.0
    %8337 = vmatprep.mubr.f32.mxu0 0.0
    %8338 = vmatmul.mubr.f32.gmra.mrb[0].mxu0 %v7684
    %v8339 = vpop.f32.mrb[0].mxu0
    %v8340 = vadd.f32 0.0, %v8339
    %v8341 = vpop.f32.mrb[0].mxu0
    %8342 = vdwg.mxu0
    %v8344 = vsel %vm6034, %v7661, 0
    %8346 = vmatprep.subr.mxu0 0.0
    %8347 = vmatpush1.msra.mxu0 %v7660
    %8348 = vmatprep.subr.mxu0 0.0
    %8349 = vmatpush1.msra.mxu0 %v8344
    %8350 = vmatprep.subr.mxu0 0.0
    %8351 = vmatpush1.msra.mxu0 0.0
    %8352 = vmatprep.subr.mxu0 0.0
    %8353 = vmatpush1.msra.mxu0 0.0
    %8354 = vmatprep.subr.mxu0 0.0
    %8355 = vmatpush1.msra.mxu0 0.0
    %8356 = vmatprep.subr.mxu0 0.0
    %8357 = vmatpush1.msra.mxu0 0.0
    %8358 = vmatprep.subr.mxu0 0.0
    %8359 = vmatpush1.msra.mxu0 0.0
    %8360 = vmatprep.subr.mxu0 0.0
    %8361 = vmatpush1.msra.mxu0 0.0
    %8362 = vmatprep.subr.mxu0 0.0
    %8363 = vmatpush1.msra.mxu0 0.0
    %8364 = vmatprep.subr.mxu0 0.0
    %8365 = vmatpush1.msra.mxu0 0.0
    %8366 = vmatprep.subr.mxu0 0.0
    %8367 = vmatpush1.msra.mxu0 0.0
    %8368 = vmatprep.subr.mxu0 0.0
    %8369 = vmatpush1.msra.mxu0 0.0
    %8370 = vmatprep.subr.mxu0 0.0
    %8371 = vmatpush1.msra.mxu0 0.0
    %8372 = vmatprep.subr.mxu0 0.0
    %8373 = vmatpush1.msra.mxu0 0.0
    %8374 = vmatprep.subr.mxu0 0.0
    %8375 = vmatpush1.msra.mxu0 0.0
    %8376 = vmatprep.subr.mxu0 0.0
    %8377 = vmatpush1.msra.mxu0 0.0
    %8378 = vmatprep.subr.mxu0 0.0
    %8379 = vmatpush1.msra.mxu0 0.0
    %8380 = vmatprep.subr.mxu0 0.0
    %8381 = vmatpush1.msra.mxu0 0.0
    %8382 = vmatprep.subr.mxu0 0.0
    %8383 = vmatpush1.msra.mxu0 0.0
    %8384 = vmatprep.subr.mxu0 0.0
    %8385 = vmatpush1.msra.mxu0 0.0
    %8386 = vmatprep.subr.mxu0 0.0
    %8387 = vmatpush1.msra.mxu0 0.0
    %8388 = vmatprep.subr.mxu0 0.0
    %8389 = vmatpush1.msra.mxu0 0.0
    %8390 = vmatprep.subr.mxu0 0.0
    %8391 = vmatpush1.msra.mxu0 0.0
    %8392 = vmatprep.subr.mxu0 0.0
    %8393 = vmatpush1.msra.mxu0 0.0
    %8394 = vmatprep.subr.mxu0 0.0
    %8395 = vmatpush1.msra.mxu0 0.0
    %8396 = vmatprep.subr.mxu0 0.0
    %8397 = vmatpush1.msra.mxu0 0.0
    %8398 = vmatprep.subr.mxu0 0.0
    %8399 = vmatpush1.msra.mxu0 0.0
    %8400 = vmatprep.subr.mxu0 0.0
    %8401 = vmatpush1.msra.mxu0 0.0
    %8402 = vmatprep.subr.mxu0 0.0
    %8403 = vmatpush1.msra.mxu0 0.0
    %8404 = vmatprep.subr.mxu0 0.0
    %8405 = vmatpush1.msra.mxu0 0.0
    %8406 = vmatprep.subr.mxu0 0.0
    %8407 = vmatpush1.msra.mxu0 0.0
    %8408 = vmatprep.subr.mxu0 0.0
    %8409 = vmatpush1.msra.mxu0 0.0
    %8410 = vmatprep.mubr.f32.mxu0 0.0
    %8411 = vmatmul.mubr.f32.gmra.mrb[0].mxu0 %v7684
    %v8412 = vpop.f32.mrb[0].mxu0
    %v8413 = vadd.f32 0.0, %v8412
    %v8414 = vpop.f32.mrb[0].mxu0
    %8415 = vdwg.mxu0
    %v8417 = vsel %vm6034, %v7663, 0
    %8419 = vmatprep.subr.mxu0 0.0
    %8420 = vmatpush1.msra.mxu0 %v7662
    %8421 = vmatprep.subr.mxu0 0.0
    %8422 = vmatpush1.msra.mxu0 %v8417
    %8423 = vmatprep.subr.mxu0 0.0
    %8424 = vmatpush1.msra.mxu0 0.0
    %8425 = vmatprep.subr.mxu0 0.0
    %8426 = vmatpush1.msra.mxu0 0.0
    %8427 = vmatprep.subr.mxu0 0.0
    %8428 = vmatpush1.msra.mxu0 0.0
    %8429 = vmatprep.subr.mxu0 0.0
    %8430 = vmatpush1.msra.mxu0 0.0
    %8431 = vmatprep.subr.mxu0 0.0
    %8432 = vmatpush1.msra.mxu0 0.0
    %8433 = vmatprep.subr.mxu0 0.0
    %8434 = vmatpush1.msra.mxu0 0.0
    %8435 = vmatprep.subr.mxu0 0.0
    %8436 = vmatpush1.msra.mxu0 0.0
    %8437 = vmatprep.subr.mxu0 0.0
    %8438 = vmatpush1.msra.mxu0 0.0
    %8439 = vmatprep.subr.mxu0 0.0
    %8440 = vmatpush1.msra.mxu0 0.0
    %8441 = vmatprep.subr.mxu0 0.0
    %8442 = vmatpush1.msra.mxu0 0.0
    %8443 = vmatprep.subr.mxu0 0.0
    %8444 = vmatpush1.msra.mxu0 0.0
    %8445 = vmatprep.subr.mxu0 0.0
    %8446 = vmatpush1.msra.mxu0 0.0
    %8447 = vmatprep.subr.mxu0 0.0
    %8448 = vmatpush1.msra.mxu0 0.0
    %8449 = vmatprep.subr.mxu0 0.0
    %8450 = vmatpush1.msra.mxu0 0.0
    %8451 = vmatprep.subr.mxu0 0.0
    %8452 = vmatpush1.msra.mxu0 0.0
    %8453 = vmatprep.subr.mxu0 0.0
    %8454 = vmatpush1.msra.mxu0 0.0
    %8455 = vmatprep.subr.mxu0 0.0
    %8456 = vmatpush1.msra.mxu0 0.0
    %8457 = vmatprep.subr.mxu0 0.0
    %8458 = vmatpush1.msra.mxu0 0.0
    %8459 = vmatprep.subr.mxu0 0.0
    %8460 = vmatpush1.msra.mxu0 0.0
    %8461 = vmatprep.subr.mxu0 0.0
    %8462 = vmatpush1.msra.mxu0 0.0
    %8463 = vmatprep.subr.mxu0 0.0
    %8464 = vmatpush1.msra.mxu0 0.0
    %8465 = vmatprep.subr.mxu0 0.0
    %8466 = vmatpush1.msra.mxu0 0.0
    %8467 = vmatprep.subr.mxu0 0.0
    %8468 = vmatpush1.msra.mxu0 0.0
    %8469 = vmatprep.subr.mxu0 0.0
    %8470 = vmatpush1.msra.mxu0 0.0
    %8471 = vmatprep.subr.mxu0 0.0
    %8472 = vmatpush1.msra.mxu0 0.0
    %8473 = vmatprep.subr.mxu0 0.0
    %8474 = vmatpush1.msra.mxu0 0.0
    %8475 = vmatprep.subr.mxu0 0.0
    %8476 = vmatpush1.msra.mxu0 0.0
    %8477 = vmatprep.subr.mxu0 0.0
    %8478 = vmatpush1.msra.mxu0 0.0
    %8479 = vmatprep.subr.mxu0 0.0
    %8480 = vmatpush1.msra.mxu0 0.0
    %8481 = vmatprep.subr.mxu0 0.0
    %8482 = vmatpush1.msra.mxu0 0.0
    %8483 = vmatprep.mubr.f32.mxu0 0.0
    %8484 = vmatmul.mubr.f32.gmra.mrb[0].mxu0 %v7684
    %v8485 = vpop.f32.mrb[0].mxu0
    %v8486 = vadd.f32 0.0, %v8485
    %v8487 = vpop.f32.mrb[0].mxu0
    %8488 = vdwg.mxu0
    %v8490 = vsel %vm6034, %v7665, 0
    %8492 = vmatprep.subr.mxu0 0.0
    %8493 = vmatpush1.msra.mxu0 %v7664
    %8494 = vmatprep.subr.mxu0 0.0
    %8495 = vmatpush1.msra.mxu0 %v8490
    %8496 = vmatprep.subr.mxu0 0.0
    %8497 = vmatpush1.msra.mxu0 0.0
    %8498 = vmatprep.subr.mxu0 0.0
    %8499 = vmatpush1.msra.mxu0 0.0
    %8500 = vmatprep.subr.mxu0 0.0
    %8501 = vmatpush1.msra.mxu0 0.0
    %8502 = vmatprep.subr.mxu0 0.0
    %8503 = vmatpush1.msra.mxu0 0.0
    %8504 = vmatprep.subr.mxu0 0.0
    %8505 = vmatpush1.msra.mxu0 0.0
    %8506 = vmatprep.subr.mxu0 0.0
    %8507 = vmatpush1.msra.mxu0 0.0
    %8508 = vmatprep.subr.mxu0 0.0
    %8509 = vmatpush1.msra.mxu0 0.0
    %8510 = vmatprep.subr.mxu0 0.0
    %8511 = vmatpush1.msra.mxu0 0.0
    %8512 = vmatprep.subr.mxu0 0.0
    %8513 = vmatpush1.msra.mxu0 0.0
    %8514 = vmatprep.subr.mxu0 0.0
    %8515 = vmatpush1.msra.mxu0 0.0
    %8516 = vmatprep.subr.mxu0 0.0
    %8517 = vmatpush1.msra.mxu0 0.0
    %8518 = vmatprep.subr.mxu0 0.0
    %8519 = vmatpush1.msra.mxu0 0.0
    %8520 = vmatprep.subr.mxu0 0.0
    %8521 = vmatpush1.msra.mxu0 0.0
    %8522 = vmatprep.subr.mxu0 0.0
    %8523 = vmatpush1.msra.mxu0 0.0
    %8524 = vmatprep.subr.mxu0 0.0
    %8525 = vmatpush1.msra.mxu0 0.0
    %8526 = vmatprep.subr.mxu0 0.0
    %8527 = vmatpush1.msra.mxu0 0.0
    %8528 = vmatprep.subr.mxu0 0.0
    %8529 = vmatpush1.msra.mxu0 0.0
    %8530 = vmatprep.subr.mxu0 0.0
    %8531 = vmatpush1.msra.mxu0 0.0
    %8532 = vmatprep.subr.mxu0 0.0
    %8533 = vmatpush1.msra.mxu0 0.0
    %8534 = vmatprep.subr.mxu0 0.0
    %8535 = vmatpush1.msra.mxu0 0.0
    %8536 = vmatprep.subr.mxu0 0.0
    %8537 = vmatpush1.msra.mxu0 0.0
    %8538 = vmatprep.subr.mxu0 0.0
    %8539 = vmatpush1.msra.mxu0 0.0
    %8540 = vmatprep.subr.mxu0 0.0
    %8541 = vmatpush1.msra.mxu0 0.0
    %8542 = vmatprep.subr.mxu0 0.0
    %8543 = vmatpush1.msra.mxu0 0.0
    %8544 = vmatprep.subr.mxu0 0.0
    %8545 = vmatpush1.msra.mxu0 0.0
    %8546 = vmatprep.subr.mxu0 0.0
    %8547 = vmatpush1.msra.mxu0 0.0
    %8548 = vmatprep.subr.mxu0 0.0
    %8549 = vmatpush1.msra.mxu0 0.0
    %8550 = vmatprep.subr.mxu0 0.0
    %8551 = vmatpush1.msra.mxu0 0.0
    %8552 = vmatprep.subr.mxu0 0.0
    %8553 = vmatpush1.msra.mxu0 0.0
    %8554 = vmatprep.subr.mxu0 0.0
    %8555 = vmatpush1.msra.mxu0 0.0
    %8556 = vmatprep.mubr.f32.mxu0 0.0
    %8557 = vmatmul.mubr.f32.gmra.mrb[0].mxu0 %v7684
    %v8558 = vpop.f32.mrb[0].mxu0
    %v8559 = vadd.f32 0.0, %v8558
    %v8560 = vpop.f32.mrb[0].mxu0
    %8561 = vdwg.mxu0
    %v8563 = vsel %vm6034, %v7667, 0
    %8565 = vmatprep.subr.mxu0 0.0
    %8566 = vmatpush1.msra.mxu0 %v7666
    %8567 = vmatprep.subr.mxu0 0.0
    %8568 = vmatpush1.msra.mxu0 %v8563
    %8569 = vmatprep.subr.mxu0 0.0
    %8570 = vmatpush1.msra.mxu0 0.0
    %8571 = vmatprep.subr.mxu0 0.0
    %8572 = vmatpush1.msra.mxu0 0.0
    %8573 = vmatprep.subr.mxu0 0.0
    %8574 = vmatpush1.msra.mxu0 0.0
    %8575 = vmatprep.subr.mxu0 0.0
    %8576 = vmatpush1.msra.mxu0 0.0
    %8577 = vmatprep.subr.mxu0 0.0
    %8578 = vmatpush1.msra.mxu0 0.0
    %8579 = vmatprep.subr.mxu0 0.0
    %8580 = vmatpush1.msra.mxu0 0.0
    %8581 = vmatprep.subr.mxu0 0.0
    %8582 = vmatpush1.msra.mxu0 0.0
    %8583 = vmatprep.subr.mxu0 0.0
    %8584 = vmatpush1.msra.mxu0 0.0
    %8585 = vmatprep.subr.mxu0 0.0
    %8586 = vmatpush1.msra.mxu0 0.0
    %8587 = vmatprep.subr.mxu0 0.0
    %8588 = vmatpush1.msra.mxu0 0.0
    %8589 = vmatprep.subr.mxu0 0.0
    %8590 = vmatpush1.msra.mxu0 0.0
    %8591 = vmatprep.subr.mxu0 0.0
    %8592 = vmatpush1.msra.mxu0 0.0
    %8593 = vmatprep.subr.mxu0 0.0
    %8594 = vmatpush1.msra.mxu0 0.0
    %8595 = vmatprep.subr.mxu0 0.0
    %8596 = vmatpush1.msra.mxu0 0.0
    %8597 = vmatprep.subr.mxu0 0.0
    %8598 = vmatpush1.msra.mxu0 0.0
    %8599 = vmatprep.subr.mxu0 0.0
    %8600 = vmatpush1.msra.mxu0 0.0
    %8601 = vmatprep.subr.mxu0 0.0
    %8602 = vmatpush1.msra.mxu0 0.0
    %8603 = vmatprep.subr.mxu0 0.0
    %8604 = vmatpush1.msra.mxu0 0.0
    %8605 = vmatprep.subr.mxu0 0.0
    %8606 = vmatpush1.msra.mxu0 0.0
    %8607 = vmatprep.subr.mxu0 0.0
    %8608 = vmatpush1.msra.mxu0 0.0
    %8609 = vmatprep.subr.mxu0 0.0
    %8610 = vmatpush1.msra.mxu0 0.0
    %8611 = vmatprep.subr.mxu0 0.0
    %8612 = vmatpush1.msra.mxu0 0.0
    %8613 = vmatprep.subr.mxu0 0.0
    %8614 = vmatpush1.msra.mxu0 0.0
    %8615 = vmatprep.subr.mxu0 0.0
    %8616 = vmatpush1.msra.mxu0 0.0
    %8617 = vmatprep.subr.mxu0 0.0
    %8618 = vmatpush1.msra.mxu0 0.0
    %8619 = vmatprep.subr.mxu0 0.0
    %8620 = vmatpush1.msra.mxu0 0.0
    %8621 = vmatprep.subr.mxu0 0.0
    %8622 = vmatpush1.msra.mxu0 0.0
    %8623 = vmatprep.subr.mxu0 0.0
    %8624 = vmatpush1.msra.mxu0 0.0
    %8625 = vmatprep.subr.mxu0 0.0
    %8626 = vmatpush1.msra.mxu0 0.0
    %8627 = vmatprep.subr.mxu0 0.0
    %8628 = vmatpush1.msra.mxu0 0.0
    %8629 = vmatprep.mubr.f32.mxu0 0.0
    %8630 = vmatmul.mubr.f32.gmra.mrb[0].mxu0 %v7684
    %v8631 = vpop.f32.mrb[0].mxu0
    %v8632 = vadd.f32 0.0, %v8631
    %v8633 = vpop.f32.mrb[0].mxu0
    %8634 = vdwg.mxu0
    %v8636 = vsel %vm6034, %v7669, 0
    %8638 = vmatprep.subr.mxu0 0.0
    %8639 = vmatpush1.msra.mxu0 %v7668
    %8640 = vmatprep.subr.mxu0 0.0
    %8641 = vmatpush1.msra.mxu0 %v8636
    %8642 = vmatprep.subr.mxu0 0.0
    %8643 = vmatpush1.msra.mxu0 0.0
    %8644 = vmatprep.subr.mxu0 0.0
    %8645 = vmatpush1.msra.mxu0 0.0
    %8646 = vmatprep.subr.mxu0 0.0
    %8647 = vmatpush1.msra.mxu0 0.0
    %8648 = vmatprep.subr.mxu0 0.0
    %8649 = vmatpush1.msra.mxu0 0.0
    %8650 = vmatprep.subr.mxu0 0.0
    %8651 = vmatpush1.msra.mxu0 0.0
    %8652 = vmatprep.subr.mxu0 0.0
    %8653 = vmatpush1.msra.mxu0 0.0
    %8654 = vmatprep.subr.mxu0 0.0
    %8655 = vmatpush1.msra.mxu0 0.0
    %8656 = vmatprep.subr.mxu0 0.0
    %8657 = vmatpush1.msra.mxu0 0.0
    %8658 = vmatprep.subr.mxu0 0.0
    %8659 = vmatpush1.msra.mxu0 0.0
    %8660 = vmatprep.subr.mxu0 0.0
    %8661 = vmatpush1.msra.mxu0 0.0
    %8662 = vmatprep.subr.mxu0 0.0
    %8663 = vmatpush1.msra.mxu0 0.0
    %8664 = vmatprep.subr.mxu0 0.0
    %8665 = vmatpush1.msra.mxu0 0.0
    %8666 = vmatprep.subr.mxu0 0.0
    %8667 = vmatpush1.msra.mxu0 0.0
    %8668 = vmatprep.subr.mxu0 0.0
    %8669 = vmatpush1.msra.mxu0 0.0
    %8670 = vmatprep.subr.mxu0 0.0
    %8671 = vmatpush1.msra.mxu0 0.0
    %8672 = vmatprep.subr.mxu0 0.0
    %8673 = vmatpush1.msra.mxu0 0.0
    %8674 = vmatprep.subr.mxu0 0.0
    %8675 = vmatpush1.msra.mxu0 0.0
    %8676 = vmatprep.subr.mxu0 0.0
    %8677 = vmatpush1.msra.mxu0 0.0
    %8678 = vmatprep.subr.mxu0 0.0
    %8679 = vmatpush1.msra.mxu0 0.0
    %8680 = vmatprep.subr.mxu0 0.0
    %8681 = vmatpush1.msra.mxu0 0.0
    %8682 = vmatprep.subr.mxu0 0.0
    %8683 = vmatpush1.msra.mxu0 0.0
    %8684 = vmatprep.subr.mxu0 0.0
    %8685 = vmatpush1.msra.mxu0 0.0
    %8686 = vmatprep.subr.mxu0 0.0
    %8687 = vmatpush1.msra.mxu0 0.0
    %8688 = vmatprep.subr.mxu0 0.0
    %8689 = vmatpush1.msra.mxu0 0.0
    %8690 = vmatprep.subr.mxu0 0.0
    %8691 = vmatpush1.msra.mxu0 0.0
    %8692 = vmatprep.subr.mxu0 0.0
    %8693 = vmatpush1.msra.mxu0 0.0
    %8694 = vmatprep.subr.mxu0 0.0
    %8695 = vmatpush1.msra.mxu0 0.0
    %8696 = vmatprep.subr.mxu0 0.0
    %8697 = vmatpush1.msra.mxu0 0.0
    %8698 = vmatprep.subr.mxu0 0.0
    %8699 = vmatpush1.msra.mxu0 0.0
    %8700 = vmatprep.subr.mxu0 0.0
    %8701 = vmatpush1.msra.mxu0 0.0
    %8702 = vmatprep.mubr.f32.mxu0 0.0
    %8703 = vmatmul.mubr.f32.gmra.mrb[0].mxu0 %v7684
    %v8704 = vpop.f32.mrb[0].mxu0
    %v8705 = vadd.f32 0.0, %v8704
    %v8706 = vpop.f32.mrb[0].mxu0
    %8707 = vdwg.mxu0
    %v8709 = vsel %vm7682, %v7681, 0
    %8711 = vmatprep.subr.mxu0 0.0
    %8712 = vmatpush1.msra.mxu0 %v7642
    %8713 = vmatprep.subr.mxu0 0.0
    %8714 = vmatpush1.msra.mxu0 %v7687
    %8715 = vmatprep.subr.mxu0 0.0
    %8716 = vmatpush1.msra.mxu0 0.0
    %8717 = vmatprep.subr.mxu0 0.0
    %8718 = vmatpush1.msra.mxu0 0.0
    %8719 = vmatprep.subr.mxu0 0.0
    %8720 = vmatpush1.msra.mxu0 0.0
    %8721 = vmatprep.subr.mxu0 0.0
    %8722 = vmatpush1.msra.mxu0 0.0
    %8723 = vmatprep.subr.mxu0 0.0
    %8724 = vmatpush1.msra.mxu0 0.0
    %8725 = vmatprep.subr.mxu0 0.0
    %8726 = vmatpush1.msra.mxu0 0.0
    %8727 = vmatprep.subr.mxu0 0.0
    %8728 = vmatpush1.msra.mxu0 0.0
    %8729 = vmatprep.subr.mxu0 0.0
    %8730 = vmatpush1.msra.mxu0 0.0
    %8731 = vmatprep.subr.mxu0 0.0
    %8732 = vmatpush1.msra.mxu0 0.0
    %8733 = vmatprep.subr.mxu0 0.0
    %8734 = vmatpush1.msra.mxu0 0.0
    %8735 = vmatprep.subr.mxu0 0.0
    %8736 = vmatpush1.msra.mxu0 0.0
    %8737 = vmatprep.subr.mxu0 0.0
    %8738 = vmatpush1.msra.mxu0 0.0
    %8739 = vmatprep.subr.mxu0 0.0
    %8740 = vmatpush1.msra.mxu0 0.0
    %8741 = vmatprep.subr.mxu0 0.0
    %8742 = vmatpush1.msra.mxu0 0.0
    %8743 = vmatprep.subr.mxu0 0.0
    %8744 = vmatpush1.msra.mxu0 0.0
    %8745 = vmatprep.subr.mxu0 0.0
    %8746 = vmatpush1.msra.mxu0 0.0
    %8747 = vmatprep.subr.mxu0 0.0
    %8748 = vmatpush1.msra.mxu0 0.0
    %8749 = vmatprep.subr.mxu0 0.0
    %8750 = vmatpush1.msra.mxu0 0.0
    %8751 = vmatprep.subr.mxu0 0.0
    %8752 = vmatpush1.msra.mxu0 0.0
    %8753 = vmatprep.subr.mxu0 0.0
    %8754 = vmatpush1.msra.mxu0 0.0
    %8755 = vmatprep.subr.mxu0 0.0
    %8756 = vmatpush1.msra.mxu0 0.0
    %8757 = vmatprep.subr.mxu0 0.0
    %8758 = vmatpush1.msra.mxu0 0.0
    %8759 = vmatprep.subr.mxu0 0.0
    %8760 = vmatpush1.msra.mxu0 0.0
    %8761 = vmatprep.subr.mxu0 0.0
    %8762 = vmatpush1.msra.mxu0 0.0
    %8763 = vmatprep.subr.mxu0 0.0
    %8764 = vmatpush1.msra.mxu0 0.0
    %8765 = vmatprep.subr.mxu0 0.0
    %8766 = vmatpush1.msra.mxu0 0.0
    %8767 = vmatprep.subr.mxu0 0.0
    %8768 = vmatpush1.msra.mxu0 0.0
    %8769 = vmatprep.subr.mxu0 0.0
    %8770 = vmatpush1.msra.mxu0 0.0
    %8771 = vmatprep.subr.mxu0 0.0
    %8772 = vmatpush1.msra.mxu0 0.0
    %8773 = vmatprep.subr.mxu0 0.0
    %8774 = vmatpush1.msra.mxu0 0.0
    %8775 = vmatprep.mubr.f32.mxu0 0.0
    %8776 = vmatmul.mubr.f32.gmra.mrb[0].mxu0 %v8709
    %v8777 = vpop.f32.mrb[0].mxu0
    %v8778 = vadd.f32 0.0, %v8777
    %v8779 = vpop.f32.mrb[0].mxu0
    %8780 = vdwg.mxu0
    %8781 = vmatprep.subr.mxu0 0.0
    %8782 = vmatpush1.msra.mxu0 %v7644
    %8783 = vmatprep.subr.mxu0 0.0
    %8784 = vmatpush1.msra.mxu0 %v7760
    %8785 = vmatprep.subr.mxu0 0.0
    %8786 = vmatpush1.msra.mxu0 0.0
    %8787 = vmatprep.subr.mxu0 0.0
    %8788 = vmatpush1.msra.mxu0 0.0
    %8789 = vmatprep.subr.mxu0 0.0
    %8790 = vmatpush1.msra.mxu0 0.0
    %8791 = vmatprep.subr.mxu0 0.0
    %8792 = vmatpush1.msra.mxu0 0.0
    %8793 = vmatprep.subr.mxu0 0.0
    %8794 = vmatpush1.msra.mxu0 0.0
    %8795 = vmatprep.subr.mxu0 0.0
    %8796 = vmatpush1.msra.mxu0 0.0
    %8797 = vmatprep.subr.mxu0 0.0
    %8798 = vmatpush1.msra.mxu0 0.0
    %8799 = vmatprep.subr.mxu0 0.0
    %8800 = vmatpush1.msra.mxu0 0.0
    %8801 = vmatprep.subr.mxu0 0.0
    %8802 = vmatpush1.msra.mxu0 0.0
    %8803 = vmatprep.subr.mxu0 0.0
    %8804 = vmatpush1.msra.mxu0 0.0
    %8805 = vmatprep.subr.mxu0 0.0
    %8806 = vmatpush1.msra.mxu0 0.0
    %8807 = vmatprep.subr.mxu0 0.0
    %8808 = vmatpush1.msra.mxu0 0.0
    %8809 = vmatprep.subr.mxu0 0.0
    %8810 = vmatpush1.msra.mxu0 0.0
    %8811 = vmatprep.subr.mxu0 0.0
    %8812 = vmatpush1.msra.mxu0 0.0
    %8813 = vmatprep.subr.mxu0 0.0
    %8814 = vmatpush1.msra.mxu0 0.0
    %8815 = vmatprep.subr.mxu0 0.0
    %8816 = vmatpush1.msra.mxu0 0.0
    %8817 = vmatprep.subr.mxu0 0.0
    %8818 = vmatpush1.msra.mxu0 0.0
    %8819 = vmatprep.subr.mxu0 0.0
    %8820 = vmatpush1.msra.mxu0 0.0
    %8821 = vmatprep.subr.mxu0 0.0
    %8822 = vmatpush1.msra.mxu0 0.0
    %8823 = vmatprep.subr.mxu0 0.0
    %8824 = vmatpush1.msra.mxu0 0.0
    %8825 = vmatprep.subr.mxu0 0.0
    %8826 = vmatpush1.msra.mxu0 0.0
    %8827 = vmatprep.subr.mxu0 0.0
    %8828 = vmatpush1.msra.mxu0 0.0
    %8829 = vmatprep.subr.mxu0 0.0
    %8830 = vmatpush1.msra.mxu0 0.0
    %8831 = vmatprep.subr.mxu0 0.0
    %8832 = vmatpush1.msra.mxu0 0.0
    %8833 = vmatprep.subr.mxu0 0.0
    %8834 = vmatpush1.msra.mxu0 0.0
    %8835 = vmatprep.subr.mxu0 0.0
    %8836 = vmatpush1.msra.mxu0 0.0
    %8837 = vmatprep.subr.mxu0 0.0
    %8838 = vmatpush1.msra.mxu0 0.0
    %8839 = vmatprep.subr.mxu0 0.0
    %8840 = vmatpush1.msra.mxu0 0.0
    %8841 = vmatprep.subr.mxu0 0.0
    %8842 = vmatpush1.msra.mxu0 0.0
    %8843 = vmatprep.subr.mxu0 0.0
    %8844 = vmatpush1.msra.mxu0 0.0
    %8845 = vmatprep.mubr.f32.mxu0 0.0
    %8846 = vmatmul.mubr.f32.gmra.mrb[0].mxu0 %v8709
    %v8847 = vpop.f32.mrb[0].mxu0
    %v8848 = vadd.f32 0.0, %v8847
    %v8849 = vpop.f32.mrb[0].mxu0
    %8850 = vdwg.mxu0
    %8851 = vmatprep.subr.mxu0 0.0
    %8852 = vmatpush1.msra.mxu0 %v7646
    %8853 = vmatprep.subr.mxu0 0.0
    %8854 = vmatpush1.msra.mxu0 %v7833
    %8855 = vmatprep.subr.mxu0 0.0
    %8856 = vmatpush1.msra.mxu0 0.0
    %8857 = vmatprep.subr.mxu0 0.0
    %8858 = vmatpush1.msra.mxu0 0.0
    %8859 = vmatprep.subr.mxu0 0.0
    %8860 = vmatpush1.msra.mxu0 0.0
    %8861 = vmatprep.subr.mxu0 0.0
    %8862 = vmatpush1.msra.mxu0 0.0
    %8863 = vmatprep.subr.mxu0 0.0
    %8864 = vmatpush1.msra.mxu0 0.0
    %8865 = vmatprep.subr.mxu0 0.0
    %8866 = vmatpush1.msra.mxu0 0.0
    %8867 = vmatprep.subr.mxu0 0.0
    %8868 = vmatpush1.msra.mxu0 0.0
    %8869 = vmatprep.subr.mxu0 0.0
    %8870 = vmatpush1.msra.mxu0 0.0
    %8871 = vmatprep.subr.mxu0 0.0
    %8872 = vmatpush1.msra.mxu0 0.0
    %8873 = vmatprep.subr.mxu0 0.0
    %8874 = vmatpush1.msra.mxu0 0.0
    %8875 = vmatprep.subr.mxu0 0.0
    %8876 = vmatpush1.msra.mxu0 0.0
    %8877 = vmatprep.subr.mxu0 0.0
    %8878 = vmatpush1.msra.mxu0 0.0
    %8879 = vmatprep.subr.mxu0 0.0
    %8880 = vmatpush1.msra.mxu0 0.0
    %8881 = vmatprep.subr.mxu0 0.0
    %8882 = vmatpush1.msra.mxu0 0.0
    %8883 = vmatprep.subr.mxu0 0.0
    %8884 = vmatpush1.msra.mxu0 0.0
    %8885 = vmatprep.subr.mxu0 0.0
    %8886 = vmatpush1.msra.mxu0 0.0
    %8887 = vmatprep.subr.mxu0 0.0
    %8888 = vmatpush1.msra.mxu0 0.0
    %8889 = vmatprep.subr.mxu0 0.0
    %8890 = vmatpush1.msra.mxu0 0.0
    %8891 = vmatprep.subr.mxu0 0.0
    %8892 = vmatpush1.msra.mxu0 0.0
    %8893 = vmatprep.subr.mxu0 0.0
    %8894 = vmatpush1.msra.mxu0 0.0
    %8895 = vmatprep.subr.mxu0 0.0
    %8896 = vmatpush1.msra.mxu0 0.0
    %8897 = vmatprep.subr.mxu0 0.0
    %8898 = vmatpush1.msra.mxu0 0.0
    %8899 = vmatprep.subr.mxu0 0.0
    %8900 = vmatpush1.msra.mxu0 0.0
    %8901 = vmatprep.subr.mxu0 0.0
    %8902 = vmatpush1.msra.mxu0 0.0
    %8903 = vmatprep.subr.mxu0 0.0
    %8904 = vmatpush1.msra.mxu0 0.0
    %8905 = vmatprep.subr.mxu0 0.0
    %8906 = vmatpush1.msra.mxu0 0.0
    %8907 = vmatprep.subr.mxu0 0.0
    %8908 = vmatpush1.msra.mxu0 0.0
    %8909 = vmatprep.subr.mxu0 0.0
    %8910 = vmatpush1.msra.mxu0 0.0
    %8911 = vmatprep.subr.mxu0 0.0
    %8912 = vmatpush1.msra.mxu0 0.0
    %8913 = vmatprep.subr.mxu0 0.0
    %8914 = vmatpush1.msra.mxu0 0.0
    %8915 = vmatprep.mubr.f32.mxu0 0.0
    %8916 = vmatmul.mubr.f32.gmra.mrb[0].mxu0 %v8709
    %v8917 = vpop.f32.mrb[0].mxu0
    %v8918 = vadd.f32 0.0, %v8917
    %v8919 = vpop.f32.mrb[0].mxu0
    %8920 = vdwg.mxu0
    %8921 = vmatprep.subr.mxu0 0.0
    %8922 = vmatpush1.msra.mxu0 %v7648
    %8923 = vmatprep.subr.mxu0 0.0
    %8924 = vmatpush1.msra.mxu0 %v7906
    %8925 = vmatprep.subr.mxu0 0.0
    %8926 = vmatpush1.msra.mxu0 0.0
    %8927 = vmatprep.subr.mxu0 0.0
    %8928 = vmatpush1.msra.mxu0 0.0
    %8929 = vmatprep.subr.mxu0 0.0
    %8930 = vmatpush1.msra.mxu0 0.0
    %8931 = vmatprep.subr.mxu0 0.0
    %8932 = vmatpush1.msra.mxu0 0.0
    %8933 = vmatprep.subr.mxu0 0.0
    %8934 = vmatpush1.msra.mxu0 0.0
    %8935 = vmatprep.subr.mxu0 0.0
    %8936 = vmatpush1.msra.mxu0 0.0
    %8937 = vmatprep.subr.mxu0 0.0
    %8938 = vmatpush1.msra.mxu0 0.0
    %8939 = vmatprep.subr.mxu0 0.0
    %8940 = vmatpush1.msra.mxu0 0.0
    %8941 = vmatprep.subr.mxu0 0.0
    %8942 = vmatpush1.msra.mxu0 0.0
    %8943 = vmatprep.subr.mxu0 0.0
    %8944 = vmatpush1.msra.mxu0 0.0
    %8945 = vmatprep.subr.mxu0 0.0
    %8946 = vmatpush1.msra.mxu0 0.0
    %8947 = vmatprep.subr.mxu0 0.0
    %8948 = vmatpush1.msra.mxu0 0.0
    %8949 = vmatprep.subr.mxu0 0.0
    %8950 = vmatpush1.msra.mxu0 0.0
    %8951 = vmatprep.subr.mxu0 0.0
    %8952 = vmatpush1.msra.mxu0 0.0
    %8953 = vmatprep.subr.mxu0 0.0
    %8954 = vmatpush1.msra.mxu0 0.0
    %8955 = vmatprep.subr.mxu0 0.0
    %8956 = vmatpush1.msra.mxu0 0.0
    %8957 = vmatprep.subr.mxu0 0.0
    %8958 = vmatpush1.msra.mxu0 0.0
    %8959 = vmatprep.subr.mxu0 0.0
    %8960 = vmatpush1.msra.mxu0 0.0
    %8961 = vmatprep.subr.mxu0 0.0
    %8962 = vmatpush1.msra.mxu0 0.0
    %8963 = vmatprep.subr.mxu0 0.0
    %8964 = vmatpush1.msra.mxu0 0.0
    %8965 = vmatprep.subr.mxu0 0.0
    %8966 = vmatpush1.msra.mxu0 0.0
    %8967 = vmatprep.subr.mxu0 0.0
    %8968 = vmatpush1.msra.mxu0 0.0
    %8969 = vmatprep.subr.mxu0 0.0
    %8970 = vmatpush1.msra.mxu0 0.0
    %8971 = vmatprep.subr.mxu0 0.0
    %8972 = vmatpush1.msra.mxu0 0.0
    %8973 = vmatprep.subr.mxu0 0.0
    %8974 = vmatpush1.msra.mxu0 0.0
    %8975 = vmatprep.subr.mxu0 0.0
    %8976 = vmatpush1.msra.mxu0 0.0
    %8977 = vmatprep.subr.mxu0 0.0
    %8978 = vmatpush1.msra.mxu0 0.0
    %8979 = vmatprep.subr.mxu0 0.0
    %8980 = vmatpush1.msra.mxu0 0.0
    %8981 = vmatprep.subr.mxu0 0.0
    %8982 = vmatpush1.msra.mxu0 0.0
    %8983 = vmatprep.subr.mxu0 0.0
    %8984 = vmatpush1.msra.mxu0 0.0
    %8985 = vmatprep.mubr.f32.mxu0 0.0
    %8986 = vmatmul.mubr.f32.gmra.mrb[0].mxu0 %v8709
    %v8987 = vpop.f32.mrb[0].mxu0
    %v8988 = vadd.f32 0.0, %v8987
    %v8989 = vpop.f32.mrb[0].mxu0
    %8990 = vdwg.mxu0
    %8991 = vmatprep.subr.mxu0 0.0
    %8992 = vmatpush1.msra.mxu0 %v7650
    %8993 = vmatprep.subr.mxu0 0.0
    %8994 = vmatpush1.msra.mxu0 %v7979
    %8995 = vmatprep.subr.mxu0 0.0
    %8996 = vmatpush1.msra.mxu0 0.0
    %8997 = vmatprep.subr.mxu0 0.0
    %8998 = vmatpush1.msra.mxu0 0.0
    %8999 = vmatprep.subr.mxu0 0.0
    %9000 = vmatpush1.msra.mxu0 0.0
    %9001 = vmatprep.subr.mxu0 0.0
    %9002 = vmatpush1.msra.mxu0 0.0
    %9003 = vmatprep.subr.mxu0 0.0
    %9004 = vmatpush1.msra.mxu0 0.0
    %9005 = vmatprep.subr.mxu0 0.0
    %9006 = vmatpush1.msra.mxu0 0.0
    %9007 = vmatprep.subr.mxu0 0.0
    %9008 = vmatpush1.msra.mxu0 0.0
    %9009 = vmatprep.subr.mxu0 0.0
    %9010 = vmatpush1.msra.mxu0 0.0
    %9011 = vmatprep.subr.mxu0 0.0
    %9012 = vmatpush1.msra.mxu0 0.0
    %9013 = vmatprep.subr.mxu0 0.0
    %9014 = vmatpush1.msra.mxu0 0.0
    %9015 = vmatprep.subr.mxu0 0.0
    %9016 = vmatpush1.msra.mxu0 0.0
    %9017 = vmatprep.subr.mxu0 0.0
    %9018 = vmatpush1.msra.mxu0 0.0
    %9019 = vmatprep.subr.mxu0 0.0
    %9020 = vmatpush1.msra.mxu0 0.0
    %9021 = vmatprep.subr.mxu0 0.0
    %9022 = vmatpush1.msra.mxu0 0.0
    %9023 = vmatprep.subr.mxu0 0.0
    %9024 = vmatpush1.msra.mxu0 0.0
    %9025 = vmatprep.subr.mxu0 0.0
    %9026 = vmatpush1.msra.mxu0 0.0
    %9027 = vmatprep.subr.mxu0 0.0
    %9028 = vmatpush1.msra.mxu0 0.0
    %9029 = vmatprep.subr.mxu0 0.0
    %9030 = vmatpush1.msra.mxu0 0.0
    %9031 = vmatprep.subr.mxu0 0.0
    %9032 = vmatpush1.msra.mxu0 0.0
    %9033 = vmatprep.subr.mxu0 0.0
    %9034 = vmatpush1.msra.mxu0 0.0
    %9035 = vmatprep.subr.mxu0 0.0
    %9036 = vmatpush1.msra.mxu0 0.0
    %9037 = vmatprep.subr.mxu0 0.0
    %9038 = vmatpush1.msra.mxu0 0.0
    %9039 = vmatprep.subr.mxu0 0.0
    %9040 = vmatpush1.msra.mxu0 0.0
    %9041 = vmatprep.subr.mxu0 0.0
    %9042 = vmatpush1.msra.mxu0 0.0
    %9043 = vmatprep.subr.mxu0 0.0
    %9044 = vmatpush1.msra.mxu0 0.0
    %9045 = vmatprep.subr.mxu0 0.0
    %9046 = vmatpush1.msra.mxu0 0.0
    %9047 = vmatprep.subr.mxu0 0.0
    %9048 = vmatpush1.msra.mxu0 0.0
    %9049 = vmatprep.subr.mxu0 0.0
    %9050 = vmatpush1.msra.mxu0 0.0
    %9051 = vmatprep.subr.mxu0 0.0
    %9052 = vmatpush1.msra.mxu0 0.0
    %9053 = vmatprep.subr.mxu0 0.0
    %9054 = vmatpush1.msra.mxu0 0.0
    %9055 = vmatprep.mubr.f32.mxu0 0.0
    %9056 = vmatmul.mubr.f32.gmra.mrb[0].mxu0 %v8709
    %v9057 = vpop.f32.mrb[0].mxu0
    %v9058 = vadd.f32 0.0, %v9057
    %v9059 = vpop.f32.mrb[0].mxu0
    %9060 = vdwg.mxu0
    %9061 = vmatprep.subr.mxu0 0.0
    %9062 = vmatpush1.msra.mxu0 %v7652
    %9063 = vmatprep.subr.mxu0 0.0
    %9064 = vmatpush1.msra.mxu0 %v8052
    %9065 = vmatprep.subr.mxu0 0.0
    %9066 = vmatpush1.msra.mxu0 0.0
    %9067 = vmatprep.subr.mxu0 0.0
    %9068 = vmatpush1.msra.mxu0 0.0
    %9069 = vmatprep.subr.mxu0 0.0
    %9070 = vmatpush1.msra.mxu0 0.0
    %9071 = vmatprep.subr.mxu0 0.0
    %9072 = vmatpush1.msra.mxu0 0.0
    %9073 = vmatprep.subr.mxu0 0.0
    %9074 = vmatpush1.msra.mxu0 0.0
    %9075 = vmatprep.subr.mxu0 0.0
    %9076 = vmatpush1.msra.mxu0 0.0
    %9077 = vmatprep.subr.mxu0 0.0
    %9078 = vmatpush1.msra.mxu0 0.0
    %9079 = vmatprep.subr.mxu0 0.0
    %9080 = vmatpush1.msra.mxu0 0.0
    %9081 = vmatprep.subr.mxu0 0.0
    %9082 = vmatpush1.msra.mxu0 0.0
    %9083 = vmatprep.subr.mxu0 0.0
    %9084 = vmatpush1.msra.mxu0 0.0
    %9085 = vmatprep.subr.mxu0 0.0
    %9086 = vmatpush1.msra.mxu0 0.0
    %9087 = vmatprep.subr.mxu0 0.0
    %9088 = vmatpush1.msra.mxu0 0.0
    %9089 = vmatprep.subr.mxu0 0.0
    %9090 = vmatpush1.msra.mxu0 0.0
    %9091 = vmatprep.subr.mxu0 0.0
    %9092 = vmatpush1.msra.mxu0 0.0
    %9093 = vmatprep.subr.mxu0 0.0
    %9094 = vmatpush1.msra.mxu0 0.0
    %9095 = vmatprep.subr.mxu0 0.0
    %9096 = vmatpush1.msra.mxu0 0.0
    %9097 = vmatprep.subr.mxu0 0.0
    %9098 = vmatpush1.msra.mxu0 0.0
    %9099 = vmatprep.subr.mxu0 0.0
    %9100 = vmatpush1.msra.mxu0 0.0
    %9101 = vmatprep.subr.mxu0 0.0
    %9102 = vmatpush1.msra.mxu0 0.0
    %9103 = vmatprep.subr.mxu0 0.0
    %9104 = vmatpush1.msra.mxu0 0.0
    %9105 = vmatprep.subr.mxu0 0.0
    %9106 = vmatpush1.msra.mxu0 0.0
    %9107 = vmatprep.subr.mxu0 0.0
    %9108 = vmatpush1.msra.mxu0 0.0
    %9109 = vmatprep.subr.mxu0 0.0
    %9110 = vmatpush1.msra.mxu0 0.0
    %9111 = vmatprep.subr.mxu0 0.0
    %9112 = vmatpush1.msra.mxu0 0.0
    %9113 = vmatprep.subr.mxu0 0.0
    %9114 = vmatpush1.msra.mxu0 0.0
    %9115 = vmatprep.subr.mxu0 0.0
    %9116 = vmatpush1.msra.mxu0 0.0
    %9117 = vmatprep.subr.mxu0 0.0
    %9118 = vmatpush1.msra.mxu0 0.0
    %9119 = vmatprep.subr.mxu0 0.0
    %9120 = vmatpush1.msra.mxu0 0.0
    %9121 = vmatprep.subr.mxu0 0.0
    %9122 = vmatpush1.msra.mxu0 0.0
    %9123 = vmatprep.subr.mxu0 0.0
    %9124 = vmatpush1.msra.mxu0 0.0
    %9125 = vmatprep.mubr.f32.mxu0 0.0
    %9126 = vmatmul.mubr.f32.gmra.mrb[0].mxu0 %v8709
    %v9127 = vpop.f32.mrb[0].mxu0
    %v9128 = vadd.f32 0.0, %v9127
    %v9129 = vpop.f32.mrb[0].mxu0
    %9130 = vdwg.mxu0
    %9131 = vmatprep.subr.mxu0 0.0
    %9132 = vmatpush1.msra.mxu0 %v7654
    %9133 = vmatprep.subr.mxu0 0.0
    %9134 = vmatpush1.msra.mxu0 %v8125
    %9135 = vmatprep.subr.mxu0 0.0
    %9136 = vmatpush1.msra.mxu0 0.0
    %9137 = vmatprep.subr.mxu0 0.0
    %9138 = vmatpush1.msra.mxu0 0.0
    %9139 = vmatprep.subr.mxu0 0.0
    %9140 = vmatpush1.msra.mxu0 0.0
    %9141 = vmatprep.subr.mxu0 0.0
    %9142 = vmatpush1.msra.mxu0 0.0
    %9143 = vmatprep.subr.mxu0 0.0
    %9144 = vmatpush1.msra.mxu0 0.0
    %9145 = vmatprep.subr.mxu0 0.0
    %9146 = vmatpush1.msra.mxu0 0.0
    %9147 = vmatprep.subr.mxu0 0.0
    %9148 = vmatpush1.msra.mxu0 0.0
    %9149 = vmatprep.subr.mxu0 0.0
    %9150 = vmatpush1.msra.mxu0 0.0
    %9151 = vmatprep.subr.mxu0 0.0
    %9152 = vmatpush1.msra.mxu0 0.0
    %9153 = vmatprep.subr.mxu0 0.0
    %9154 = vmatpush1.msra.mxu0 0.0
    %9155 = vmatprep.subr.mxu0 0.0
    %9156 = vmatpush1.msra.mxu0 0.0
    %9157 = vmatprep.subr.mxu0 0.0
    %9158 = vmatpush1.msra.mxu0 0.0
    %9159 = vmatprep.subr.mxu0 0.0
    %9160 = vmatpush1.msra.mxu0 0.0
    %9161 = vmatprep.subr.mxu0 0.0
    %9162 = vmatpush1.msra.mxu0 0.0
    %9163 = vmatprep.subr.mxu0 0.0
    %9164 = vmatpush1.msra.mxu0 0.0
    %9165 = vmatprep.subr.mxu0 0.0
    %9166 = vmatpush1.msra.mxu0 0.0
    %9167 = vmatprep.subr.mxu0 0.0
    %9168 = vmatpush1.msra.mxu0 0.0
    %9169 = vmatprep.subr.mxu0 0.0
    %9170 = vmatpush1.msra.mxu0 0.0
    %9171 = vmatprep.subr.mxu0 0.0
    %9172 = vmatpush1.msra.mxu0 0.0
    %9173 = vmatprep.subr.mxu0 0.0
    %9174 = vmatpush1.msra.mxu0 0.0
    %9175 = vmatprep.subr.mxu0 0.0
    %9176 = vmatpush1.msra.mxu0 0.0
    %9177 = vmatprep.subr.mxu0 0.0
    %9178 = vmatpush1.msra.mxu0 0.0
    %9179 = vmatprep.subr.mxu0 0.0
    %9180 = vmatpush1.msra.mxu0 0.0
    %9181 = vmatprep.subr.mxu0 0.0
    %9182 = vmatpush1.msra.mxu0 0.0
    %9183 = vmatprep.subr.mxu0 0.0
    %9184 = vmatpush1.msra.mxu0 0.0
    %9185 = vmatprep.subr.mxu0 0.0
    %9186 = vmatpush1.msra.mxu0 0.0
    %9187 = vmatprep.subr.mxu0 0.0
    %9188 = vmatpush1.msra.mxu0 0.0
    %9189 = vmatprep.subr.mxu0 0.0
    %9190 = vmatpush1.msra.mxu0 0.0
    %9191 = vmatprep.subr.mxu0 0.0
    %9192 = vmatpush1.msra.mxu0 0.0
    %9193 = vmatprep.subr.mxu0 0.0
    %9194 = vmatpush1.msra.mxu0 0.0
    %9195 = vmatprep.mubr.f32.mxu0 0.0
    %9196 = vmatmul.mubr.f32.gmra.mrb[0].mxu0 %v8709
    %v9197 = vpop.f32.mrb[0].mxu0
    %v9198 = vadd.f32 0.0, %v9197
    %v9199 = vpop.f32.mrb[0].mxu0
    %9200 = vdwg.mxu0
    %9201 = vmatprep.subr.mxu0 0.0
    %9202 = vmatpush1.msra.mxu0 %v7656
    %9203 = vmatprep.subr.mxu0 0.0
    %9204 = vmatpush1.msra.mxu0 %v8198
    %9205 = vmatprep.subr.mxu0 0.0
    %9206 = vmatpush1.msra.mxu0 0.0
    %9207 = vmatprep.subr.mxu0 0.0
    %9208 = vmatpush1.msra.mxu0 0.0
    %9209 = vmatprep.subr.mxu0 0.0
    %9210 = vmatpush1.msra.mxu0 0.0
    %9211 = vmatprep.subr.mxu0 0.0
    %9212 = vmatpush1.msra.mxu0 0.0
    %9213 = vmatprep.subr.mxu0 0.0
    %9214 = vmatpush1.msra.mxu0 0.0
    %9215 = vmatprep.subr.mxu0 0.0
    %9216 = vmatpush1.msra.mxu0 0.0
    %9217 = vmatprep.subr.mxu0 0.0
    %9218 = vmatpush1.msra.mxu0 0.0
    %9219 = vmatprep.subr.mxu0 0.0
    %9220 = vmatpush1.msra.mxu0 0.0
    %9221 = vmatprep.subr.mxu0 0.0
    %9222 = vmatpush1.msra.mxu0 0.0
    %9223 = vmatprep.subr.mxu0 0.0
    %9224 = vmatpush1.msra.mxu0 0.0
    %9225 = vmatprep.subr.mxu0 0.0
    %9226 = vmatpush1.msra.mxu0 0.0
    %9227 = vmatprep.subr.mxu0 0.0
    %9228 = vmatpush1.msra.mxu0 0.0
    %9229 = vmatprep.subr.mxu0 0.0
    %9230 = vmatpush1.msra.mxu0 0.0
    %9231 = vmatprep.subr.mxu0 0.0
    %9232 = vmatpush1.msra.mxu0 0.0
    %9233 = vmatprep.subr.mxu0 0.0
    %9234 = vmatpush1.msra.mxu0 0.0
    %9235 = vmatprep.subr.mxu0 0.0
    %9236 = vmatpush1.msra.mxu0 0.0
    %9237 = vmatprep.subr.mxu0 0.0
    %9238 = vmatpush1.msra.mxu0 0.0
    %9239 = vmatprep.subr.mxu0 0.0
    %9240 = vmatpush1.msra.mxu0 0.0
    %9241 = vmatprep.subr.mxu0 0.0
    %9242 = vmatpush1.msra.mxu0 0.0
    %9243 = vmatprep.subr.mxu0 0.0
    %9244 = vmatpush1.msra.mxu0 0.0
    %9245 = vmatprep.subr.mxu0 0.0
    %9246 = vmatpush1.msra.mxu0 0.0
    %9247 = vmatprep.subr.mxu0 0.0
    %9248 = vmatpush1.msra.mxu0 0.0
    %9249 = vmatprep.subr.mxu0 0.0
    %9250 = vmatpush1.msra.mxu0 0.0
    %9251 = vmatprep.subr.mxu0 0.0
    %9252 = vmatpush1.msra.mxu0 0.0
    %9253 = vmatprep.subr.mxu0 0.0
    %9254 = vmatpush1.msra.mxu0 0.0
    %9255 = vmatprep.subr.mxu0 0.0
    %9256 = vmatpush1.msra.mxu0 0.0
    %9257 = vmatprep.subr.mxu0 0.0
    %9258 = vmatpush1.msra.mxu0 0.0
    %9259 = vmatprep.subr.mxu0 0.0
    %9260 = vmatpush1.msra.mxu0 0.0
    %9261 = vmatprep.subr.mxu0 0.0
    %9262 = vmatpush1.msra.mxu0 0.0
    %9263 = vmatprep.subr.mxu0 0.0
    %9264 = vmatpush1.msra.mxu0 0.0
    %9265 = vmatprep.mubr.f32.mxu0 0.0
    %9266 = vmatmul.mubr.f32.gmra.mrb[0].mxu0 %v8709
    %v9267 = vpop.f32.mrb[0].mxu0
    %v9268 = vadd.f32 0.0, %v9267
    %v9269 = vpop.f32.mrb[0].mxu0
    %9270 = vdwg.mxu0
    %9271 = vmatprep.subr.mxu0 0.0
    %9272 = vmatpush1.msra.mxu0 %v7658
    %9273 = vmatprep.subr.mxu0 0.0
    %9274 = vmatpush1.msra.mxu0 %v8271
    %9275 = vmatprep.subr.mxu0 0.0
    %9276 = vmatpush1.msra.mxu0 0.0
    %9277 = vmatprep.subr.mxu0 0.0
    %9278 = vmatpush1.msra.mxu0 0.0
    %9279 = vmatprep.subr.mxu0 0.0
    %9280 = vmatpush1.msra.mxu0 0.0
    %9281 = vmatprep.subr.mxu0 0.0
    %9282 = vmatpush1.msra.mxu0 0.0
    %9283 = vmatprep.subr.mxu0 0.0
    %9284 = vmatpush1.msra.mxu0 0.0
    %9285 = vmatprep.subr.mxu0 0.0
    %9286 = vmatpush1.msra.mxu0 0.0
    %9287 = vmatprep.subr.mxu0 0.0
    %9288 = vmatpush1.msra.mxu0 0.0
    %9289 = vmatprep.subr.mxu0 0.0
    %9290 = vmatpush1.msra.mxu0 0.0
    %9291 = vmatprep.subr.mxu0 0.0
    %9292 = vmatpush1.msra.mxu0 0.0
    %9293 = vmatprep.subr.mxu0 0.0
    %9294 = vmatpush1.msra.mxu0 0.0
    %9295 = vmatprep.subr.mxu0 0.0
    %9296 = vmatpush1.msra.mxu0 0.0
    %9297 = vmatprep.subr.mxu0 0.0
    %9298 = vmatpush1.msra.mxu0 0.0
    %9299 = vmatprep.subr.mxu0 0.0
    %9300 = vmatpush1.msra.mxu0 0.0
    %9301 = vmatprep.subr.mxu0 0.0
    %9302 = vmatpush1.msra.mxu0 0.0
    %9303 = vmatprep.subr.mxu0 0.0
    %9304 = vmatpush1.msra.mxu0 0.0
    %9305 = vmatprep.subr.mxu0 0.0
    %9306 = vmatpush1.msra.mxu0 0.0
    %9307 = vmatprep.subr.mxu0 0.0
    %9308 = vmatpush1.msra.mxu0 0.0
    %9309 = vmatprep.subr.mxu0 0.0
    %9310 = vmatpush1.msra.mxu0 0.0
    %9311 = vmatprep.subr.mxu0 0.0
    %9312 = vmatpush1.msra.mxu0 0.0
    %9313 = vmatprep.subr.mxu0 0.0
    %9314 = vmatpush1.msra.mxu0 0.0
    %9315 = vmatprep.subr.mxu0 0.0
    %9316 = vmatpush1.msra.mxu0 0.0
    %9317 = vmatprep.subr.mxu0 0.0
    %9318 = vmatpush1.msra.mxu0 0.0
    %9319 = vmatprep.subr.mxu0 0.0
    %9320 = vmatpush1.msra.mxu0 0.0
    %9321 = vmatprep.subr.mxu0 0.0
    %9322 = vmatpush1.msra.mxu0 0.0
    %9323 = vmatprep.subr.mxu0 0.0
    %9324 = vmatpush1.msra.mxu0 0.0
    %9325 = vmatprep.subr.mxu0 0.0
    %9326 = vmatpush1.msra.mxu0 0.0
    %9327 = vmatprep.subr.mxu0 0.0
    %9328 = vmatpush1.msra.mxu0 0.0
    %9329 = vmatprep.subr.mxu0 0.0
    %9330 = vmatpush1.msra.mxu0 0.0
    %9331 = vmatprep.subr.mxu0 0.0
    %9332 = vmatpush1.msra.mxu0 0.0
    %9333 = vmatprep.subr.mxu0 0.0
    %9334 = vmatpush1.msra.mxu0 0.0
    %9335 = vmatprep.mubr.f32.mxu0 0.0
    %9336 = vmatmul.mubr.f32.gmra.mrb[0].mxu0 %v8709
    %v9337 = vpop.f32.mrb[0].mxu0
    %v9338 = vadd.f32 0.0, %v9337
    %v9339 = vpop.f32.mrb[0].mxu0
    %9340 = vdwg.mxu0
    %9341 = vmatprep.subr.mxu0 0.0
    %9342 = vmatpush1.msra.mxu0 %v7660
    %9343 = vmatprep.subr.mxu0 0.0
    %9344 = vmatpush1.msra.mxu0 %v8344
    %9345 = vmatprep.subr.mxu0 0.0
    %9346 = vmatpush1.msra.mxu0 0.0
    %9347 = vmatprep.subr.mxu0 0.0
    %9348 = vmatpush1.msra.mxu0 0.0
    %9349 = vmatprep.subr.mxu0 0.0
    %9350 = vmatpush1.msra.mxu0 0.0
    %9351 = vmatprep.subr.mxu0 0.0
    %9352 = vmatpush1.msra.mxu0 0.0
    %9353 = vmatprep.subr.mxu0 0.0
    %9354 = vmatpush1.msra.mxu0 0.0
    %9355 = vmatprep.subr.mxu0 0.0
    %9356 = vmatpush1.msra.mxu0 0.0
    %9357 = vmatprep.subr.mxu0 0.0
    %9358 = vmatpush1.msra.mxu0 0.0
    %9359 = vmatprep.subr.mxu0 0.0
    %9360 = vmatpush1.msra.mxu0 0.0
    %9361 = vmatprep.subr.mxu0 0.0
    %9362 = vmatpush1.msra.mxu0 0.0
    %9363 = vmatprep.subr.mxu0 0.0
    %9364 = vmatpush1.msra.mxu0 0.0
    %9365 = vmatprep.subr.mxu0 0.0
    %9366 = vmatpush1.msra.mxu0 0.0
    %9367 = vmatprep.subr.mxu0 0.0
    %9368 = vmatpush1.msra.mxu0 0.0
    %9369 = vmatprep.subr.mxu0 0.0
    %9370 = vmatpush1.msra.mxu0 0.0
    %9371 = vmatprep.subr.mxu0 0.0
    %9372 = vmatpush1.msra.mxu0 0.0
    %9373 = vmatprep.subr.mxu0 0.0
    %9374 = vmatpush1.msra.mxu0 0.0
    %9375 = vmatprep.subr.mxu0 0.0
    %9376 = vmatpush1.msra.mxu0 0.0
    %9377 = vmatprep.subr.mxu0 0.0
    %9378 = vmatpush1.msra.mxu0 0.0
    %9379 = vmatprep.subr.mxu0 0.0
    %9380 = vmatpush1.msra.mxu0 0.0
    %9381 = vmatprep.subr.mxu0 0.0
    %9382 = vmatpush1.msra.mxu0 0.0
    %9383 = vmatprep.subr.mxu0 0.0
    %9384 = vmatpush1.msra.mxu0 0.0
    %9385 = vmatprep.subr.mxu0 0.0
    %9386 = vmatpush1.msra.mxu0 0.0
    %9387 = vmatprep.subr.mxu0 0.0
    %9388 = vmatpush1.msra.mxu0 0.0
    %9389 = vmatprep.subr.mxu0 0.0
    %9390 = vmatpush1.msra.mxu0 0.0
    %9391 = vmatprep.subr.mxu0 0.0
    %9392 = vmatpush1.msra.mxu0 0.0
    %9393 = vmatprep.subr.mxu0 0.0
    %9394 = vmatpush1.msra.mxu0 0.0
    %9395 = vmatprep.subr.mxu0 0.0
    %9396 = vmatpush1.msra.mxu0 0.0
    %9397 = vmatprep.subr.mxu0 0.0
    %9398 = vmatpush1.msra.mxu0 0.0
    %9399 = vmatprep.subr.mxu0 0.0
    %9400 = vmatpush1.msra.mxu0 0.0
    %9401 = vmatprep.subr.mxu0 0.0
    %9402 = vmatpush1.msra.mxu0 0.0
    %9403 = vmatprep.subr.mxu0 0.0
    %9404 = vmatpush1.msra.mxu0 0.0
    %9405 = vmatprep.mubr.f32.mxu0 0.0
    %9406 = vmatmul.mubr.f32.gmra.mrb[0].mxu0 %v8709
    %v9407 = vpop.f32.mrb[0].mxu0
    %v9408 = vadd.f32 0.0, %v9407
    %v9409 = vpop.f32.mrb[0].mxu0
    %9410 = vdwg.mxu0
    %9411 = vmatprep.subr.mxu0 0.0
    %9412 = vmatpush1.msra.mxu0 %v7662
    %9413 = vmatprep.subr.mxu0 0.0
    %9414 = vmatpush1.msra.mxu0 %v8417
    %9415 = vmatprep.subr.mxu0 0.0
    %9416 = vmatpush1.msra.mxu0 0.0
    %9417 = vmatprep.subr.mxu0 0.0
    %9418 = vmatpush1.msra.mxu0 0.0
    %9419 = vmatprep.subr.mxu0 0.0
    %9420 = vmatpush1.msra.mxu0 0.0
    %9421 = vmatprep.subr.mxu0 0.0
    %9422 = vmatpush1.msra.mxu0 0.0
    %9423 = vmatprep.subr.mxu0 0.0
    %9424 = vmatpush1.msra.mxu0 0.0
    %9425 = vmatprep.subr.mxu0 0.0
    %9426 = vmatpush1.msra.mxu0 0.0
    %9427 = vmatprep.subr.mxu0 0.0
    %9428 = vmatpush1.msra.mxu0 0.0
    %9429 = vmatprep.subr.mxu0 0.0
    %9430 = vmatpush1.msra.mxu0 0.0
    %9431 = vmatprep.subr.mxu0 0.0
    %9432 = vmatpush1.msra.mxu0 0.0
    %9433 = vmatprep.subr.mxu0 0.0
    %9434 = vmatpush1.msra.mxu0 0.0
    %9435 = vmatprep.subr.mxu0 0.0
    %9436 = vmatpush1.msra.mxu0 0.0
    %9437 = vmatprep.subr.mxu0 0.0
    %9438 = vmatpush1.msra.mxu0 0.0
    %9439 = vmatprep.subr.mxu0 0.0
    %9440 = vmatpush1.msra.mxu0 0.0
    %9441 = vmatprep.subr.mxu0 0.0
    %9442 = vmatpush1.msra.mxu0 0.0
    %9443 = vmatprep.subr.mxu0 0.0
    %9444 = vmatpush1.msra.mxu0 0.0
    %9445 = vmatprep.subr.mxu0 0.0
    %9446 = vmatpush1.msra.mxu0 0.0
    %9447 = vmatprep.subr.mxu0 0.0
    %9448 = vmatpush1.msra.mxu0 0.0
    %9449 = vmatprep.subr.mxu0 0.0
    %9450 = vmatpush1.msra.mxu0 0.0
    %9451 = vmatprep.subr.mxu0 0.0
    %9452 = vmatpush1.msra.mxu0 0.0
    %9453 = vmatprep.subr.mxu0 0.0
    %9454 = vmatpush1.msra.mxu0 0.0
    %9455 = vmatprep.subr.mxu0 0.0
    %9456 = vmatpush1.msra.mxu0 0.0
    %9457 = vmatprep.subr.mxu0 0.0
    %9458 = vmatpush1.msra.mxu0 0.0
    %9459 = vmatprep.subr.mxu0 0.0
    %9460 = vmatpush1.msra.mxu0 0.0
    %9461 = vmatprep.subr.mxu0 0.0
    %9462 = vmatpush1.msra.mxu0 0.0
    %9463 = vmatprep.subr.mxu0 0.0
    %9464 = vmatpush1.msra.mxu0 0.0
    %9465 = vmatprep.subr.mxu0 0.0
    %9466 = vmatpush1.msra.mxu0 0.0
    %9467 = vmatprep.subr.mxu0 0.0
    %9468 = vmatpush1.msra.mxu0 0.0
    %9469 = vmatprep.subr.mxu0 0.0
    %9470 = vmatpush1.msra.mxu0 0.0
    %9471 = vmatprep.subr.mxu0 0.0
    %9472 = vmatpush1.msra.mxu0 0.0
    %9473 = vmatprep.subr.mxu0 0.0
    %9474 = vmatpush1.msra.mxu0 0.0
    %9475 = vmatprep.mubr.f32.mxu0 0.0
    %9476 = vmatmul.mubr.f32.gmra.mrb[0].mxu0 %v8709
    %v9477 = vpop.f32.mrb[0].mxu0
    %v9478 = vadd.f32 0.0, %v9477
    %v9479 = vpop.f32.mrb[0].mxu0
    %9480 = vdwg.mxu0
    %9481 = vmatprep.subr.mxu0 0.0
    %9482 = vmatpush1.msra.mxu0 %v7664
    %9483 = vmatprep.subr.mxu0 0.0
    %9484 = vmatpush1.msra.mxu0 %v8490
    %9485 = vmatprep.subr.mxu0 0.0
    %9486 = vmatpush1.msra.mxu0 0.0
    %9487 = vmatprep.subr.mxu0 0.0
    %9488 = vmatpush1.msra.mxu0 0.0
    %9489 = vmatprep.subr.mxu0 0.0
    %9490 = vmatpush1.msra.mxu0 0.0
    %9491 = vmatprep.subr.mxu0 0.0
    %9492 = vmatpush1.msra.mxu0 0.0
    %9493 = vmatprep.subr.mxu0 0.0
    %9494 = vmatpush1.msra.mxu0 0.0
    %9495 = vmatprep.subr.mxu0 0.0
    %9496 = vmatpush1.msra.mxu0 0.0
    %9497 = vmatprep.subr.mxu0 0.0
    %9498 = vmatpush1.msra.mxu0 0.0
    %9499 = vmatprep.subr.mxu0 0.0
    %9500 = vmatpush1.msra.mxu0 0.0
    %9501 = vmatprep.subr.mxu0 0.0
    %9502 = vmatpush1.msra.mxu0 0.0
    %9503 = vmatprep.subr.mxu0 0.0
    %9504 = vmatpush1.msra.mxu0 0.0
    %9505 = vmatprep.subr.mxu0 0.0
    %9506 = vmatpush1.msra.mxu0 0.0
    %9507 = vmatprep.subr.mxu0 0.0
    %9508 = vmatpush1.msra.mxu0 0.0
    %9509 = vmatprep.subr.mxu0 0.0
    %9510 = vmatpush1.msra.mxu0 0.0
    %9511 = vmatprep.subr.mxu0 0.0
    %9512 = vmatpush1.msra.mxu0 0.0
    %9513 = vmatprep.subr.mxu0 0.0
    %9514 = vmatpush1.msra.mxu0 0.0
    %9515 = vmatprep.subr.mxu0 0.0
    %9516 = vmatpush1.msra.mxu0 0.0
    %9517 = vmatprep.subr.mxu0 0.0
    %9518 = vmatpush1.msra.mxu0 0.0
    %9519 = vmatprep.subr.mxu0 0.0
    %9520 = vmatpush1.msra.mxu0 0.0
    %9521 = vmatprep.subr.mxu0 0.0
    %9522 = vmatpush1.msra.mxu0 0.0
    %9523 = vmatprep.subr.mxu0 0.0
    %9524 = vmatpush1.msra.mxu0 0.0
    %9525 = vmatprep.subr.mxu0 0.0
    %9526 = vmatpush1.msra.mxu0 0.0
    %9527 = vmatprep.subr.mxu0 0.0
    %9528 = vmatpush1.msra.mxu0 0.0
    %9529 = vmatprep.subr.mxu0 0.0
    %9530 = vmatpush1.msra.mxu0 0.0
    %9531 = vmatprep.subr.mxu0 0.0
    %9532 = vmatpush1.msra.mxu0 0.0
    %9533 = vmatprep.subr.mxu0 0.0
    %9534 = vmatpush1.msra.mxu0 0.0
    %9535 = vmatprep.subr.mxu0 0.0
    %9536 = vmatpush1.msra.mxu0 0.0
    %9537 = vmatprep.subr.mxu0 0.0
    %9538 = vmatpush1.msra.mxu0 0.0
    %9539 = vmatprep.subr.mxu0 0.0
    %9540 = vmatpush1.msra.mxu0 0.0
    %9541 = vmatprep.subr.mxu0 0.0
    %9542 = vmatpush1.msra.mxu0 0.0
    %9543 = vmatprep.subr.mxu0 0.0
    %9544 = vmatpush1.msra.mxu0 0.0
    %9545 = vmatprep.mubr.f32.mxu0 0.0
    %9546 = vmatmul.mubr.f32.gmra.mrb[0].mxu0 %v8709
    %v9547 = vpop.f32.mrb[0].mxu0
    %v9548 = vadd.f32 0.0, %v9547
    %v9549 = vpop.f32.mrb[0].mxu0
    %9550 = vdwg.mxu0
    %9551 = vmatprep.subr.mxu0 0.0
    %9552 = vmatpush1.msra.mxu0 %v7666
    %9553 = vmatprep.subr.mxu0 0.0
    %9554 = vmatpush1.msra.mxu0 %v8563
    %9555 = vmatprep.subr.mxu0 0.0
    %9556 = vmatpush1.msra.mxu0 0.0
    %9557 = vmatprep.subr.mxu0 0.0
    %9558 = vmatpush1.msra.mxu0 0.0
    %9559 = vmatprep.subr.mxu0 0.0
    %9560 = vmatpush1.msra.mxu0 0.0
    %9561 = vmatprep.subr.mxu0 0.0
    %9562 = vmatpush1.msra.mxu0 0.0
    %9563 = vmatprep.subr.mxu0 0.0
    %9564 = vmatpush1.msra.mxu0 0.0
    %9565 = vmatprep.subr.mxu0 0.0
    %9566 = vmatpush1.msra.mxu0 0.0
    %9567 = vmatprep.subr.mxu0 0.0
    %9568 = vmatpush1.msra.mxu0 0.0
    %9569 = vmatprep.subr.mxu0 0.0
    %9570 = vmatpush1.msra.mxu0 0.0
    %9571 = vmatprep.subr.mxu0 0.0
    %9572 = vmatpush1.msra.mxu0 0.0
    %9573 = vmatprep.subr.mxu0 0.0
    %9574 = vmatpush1.msra.mxu0 0.0
    %9575 = vmatprep.subr.mxu0 0.0
    %9576 = vmatpush1.msra.mxu0 0.0
    %9577 = vmatprep.subr.mxu0 0.0
    %9578 = vmatpush1.msra.mxu0 0.0
    %9579 = vmatprep.subr.mxu0 0.0
    %9580 = vmatpush1.msra.mxu0 0.0
    %9581 = vmatprep.subr.mxu0 0.0
    %9582 = vmatpush1.msra.mxu0 0.0
    %9583 = vmatprep.subr.mxu0 0.0
    %9584 = vmatpush1.msra.mxu0 0.0
    %9585 = vmatprep.subr.mxu0 0.0
    %9586 = vmatpush1.msra.mxu0 0.0
    %9587 = vmatprep.subr.mxu0 0.0
    %9588 = vmatpush1.msra.mxu0 0.0
    %9589 = vmatprep.subr.mxu0 0.0
    %9590 = vmatpush1.msra.mxu0 0.0
    %9591 = vmatprep.subr.mxu0 0.0
    %9592 = vmatpush1.msra.mxu0 0.0
    %9593 = vmatprep.subr.mxu0 0.0
    %9594 = vmatpush1.msra.mxu0 0.0
    %9595 = vmatprep.subr.mxu0 0.0
    %9596 = vmatpush1.msra.mxu0 0.0
    %9597 = vmatprep.subr.mxu0 0.0
    %9598 = vmatpush1.msra.mxu0 0.0
    %9599 = vmatprep.subr.mxu0 0.0
    %9600 = vmatpush1.msra.mxu0 0.0
    %9601 = vmatprep.subr.mxu0 0.0
    %9602 = vmatpush1.msra.mxu0 0.0
    %9603 = vmatprep.subr.mxu0 0.0
    %9604 = vmatpush1.msra.mxu0 0.0
    %9605 = vmatprep.subr.mxu0 0.0
    %9606 = vmatpush1.msra.mxu0 0.0
    %9607 = vmatprep.subr.mxu0 0.0
    %9608 = vmatpush1.msra.mxu0 0.0
    %9609 = vmatprep.subr.mxu0 0.0
    %9610 = vmatpush1.msra.mxu0 0.0
    %9611 = vmatprep.subr.mxu0 0.0
    %9612 = vmatpush1.msra.mxu0 0.0
    %9613 = vmatprep.subr.mxu0 0.0
    %9614 = vmatpush1.msra.mxu0 0.0
    %9615 = vmatprep.mubr.f32.mxu0 0.0
    %9616 = vmatmul.mubr.f32.gmra.mrb[0].mxu0 %v8709
    %v9617 = vpop.f32.mrb[0].mxu0
    %v9618 = vadd.f32 0.0, %v9617
    %v9619 = vpop.f32.mrb[0].mxu0
    %9620 = vdwg.mxu0
    %9621 = vmatprep.subr.mxu0 0.0
    %9622 = vmatpush1.msra.mxu0 %v7668
    %9623 = vmatprep.subr.mxu0 0.0
    %9624 = vmatpush1.msra.mxu0 %v8636
    %9625 = vmatprep.subr.mxu0 0.0
    %9626 = vmatpush1.msra.mxu0 0.0
    %9627 = vmatprep.subr.mxu0 0.0
    %9628 = vmatpush1.msra.mxu0 0.0
    %9629 = vmatprep.subr.mxu0 0.0
    %9630 = vmatpush1.msra.mxu0 0.0
    %9631 = vmatprep.subr.mxu0 0.0
    %9632 = vmatpush1.msra.mxu0 0.0
    %9633 = vmatprep.subr.mxu0 0.0
    %9634 = vmatpush1.msra.mxu0 0.0
    %9635 = vmatprep.subr.mxu0 0.0
    %9636 = vmatpush1.msra.mxu0 0.0
    %9637 = vmatprep.subr.mxu0 0.0
    %9638 = vmatpush1.msra.mxu0 0.0
    %9639 = vmatprep.subr.mxu0 0.0
    %9640 = vmatpush1.msra.mxu0 0.0
    %9641 = vmatprep.subr.mxu0 0.0
    %9642 = vmatpush1.msra.mxu0 0.0
    %9643 = vmatprep.subr.mxu0 0.0
    %9644 = vmatpush1.msra.mxu0 0.0
    %9645 = vmatprep.subr.mxu0 0.0
    %9646 = vmatpush1.msra.mxu0 0.0
    %9647 = vmatprep.subr.mxu0 0.0
    %9648 = vmatpush1.msra.mxu0 0.0
    %9649 = vmatprep.subr.mxu0 0.0
    %9650 = vmatpush1.msra.mxu0 0.0
    %9651 = vmatprep.subr.mxu0 0.0
    %9652 = vmatpush1.msra.mxu0 0.0
    %9653 = vmatprep.subr.mxu0 0.0
    %9654 = vmatpush1.msra.mxu0 0.0
    %9655 = vmatprep.subr.mxu0 0.0
    %9656 = vmatpush1.msra.mxu0 0.0
    %9657 = vmatprep.subr.mxu0 0.0
    %9658 = vmatpush1.msra.mxu0 0.0
    %9659 = vmatprep.subr.mxu0 0.0
    %9660 = vmatpush1.msra.mxu0 0.0
    %9661 = vmatprep.subr.mxu0 0.0
    %9662 = vmatpush1.msra.mxu0 0.0
    %9663 = vmatprep.subr.mxu0 0.0
    %9664 = vmatpush1.msra.mxu0 0.0
    %9665 = vmatprep.subr.mxu0 0.0
    %9666 = vmatpush1.msra.mxu0 0.0
    %9667 = vmatprep.subr.mxu0 0.0
    %9668 = vmatpush1.msra.mxu0 0.0
    %9669 = vmatprep.subr.mxu0 0.0
    %9670 = vmatpush1.msra.mxu0 0.0
    %9671 = vmatprep.subr.mxu0 0.0
    %9672 = vmatpush1.msra.mxu0 0.0
    %9673 = vmatprep.subr.mxu0 0.0
    %9674 = vmatpush1.msra.mxu0 0.0
    %9675 = vmatprep.subr.mxu0 0.0
    %9676 = vmatpush1.msra.mxu0 0.0
    %9677 = vmatprep.subr.mxu0 0.0
    %9678 = vmatpush1.msra.mxu0 0.0
    %9679 = vmatprep.subr.mxu0 0.0
    %9680 = vmatpush1.msra.mxu0 0.0
    %9681 = vmatprep.subr.mxu0 0.0
    %9682 = vmatpush1.msra.mxu0 0.0
    %9683 = vmatprep.subr.mxu0 0.0
    %9684 = vmatpush1.msra.mxu0 0.0
    %9685 = vmatprep.mubr.f32.mxu0 0.0
    %9686 = vmatmul.mubr.f32.gmra.mrb[0].mxu0 %v8709
    %v9687 = vpop.f32.mrb[0].mxu0
    %v9688 = vadd.f32 0.0, %v9687
    %v9689 = vpop.f32.mrb[0].mxu0
    %9690 = vdwg.mxu0
    %v9691 = vmax.f32 %v7756, %v8778
    %v9692 = vmax.f32 %v7829, %v8848
    %v9693 = vmax.f32 %v7902, %v8918
    %v9694 = vmax.f32 %v7975, %v8988
    %v9695 = vmax.f32 %v8048, %v9058
    %v9696 = vmax.f32 %v8121, %v9128
    %v9697 = vmax.f32 %v8194, %v9198
    %v9698 = vmax.f32 %v8267, %v9268
    %v9699 = vmax.f32 %v8340, %v9338
    %v9700 = vmax.f32 %v8413, %v9408
    %v9701 = vmax.f32 %v8486, %v9478
    %v9702 = vmax.f32 %v8559, %v9548
    %v9703 = vmax.f32 %v8632, %v9618
    %v9704 = vmax.f32 %v8705, %v9688
    %v9705 = vpack.c.bf16 %v9691, %v9691
    %v9706 = vpack.c.bf16 %v9692, %v9692
    %v9707 = vpack.c.bf16 %v9693, %v9693
    %v9708 = vpack.c.bf16 %v9694, %v9694
    %v9709 = vpack.c.bf16 %v9695, %v9695
    %v9710 = vpack.c.bf16 %v9696, %v9696
    %v9711 = vpack.c.bf16 %v9697, %v9697
    %v9712 = vpack.c.bf16 %v9698, %v9698
    %v9713 = vpack.c.bf16 %v9699, %v9699
    %v9714 = vpack.c.bf16 %v9700, %v9700
    %v9715 = vpack.c.bf16 %v9701, %v9701
    %v9716 = vpack.c.bf16 %v9702, %v9702
    %v9717 = vpack.c.bf16 %v9703, %v9703
    %v9718 = vpack.c.bf16 %v9704, %v9704
    %vm9719 = vcmask 60416
    %vm9720 = vmand %vm9719, %vm945
    %v9721 = vld [vmem:[#allocation4] sm:$0xf]
    %v9722 = vsel %vm9720, %v9705, %v9721
    %9723 = vst [vmem:[#allocation4] sm:$0xf] %v9722
    %v9724 = vld [vmem:[#allocation4 + $0x4] sm:$0xf]
    %v9725 = vsel %vm9720, %v9706, %v9724
    %9726 = vst [vmem:[#allocation4 + $0x4] sm:$0xf] %v9725
    %v9727 = vld [vmem:[#allocation4 + $0x8] sm:$0xf]
    %v9728 = vsel %vm9720, %v9707, %v9727
    %9729 = vst [vmem:[#allocation4 + $0x8] sm:$0xf] %v9728
    %v9730 = vld [vmem:[#allocation4 + $0xc] sm:$0xf]
    %v9731 = vsel %vm9720, %v9708, %v9730
    %9732 = vst [vmem:[#allocation4 + $0xc] sm:$0xf] %v9731
    %v9733 = vld [vmem:[#allocation4 + $0x10] sm:$0xf]
    %v9734 = vsel %vm9720, %v9709, %v9733
    %9735 = vst [vmem:[#allocation4 + $0x10] sm:$0xf] %v9734
    %v9736 = vld [vmem:[#allocation4 + $0x14] sm:$0xf]
    %v9737 = vsel %vm9720, %v9710, %v9736
    %9738 = vst [vmem:[#allocation4 + $0x14] sm:$0xf] %v9737
    %v9739 = vld [vmem:[#allocation4 + $0x18] sm:$0xf]
    %v9740 = vsel %vm9720, %v9711, %v9739
    %9741 = vst [vmem:[#allocation4 + $0x18] sm:$0xf] %v9740
    %v9742 = vld [vmem:[#allocation4 + $0x1c] sm:$0xf]
    %v9743 = vsel %vm9720, %v9712, %v9742
    %9744 = vst [vmem:[#allocation4 + $0x1c] sm:$0xf] %v9743
    %v9745 = vld [vmem:[#allocation4 + $0x20] sm:$0xf]
    %v9746 = vsel %vm9720, %v9713, %v9745
    %9747 = vst [vmem:[#allocation4 + $0x20] sm:$0xf] %v9746
    %v9748 = vld [vmem:[#allocation4 + $0x24] sm:$0xf]
    %v9749 = vsel %vm9720, %v9714, %v9748
    %9750 = vst [vmem:[#allocation4 + $0x24] sm:$0xf] %v9749
    %v9751 = vld [vmem:[#allocation4 + $0x28] sm:$0xf]
    %v9752 = vsel %vm9720, %v9715, %v9751
    %9753 = vst [vmem:[#allocation4 + $0x28] sm:$0xf] %v9752
    %v9754 = vld [vmem:[#allocation4 + $0x2c] sm:$0xf]
    %v9755 = vsel %vm9720, %v9716, %v9754
    %9756 = vst [vmem:[#allocation4 + $0x2c] sm:$0xf] %v9755
    %v9757 = vld [vmem:[#allocation4 + $0x30] sm:$0xf]
    %v9758 = vsel %vm9720, %v9717, %v9757
    %9759 = vst [vmem:[#allocation4 + $0x30] sm:$0xf] %v9758
    %v9760 = vld [vmem:[#allocation4 + $0x34] sm:$0xf]
    %v9761 = vsel %vm9720, %v9718, %v9760
    %9762 = vst [vmem:[#allocation4 + $0x34] sm:$0xf] %v9761
    %v9763 = vld [vmem:[#allocation4] sm:$0x7]
    %v9764 = vld [vmem:[#allocation4 + $0x4] sm:$0x7]
    %v9765 = vld [vmem:[#allocation4 + $0x8] sm:$0x7]
    %v9766 = vld [vmem:[#allocation4 + $0xc] sm:$0x7]
    %v9767 = vld [vmem:[#allocation4 + $0x1c] sm:$0x7]
    %v9768 = vld [vmem:[#allocation4 + $0x20] sm:$0x7]
    %v9769 = vld [vmem:[#allocation4 + $0x24] sm:$0x7]
    %v9770 = vld [vmem:[#allocation4 + $0x28] sm:$0x7]
    %vm9771 = vcmask 59392
    %vm9772 = vsmask.f32 2304
    %vm9773 = vmand %vm9771, %vm9772
    %v9774 = vld [vmem:[#allocation5] sm:$0x7]
    %v9775 = vsel %vm9773, %v9763, %v9774
    %9776 = vst [vmem:[#allocation5] sm:$0x7] %v9775
    %v9777 = vld [vmem:[#allocation5 + $0x4] sm:$0x7]
    %v9778 = vsel %vm9773, %v9764, %v9777
    %9779 = vst [vmem:[#allocation5 + $0x4] sm:$0x7] %v9778
    %v9780 = vld [vmem:[#allocation5 + $0x8] sm:$0x7]
    %v9781 = vsel %vm9773, %v9765, %v9780
    %9782 = vst [vmem:[#allocation5 + $0x8] sm:$0x7] %v9781
    %v9783 = vld [vmem:[#allocation5 + $0xc] sm:$0x7]
    %v9784 = vsel %vm9773, %v9766, %v9783
    %9785 = vst [vmem:[#allocation5 + $0xc] sm:$0x7] %v9784
    %v9786 = vld [vmem:[#allocation5 + $0x10] sm:$0x7]
    %v9787 = vsel %vm9773, %v9767, %v9786
    %9788 = vst [vmem:[#allocation5 + $0x10] sm:$0x7] %v9787
    %v9789 = vld [vmem:[#allocation5 + $0x14] sm:$0x7]
    %v9790 = vsel %vm9773, %v9768, %v9789
    %9791 = vst [vmem:[#allocation5 + $0x14] sm:$0x7] %v9790
    %v9792 = vld [vmem:[#allocation5 + $0x18] sm:$0x7]
    %v9793 = vsel %vm9773, %v9769, %v9792
    %9794 = vst [vmem:[#allocation5 + $0x18] sm:$0x7] %v9793
    %v9795 = vld [vmem:[#allocation5 + $0x1c] sm:$0x7]
    %v9796 = vsel %vm9773, %v9770, %v9795
    %9797 = vst [vmem:[#allocation5 + $0x1c] sm:$0x7] %v9796
    %v9798 = vld [vmem:[#allocation4] sm:$0x7]
    %v9799 = vld [vmem:[#allocation4 + $0x4] sm:$0x7]
    %v9800 = vld [vmem:[#allocation4 + $0x8] sm:$0x7]
    %v9801 = vld [vmem:[#allocation4 + $0xc] sm:$0x7]
    %v9802 = vld [vmem:[#allocation4 + $0x1c] sm:$0x7]
    %v9803 = vld [vmem:[#allocation4 + $0x20] sm:$0x7]
    %v9804 = vld [vmem:[#allocation4 + $0x24] sm:$0x7]
    %v9805 = vld [vmem:[#allocation4 + $0x28] sm:$0x7]
    %v9807 = vshrl.u32 %v9798, 16
    %v9809 = vrot.slane %v9807, 4
    %v9810 = vshll.u32 %v9798, 16
    %v9812 = vrot.slane %v9810, 5
    %v9813 = vor.u32 %v9809, %v9812
    %v9814 = vrot.slane %v9813, 4
    %v9816 = vshrl.u32 %v9799, 16
    %v9818 = vrot.slane %v9816, 4
    %v9819 = vshll.u32 %v9799, 16
    %v9821 = vrot.slane %v9819, 5
    %v9822 = vor.u32 %v9818, %v9821
    %v9823 = vrot.slane %v9822, 4
    %v9825 = vshrl.u32 %v9800, 16
    %v9827 = vrot.slane %v9825, 4
    %v9828 = vshll.u32 %v9800, 16
    %v9830 = vrot.slane %v9828, 5
    %v9831 = vor.u32 %v9827, %v9830
    %v9832 = vrot.slane %v9831, 4
    %v9834 = vshrl.u32 %v9801, 16
    %v9836 = vrot.slane %v9834, 4
    %v9837 = vshll.u32 %v9801, 16
    %v9839 = vrot.slane %v9837, 5
    %v9840 = vor.u32 %v9836, %v9839
    %v9841 = vrot.slane %v9840, 4
    %v9843 = vshrl.u32 %v9802, 16
    %v9845 = vrot.slane %v9843, 4
    %v9846 = vshll.u32 %v9802, 16
    %v9848 = vrot.slane %v9846, 5
    %v9849 = vor.u32 %v9845, %v9848
    %v9850 = vrot.slane %v9849, 4
    %v9852 = vshrl.u32 %v9803, 16
    %v9854 = vrot.slane %v9852, 4
    %v9855 = vshll.u32 %v9803, 16
    %v9857 = vrot.slane %v9855, 5
    %v9858 = vor.u32 %v9854, %v9857
    %v9859 = vrot.slane %v9858, 4
    %v9861 = vshrl.u32 %v9804, 16
    %v9863 = vrot.slane %v9861, 4
    %v9864 = vshll.u32 %v9804, 16
    %v9866 = vrot.slane %v9864, 5
    %v9867 = vor.u32 %v9863, %v9866
    %v9868 = vrot.slane %v9867, 4
    %v9870 = vshrl.u32 %v9805, 16
    %v9872 = vrot.slane %v9870, 4
    %v9873 = vshll.u32 %v9805, 16
    %v9875 = vrot.slane %v9873, 5
    %v9876 = vor.u32 %v9872, %v9875
    %v9877 = vrot.slane %v9876, 4
    %9878 = vrot.lane.b32.xlu0 %v9814, 8
    %v9879 = vpop.permute.xlu0 %9878
    %9880 = vrot.lane.b32.xlu0 %v9823, 8
    %v9881 = vpop.permute.xlu0 %9880
    %9882 = vrot.lane.b32.xlu0 %v9832, 8
    %v9883 = vpop.permute.xlu0 %9882
    %9884 = vrot.lane.b32.xlu0 %v9841, 8
    %v9885 = vpop.permute.xlu0 %9884
    %9886 = vrot.lane.b32.xlu0 %v9850, 8
    %v9887 = vpop.permute.xlu0 %9886
    %9888 = vrot.lane.b32.xlu0 %v9859, 8
    %v9889 = vpop.permute.xlu0 %9888
    %9890 = vrot.lane.b32.xlu0 %v9868, 8
    %v9891 = vpop.permute.xlu0 %9890
    %9892 = vrot.lane.b32.xlu0 %v9877, 8
    %v9893 = vpop.permute.xlu0 %9892
    %vm9902 = vcmask 124992
    %vm9903 = vmand %vm9902, %vm9772
    %v9904 = vld [vmem:[#allocation5] sm:$0x7]
    %v9905 = vsel %vm9903, %v9879, %v9904
    %9906 = vst [vmem:[#allocation5] sm:$0x7] %v9905
    %v9907 = vld [vmem:[#allocation5 + $0x4] sm:$0x7]
    %v9908 = vsel %vm9903, %v9881, %v9907
    %9909 = vst [vmem:[#allocation5 + $0x4] sm:$0x7] %v9908
    %v9910 = vld [vmem:[#allocation5 + $0x8] sm:$0x7]
    %v9911 = vsel %vm9903, %v9883, %v9910
    %9912 = vst [vmem:[#allocation5 + $0x8] sm:$0x7] %v9911
    %v9913 = vld [vmem:[#allocation5 + $0xc] sm:$0x7]
    %v9914 = vsel %vm9903, %v9885, %v9913
    %9915 = vst [vmem:[#allocation5 + $0xc] sm:$0x7] %v9914
    %v9916 = vld [vmem:[#allocation5 + $0x10] sm:$0x7]
    %v9917 = vsel %vm9903, %v9887, %v9916
    %9918 = vst [vmem:[#allocation5 + $0x10] sm:$0x7] %v9917
    %v9919 = vld [vmem:[#allocation5 + $0x14] sm:$0x7]
    %v9920 = vsel %vm9903, %v9889, %v9919
    %9921 = vst [vmem:[#allocation5 + $0x14] sm:$0x7] %v9920
    %v9922 = vld [vmem:[#allocation5 + $0x18] sm:$0x7]
    %v9923 = vsel %vm9903, %v9891, %v9922
    %9924 = vst [vmem:[#allocation5 + $0x18] sm:$0x7] %v9923
    %v9925 = vld [vmem:[#allocation5 + $0x1c] sm:$0x7]
    %v9926 = vsel %vm9903, %v9893, %v9925
    %9927 = vst [vmem:[#allocation5 + $0x1c] sm:$0x7] %v9926
    %v9928 = vld [vmem:[#allocation4] sm:$0xe]
    %v9929 = vld [vmem:[#allocation4 + $0x4] sm:$0xe]
    %v9930 = vld [vmem:[#allocation4 + $0x8] sm:$0xe]
    %v9931 = vld [vmem:[#allocation4 + $0xc] sm:$0xe]
    %v9932 = vld [vmem:[#allocation4 + $0x1c] sm:$0xe]
    %v9933 = vld [vmem:[#allocation4 + $0x20] sm:$0xe]
    %v9934 = vld [vmem:[#allocation4 + $0x24] sm:$0xe]
    %v9935 = vld [vmem:[#allocation4 + $0x28] sm:$0xe]
    %v9944 = vrot.slane %v9928, 5
    %v9945 = vrot.slane %v9944, 4
    %v9946 = vrot.slane %v9929, 5
    %v9947 = vrot.slane %v9946, 4
    %v9948 = vrot.slane %v9930, 5
    %v9949 = vrot.slane %v9948, 4
    %v9950 = vrot.slane %v9931, 5
    %v9951 = vrot.slane %v9950, 4
    %v9952 = vrot.slane %v9932, 5
    %v9953 = vrot.slane %v9952, 4
    %v9954 = vrot.slane %v9933, 5
    %v9955 = vrot.slane %v9954, 4
    %v9956 = vrot.slane %v9934, 5
    %v9957 = vrot.slane %v9956, 4
    %v9958 = vrot.slane %v9935, 5
    %v9959 = vrot.slane %v9958, 4
    %9960 = vrot.lane.b32.xlu0 %v9945, 16
    %v9961 = vpop.permute.xlu0 %9960
    %9962 = vrot.lane.b32.xlu0 %v9947, 16
    %v9963 = vpop.permute.xlu0 %9962
    %9964 = vrot.lane.b32.xlu0 %v9949, 16
    %v9965 = vpop.permute.xlu0 %9964
    %9966 = vrot.lane.b32.xlu0 %v9951, 16
    %v9967 = vpop.permute.xlu0 %9966
    %9968 = vrot.lane.b32.xlu0 %v9953, 16
    %v9969 = vpop.permute.xlu0 %9968
    %9970 = vrot.lane.b32.xlu0 %v9955, 16
    %v9971 = vpop.permute.xlu0 %9970
    %9972 = vrot.lane.b32.xlu0 %v9957, 16
    %v9973 = vpop.permute.xlu0 %9972
    %9974 = vrot.lane.b32.xlu0 %v9959, 16
    %v9975 = vpop.permute.xlu0 %9974
    %vm9984 = vcmask 190592
    %vm9985 = vmand %vm9984, %vm9772
    %v9986 = vld [vmem:[#allocation5] sm:$0x7]
    %v9987 = vsel %vm9985, %v9961, %v9986
    %9988 = vst [vmem:[#allocation5] sm:$0x7] %v9987
    %v9989 = vld [vmem:[#allocation5 + $0x4] sm:$0x7]
    %v9990 = vsel %vm9985, %v9963, %v9989
    %9991 = vst [vmem:[#allocation5 + $0x4] sm:$0x7] %v9990
    %v9992 = vld [vmem:[#allocation5 + $0x8] sm:$0x7]
    %v9993 = vsel %vm9985, %v9965, %v9992
    %9994 = vst [vmem:[#allocation5 + $0x8] sm:$0x7] %v9993
    %v9995 = vld [vmem:[#allocation5 + $0xc] sm:$0x7]
    %v9996 = vsel %vm9985, %v9967, %v9995
    %9997 = vst [vmem:[#allocation5 + $0xc] sm:$0x7] %v9996
    %v9998 = vld [vmem:[#allocation5 + $0x10] sm:$0x7]
    %v9999 = vsel %vm9985, %v9969, %v9998
    %10000 = vst [vmem:[#allocation5 + $0x10] sm:$0x7] %v9999
    %v10001 = vld [vmem:[#allocation5 + $0x14] sm:$0x7]
    %v10002 = vsel %vm9985, %v9971, %v10001
    %10003 = vst [vmem:[#allocation5 + $0x14] sm:$0x7] %v10002
    %v10004 = vld [vmem:[#allocation5 + $0x18] sm:$0x7]
    %v10005 = vsel %vm9985, %v9973, %v10004
    %10006 = vst [vmem:[#allocation5 + $0x18] sm:$0x7] %v10005
    %v10007 = vld [vmem:[#allocation5 + $0x1c] sm:$0x7]
    %v10008 = vsel %vm9985, %v9975, %v10007
    %10009 = vst [vmem:[#allocation5 + $0x1c] sm:$0x7] %v10008
    %s10010 = scalar_lea.vmem [#allocation4], 4
    %v10011 = vld [vmem:[%s10010] sm:$0x7]
    %v10012 = vld [vmem:[%s10010 + $0x4] sm:$0x7]
    %v10013 = vld [vmem:[%s10010 + $0x8] sm:$0x7]
    %v10014 = vld [vmem:[%s10010 + $0xc] sm:$0x7]
    %v10015 = vld [vmem:[%s10010 + $0x1c] sm:$0x7]
    %v10016 = vld [vmem:[%s10010 + $0x20] sm:$0x7]
    %v10017 = vld [vmem:[%s10010 + $0x24] sm:$0x7]
    %v10018 = vld [vmem:[%s10010 + $0x28] sm:$0x7]
    %10027 = vrot.lane.b32.xlu0 %v10011, 24
    %v10028 = vpop.permute.xlu0 %10027
    %10029 = vrot.lane.b32.xlu0 %v10012, 24
    %v10030 = vpop.permute.xlu0 %10029
    %10031 = vrot.lane.b32.xlu0 %v10013, 24
    %v10032 = vpop.permute.xlu0 %10031
    %10033 = vrot.lane.b32.xlu0 %v10014, 24
    %v10034 = vpop.permute.xlu0 %10033
    %10035 = vrot.lane.b32.xlu0 %v10015, 24
    %v10036 = vpop.permute.xlu0 %10035
    %10037 = vrot.lane.b32.xlu0 %v10016, 24
    %v10038 = vpop.permute.xlu0 %10037
    %10039 = vrot.lane.b32.xlu0 %v10017, 24
    %v10040 = vpop.permute.xlu0 %10039
    %10041 = vrot.lane.b32.xlu0 %v10018, 24
    %v10042 = vpop.permute.xlu0 %10041
    %vm10051 = vcmask 256192
    %vm10052 = vmand %vm10051, %vm9772
    %v10053 = vld [vmem:[#allocation5] sm:$0x7]
    %v10054 = vsel %vm10052, %v10028, %v10053
    %10055 = vst [vmem:[#allocation5] sm:$0x7] %v10054
    %v10056 = vld [vmem:[#allocation5 + $0x4] sm:$0x7]
    %v10057 = vsel %vm10052, %v10030, %v10056
    %10058 = vst [vmem:[#allocation5 + $0x4] sm:$0x7] %v10057
    %v10059 = vld [vmem:[#allocation5 + $0x8] sm:$0x7]
    %v10060 = vsel %vm10052, %v10032, %v10059
    %10061 = vst [vmem:[#allocation5 + $0x8] sm:$0x7] %v10060
    %v10062 = vld [vmem:[#allocation5 + $0xc] sm:$0x7]
    %v10063 = vsel %vm10052, %v10034, %v10062
    %10064 = vst [vmem:[#allocation5 + $0xc] sm:$0x7] %v10063
    %v10065 = vld [vmem:[#allocation5 + $0x10] sm:$0x7]
    %v10066 = vsel %vm10052, %v10036, %v10065
    %10067 = vst [vmem:[#allocation5 + $0x10] sm:$0x7] %v10066
    %v10068 = vld [vmem:[#allocation5 + $0x14] sm:$0x7]
    %v10069 = vsel %vm10052, %v10038, %v10068
    %10070 = vst [vmem:[#allocation5 + $0x14] sm:$0x7] %v10069
    %v10071 = vld [vmem:[#allocation5 + $0x18] sm:$0x7]
    %v10072 = vsel %vm10052, %v10040, %v10071
    %10073 = vst [vmem:[#allocation5 + $0x18] sm:$0x7] %v10072
    %v10074 = vld [vmem:[#allocation5 + $0x1c] sm:$0x7]
    %v10075 = vsel %vm10052, %v10042, %v10074
    %10076 = vst [vmem:[#allocation5 + $0x1c] sm:$0x7] %v10075
    %v10077 = vld [vmem:[%s10010] sm:$0x7]
    %v10078 = vld [vmem:[%s10010 + $0x4] sm:$0x7]
    %v10079 = vld [vmem:[%s10010 + $0x8] sm:$0x7]
    %v10080 = vld [vmem:[%s10010 + $0xc] sm:$0x7]
    %v10081 = vld [vmem:[%s10010 + $0x1c] sm:$0x7]
    %v10082 = vld [vmem:[%s10010 + $0x20] sm:$0x7]
    %v10083 = vld [vmem:[%s10010 + $0x24] sm:$0x7]
    %v10084 = vld [vmem:[%s10010 + $0x28] sm:$0x7]
    %v10086 = vshrl.u32 %v10077, 16
    %v10088 = vrot.slane %v10086, 4
    %v10089 = vshll.u32 %v10077, 16
    %v10091 = vrot.slane %v10089, 5
    %v10092 = vor.u32 %v10088, %v10091
    %v10093 = vrot.slane %v10092, 4
    %v10095 = vshrl.u32 %v10078, 16
    %v10097 = vrot.slane %v10095, 4
    %v10098 = vshll.u32 %v10078, 16
    %v10100 = vrot.slane %v10098, 5
    %v10101 = vor.u32 %v10097, %v10100
    %v10102 = vrot.slane %v10101, 4
    %v10104 = vshrl.u32 %v10079, 16
    %v10106 = vrot.slane %v10104, 4
    %v10107 = vshll.u32 %v10079, 16
    %v10109 = vrot.slane %v10107, 5
    %v10110 = vor.u32 %v10106, %v10109
    %v10111 = vrot.slane %v10110, 4
    %v10113 = vshrl.u32 %v10080, 16
    %v10115 = vrot.slane %v10113, 4
    %v10116 = vshll.u32 %v10080, 16
    %v10118 = vrot.slane %v10116, 5
    %v10119 = vor.u32 %v10115, %v10118
    %v10120 = vrot.slane %v10119, 4
    %v10122 = vshrl.u32 %v10081, 16
    %v10124 = vrot.slane %v10122, 4
    %v10125 = vshll.u32 %v10081, 16
    %v10127 = vrot.slane %v10125, 5
    %v10128 = vor.u32 %v10124, %v10127
    %v10129 = vrot.slane %v10128, 4
    %v10131 = vshrl.u32 %v10082, 16
    %v10133 = vrot.slane %v10131, 4
    %v10134 = vshll.u32 %v10082, 16
    %v10136 = vrot.slane %v10134, 5
    %v10137 = vor.u32 %v10133, %v10136
    %v10138 = vrot.slane %v10137, 4
    %v10140 = vshrl.u32 %v10083, 16
    %v10142 = vrot.slane %v10140, 4
    %v10143 = vshll.u32 %v10083, 16
    %v10145 = vrot.slane %v10143, 5
    %v10146 = vor.u32 %v10142, %v10145
    %v10147 = vrot.slane %v10146, 4
    %v10149 = vshrl.u32 %v10084, 16
    %v10151 = vrot.slane %v10149, 4
    %v10152 = vshll.u32 %v10084, 16
    %v10154 = vrot.slane %v10152, 5
    %v10155 = vor.u32 %v10151, %v10154
    %v10156 = vrot.slane %v10155, 4
    %10157 = vrot.lane.b32.xlu0 %v10093, 32
    %v10158 = vpop.permute.xlu0 %10157
    %10159 = vrot.lane.b32.xlu0 %v10102, 32
    %v10160 = vpop.permute.xlu0 %10159
    %10161 = vrot.lane.b32.xlu0 %v10111, 32
    %v10162 = vpop.permute.xlu0 %10161
    %10163 = vrot.lane.b32.xlu0 %v10120, 32
    %v10164 = vpop.permute.xlu0 %10163
    %10165 = vrot.lane.b32.xlu0 %v10129, 32
    %v10166 = vpop.permute.xlu0 %10165
    %10167 = vrot.lane.b32.xlu0 %v10138, 32
    %v10168 = vpop.permute.xlu0 %10167
    %10169 = vrot.lane.b32.xlu0 %v10147, 32
    %v10170 = vpop.permute.xlu0 %10169
    %10171 = vrot.lane.b32.xlu0 %v10156, 32
    %v10172 = vpop.permute.xlu0 %10171
    %vm10181 = vcmask 321792
    %vm10182 = vmand %vm10181, %vm9772
    %v10183 = vld [vmem:[#allocation5] sm:$0x7]
    %v10184 = vsel %vm10182, %v10158, %v10183
    %10185 = vst [vmem:[#allocation5] sm:$0x7] %v10184
    %v10186 = vld [vmem:[#allocation5 + $0x4] sm:$0x7]
    %v10187 = vsel %vm10182, %v10160, %v10186
    %10188 = vst [vmem:[#allocation5 + $0x4] sm:$0x7] %v10187
    %v10189 = vld [vmem:[#allocation5 + $0x8] sm:$0x7]
    %v10190 = vsel %vm10182, %v10162, %v10189
    %10191 = vst [vmem:[#allocation5 + $0x8] sm:$0x7] %v10190
    %v10192 = vld [vmem:[#allocation5 + $0xc] sm:$0x7]
    %v10193 = vsel %vm10182, %v10164, %v10192
    %10194 = vst [vmem:[#allocation5 + $0xc] sm:$0x7] %v10193
    %v10195 = vld [vmem:[#allocation5 + $0x10] sm:$0x7]
    %v10196 = vsel %vm10182, %v10166, %v10195
    %10197 = vst [vmem:[#allocation5 + $0x10] sm:$0x7] %v10196
    %v10198 = vld [vmem:[#allocation5 + $0x14] sm:$0x7]
    %v10199 = vsel %vm10182, %v10168, %v10198
    %10200 = vst [vmem:[#allocation5 + $0x14] sm:$0x7] %v10199
    %v10201 = vld [vmem:[#allocation5 + $0x18] sm:$0x7]
    %v10202 = vsel %vm10182, %v10170, %v10201
    %10203 = vst [vmem:[#allocation5 + $0x18] sm:$0x7] %v10202
    %v10204 = vld [vmem:[#allocation5 + $0x1c] sm:$0x7]
    %v10205 = vsel %vm10182, %v10172, %v10204
    %10206 = vst [vmem:[#allocation5 + $0x1c] sm:$0x7] %v10205
    %v10207 = vld [vmem:[%s10010] sm:$0xe]
    %v10208 = vld [vmem:[%s10010 + $0x4] sm:$0xe]
    %v10209 = vld [vmem:[%s10010 + $0x8] sm:$0xe]
    %v10210 = vld [vmem:[%s10010 + $0xc] sm:$0xe]
    %v10211 = vld [vmem:[%s10010 + $0x1c] sm:$0xe]
    %v10212 = vld [vmem:[%s10010 + $0x20] sm:$0xe]
    %v10213 = vld [vmem:[%s10010 + $0x24] sm:$0xe]
    %v10214 = vld [vmem:[%s10010 + $0x28] sm:$0xe]
    %v10223 = vrot.slane %v10207, 5
    %v10224 = vrot.slane %v10223, 4
    %v10225 = vrot.slane %v10208, 5
    %v10226 = vrot.slane %v10225, 4
    %v10227 = vrot.slane %v10209, 5
    %v10228 = vrot.slane %v10227, 4
    %v10229 = vrot.slane %v10210, 5
    %v10230 = vrot.slane %v10229, 4
    %v10231 = vrot.slane %v10211, 5
    %v10232 = vrot.slane %v10231, 4
    %v10233 = vrot.slane %v10212, 5
    %v10234 = vrot.slane %v10233, 4
    %v10235 = vrot.slane %v10213, 5
    %v10236 = vrot.slane %v10235, 4
    %v10237 = vrot.slane %v10214, 5
    %v10238 = vrot.slane %v10237, 4
    %10239 = vrot.lane.b32.xlu0 %v10224, 40
    %v10240 = vpop.permute.xlu0 %10239
    %10241 = vrot.lane.b32.xlu0 %v10226, 40
    %v10242 = vpop.permute.xlu0 %10241
    %10243 = vrot.lane.b32.xlu0 %v10228, 40
    %v10244 = vpop.permute.xlu0 %10243
    %10245 = vrot.lane.b32.xlu0 %v10230, 40
    %v10246 = vpop.permute.xlu0 %10245
    %10247 = vrot.lane.b32.xlu0 %v10232, 40
    %v10248 = vpop.permute.xlu0 %10247
    %10249 = vrot.lane.b32.xlu0 %v10234, 40
    %v10250 = vpop.permute.xlu0 %10249
    %10251 = vrot.lane.b32.xlu0 %v10236, 40
    %v10252 = vpop.permute.xlu0 %10251
    %10253 = vrot.lane.b32.xlu0 %v10238, 40
    %v10254 = vpop.permute.xlu0 %10253
    %vm10263 = vcmask 387392
    %vm10264 = vmand %vm10263, %vm9772
    %v10265 = vld [vmem:[#allocation5] sm:$0x7]
    %v10266 = vsel %vm10264, %v10240, %v10265
    %10267 = vst [vmem:[#allocation5] sm:$0x7] %v10266
    %v10268 = vld [vmem:[#allocation5 + $0x4] sm:$0x7]
    %v10269 = vsel %vm10264, %v10242, %v10268
    %10270 = vst [vmem:[#allocation5 + $0x4] sm:$0x7] %v10269
    %v10271 = vld [vmem:[#allocation5 + $0x8] sm:$0x7]
    %v10272 = vsel %vm10264, %v10244, %v10271
    %10273 = vst [vmem:[#allocation5 + $0x8] sm:$0x7] %v10272
    %v10274 = vld [vmem:[#allocation5 + $0xc] sm:$0x7]
    %v10275 = vsel %vm10264, %v10246, %v10274
    %10276 = vst [vmem:[#allocation5 + $0xc] sm:$0x7] %v10275
    %v10277 = vld [vmem:[#allocation5 + $0x10] sm:$0x7]
    %v10278 = vsel %vm10264, %v10248, %v10277
    %10279 = vst [vmem:[#allocation5 + $0x10] sm:$0x7] %v10278
    %v10280 = vld [vmem:[#allocation5 + $0x14] sm:$0x7]
    %v10281 = vsel %vm10264, %v10250, %v10280
    %10282 = vst [vmem:[#allocation5 + $0x14] sm:$0x7] %v10281
    %v10283 = vld [vmem:[#allocation5 + $0x18] sm:$0x7]
    %v10284 = vsel %vm10264, %v10252, %v10283
    %10285 = vst [vmem:[#allocation5 + $0x18] sm:$0x7] %v10284
    %v10286 = vld [vmem:[#allocation5 + $0x1c] sm:$0x7]
    %v10287 = vsel %vm10264, %v10254, %v10286
    %10288 = vst [vmem:[#allocation5 + $0x1c] sm:$0x7] %v10287
    %s10289 = scalar_lea.vmem [#allocation4], 8
    %v10290 = vld [vmem:[%s10289] sm:$0x7]
    %v10291 = vld [vmem:[%s10289 + $0x4] sm:$0x7]
    %v10292 = vld [vmem:[%s10289 + $0x8] sm:$0x7]
    %v10293 = vld [vmem:[%s10289 + $0xc] sm:$0x7]
    %v10294 = vld [vmem:[%s10289 + $0x1c] sm:$0x7]
    %v10295 = vld [vmem:[%s10289 + $0x20] sm:$0x7]
    %v10296 = vld [vmem:[%s10289 + $0x24] sm:$0x7]
    %v10297 = vld [vmem:[%s10289 + $0x28] sm:$0x7]
    %10306 = vrot.lane.b32.xlu0 %v10290, 48
    %v10307 = vpop.permute.xlu0 %10306
    %10308 = vrot.lane.b32.xlu0 %v10291, 48
    %v10309 = vpop.permute.xlu0 %10308
    %10310 = vrot.lane.b32.xlu0 %v10292, 48
    %v10311 = vpop.permute.xlu0 %10310
    %10312 = vrot.lane.b32.xlu0 %v10293, 48
    %v10313 = vpop.permute.xlu0 %10312
    %10314 = vrot.lane.b32.xlu0 %v10294, 48
    %v10315 = vpop.permute.xlu0 %10314
    %10316 = vrot.lane.b32.xlu0 %v10295, 48
    %v10317 = vpop.permute.xlu0 %10316
    %10318 = vrot.lane.b32.xlu0 %v10296, 48
    %v10319 = vpop.permute.xlu0 %10318
    %10320 = vrot.lane.b32.xlu0 %v10297, 48
    %v10321 = vpop.permute.xlu0 %10320
    %vm10330 = vcmask 452992
    %vm10331 = vmand %vm10330, %vm9772
    %v10332 = vld [vmem:[#allocation5] sm:$0x7]
    %v10333 = vsel %vm10331, %v10307, %v10332
    %10334 = vst [vmem:[#allocation5] sm:$0x7] %v10333
    %v10335 = vld [vmem:[#allocation5 + $0x4] sm:$0x7]
    %v10336 = vsel %vm10331, %v10309, %v10335
    %10337 = vst [vmem:[#allocation5 + $0x4] sm:$0x7] %v10336
    %v10338 = vld [vmem:[#allocation5 + $0x8] sm:$0x7]
    %v10339 = vsel %vm10331, %v10311, %v10338
    %10340 = vst [vmem:[#allocation5 + $0x8] sm:$0x7] %v10339
    %v10341 = vld [vmem:[#allocation5 + $0xc] sm:$0x7]
    %v10342 = vsel %vm10331, %v10313, %v10341
    %10343 = vst [vmem:[#allocation5 + $0xc] sm:$0x7] %v10342
    %v10344 = vld [vmem:[#allocation5 + $0x10] sm:$0x7]
    %v10345 = vsel %vm10331, %v10315, %v10344
    %10346 = vst [vmem:[#allocation5 + $0x10] sm:$0x7] %v10345
    %v10347 = vld [vmem:[#allocation5 + $0x14] sm:$0x7]
    %v10348 = vsel %vm10331, %v10317, %v10347
    %10349 = vst [vmem:[#allocation5 + $0x14] sm:$0x7] %v10348
    %v10350 = vld [vmem:[#allocation5 + $0x18] sm:$0x7]
    %v10351 = vsel %vm10331, %v10319, %v10350
    %10352 = vst [vmem:[#allocation5 + $0x18] sm:$0x7] %v10351
    %v10353 = vld [vmem:[#allocation5 + $0x1c] sm:$0x7]
    %v10354 = vsel %vm10331, %v10321, %v10353
    %10355 = vst [vmem:[#allocation5 + $0x1c] sm:$0x7] %v10354
    %v10356 = vld [vmem:[%s10289] sm:$0x7]
    %v10357 = vld [vmem:[%s10289 + $0x4] sm:$0x7]
    %v10358 = vld [vmem:[%s10289 + $0x8] sm:$0x7]
    %v10359 = vld [vmem:[%s10289 + $0xc] sm:$0x7]
    %v10360 = vld [vmem:[%s10289 + $0x1c] sm:$0x7]
    %v10361 = vld [vmem:[%s10289 + $0x20] sm:$0x7]
    %v10362 = vld [vmem:[%s10289 + $0x24] sm:$0x7]
    %v10363 = vld [vmem:[%s10289 + $0x28] sm:$0x7]
    %v10365 = vshrl.u32 %v10356, 16
    %v10367 = vrot.slane %v10365, 4
    %v10368 = vshll.u32 %v10356, 16
    %v10370 = vrot.slane %v10368, 5
    %v10371 = vor.u32 %v10367, %v10370
    %v10372 = vrot.slane %v10371, 4
    %v10374 = vshrl.u32 %v10357, 16
    %v10376 = vrot.slane %v10374, 4
    %v10377 = vshll.u32 %v10357, 16
    %v10379 = vrot.slane %v10377, 5
    %v10380 = vor.u32 %v10376, %v10379
    %v10381 = vrot.slane %v10380, 4
    %v10383 = vshrl.u32 %v10358, 16
    %v10385 = vrot.slane %v10383, 4
    %v10386 = vshll.u32 %v10358, 16
    %v10388 = vrot.slane %v10386, 5
    %v10389 = vor.u32 %v10385, %v10388
    %v10390 = vrot.slane %v10389, 4
    %v10392 = vshrl.u32 %v10359, 16
    %v10394 = vrot.slane %v10392, 4
    %v10395 = vshll.u32 %v10359, 16
    %v10397 = vrot.slane %v10395, 5
    %v10398 = vor.u32 %v10394, %v10397
    %v10399 = vrot.slane %v10398, 4
    %v10401 = vshrl.u32 %v10360, 16
    %v10403 = vrot.slane %v10401, 4
    %v10404 = vshll.u32 %v10360, 16
    %v10406 = vrot.slane %v10404, 5
    %v10407 = vor.u32 %v10403, %v10406
    %v10408 = vrot.slane %v10407, 4
    %v10410 = vshrl.u32 %v10361, 16
    %v10412 = vrot.slane %v10410, 4
    %v10413 = vshll.u32 %v10361, 16
    %v10415 = vrot.slane %v10413, 5
    %v10416 = vor.u32 %v10412, %v10415
    %v10417 = vrot.slane %v10416, 4
    %v10419 = vshrl.u32 %v10362, 16
    %v10421 = vrot.slane %v10419, 4
    %v10422 = vshll.u32 %v10362, 16
    %v10424 = vrot.slane %v10422, 5
    %v10425 = vor.u32 %v10421, %v10424
    %v10426 = vrot.slane %v10425, 4
    %v10428 = vshrl.u32 %v10363, 16
    %v10430 = vrot.slane %v10428, 4
    %v10431 = vshll.u32 %v10363, 16
    %v10433 = vrot.slane %v10431, 5
    %v10434 = vor.u32 %v10430, %v10433
    %v10435 = vrot.slane %v10434, 4
    %10436 = vrot.lane.b32.xlu0 %v10372, 56
    %v10437 = vpop.permute.xlu0 %10436
    %10438 = vrot.lane.b32.xlu0 %v10381, 56
    %v10439 = vpop.permute.xlu0 %10438
    %10440 = vrot.lane.b32.xlu0 %v10390, 56
    %v10441 = vpop.permute.xlu0 %10440
    %10442 = vrot.lane.b32.xlu0 %v10399, 56
    %v10443 = vpop.permute.xlu0 %10442
    %10444 = vrot.lane.b32.xlu0 %v10408, 56
    %v10445 = vpop.permute.xlu0 %10444
    %10446 = vrot.lane.b32.xlu0 %v10417, 56
    %v10447 = vpop.permute.xlu0 %10446
    %10448 = vrot.lane.b32.xlu0 %v10426, 56
    %v10449 = vpop.permute.xlu0 %10448
    %10450 = vrot.lane.b32.xlu0 %v10435, 56
    %v10451 = vpop.permute.xlu0 %10450
    %vm10460 = vcmask 518592
    %vm10461 = vmand %vm10460, %vm9772
    %v10462 = vld [vmem:[#allocation5] sm:$0x7]
    %v10463 = vsel %vm10461, %v10437, %v10462
    %10464 = vst [vmem:[#allocation5] sm:$0x7] %v10463
    %v10465 = vld [vmem:[#allocation5 + $0x4] sm:$0x7]
    %v10466 = vsel %vm10461, %v10439, %v10465
    %10467 = vst [vmem:[#allocation5 + $0x4] sm:$0x7] %v10466
    %v10468 = vld [vmem:[#allocation5 + $0x8] sm:$0x7]
    %v10469 = vsel %vm10461, %v10441, %v10468
    %10470 = vst [vmem:[#allocation5 + $0x8] sm:$0x7] %v10469
    %v10471 = vld [vmem:[#allocation5 + $0xc] sm:$0x7]
    %v10472 = vsel %vm10461, %v10443, %v10471
    %10473 = vst [vmem:[#allocation5 + $0xc] sm:$0x7] %v10472
    %v10474 = vld [vmem:[#allocation5 + $0x10] sm:$0x7]
    %v10475 = vsel %vm10461, %v10445, %v10474
    %10476 = vst [vmem:[#allocation5 + $0x10] sm:$0x7] %v10475
    %v10477 = vld [vmem:[#allocation5 + $0x14] sm:$0x7]
    %v10478 = vsel %vm10461, %v10447, %v10477
    %10479 = vst [vmem:[#allocation5 + $0x14] sm:$0x7] %v10478
    %v10480 = vld [vmem:[#allocation5 + $0x18] sm:$0x7]
    %v10481 = vsel %vm10461, %v10449, %v10480
    %10482 = vst [vmem:[#allocation5 + $0x18] sm:$0x7] %v10481
    %v10483 = vld [vmem:[#allocation5 + $0x1c] sm:$0x7]
    %v10484 = vsel %vm10461, %v10451, %v10483
    %10485 = vst [vmem:[#allocation5 + $0x1c] sm:$0x7] %v10484
    %v10486 = vld [vmem:[%s10289] sm:$0xe]
    %v10487 = vld [vmem:[%s10289 + $0x4] sm:$0xe]
    %v10488 = vld [vmem:[%s10289 + $0x8] sm:$0xe]
    %v10489 = vld [vmem:[%s10289 + $0xc] sm:$0xe]
    %v10490 = vld [vmem:[%s10289 + $0x1c] sm:$0xe]
    %v10491 = vld [vmem:[%s10289 + $0x20] sm:$0xe]
    %v10492 = vld [vmem:[%s10289 + $0x24] sm:$0xe]
    %v10493 = vld [vmem:[%s10289 + $0x28] sm:$0xe]
    %v10502 = vrot.slane %v10486, 5
    %v10503 = vrot.slane %v10502, 4
    %v10504 = vrot.slane %v10487, 5
    %v10505 = vrot.slane %v10504, 4
    %v10506 = vrot.slane %v10488, 5
    %v10507 = vrot.slane %v10506, 4
    %v10508 = vrot.slane %v10489, 5
    %v10509 = vrot.slane %v10508, 4
    %v10510 = vrot.slane %v10490, 5
    %v10511 = vrot.slane %v10510, 4
    %v10512 = vrot.slane %v10491, 5
    %v10513 = vrot.slane %v10512, 4
    %v10514 = vrot.slane %v10492, 5
    %v10515 = vrot.slane %v10514, 4
    %v10516 = vrot.slane %v10493, 5
    %v10517 = vrot.slane %v10516, 4
    %10518 = vrot.lane.b32.xlu0 %v10503, 64
    %v10519 = vpop.permute.xlu0 %10518
    %10520 = vrot.lane.b32.xlu0 %v10505, 64
    %v10521 = vpop.permute.xlu0 %10520
    %10522 = vrot.lane.b32.xlu0 %v10507, 64
    %v10523 = vpop.permute.xlu0 %10522
    %10524 = vrot.lane.b32.xlu0 %v10509, 64
    %v10525 = vpop.permute.xlu0 %10524
    %10526 = vrot.lane.b32.xlu0 %v10511, 64
    %v10527 = vpop.permute.xlu0 %10526
    %10528 = vrot.lane.b32.xlu0 %v10513, 64
    %v10529 = vpop.permute.xlu0 %10528
    %10530 = vrot.lane.b32.xlu0 %v10515, 64
    %v10531 = vpop.permute.xlu0 %10530
    %10532 = vrot.lane.b32.xlu0 %v10517, 64
    %v10533 = vpop.permute.xlu0 %10532
    %vm10542 = vcmask 584192
    %vm10543 = vmand %vm10542, %vm9772
    %v10544 = vld [vmem:[#allocation5] sm:$0x7]
    %v10545 = vsel %vm10543, %v10519, %v10544
    %10546 = vst [vmem:[#allocation5] sm:$0x7] %v10545
    %v10547 = vld [vmem:[#allocation5 + $0x4] sm:$0x7]
    %v10548 = vsel %vm10543, %v10521, %v10547
    %10549 = vst [vmem:[#allocation5 + $0x4] sm:$0x7] %v10548
    %v10550 = vld [vmem:[#allocation5 + $0x8] sm:$0x7]
    %v10551 = vsel %vm10543, %v10523, %v10550
    %10552 = vst [vmem:[#allocation5 + $0x8] sm:$0x7] %v10551
    %v10553 = vld [vmem:[#allocation5 + $0xc] sm:$0x7]
    %v10554 = vsel %vm10543, %v10525, %v10553
    %10555 = vst [vmem:[#allocation5 + $0xc] sm:$0x7] %v10554
    %v10556 = vld [vmem:[#allocation5 + $0x10] sm:$0x7]
    %v10557 = vsel %vm10543, %v10527, %v10556
    %10558 = vst [vmem:[#allocation5 + $0x10] sm:$0x7] %v10557
    %v10559 = vld [vmem:[#allocation5 + $0x14] sm:$0x7]
    %v10560 = vsel %vm10543, %v10529, %v10559
    %10561 = vst [vmem:[#allocation5 + $0x14] sm:$0x7] %v10560
    %v10562 = vld [vmem:[#allocation5 + $0x18] sm:$0x7]
    %v10563 = vsel %vm10543, %v10531, %v10562
    %10564 = vst [vmem:[#allocation5 + $0x18] sm:$0x7] %v10563
    %v10565 = vld [vmem:[#allocation5 + $0x1c] sm:$0x7]
    %v10566 = vsel %vm10543, %v10533, %v10565
    %10567 = vst [vmem:[#allocation5 + $0x1c] sm:$0x7] %v10566
    %v10568 = vld [vmem:[#allocation5] sm:$0x7]
    %v10569 = vld [vmem:[#allocation5 + $0x4] sm:$0x7]
    %v10570 = vld [vmem:[#allocation5 + $0x8] sm:$0x7]
    %v10571 = vld [vmem:[#allocation5 + $0xc] sm:$0x7]
    %v10572 = vld [vmem:[#allocation5 + $0x10] sm:$0x7]
    %v10573 = vld [vmem:[#allocation5 + $0x14] sm:$0x7]
    %v10574 = vld [vmem:[#allocation5 + $0x18] sm:$0x7]
    %v10575 = vld [vmem:[#allocation5 + $0x1c] sm:$0x7]
    %v10576 = vld [vmem:[%s4] sm:$0xf]
    %v10577 = vld [vmem:[%s4 + $0x4] sm:$0xf]
    %v10578 = vld [vmem:[%s4 + $0x8] sm:$0xf]
    %v10579 = vld [vmem:[%s4 + $0xc] sm:$0xf]
    %v10580 = vld [vmem:[%s4 + $0x10] sm:$0xf]
    %v10581 = vld [vmem:[%s4 + $0x14] sm:$0xf]
    %v10582 = vld [vmem:[%s4 + $0x18] sm:$0xf]
    %v10583 = vld [vmem:[%s4 + $0x1c] sm:$0xf]
    %v10584 = vld [vmem:[%s4 + $0x20] sm:$0xf]
    %v10594 = vunpack.c.l.b16 %v10576
    %v10595 = vunpack.c.l.b16 %v10577
    %v10596 = vunpack.c.l.b16 %v10578
    %v10597 = vunpack.c.l.b16 %v10579
    %v10598 = vunpack.c.l.b16 %v10580
    %v10599 = vunpack.c.l.b16 %v10581
    %v10600 = vunpack.c.l.b16 %v10582
    %v10601 = vunpack.c.l.b16 %v10583
    %v10602 = vunpack.c.l.b16 %v10584
    %v10603 = vpack.c.b16 %v10595, %v10594
    %v10604 = vpack.c.b16 %v10597, %v10596
    %v10605 = vpack.c.b16 %v10599, %v10598
    %v10606 = vpack.c.b16 %v10601, %v10600
    %v10607 = vpack.c.b16 %v10602, %v10602
    %vm10612 = vcmask 588800
    %v10614 = vsel %vm10612, %v10568, 0
    %vm10616 = vcmask 1043456
    %v10618 = vsel %vm10616, %v10607, 0
    %10620 = vmatprep.subr.bf16.mxu0 0
    %10621 = vmatpush1.bf16.msra.mxu0 %v10603
    %10622 = vmatprep.subr.bf16.mxu0 0
    %10623 = vmatpush1.bf16.msra.mxu0 %v10604
    %10624 = vmatprep.subr.bf16.mxu0 0
    %10625 = vmatpush1.bf16.msra.mxu0 %v10605
    %10626 = vmatprep.subr.bf16.mxu0 0
    %10627 = vmatpush1.bf16.msra.mxu0 %v10606
    %10628 = vmatprep.subr.bf16.mxu0 0
    %10629 = vmatpush1.bf16.msra.mxu0 %v10618
    %10630 = vmatprep.subr.bf16.mxu0 0
    %10631 = vmatpush1.bf16.msra.mxu0 0
    %10632 = vmatprep.subr.bf16.mxu0 0
    %10633 = vmatpush1.bf16.msra.mxu0 0
    %10634 = vmatprep.subr.bf16.mxu0 0
    %10635 = vmatpush1.bf16.msra.mxu0 0
    %10636 = vmatprep.subr.bf16.mxu0 0
    %10637 = vmatpush1.bf16.msra.mxu0 0
    %10638 = vmatprep.subr.bf16.mxu0 0
    %10639 = vmatpush1.bf16.msra.mxu0 0
    %10640 = vmatprep.subr.bf16.mxu0 0
    %10641 = vmatpush1.bf16.msra.mxu0 0
    %10642 = vmatprep.subr.bf16.mxu0 0
    %10643 = vmatpush1.bf16.msra.mxu0 0
    %10644 = vmatprep.subr.bf16.mxu0 0
    %10645 = vmatpush1.bf16.msra.mxu0 0
    %10646 = vmatprep.subr.bf16.mxu0 0
    %10647 = vmatpush1.bf16.msra.mxu0 0
    %10648 = vmatprep.subr.bf16.mxu0 0
    %10649 = vmatpush1.bf16.msra.mxu0 0
    %10650 = vmatprep.subr.bf16.mxu0 0
    %10651 = vmatpush1.bf16.msra.mxu0 0
    %10652 = vmatprep.mubr.bf16.mxu0 0
    %10653 = vmatmul.mubr.bf16.gmra.mrb[0].mxu0 %v10614
    %v10654 = vpop.f32.mrb[0].mxu0
    %v10655 = vadd.f32 0.0, %v10654
    %v10656 = vpop.f32.mrb[0].mxu0
    %v10657 = vpop.f32.mrb[0].mxu0
    %v10658 = vpop.f32.mrb[0].mxu0
    %10659 = vdwg.mxu0
    %v10661 = vsel %vm10612, %v10569, 0
    %10663 = vmatprep.subr.bf16.mxu0 0
    %10664 = vmatpush1.bf16.msra.mxu0 %v10603
    %10665 = vmatprep.subr.bf16.mxu0 0
    %10666 = vmatpush1.bf16.msra.mxu0 %v10604
    %10667 = vmatprep.subr.bf16.mxu0 0
    %10668 = vmatpush1.bf16.msra.mxu0 %v10605
    %10669 = vmatprep.subr.bf16.mxu0 0
    %10670 = vmatpush1.bf16.msra.mxu0 %v10606
    %10671 = vmatprep.subr.bf16.mxu0 0
    %10672 = vmatpush1.bf16.msra.mxu0 %v10618
    %10673 = vmatprep.subr.bf16.mxu0 0
    %10674 = vmatpush1.bf16.msra.mxu0 0
    %10675 = vmatprep.subr.bf16.mxu0 0
    %10676 = vmatpush1.bf16.msra.mxu0 0
    %10677 = vmatprep.subr.bf16.mxu0 0
    %10678 = vmatpush1.bf16.msra.mxu0 0
    %10679 = vmatprep.subr.bf16.mxu0 0
    %10680 = vmatpush1.bf16.msra.mxu0 0
    %10681 = vmatprep.subr.bf16.mxu0 0
    %10682 = vmatpush1.bf16.msra.mxu0 0
    %10683 = vmatprep.subr.bf16.mxu0 0
    %10684 = vmatpush1.bf16.msra.mxu0 0
    %10685 = vmatprep.subr.bf16.mxu0 0
    %10686 = vmatpush1.bf16.msra.mxu0 0
    %10687 = vmatprep.subr.bf16.mxu0 0
    %10688 = vmatpush1.bf16.msra.mxu0 0
    %10689 = vmatprep.subr.bf16.mxu0 0
    %10690 = vmatpush1.bf16.msra.mxu0 0
    %10691 = vmatprep.subr.bf16.mxu0 0
    %10692 = vmatpush1.bf16.msra.mxu0 0
    %10693 = vmatprep.subr.bf16.mxu0 0
    %10694 = vmatpush1.bf16.msra.mxu0 0
    %10695 = vmatprep.mubr.bf16.mxu0 0
    %10696 = vmatmul.mubr.bf16.gmra.mrb[0].mxu0 %v10661
    %v10697 = vpop.f32.mrb[0].mxu0
    %v10698 = vadd.f32 0.0, %v10697
    %v10699 = vpop.f32.mrb[0].mxu0
    %v10700 = vpop.f32.mrb[0].mxu0
    %v10701 = vpop.f32.mrb[0].mxu0
    %10702 = vdwg.mxu0
    %v10704 = vsel %vm10612, %v10570, 0
    %10706 = vmatprep.subr.bf16.mxu0 0
    %10707 = vmatpush1.bf16.msra.mxu0 %v10603
    %10708 = vmatprep.subr.bf16.mxu0 0
    %10709 = vmatpush1.bf16.msra.mxu0 %v10604
    %10710 = vmatprep.subr.bf16.mxu0 0
    %10711 = vmatpush1.bf16.msra.mxu0 %v10605
    %10712 = vmatprep.subr.bf16.mxu0 0
    %10713 = vmatpush1.bf16.msra.mxu0 %v10606
    %10714 = vmatprep.subr.bf16.mxu0 0
    %10715 = vmatpush1.bf16.msra.mxu0 %v10618
    %10716 = vmatprep.subr.bf16.mxu0 0
    %10717 = vmatpush1.bf16.msra.mxu0 0
    %10718 = vmatprep.subr.bf16.mxu0 0
    %10719 = vmatpush1.bf16.msra.mxu0 0
    %10720 = vmatprep.subr.bf16.mxu0 0
    %10721 = vmatpush1.bf16.msra.mxu0 0
    %10722 = vmatprep.subr.bf16.mxu0 0
    %10723 = vmatpush1.bf16.msra.mxu0 0
    %10724 = vmatprep.subr.bf16.mxu0 0
    %10725 = vmatpush1.bf16.msra.mxu0 0
    %10726 = vmatprep.subr.bf16.mxu0 0
    %10727 = vmatpush1.bf16.msra.mxu0 0
    %10728 = vmatprep.subr.bf16.mxu0 0
    %10729 = vmatpush1.bf16.msra.mxu0 0
    %10730 = vmatprep.subr.bf16.mxu0 0
    %10731 = vmatpush1.bf16.msra.mxu0 0
    %10732 = vmatprep.subr.bf16.mxu0 0
    %10733 = vmatpush1.bf16.msra.mxu0 0
    %10734 = vmatprep.subr.bf16.mxu0 0
    %10735 = vmatpush1.bf16.msra.mxu0 0
    %10736 = vmatprep.subr.bf16.mxu0 0
    %10737 = vmatpush1.bf16.msra.mxu0 0
    %10738 = vmatprep.mubr.bf16.mxu0 0
    %10739 = vmatmul.mubr.bf16.gmra.mrb[0].mxu0 %v10704
    %v10740 = vpop.f32.mrb[0].mxu0
    %v10741 = vadd.f32 0.0, %v10740
    %v10742 = vpop.f32.mrb[0].mxu0
    %v10743 = vpop.f32.mrb[0].mxu0
    %v10744 = vpop.f32.mrb[0].mxu0
    %10745 = vdwg.mxu0
    %v10747 = vsel %vm10612, %v10571, 0
    %10749 = vmatprep.subr.bf16.mxu0 0
    %10750 = vmatpush1.bf16.msra.mxu0 %v10603
    %10751 = vmatprep.subr.bf16.mxu0 0
    %10752 = vmatpush1.bf16.msra.mxu0 %v10604
    %10753 = vmatprep.subr.bf16.mxu0 0
    %10754 = vmatpush1.bf16.msra.mxu0 %v10605
    %10755 = vmatprep.subr.bf16.mxu0 0
    %10756 = vmatpush1.bf16.msra.mxu0 %v10606
    %10757 = vmatprep.subr.bf16.mxu0 0
    %10758 = vmatpush1.bf16.msra.mxu0 %v10618
    %10759 = vmatprep.subr.bf16.mxu0 0
    %10760 = vmatpush1.bf16.msra.mxu0 0
    %10761 = vmatprep.subr.bf16.mxu0 0
    %10762 = vmatpush1.bf16.msra.mxu0 0
    %10763 = vmatprep.subr.bf16.mxu0 0
    %10764 = vmatpush1.bf16.msra.mxu0 0
    %10765 = vmatprep.subr.bf16.mxu0 0
    %10766 = vmatpush1.bf16.msra.mxu0 0
    %10767 = vmatprep.subr.bf16.mxu0 0
    %10768 = vmatpush1.bf16.msra.mxu0 0
    %10769 = vmatprep.subr.bf16.mxu0 0
    %10770 = vmatpush1.bf16.msra.mxu0 0
    %10771 = vmatprep.subr.bf16.mxu0 0
    %10772 = vmatpush1.bf16.msra.mxu0 0
    %10773 = vmatprep.subr.bf16.mxu0 0
    %10774 = vmatpush1.bf16.msra.mxu0 0
    %10775 = vmatprep.subr.bf16.mxu0 0
    %10776 = vmatpush1.bf16.msra.mxu0 0
    %10777 = vmatprep.subr.bf16.mxu0 0
    %10778 = vmatpush1.bf16.msra.mxu0 0
    %10779 = vmatprep.subr.bf16.mxu0 0
    %10780 = vmatpush1.bf16.msra.mxu0 0
    %10781 = vmatprep.mubr.bf16.mxu0 0
    %10782 = vmatmul.mubr.bf16.gmra.mrb[0].mxu0 %v10747
    %v10783 = vpop.f32.mrb[0].mxu0
    %v10784 = vadd.f32 0.0, %v10783
    %v10785 = vpop.f32.mrb[0].mxu0
    %v10786 = vpop.f32.mrb[0].mxu0
    %v10787 = vpop.f32.mrb[0].mxu0
    %10788 = vdwg.mxu0
    %v10790 = vsel %vm10612, %v10572, 0
    %10792 = vmatprep.subr.bf16.mxu0 0
    %10793 = vmatpush1.bf16.msra.mxu0 %v10603
    %10794 = vmatprep.subr.bf16.mxu0 0
    %10795 = vmatpush1.bf16.msra.mxu0 %v10604
    %10796 = vmatprep.subr.bf16.mxu0 0
    %10797 = vmatpush1.bf16.msra.mxu0 %v10605
    %10798 = vmatprep.subr.bf16.mxu0 0
    %10799 = vmatpush1.bf16.msra.mxu0 %v10606
    %10800 = vmatprep.subr.bf16.mxu0 0
    %10801 = vmatpush1.bf16.msra.mxu0 %v10618
    %10802 = vmatprep.subr.bf16.mxu0 0
    %10803 = vmatpush1.bf16.msra.mxu0 0
    %10804 = vmatprep.subr.bf16.mxu0 0
    %10805 = vmatpush1.bf16.msra.mxu0 0
    %10806 = vmatprep.subr.bf16.mxu0 0
    %10807 = vmatpush1.bf16.msra.mxu0 0
    %10808 = vmatprep.subr.bf16.mxu0 0
    %10809 = vmatpush1.bf16.msra.mxu0 0
    %10810 = vmatprep.subr.bf16.mxu0 0
    %10811 = vmatpush1.bf16.msra.mxu0 0
    %10812 = vmatprep.subr.bf16.mxu0 0
    %10813 = vmatpush1.bf16.msra.mxu0 0
    %10814 = vmatprep.subr.bf16.mxu0 0
    %10815 = vmatpush1.bf16.msra.mxu0 0
    %10816 = vmatprep.subr.bf16.mxu0 0
    %10817 = vmatpush1.bf16.msra.mxu0 0
    %10818 = vmatprep.subr.bf16.mxu0 0
    %10819 = vmatpush1.bf16.msra.mxu0 0
    %10820 = vmatprep.subr.bf16.mxu0 0
    %10821 = vmatpush1.bf16.msra.mxu0 0
    %10822 = vmatprep.subr.bf16.mxu0 0
    %10823 = vmatpush1.bf16.msra.mxu0 0
    %10824 = vmatprep.mubr.bf16.mxu0 0
    %10825 = vmatmul.mubr.bf16.gmra.mrb[0].mxu0 %v10790
    %v10826 = vpop.f32.mrb[0].mxu0
    %v10827 = vadd.f32 0.0, %v10826
    %v10828 = vpop.f32.mrb[0].mxu0
    %v10829 = vpop.f32.mrb[0].mxu0
    %v10830 = vpop.f32.mrb[0].mxu0
    %10831 = vdwg.mxu0
    %v10833 = vsel %vm10612, %v10573, 0
    %10835 = vmatprep.subr.bf16.mxu0 0
    %10836 = vmatpush1.bf16.msra.mxu0 %v10603
    %10837 = vmatprep.subr.bf16.mxu0 0
    %10838 = vmatpush1.bf16.msra.mxu0 %v10604
    %10839 = vmatprep.subr.bf16.mxu0 0
    %10840 = vmatpush1.bf16.msra.mxu0 %v10605
    %10841 = vmatprep.subr.bf16.mxu0 0
    %10842 = vmatpush1.bf16.msra.mxu0 %v10606
    %10843 = vmatprep.subr.bf16.mxu0 0
    %10844 = vmatpush1.bf16.msra.mxu0 %v10618
    %10845 = vmatprep.subr.bf16.mxu0 0
    %10846 = vmatpush1.bf16.msra.mxu0 0
    %10847 = vmatprep.subr.bf16.mxu0 0
    %10848 = vmatpush1.bf16.msra.mxu0 0
    %10849 = vmatprep.subr.bf16.mxu0 0
    %10850 = vmatpush1.bf16.msra.mxu0 0
    %10851 = vmatprep.subr.bf16.mxu0 0
    %10852 = vmatpush1.bf16.msra.mxu0 0
    %10853 = vmatprep.subr.bf16.mxu0 0
    %10854 = vmatpush1.bf16.msra.mxu0 0
    %10855 = vmatprep.subr.bf16.mxu0 0
    %10856 = vmatpush1.bf16.msra.mxu0 0
    %10857 = vmatprep.subr.bf16.mxu0 0
    %10858 = vmatpush1.bf16.msra.mxu0 0
    %10859 = vmatprep.subr.bf16.mxu0 0
    %10860 = vmatpush1.bf16.msra.mxu0 0
    %10861 = vmatprep.subr.bf16.mxu0 0
    %10862 = vmatpush1.bf16.msra.mxu0 0
    %10863 = vmatprep.subr.bf16.mxu0 0
    %10864 = vmatpush1.bf16.msra.mxu0 0
    %10865 = vmatprep.subr.bf16.mxu0 0
    %10866 = vmatpush1.bf16.msra.mxu0 0
    %10867 = vmatprep.mubr.bf16.mxu0 0
    %10868 = vmatmul.mubr.bf16.gmra.mrb[0].mxu0 %v10833
    %v10869 = vpop.f32.mrb[0].mxu0
    %v10870 = vadd.f32 0.0, %v10869
    %v10871 = vpop.f32.mrb[0].mxu0
    %v10872 = vpop.f32.mrb[0].mxu0
    %v10873 = vpop.f32.mrb[0].mxu0
    %10874 = vdwg.mxu0
    %v10876 = vsel %vm10612, %v10574, 0
    %10878 = vmatprep.subr.bf16.mxu0 0
    %10879 = vmatpush1.bf16.msra.mxu0 %v10603
    %10880 = vmatprep.subr.bf16.mxu0 0
    %10881 = vmatpush1.bf16.msra.mxu0 %v10604
    %10882 = vmatprep.subr.bf16.mxu0 0
    %10883 = vmatpush1.bf16.msra.mxu0 %v10605
    %10884 = vmatprep.subr.bf16.mxu0 0
    %10885 = vmatpush1.bf16.msra.mxu0 %v10606
    %10886 = vmatprep.subr.bf16.mxu0 0
    %10887 = vmatpush1.bf16.msra.mxu0 %v10618
    %10888 = vmatprep.subr.bf16.mxu0 0
    %10889 = vmatpush1.bf16.msra.mxu0 0
    %10890 = vmatprep.subr.bf16.mxu0 0
    %10891 = vmatpush1.bf16.msra.mxu0 0
    %10892 = vmatprep.subr.bf16.mxu0 0
    %10893 = vmatpush1.bf16.msra.mxu0 0
    %10894 = vmatprep.subr.bf16.mxu0 0
    %10895 = vmatpush1.bf16.msra.mxu0 0
    %10896 = vmatprep.subr.bf16.mxu0 0
    %10897 = vmatpush1.bf16.msra.mxu0 0
    %10898 = vmatprep.subr.bf16.mxu0 0
    %10899 = vmatpush1.bf16.msra.mxu0 0
    %10900 = vmatprep.subr.bf16.mxu0 0
    %10901 = vmatpush1.bf16.msra.mxu0 0
    %10902 = vmatprep.subr.bf16.mxu0 0
    %10903 = vmatpush1.bf16.msra.mxu0 0
    %10904 = vmatprep.subr.bf16.mxu0 0
    %10905 = vmatpush1.bf16.msra.mxu0 0
    %10906 = vmatprep.subr.bf16.mxu0 0
    %10907 = vmatpush1.bf16.msra.mxu0 0
    %10908 = vmatprep.subr.bf16.mxu0 0
    %10909 = vmatpush1.bf16.msra.mxu0 0
    %10910 = vmatprep.mubr.bf16.mxu0 0
    %10911 = vmatmul.mubr.bf16.gmra.mrb[0].mxu0 %v10876
    %v10912 = vpop.f32.mrb[0].mxu0
    %v10913 = vadd.f32 0.0, %v10912
    %v10914 = vpop.f32.mrb[0].mxu0
    %v10915 = vpop.f32.mrb[0].mxu0
    %v10916 = vpop.f32.mrb[0].mxu0
    %10917 = vdwg.mxu0
    %v10919 = vsel %vm10612, %v10575, 0
    %10921 = vmatprep.subr.bf16.mxu0 0
    %10922 = vmatpush1.bf16.msra.mxu0 %v10603
    %10923 = vmatprep.subr.bf16.mxu0 0
    %10924 = vmatpush1.bf16.msra.mxu0 %v10604
    %10925 = vmatprep.subr.bf16.mxu0 0
    %10926 = vmatpush1.bf16.msra.mxu0 %v10605
    %10927 = vmatprep.subr.bf16.mxu0 0
    %10928 = vmatpush1.bf16.msra.mxu0 %v10606
    %10929 = vmatprep.subr.bf16.mxu0 0
    %10930 = vmatpush1.bf16.msra.mxu0 %v10618
    %10931 = vmatprep.subr.bf16.mxu0 0
    %10932 = vmatpush1.bf16.msra.mxu0 0
    %10933 = vmatprep.subr.bf16.mxu0 0
    %10934 = vmatpush1.bf16.msra.mxu0 0
    %10935 = vmatprep.subr.bf16.mxu0 0
    %10936 = vmatpush1.bf16.msra.mxu0 0
    %10937 = vmatprep.subr.bf16.mxu0 0
    %10938 = vmatpush1.bf16.msra.mxu0 0
    %10939 = vmatprep.subr.bf16.mxu0 0
    %10940 = vmatpush1.bf16.msra.mxu0 0
    %10941 = vmatprep.subr.bf16.mxu0 0
    %10942 = vmatpush1.bf16.msra.mxu0 0
    %10943 = vmatprep.subr.bf16.mxu0 0
    %10944 = vmatpush1.bf16.msra.mxu0 0
    %10945 = vmatprep.subr.bf16.mxu0 0
    %10946 = vmatpush1.bf16.msra.mxu0 0
    %10947 = vmatprep.subr.bf16.mxu0 0
    %10948 = vmatpush1.bf16.msra.mxu0 0
    %10949 = vmatprep.subr.bf16.mxu0 0
    %10950 = vmatpush1.bf16.msra.mxu0 0
    %10951 = vmatprep.subr.bf16.mxu0 0
    %10952 = vmatpush1.bf16.msra.mxu0 0
    %10953 = vmatprep.mubr.bf16.mxu0 0
    %10954 = vmatmul.mubr.bf16.gmra.mrb[0].mxu0 %v10919
    %v10955 = vpop.f32.mrb[0].mxu0
    %v10956 = vadd.f32 0.0, %v10955
    %v10957 = vpop.f32.mrb[0].mxu0
    %v10958 = vpop.f32.mrb[0].mxu0
    %v10959 = vpop.f32.mrb[0].mxu0
    %10960 = vdwg.mxu0
    %v10961 = vld [vmem:[%s5] sm:$0x1]
    %v10963 = vlaneseq
    %v10964 = vshrl.u32 %v10963, 7
    %v10965 = vsub.s32 0, %v10964
    %v10966 = vrot.slane %v10961, %v10965
    %v10968 = vmul.f32 %v10655, %v10966
    %v10969 = vmul.f32 %v10698, %v10966
    %v10970 = vmul.f32 %v10741, %v10966
    %v10971 = vmul.f32 %v10784, %v10966
    %v10972 = vmul.f32 %v10827, %v10966
    %v10973 = vmul.f32 %v10870, %v10966
    %v10974 = vmul.f32 %v10913, %v10966
    %v10975 = vmul.f32 %v10956, %v10966
    %v10976 = vld [vmem:[%s6] sm:$0x1]
    %v10978 = vlaneseq
    %v10979 = vshrl.u32 %v10978, 7
    %v10980 = vsub.s32 0, %v10979
    %v10981 = vrot.slane %v10976, %v10980
    %v10983 = vadd.f32 %v10968, %v10981
    %v10984 = vadd.f32 %v10969, %v10981
    %v10985 = vadd.f32 %v10970, %v10981
    %v10986 = vadd.f32 %v10971, %v10981
    %v10987 = vadd.f32 %v10972, %v10981
    %v10988 = vadd.f32 %v10973, %v10981
    %v10989 = vadd.f32 %v10974, %v10981
    %v10990 = vadd.f32 %v10975, %v10981
    %vm10991 = vcmp.ge.f32.partialorder %v10983, 0.0
    %vm10992 = vcmp.ge.f32.partialorder %v10984, 0.0
    %vm10993 = vcmp.ge.f32.partialorder %v10985, 0.0
    %vm10994 = vcmp.ge.f32.partialorder %v10986, 0.0
    %vm10995 = vcmp.ge.f32.partialorder %v10987, 0.0
    %vm10996 = vcmp.ge.f32.partialorder %v10988, 0.0
    %vm10997 = vcmp.ge.f32.partialorder %v10989, 0.0
    %vm10998 = vcmp.ge.f32.partialorder %v10990, 0.0
    %v10999 = vsel %vm10991, 1.0, -1.0
    %v11000 = vsel %vm10992, 1.0, -1.0
    %v11001 = vsel %vm10993, 1.0, -1.0
    %v11002 = vsel %vm10994, 1.0, -1.0
    %v11003 = vsel %vm10995, 1.0, -1.0
    %v11004 = vsel %vm10996, 1.0, -1.0
    %v11005 = vsel %vm10997, 1.0, -1.0
    %v11006 = vsel %vm10998, 1.0, -1.0
    %v11007 = vmax.f32 %v10999, %v11000
    %v11008 = vmax.f32 %v11001, %v11002
    %v11009 = vmax.f32 %v11003, %v11004
    %v11010 = vmax.f32 %v11005, %v11006
    %vm11011 = vcmask 39936
    %v11012 = vsel %vm11011, %v7677, 0
    %v11015 = vsel %vm6033, %v11007, 0
    %11017 = vmatprep.subr.mxu0 0.0
    %11018 = vmatpush1.msra.mxu0 %v11015
    %11019 = vmatprep.subr.mxu0 0.0
    %11020 = vmatpush1.msra.mxu0 0.0
    %11021 = vmatprep.subr.mxu0 0.0
    %11022 = vmatpush1.msra.mxu0 0.0
    %11023 = vmatprep.subr.mxu0 0.0
    %11024 = vmatpush1.msra.mxu0 0.0
    %11025 = vmatprep.subr.mxu0 0.0
    %11026 = vmatpush1.msra.mxu0 0.0
    %11027 = vmatprep.subr.mxu0 0.0
    %11028 = vmatpush1.msra.mxu0 0.0
    %11029 = vmatprep.subr.mxu0 0.0
    %11030 = vmatpush1.msra.mxu0 0.0
    %11031 = vmatprep.subr.mxu0 0.0
    %11032 = vmatpush1.msra.mxu0 0.0
    %11033 = vmatprep.subr.mxu0 0.0
    %11034 = vmatpush1.msra.mxu0 0.0
    %11035 = vmatprep.subr.mxu0 0.0
    %11036 = vmatpush1.msra.mxu0 0.0
    %11037 = vmatprep.subr.mxu0 0.0
    %11038 = vmatpush1.msra.mxu0 0.0
    %11039 = vmatprep.subr.mxu0 0.0
    %11040 = vmatpush1.msra.mxu0 0.0
    %11041 = vmatprep.subr.mxu0 0.0
    %11042 = vmatpush1.msra.mxu0 0.0
    %11043 = vmatprep.subr.mxu0 0.0
    %11044 = vmatpush1.msra.mxu0 0.0
    %11045 = vmatprep.subr.mxu0 0.0
    %11046 = vmatpush1.msra.mxu0 0.0
    %11047 = vmatprep.subr.mxu0 0.0
    %11048 = vmatpush1.msra.mxu0 0.0
    %11049 = vmatprep.subr.mxu0 0.0
    %11050 = vmatpush1.msra.mxu0 0.0
    %11051 = vmatprep.subr.mxu0 0.0
    %11052 = vmatpush1.msra.mxu0 0.0
    %11053 = vmatprep.subr.mxu0 0.0
    %11054 = vmatpush1.msra.mxu0 0.0
    %11055 = vmatprep.subr.mxu0 0.0
    %11056 = vmatpush1.msra.mxu0 0.0
    %11057 = vmatprep.subr.mxu0 0.0
    %11058 = vmatpush1.msra.mxu0 0.0
    %11059 = vmatprep.subr.mxu0 0.0
    %11060 = vmatpush1.msra.mxu0 0.0
    %11061 = vmatprep.subr.mxu0 0.0
    %11062 = vmatpush1.msra.mxu0 0.0
    %11063 = vmatprep.subr.mxu0 0.0
    %11064 = vmatpush1.msra.mxu0 0.0
    %11065 = vmatprep.subr.mxu0 0.0
    %11066 = vmatpush1.msra.mxu0 0.0
    %11067 = vmatprep.subr.mxu0 0.0
    %11068 = vmatpush1.msra.mxu0 0.0
    %11069 = vmatprep.subr.mxu0 0.0
    %11070 = vmatpush1.msra.mxu0 0.0
    %11071 = vmatprep.subr.mxu0 0.0
    %11072 = vmatpush1.msra.mxu0 0.0
    %11073 = vmatprep.subr.mxu0 0.0
    %11074 = vmatpush1.msra.mxu0 0.0
    %11075 = vmatprep.subr.mxu0 0.0
    %11076 = vmatpush1.msra.mxu0 0.0
    %11077 = vmatprep.subr.mxu0 0.0
    %11078 = vmatpush1.msra.mxu0 0.0
    %11079 = vmatprep.subr.mxu0 0.0
    %11080 = vmatpush1.msra.mxu0 0.0
    %11081 = vmatprep.mubr.f32.mxu0 0.0
    %11082 = vmatmul.mubr.f32.gmra.mrb[0].mxu0 %v11012
    %v11083 = vpop.f32.mrb[0].mxu0
    %v11084 = vadd.f32 0.0, %v11083
    %v11085 = vpop.f32.mrb[0].mxu0
    %11086 = vdwg.mxu0
    %v11088 = vsel %vm6033, %v11008, 0
    %11090 = vmatprep.subr.mxu0 0.0
    %11091 = vmatpush1.msra.mxu0 %v11088
    %11092 = vmatprep.subr.mxu0 0.0
    %11093 = vmatpush1.msra.mxu0 0.0
    %11094 = vmatprep.subr.mxu0 0.0
    %11095 = vmatpush1.msra.mxu0 0.0
    %11096 = vmatprep.subr.mxu0 0.0
    %11097 = vmatpush1.msra.mxu0 0.0
    %11098 = vmatprep.subr.mxu0 0.0
    %11099 = vmatpush1.msra.mxu0 0.0
    %11100 = vmatprep.subr.mxu0 0.0
    %11101 = vmatpush1.msra.mxu0 0.0
    %11102 = vmatprep.subr.mxu0 0.0
    %11103 = vmatpush1.msra.mxu0 0.0
    %11104 = vmatprep.subr.mxu0 0.0
    %11105 = vmatpush1.msra.mxu0 0.0
    %11106 = vmatprep.subr.mxu0 0.0
    %11107 = vmatpush1.msra.mxu0 0.0
    %11108 = vmatprep.subr.mxu0 0.0
    %11109 = vmatpush1.msra.mxu0 0.0
    %11110 = vmatprep.subr.mxu0 0.0
    %11111 = vmatpush1.msra.mxu0 0.0
    %11112 = vmatprep.subr.mxu0 0.0
    %11113 = vmatpush1.msra.mxu0 0.0
    %11114 = vmatprep.subr.mxu0 0.0
    %11115 = vmatpush1.msra.mxu0 0.0
    %11116 = vmatprep.subr.mxu0 0.0
    %11117 = vmatpush1.msra.mxu0 0.0
    %11118 = vmatprep.subr.mxu0 0.0
    %11119 = vmatpush1.msra.mxu0 0.0
    %11120 = vmatprep.subr.mxu0 0.0
    %11121 = vmatpush1.msra.mxu0 0.0
    %11122 = vmatprep.subr.mxu0 0.0
    %11123 = vmatpush1.msra.mxu0 0.0
    %11124 = vmatprep.subr.mxu0 0.0
    %11125 = vmatpush1.msra.mxu0 0.0
    %11126 = vmatprep.subr.mxu0 0.0
    %11127 = vmatpush1.msra.mxu0 0.0
    %11128 = vmatprep.subr.mxu0 0.0
    %11129 = vmatpush1.msra.mxu0 0.0
    %11130 = vmatprep.subr.mxu0 0.0
    %11131 = vmatpush1.msra.mxu0 0.0
    %11132 = vmatprep.subr.mxu0 0.0
    %11133 = vmatpush1.msra.mxu0 0.0
    %11134 = vmatprep.subr.mxu0 0.0
    %11135 = vmatpush1.msra.mxu0 0.0
    %11136 = vmatprep.subr.mxu0 0.0
    %11137 = vmatpush1.msra.mxu0 0.0
    %11138 = vmatprep.subr.mxu0 0.0
    %11139 = vmatpush1.msra.mxu0 0.0
    %11140 = vmatprep.subr.mxu0 0.0
    %11141 = vmatpush1.msra.mxu0 0.0
    %11142 = vmatprep.subr.mxu0 0.0
    %11143 = vmatpush1.msra.mxu0 0.0
    %11144 = vmatprep.subr.mxu0 0.0
    %11145 = vmatpush1.msra.mxu0 0.0
    %11146 = vmatprep.subr.mxu0 0.0
    %11147 = vmatpush1.msra.mxu0 0.0
    %11148 = vmatprep.subr.mxu0 0.0
    %11149 = vmatpush1.msra.mxu0 0.0
    %11150 = vmatprep.subr.mxu0 0.0
    %11151 = vmatpush1.msra.mxu0 0.0
    %11152 = vmatprep.subr.mxu0 0.0
    %11153 = vmatpush1.msra.mxu0 0.0
    %11154 = vmatprep.mubr.f32.mxu0 0.0
    %11155 = vmatmul.mubr.f32.gmra.mrb[0].mxu0 %v11012
    %v11156 = vpop.f32.mrb[0].mxu0
    %v11157 = vadd.f32 0.0, %v11156
    %v11158 = vpop.f32.mrb[0].mxu0
    %11159 = vdwg.mxu0
    %v11161 = vsel %vm6033, %v11009, 0
    %11163 = vmatprep.subr.mxu0 0.0
    %11164 = vmatpush1.msra.mxu0 %v11161
    %11165 = vmatprep.subr.mxu0 0.0
    %11166 = vmatpush1.msra.mxu0 0.0
    %11167 = vmatprep.subr.mxu0 0.0
    %11168 = vmatpush1.msra.mxu0 0.0
    %11169 = vmatprep.subr.mxu0 0.0
    %11170 = vmatpush1.msra.mxu0 0.0
    %11171 = vmatprep.subr.mxu0 0.0
    %11172 = vmatpush1.msra.mxu0 0.0
    %11173 = vmatprep.subr.mxu0 0.0
    %11174 = vmatpush1.msra.mxu0 0.0
    %11175 = vmatprep.subr.mxu0 0.0
    %11176 = vmatpush1.msra.mxu0 0.0
    %11177 = vmatprep.subr.mxu0 0.0
    %11178 = vmatpush1.msra.mxu0 0.0
    %11179 = vmatprep.subr.mxu0 0.0
    %11180 = vmatpush1.msra.mxu0 0.0
    %11181 = vmatprep.subr.mxu0 0.0
    %11182 = vmatpush1.msra.mxu0 0.0
    %11183 = vmatprep.subr.mxu0 0.0
    %11184 = vmatpush1.msra.mxu0 0.0
    %11185 = vmatprep.subr.mxu0 0.0
    %11186 = vmatpush1.msra.mxu0 0.0
    %11187 = vmatprep.subr.mxu0 0.0
    %11188 = vmatpush1.msra.mxu0 0.0
    %11189 = vmatprep.subr.mxu0 0.0
    %11190 = vmatpush1.msra.mxu0 0.0
    %11191 = vmatprep.subr.mxu0 0.0
    %11192 = vmatpush1.msra.mxu0 0.0
    %11193 = vmatprep.subr.mxu0 0.0
    %11194 = vmatpush1.msra.mxu0 0.0
    %11195 = vmatprep.subr.mxu0 0.0
    %11196 = vmatpush1.msra.mxu0 0.0
    %11197 = vmatprep.subr.mxu0 0.0
    %11198 = vmatpush1.msra.mxu0 0.0
    %11199 = vmatprep.subr.mxu0 0.0
    %11200 = vmatpush1.msra.mxu0 0.0
    %11201 = vmatprep.subr.mxu0 0.0
    %11202 = vmatpush1.msra.mxu0 0.0
    %11203 = vmatprep.subr.mxu0 0.0
    %11204 = vmatpush1.msra.mxu0 0.0
    %11205 = vmatprep.subr.mxu0 0.0
    %11206 = vmatpush1.msra.mxu0 0.0
    %11207 = vmatprep.subr.mxu0 0.0
    %11208 = vmatpush1.msra.mxu0 0.0
    %11209 = vmatprep.subr.mxu0 0.0
    %11210 = vmatpush1.msra.mxu0 0.0
    %11211 = vmatprep.subr.mxu0 0.0
    %11212 = vmatpush1.msra.mxu0 0.0
    %11213 = vmatprep.subr.mxu0 0.0
    %11214 = vmatpush1.msra.mxu0 0.0
    %11215 = vmatprep.subr.mxu0 0.0
    %11216 = vmatpush1.msra.mxu0 0.0
    %11217 = vmatprep.subr.mxu0 0.0
    %11218 = vmatpush1.msra.mxu0 0.0
    %11219 = vmatprep.subr.mxu0 0.0
    %11220 = vmatpush1.msra.mxu0 0.0
    %11221 = vmatprep.subr.mxu0 0.0
    %11222 = vmatpush1.msra.mxu0 0.0
    %11223 = vmatprep.subr.mxu0 0.0
    %11224 = vmatpush1.msra.mxu0 0.0
    %11225 = vmatprep.subr.mxu0 0.0
    %11226 = vmatpush1.msra.mxu0 0.0
    %11227 = vmatprep.mubr.f32.mxu0 0.0
    %11228 = vmatmul.mubr.f32.gmra.mrb[0].mxu0 %v11012
    %v11229 = vpop.f32.mrb[0].mxu0
    %v11230 = vadd.f32 0.0, %v11229
    %v11231 = vpop.f32.mrb[0].mxu0
    %11232 = vdwg.mxu0
    %v11234 = vsel %vm6033, %v11010, 0
    %11236 = vmatprep.subr.mxu0 0.0
    %11237 = vmatpush1.msra.mxu0 %v11234
    %11238 = vmatprep.subr.mxu0 0.0
    %11239 = vmatpush1.msra.mxu0 0.0
    %11240 = vmatprep.subr.mxu0 0.0
    %11241 = vmatpush1.msra.mxu0 0.0
    %11242 = vmatprep.subr.mxu0 0.0
    %11243 = vmatpush1.msra.mxu0 0.0
    %11244 = vmatprep.subr.mxu0 0.0
    %11245 = vmatpush1.msra.mxu0 0.0
    %11246 = vmatprep.subr.mxu0 0.0
    %11247 = vmatpush1.msra.mxu0 0.0
    %11248 = vmatprep.subr.mxu0 0.0
    %11249 = vmatpush1.msra.mxu0 0.0
    %11250 = vmatprep.subr.mxu0 0.0
    %11251 = vmatpush1.msra.mxu0 0.0
    %11252 = vmatprep.subr.mxu0 0.0
    %11253 = vmatpush1.msra.mxu0 0.0
    %11254 = vmatprep.subr.mxu0 0.0
    %11255 = vmatpush1.msra.mxu0 0.0
    %11256 = vmatprep.subr.mxu0 0.0
    %11257 = vmatpush1.msra.mxu0 0.0
    %11258 = vmatprep.subr.mxu0 0.0
    %11259 = vmatpush1.msra.mxu0 0.0
    %11260 = vmatprep.subr.mxu0 0.0
    %11261 = vmatpush1.msra.mxu0 0.0
    %11262 = vmatprep.subr.mxu0 0.0
    %11263 = vmatpush1.msra.mxu0 0.0
    %11264 = vmatprep.subr.mxu0 0.0
    %11265 = vmatpush1.msra.mxu0 0.0
    %11266 = vmatprep.subr.mxu0 0.0
    %11267 = vmatpush1.msra.mxu0 0.0
    %11268 = vmatprep.subr.mxu0 0.0
    %11269 = vmatpush1.msra.mxu0 0.0
    %11270 = vmatprep.subr.mxu0 0.0
    %11271 = vmatpush1.msra.mxu0 0.0
    %11272 = vmatprep.subr.mxu0 0.0
    %11273 = vmatpush1.msra.mxu0 0.0
    %11274 = vmatprep.subr.mxu0 0.0
    %11275 = vmatpush1.msra.mxu0 0.0
    %11276 = vmatprep.subr.mxu0 0.0
    %11277 = vmatpush1.msra.mxu0 0.0
    %11278 = vmatprep.subr.mxu0 0.0
    %11279 = vmatpush1.msra.mxu0 0.0
    %11280 = vmatprep.subr.mxu0 0.0
    %11281 = vmatpush1.msra.mxu0 0.0
    %11282 = vmatprep.subr.mxu0 0.0
    %11283 = vmatpush1.msra.mxu0 0.0
    %11284 = vmatprep.subr.mxu0 0.0
    %11285 = vmatpush1.msra.mxu0 0.0
    %11286 = vmatprep.subr.mxu0 0.0
    %11287 = vmatpush1.msra.mxu0 0.0
    %11288 = vmatprep.subr.mxu0 0.0
    %11289 = vmatpush1.msra.mxu0 0.0
    %11290 = vmatprep.subr.mxu0 0.0
    %11291 = vmatpush1.msra.mxu0 0.0
    %11292 = vmatprep.subr.mxu0 0.0
    %11293 = vmatpush1.msra.mxu0 0.0
    %11294 = vmatprep.subr.mxu0 0.0
    %11295 = vmatpush1.msra.mxu0 0.0
    %11296 = vmatprep.subr.mxu0 0.0
    %11297 = vmatpush1.msra.mxu0 0.0
    %11298 = vmatprep.subr.mxu0 0.0
    %11299 = vmatpush1.msra.mxu0 0.0
    %11300 = vmatprep.mubr.f32.mxu0 0.0
    %11301 = vmatmul.mubr.f32.gmra.mrb[0].mxu0 %v11012
    %v11302 = vpop.f32.mrb[0].mxu0
    %v11303 = vadd.f32 0.0, %v11302
    %v11304 = vpop.f32.mrb[0].mxu0
    %11305 = vdwg.mxu0
    %v11306 = vsel %vm11011, %v7681, 0
    %11308 = vmatprep.subr.mxu0 0.0
    %11309 = vmatpush1.msra.mxu0 %v11015
    %11310 = vmatprep.subr.mxu0 0.0
    %11311 = vmatpush1.msra.mxu0 0.0
    %11312 = vmatprep.subr.mxu0 0.0
    %11313 = vmatpush1.msra.mxu0 0.0
    %11314 = vmatprep.subr.mxu0 0.0
    %11315 = vmatpush1.msra.mxu0 0.0
    %11316 = vmatprep.subr.mxu0 0.0
    %11317 = vmatpush1.msra.mxu0 0.0
    %11318 = vmatprep.subr.mxu0 0.0
    %11319 = vmatpush1.msra.mxu0 0.0
    %11320 = vmatprep.subr.mxu0 0.0
    %11321 = vmatpush1.msra.mxu0 0.0
    %11322 = vmatprep.subr.mxu0 0.0
    %11323 = vmatpush1.msra.mxu0 0.0
    %11324 = vmatprep.subr.mxu0 0.0
    %11325 = vmatpush1.msra.mxu0 0.0
    %11326 = vmatprep.subr.mxu0 0.0
    %11327 = vmatpush1.msra.mxu0 0.0
    %11328 = vmatprep.subr.mxu0 0.0
    %11329 = vmatpush1.msra.mxu0 0.0
    %11330 = vmatprep.subr.mxu0 0.0
    %11331 = vmatpush1.msra.mxu0 0.0
    %11332 = vmatprep.subr.mxu0 0.0
    %11333 = vmatpush1.msra.mxu0 0.0
    %11334 = vmatprep.subr.mxu0 0.0
    %11335 = vmatpush1.msra.mxu0 0.0
    %11336 = vmatprep.subr.mxu0 0.0
    %11337 = vmatpush1.msra.mxu0 0.0
    %11338 = vmatprep.subr.mxu0 0.0
    %11339 = vmatpush1.msra.mxu0 0.0
    %11340 = vmatprep.subr.mxu0 0.0
    %11341 = vmatpush1.msra.mxu0 0.0
    %11342 = vmatprep.subr.mxu0 0.0
    %11343 = vmatpush1.msra.mxu0 0.0
    %11344 = vmatprep.subr.mxu0 0.0
    %11345 = vmatpush1.msra.mxu0 0.0
    %11346 = vmatprep.subr.mxu0 0.0
    %11347 = vmatpush1.msra.mxu0 0.0
    %11348 = vmatprep.subr.mxu0 0.0
    %11349 = vmatpush1.msra.mxu0 0.0
    %11350 = vmatprep.subr.mxu0 0.0
    %11351 = vmatpush1.msra.mxu0 0.0
    %11352 = vmatprep.subr.mxu0 0.0
    %11353 = vmatpush1.msra.mxu0 0.0
    %11354 = vmatprep.subr.mxu0 0.0
    %11355 = vmatpush1.msra.mxu0 0.0
    %11356 = vmatprep.subr.mxu0 0.0
    %11357 = vmatpush1.msra.mxu0 0.0
    %11358 = vmatprep.subr.mxu0 0.0
    %11359 = vmatpush1.msra.mxu0 0.0
    %11360 = vmatprep.subr.mxu0 0.0
    %11361 = vmatpush1.msra.mxu0 0.0
    %11362 = vmatprep.subr.mxu0 0.0
    %11363 = vmatpush1.msra.mxu0 0.0
    %11364 = vmatprep.subr.mxu0 0.0
    %11365 = vmatpush1.msra.mxu0 0.0
    %11366 = vmatprep.subr.mxu0 0.0
    %11367 = vmatpush1.msra.mxu0 0.0
    %11368 = vmatprep.subr.mxu0 0.0
    %11369 = vmatpush1.msra.mxu0 0.0
    %11370 = vmatprep.subr.mxu0 0.0
    %11371 = vmatpush1.msra.mxu0 0.0
    %11372 = vmatprep.mubr.f32.mxu0 0.0
    %11373 = vmatmul.mubr.f32.gmra.mrb[0].mxu0 %v11306
    %v11374 = vpop.f32.mrb[0].mxu0
    %v11375 = vadd.f32 0.0, %v11374
    %v11376 = vpop.f32.mrb[0].mxu0
    %11377 = vdwg.mxu0
    %11378 = vmatprep.subr.mxu0 0.0
    %11379 = vmatpush1.msra.mxu0 %v11088
    %11380 = vmatprep.subr.mxu0 0.0
    %11381 = vmatpush1.msra.mxu0 0.0
    %11382 = vmatprep.subr.mxu0 0.0
    %11383 = vmatpush1.msra.mxu0 0.0
    %11384 = vmatprep.subr.mxu0 0.0
    %11385 = vmatpush1.msra.mxu0 0.0
    %11386 = vmatprep.subr.mxu0 0.0
    %11387 = vmatpush1.msra.mxu0 0.0
    %11388 = vmatprep.subr.mxu0 0.0
    %11389 = vmatpush1.msra.mxu0 0.0
    %11390 = vmatprep.subr.mxu0 0.0
    %11391 = vmatpush1.msra.mxu0 0.0
    %11392 = vmatprep.subr.mxu0 0.0
    %11393 = vmatpush1.msra.mxu0 0.0
    %11394 = vmatprep.subr.mxu0 0.0
    %11395 = vmatpush1.msra.mxu0 0.0
    %11396 = vmatprep.subr.mxu0 0.0
    %11397 = vmatpush1.msra.mxu0 0.0
    %11398 = vmatprep.subr.mxu0 0.0
    %11399 = vmatpush1.msra.mxu0 0.0
    %11400 = vmatprep.subr.mxu0 0.0
    %11401 = vmatpush1.msra.mxu0 0.0
    %11402 = vmatprep.subr.mxu0 0.0
    %11403 = vmatpush1.msra.mxu0 0.0
    %11404 = vmatprep.subr.mxu0 0.0
    %11405 = vmatpush1.msra.mxu0 0.0
    %11406 = vmatprep.subr.mxu0 0.0
    %11407 = vmatpush1.msra.mxu0 0.0
    %11408 = vmatprep.subr.mxu0 0.0
    %11409 = vmatpush1.msra.mxu0 0.0
    %11410 = vmatprep.subr.mxu0 0.0
    %11411 = vmatpush1.msra.mxu0 0.0
    %11412 = vmatprep.subr.mxu0 0.0
    %11413 = vmatpush1.msra.mxu0 0.0
    %11414 = vmatprep.subr.mxu0 0.0
    %11415 = vmatpush1.msra.mxu0 0.0
    %11416 = vmatprep.subr.mxu0 0.0
    %11417 = vmatpush1.msra.mxu0 0.0
    %11418 = vmatprep.subr.mxu0 0.0
    %11419 = vmatpush1.msra.mxu0 0.0
    %11420 = vmatprep.subr.mxu0 0.0
    %11421 = vmatpush1.msra.mxu0 0.0
    %11422 = vmatprep.subr.mxu0 0.0
    %11423 = vmatpush1.msra.mxu0 0.0
    %11424 = vmatprep.subr.mxu0 0.0
    %11425 = vmatpush1.msra.mxu0 0.0
    %11426 = vmatprep.subr.mxu0 0.0
    %11427 = vmatpush1.msra.mxu0 0.0
    %11428 = vmatprep.subr.mxu0 0.0
    %11429 = vmatpush1.msra.mxu0 0.0
    %11430 = vmatprep.subr.mxu0 0.0
    %11431 = vmatpush1.msra.mxu0 0.0
    %11432 = vmatprep.subr.mxu0 0.0
    %11433 = vmatpush1.msra.mxu0 0.0
    %11434 = vmatprep.subr.mxu0 0.0
    %11435 = vmatpush1.msra.mxu0 0.0
    %11436 = vmatprep.subr.mxu0 0.0
    %11437 = vmatpush1.msra.mxu0 0.0
    %11438 = vmatprep.subr.mxu0 0.0
    %11439 = vmatpush1.msra.mxu0 0.0
    %11440 = vmatprep.subr.mxu0 0.0
    %11441 = vmatpush1.msra.mxu0 0.0
    %11442 = vmatprep.mubr.f32.mxu0 0.0
    %11443 = vmatmul.mubr.f32.gmra.mrb[0].mxu0 %v11306
    %v11444 = vpop.f32.mrb[0].mxu0
    %v11445 = vadd.f32 0.0, %v11444
    %v11446 = vpop.f32.mrb[0].mxu0
    %11447 = vdwg.mxu0
    %11448 = vmatprep.subr.mxu0 0.0
    %11449 = vmatpush1.msra.mxu0 %v11161
    %11450 = vmatprep.subr.mxu0 0.0
    %11451 = vmatpush1.msra.mxu0 0.0
    %11452 = vmatprep.subr.mxu0 0.0
    %11453 = vmatpush1.msra.mxu0 0.0
    %11454 = vmatprep.subr.mxu0 0.0
    %11455 = vmatpush1.msra.mxu0 0.0
    %11456 = vmatprep.subr.mxu0 0.0
    %11457 = vmatpush1.msra.mxu0 0.0
    %11458 = vmatprep.subr.mxu0 0.0
    %11459 = vmatpush1.msra.mxu0 0.0
    %11460 = vmatprep.subr.mxu0 0.0
    %11461 = vmatpush1.msra.mxu0 0.0
    %11462 = vmatprep.subr.mxu0 0.0
    %11463 = vmatpush1.msra.mxu0 0.0
    %11464 = vmatprep.subr.mxu0 0.0
    %11465 = vmatpush1.msra.mxu0 0.0
    %11466 = vmatprep.subr.mxu0 0.0
    %11467 = vmatpush1.msra.mxu0 0.0
    %11468 = vmatprep.subr.mxu0 0.0
    %11469 = vmatpush1.msra.mxu0 0.0
    %11470 = vmatprep.subr.mxu0 0.0
    %11471 = vmatpush1.msra.mxu0 0.0
    %11472 = vmatprep.subr.mxu0 0.0
    %11473 = vmatpush1.msra.mxu0 0.0
    %11474 = vmatprep.subr.mxu0 0.0
    %11475 = vmatpush1.msra.mxu0 0.0
    %11476 = vmatprep.subr.mxu0 0.0
    %11477 = vmatpush1.msra.mxu0 0.0
    %11478 = vmatprep.subr.mxu0 0.0
    %11479 = vmatpush1.msra.mxu0 0.0
    %11480 = vmatprep.subr.mxu0 0.0
    %11481 = vmatpush1.msra.mxu0 0.0
    %11482 = vmatprep.subr.mxu0 0.0
    %11483 = vmatpush1.msra.mxu0 0.0
    %11484 = vmatprep.subr.mxu0 0.0
    %11485 = vmatpush1.msra.mxu0 0.0
    %11486 = vmatprep.subr.mxu0 0.0
    %11487 = vmatpush1.msra.mxu0 0.0
    %11488 = vmatprep.subr.mxu0 0.0
    %11489 = vmatpush1.msra.mxu0 0.0
    %11490 = vmatprep.subr.mxu0 0.0
    %11491 = vmatpush1.msra.mxu0 0.0
    %11492 = vmatprep.subr.mxu0 0.0
    %11493 = vmatpush1.msra.mxu0 0.0
    %11494 = vmatprep.subr.mxu0 0.0
    %11495 = vmatpush1.msra.mxu0 0.0
    %11496 = vmatprep.subr.mxu0 0.0
    %11497 = vmatpush1.msra.mxu0 0.0
    %11498 = vmatprep.subr.mxu0 0.0
    %11499 = vmatpush1.msra.mxu0 0.0
    %11500 = vmatprep.subr.mxu0 0.0
    %11501 = vmatpush1.msra.mxu0 0.0
    %11502 = vmatprep.subr.mxu0 0.0
    %11503 = vmatpush1.msra.mxu0 0.0
    %11504 = vmatprep.subr.mxu0 0.0
    %11505 = vmatpush1.msra.mxu0 0.0
    %11506 = vmatprep.subr.mxu0 0.0
    %11507 = vmatpush1.msra.mxu0 0.0
    %11508 = vmatprep.subr.mxu0 0.0
    %11509 = vmatpush1.msra.mxu0 0.0
    %11510 = vmatprep.subr.mxu0 0.0
    %11511 = vmatpush1.msra.mxu0 0.0
    %11512 = vmatprep.mubr.f32.mxu0 0.0
    %11513 = vmatmul.mubr.f32.gmra.mrb[0].mxu0 %v11306
    %v11514 = vpop.f32.mrb[0].mxu0
    %v11515 = vadd.f32 0.0, %v11514
    %v11516 = vpop.f32.mrb[0].mxu0
    %11517 = vdwg.mxu0
    %11518 = vmatprep.subr.mxu0 0.0
    %11519 = vmatpush1.msra.mxu0 %v11234
    %11520 = vmatprep.subr.mxu0 0.0
    %11521 = vmatpush1.msra.mxu0 0.0
    %11522 = vmatprep.subr.mxu0 0.0
    %11523 = vmatpush1.msra.mxu0 0.0
    %11524 = vmatprep.subr.mxu0 0.0
    %11525 = vmatpush1.msra.mxu0 0.0
    %11526 = vmatprep.subr.mxu0 0.0
    %11527 = vmatpush1.msra.mxu0 0.0
    %11528 = vmatprep.subr.mxu0 0.0
    %11529 = vmatpush1.msra.mxu0 0.0
    %11530 = vmatprep.subr.mxu0 0.0
    %11531 = vmatpush1.msra.mxu0 0.0
    %11532 = vmatprep.subr.mxu0 0.0
    %11533 = vmatpush1.msra.mxu0 0.0
    %11534 = vmatprep.subr.mxu0 0.0
    %11535 = vmatpush1.msra.mxu0 0.0
    %11536 = vmatprep.subr.mxu0 0.0
    %11537 = vmatpush1.msra.mxu0 0.0
    %11538 = vmatprep.subr.mxu0 0.0
    %11539 = vmatpush1.msra.mxu0 0.0
    %11540 = vmatprep.subr.mxu0 0.0
    %11541 = vmatpush1.msra.mxu0 0.0
    %11542 = vmatprep.subr.mxu0 0.0
    %11543 = vmatpush1.msra.mxu0 0.0
    %11544 = vmatprep.subr.mxu0 0.0
    %11545 = vmatpush1.msra.mxu0 0.0
    %11546 = vmatprep.subr.mxu0 0.0
    %11547 = vmatpush1.msra.mxu0 0.0
    %11548 = vmatprep.subr.mxu0 0.0
    %11549 = vmatpush1.msra.mxu0 0.0
    %11550 = vmatprep.subr.mxu0 0.0
    %11551 = vmatpush1.msra.mxu0 0.0
    %11552 = vmatprep.subr.mxu0 0.0
    %11553 = vmatpush1.msra.mxu0 0.0
    %11554 = vmatprep.subr.mxu0 0.0
    %11555 = vmatpush1.msra.mxu0 0.0
    %11556 = vmatprep.subr.mxu0 0.0
    %11557 = vmatpush1.msra.mxu0 0.0
    %11558 = vmatprep.subr.mxu0 0.0
    %11559 = vmatpush1.msra.mxu0 0.0
    %11560 = vmatprep.subr.mxu0 0.0
    %11561 = vmatpush1.msra.mxu0 0.0
    %11562 = vmatprep.subr.mxu0 0.0
    %11563 = vmatpush1.msra.mxu0 0.0
    %11564 = vmatprep.subr.mxu0 0.0
    %11565 = vmatpush1.msra.mxu0 0.0
    %11566 = vmatprep.subr.mxu0 0.0
    %11567 = vmatpush1.msra.mxu0 0.0
    %11568 = vmatprep.subr.mxu0 0.0
    %11569 = vmatpush1.msra.mxu0 0.0
    %11570 = vmatprep.subr.mxu0 0.0
    %11571 = vmatpush1.msra.mxu0 0.0
    %11572 = vmatprep.subr.mxu0 0.0
    %11573 = vmatpush1.msra.mxu0 0.0
    %11574 = vmatprep.subr.mxu0 0.0
    %11575 = vmatpush1.msra.mxu0 0.0
    %11576 = vmatprep.subr.mxu0 0.0
    %11577 = vmatpush1.msra.mxu0 0.0
    %11578 = vmatprep.subr.mxu0 0.0
    %11579 = vmatpush1.msra.mxu0 0.0
    %11580 = vmatprep.subr.mxu0 0.0
    %11581 = vmatpush1.msra.mxu0 0.0
    %11582 = vmatprep.mubr.f32.mxu0 0.0
    %11583 = vmatmul.mubr.f32.gmra.mrb[0].mxu0 %v11306
    %v11584 = vpop.f32.mrb[0].mxu0
    %v11585 = vadd.f32 0.0, %v11584
    %v11586 = vpop.f32.mrb[0].mxu0
    %11587 = vdwg.mxu0
    %v11588 = vmax.f32 %v11084, %v11375
    %v11589 = vmax.f32 %v11157, %v11445
    %v11590 = vmax.f32 %v11230, %v11515
    %v11591 = vmax.f32 %v11303, %v11585
    %v11592 = vpack.c.bf16 %v11588, %v11588
    %v11593 = vpack.c.bf16 %v11589, %v11589
    %v11594 = vpack.c.bf16 %v11590, %v11590
    %v11595 = vpack.c.bf16 %v11591, %v11591
    %vm11596 = vcmask 122880
    %11597 = vst.msk [vmem:[#allocation6] sm:$0x1] %vm11596, %v11592
    %11598 = vst.msk [vmem:[#allocation6 + $0x1] sm:$0x1] %vm11596, %v11593
    %11599 = vst.msk [vmem:[#allocation6 + $0x2] sm:$0x1] %vm11596, %v11594
    %11600 = vst.msk [vmem:[#allocation6 + $0x3] sm:$0x1] %vm11596, %v11595
    %v11601 = vld [vmem:[#allocation6] sm:$0x1]
    %v11602 = vunpack.c.l.bf16 %v11601
    %11603 = vst.msk [vmem:[#allocation7] sm:$0x1] %vm11596, %v11602
    %v11604 = vld [vmem:[#allocation6] sm:$0x1]
    %v11605 = vunpack.c.l.bf16 %v11604
    %v11607 = vlaneseq
    %v11608 = vshrl.u32 %v11607, 7
    %v11609 = vsub.s32 1, %v11608
    %v11610 = vrot.slane %v11605, %v11609
    %11611 = vrot.lane.b32.xlu0 %v11610, 16
    %v11612 = vpop.permute.xlu0 %11611
    %vm11614 = vcmask 255105
    %11615 = vst.msk [vmem:[#allocation7 - $0x1] sm:$0x2] %vm11614, %v11612
    %s11616 = scalar_lea.vmem [#allocation6], 1
    %v11617 = vld [vmem:[%s11616] sm:$0x1]
    %v11618 = vunpack.c.l.bf16 %v11617
    %v11620 = vlaneseq
    %v11621 = vshrl.u32 %v11620, 7
    %v11622 = vsub.s32 0, %v11621
    %v11623 = vrot.slane %v11618, %v11622
    %11624 = vrot.lane.b32.xlu0 %v11623, 32
    %v11625 = vpop.permute.xlu0 %11624
    %vm11627 = vcmask 385280
    %11628 = vst.msk [vmem:[#allocation7] sm:$0x1] %vm11627, %v11625
    %v11629 = vld [vmem:[%s11616] sm:$0x1]
    %v11630 = vunpack.c.l.bf16 %v11629
    %v11632 = vlaneseq
    %v11633 = vshrl.u32 %v11632, 7
    %v11634 = vsub.s32 1, %v11633
    %v11635 = vrot.slane %v11630, %v11634
    %11636 = vrot.lane.b32.xlu0 %v11635, 48
    %v11637 = vpop.permute.xlu0 %11636
    %vm11639 = vcmask 517505
    %11640 = vst.msk [vmem:[#allocation7 - $0x1] sm:$0x2] %vm11639, %v11637
    %s11641 = scalar_lea.vmem [#allocation6], 2
    %v11642 = vld [vmem:[%s11641] sm:$0x1]
    %v11643 = vunpack.c.l.bf16 %v11642
    %11644 = vst.msk [vmem:[#allocation7 + $0x1] sm:$0x1] %vm11596, %v11643
    %v11645 = vld [vmem:[%s11641] sm:$0x1]
    %v11646 = vunpack.c.l.bf16 %v11645
    %v11648 = vlaneseq
    %v11649 = vshrl.u32 %v11648, 7
    %v11650 = vsub.s32 1, %v11649
    %v11651 = vrot.slane %v11646, %v11650
    %11652 = vrot.lane.b32.xlu0 %v11651, 16
    %v11653 = vpop.permute.xlu0 %11652
    %11655 = vst.msk [vmem:[#allocation7] sm:$0x2] %vm11614, %v11653
    %s11656 = scalar_lea.vmem [#allocation6], 3
    %v11657 = vld [vmem:[%s11656] sm:$0x1]
    %v11658 = vunpack.c.l.bf16 %v11657
    %v11660 = vlaneseq
    %v11661 = vshrl.u32 %v11660, 7
    %v11662 = vsub.s32 0, %v11661
    %v11663 = vrot.slane %v11658, %v11662
    %11664 = vrot.lane.b32.xlu0 %v11663, 32
    %v11665 = vpop.permute.xlu0 %11664
    %11667 = vst.msk [vmem:[#allocation7 + $0x1] sm:$0x1] %vm11627, %v11665
    %v11668 = vld [vmem:[%s11656] sm:$0x1]
    %v11669 = vunpack.c.l.bf16 %v11668
    %v11671 = vlaneseq
    %v11672 = vshrl.u32 %v11671, 7
    %v11673 = vsub.s32 1, %v11672
    %v11674 = vrot.slane %v11669, %v11673
    %11675 = vrot.lane.b32.xlu0 %v11674, 48
    %v11676 = vpop.permute.xlu0 %11675
    %11678 = vst.msk [vmem:[#allocation7] sm:$0x2] %vm11639, %v11676
    %v11679 = vld [vmem:[#allocation7] sm:$0x3]
    %v11680 = vmul.f32 %v11679, 8.0
    %v11681 = vround.ne.pseudo %v11680
    %v11682 = vmul.f32 %v11681, 0.125
    %v11683 = vmax.f32 %v11682, -1.0
    %v11684 = vmin.f32 %v11683, 0.875
    %v11685 = vld [vmem:[%s7] sm:$0xff]
    %v11686 = vld [vmem:[%s7 + $0x8] sm:$0xff]
    %v11687 = vld [vmem:[%s7 + $0x10] sm:$0xff]
    %v11688 = vld [vmem:[%s7 + $0x18] sm:$0xff]
    %v11689 = vld [vmem:[%s7 + $0x20] sm:$0xff]
    %v11690 = vld [vmem:[%s7 + $0x28] sm:$0xff]
    %v11691 = vld [vmem:[%s7 + $0x30] sm:$0xff]
    %v11692 = vld [vmem:[%s7 + $0x38] sm:$0xff]
    %v11693 = vld [vmem:[%s8] sm:$0x1]
    %v11695 = vlaneseq
    %v11696 = vshrl.u32 %v11695, 7
    %v11697 = vsub.s32 0, %v11696
    %v11698 = vrot.slane %v11693, %v11697
    %vm11700 = vcmask 523264
    %v11702 = vsel %vm11700, %v11684, 0
    %11704 = vmatprep.subr.mxu0 0.0
    %11705 = vmatpush1.msra.mxu0 %v11685
    %11706 = vmatprep.subr.mxu0 0.0
    %11707 = vmatpush1.msra.mxu0 %v11686
    %11708 = vmatprep.subr.mxu0 0.0
    %11709 = vmatpush1.msra.mxu0 %v11687
    %11710 = vmatprep.subr.mxu0 0.0
    %11711 = vmatpush1.msra.mxu0 %v11688
    %11712 = vmatprep.subr.mxu0 0.0
    %11713 = vmatpush1.msra.mxu0 %v11689
    %11714 = vmatprep.subr.mxu0 0.0
    %11715 = vmatpush1.msra.mxu0 %v11690
    %11716 = vmatprep.subr.mxu0 0.0
    %11717 = vmatpush1.msra.mxu0 %v11691
    %11718 = vmatprep.subr.mxu0 0.0
    %11719 = vmatpush1.msra.mxu0 %v11692
    %11720 = vmatprep.subr.mxu0 0.0
    %11721 = vmatpush1.msra.mxu0 0.0
    %11722 = vmatprep.subr.mxu0 0.0
    %11723 = vmatpush1.msra.mxu0 0.0
    %11724 = vmatprep.subr.mxu0 0.0
    %11725 = vmatpush1.msra.mxu0 0.0
    %11726 = vmatprep.subr.mxu0 0.0
    %11727 = vmatpush1.msra.mxu0 0.0
    %11728 = vmatprep.subr.mxu0 0.0
    %11729 = vmatpush1.msra.mxu0 0.0
    %11730 = vmatprep.subr.mxu0 0.0
    %11731 = vmatpush1.msra.mxu0 0.0
    %11732 = vmatprep.subr.mxu0 0.0
    %11733 = vmatpush1.msra.mxu0 0.0
    %11734 = vmatprep.subr.mxu0 0.0
    %11735 = vmatpush1.msra.mxu0 0.0
    %11736 = vmatprep.subr.mxu0 0.0
    %11737 = vmatpush1.msra.mxu0 0.0
    %11738 = vmatprep.subr.mxu0 0.0
    %11739 = vmatpush1.msra.mxu0 0.0
    %11740 = vmatprep.subr.mxu0 0.0
    %11741 = vmatpush1.msra.mxu0 0.0
    %11742 = vmatprep.subr.mxu0 0.0
    %11743 = vmatpush1.msra.mxu0 0.0
    %11744 = vmatprep.subr.mxu0 0.0
    %11745 = vmatpush1.msra.mxu0 0.0
    %11746 = vmatprep.subr.mxu0 0.0
    %11747 = vmatpush1.msra.mxu0 0.0
    %11748 = vmatprep.subr.mxu0 0.0
    %11749 = vmatpush1.msra.mxu0 0.0
    %11750 = vmatprep.subr.mxu0 0.0
    %11751 = vmatpush1.msra.mxu0 0.0
    %11752 = vmatprep.subr.mxu0 0.0
    %11753 = vmatpush1.msra.mxu0 0.0
    %11754 = vmatprep.subr.mxu0 0.0
    %11755 = vmatpush1.msra.mxu0 0.0
    %11756 = vmatprep.subr.mxu0 0.0
    %11757 = vmatpush1.msra.mxu0 0.0
    %11758 = vmatprep.subr.mxu0 0.0
    %11759 = vmatpush1.msra.mxu0 0.0
    %11760 = vmatprep.subr.mxu0 0.0
    %11761 = vmatpush1.msra.mxu0 0.0
    %11762 = vmatprep.subr.mxu0 0.0
    %11763 = vmatpush1.msra.mxu0 0.0
    %11764 = vmatprep.subr.mxu0 0.0
    %11765 = vmatpush1.msra.mxu0 0.0
    %11766 = vmatprep.subr.mxu0 0.0
    %11767 = vmatpush1.msra.mxu0 0.0
    %11768 = vmatprep.mubr.f32.mxu0 0.0
    %11769 = vmatmul.mubr.f32.gmra.mrb[0].mxu0 %v11702
    %v11770 = vpop.f32.mrb[0].mxu0
    %v11771 = vadd.f32 %v11698, %v11770
    %v11772 = vpop.f32.mrb[0].mxu0
    %11773 = vdwg.mxu0
    %vm11774 = vcmp.ge.f32.partialorder %v11771, 0.0
    %v11775 = vsel %vm11774, 1.0, -1.0
    %v11776 = vmul.f32 %v11775, 8.0
    %v11777 = vround.ne.pseudo %v11776
    %v11778 = vmul.f32 %v11777, 0.125
    %v11779 = vmax.f32 %v11778, -1.0
    %v11780 = vmin.f32 %v11779, 0.875
    %v11781 = vld [vmem:[%s9] sm:$0xff]
    %v11782 = vld [vmem:[%s9 + $0x8] sm:$0xff]
    %v11783 = vld [vmem:[%s9 + $0x10] sm:$0xff]
    %v11784 = vld [vmem:[%s9 + $0x18] sm:$0xff]
    %v11785 = vld [vmem:[%s10] sm:$0x1]
    %v11787 = vlaneseq
    %v11788 = vshrl.u32 %v11787, 7
    %v11789 = vsub.s32 0, %v11788
    %v11790 = vrot.slane %v11785, %v11789
    %vm11792 = vcmask 261120
    %v11794 = vsel %vm11792, %v11780, 0
    %11796 = vmatprep.subr.mxu0 0.0
    %11797 = vmatpush1.msra.mxu0 %v11781
    %11798 = vmatprep.subr.mxu0 0.0
    %11799 = vmatpush1.msra.mxu0 %v11782
    %11800 = vmatprep.subr.mxu0 0.0
    %11801 = vmatpush1.msra.mxu0 %v11783
    %11802 = vmatprep.subr.mxu0 0.0
    %11803 = vmatpush1.msra.mxu0 %v11784
    %11804 = vmatprep.subr.mxu0 0.0
    %11805 = vmatpush1.msra.mxu0 0.0
    %11806 = vmatprep.subr.mxu0 0.0
    %11807 = vmatpush1.msra.mxu0 0.0
    %11808 = vmatprep.subr.mxu0 0.0
    %11809 = vmatpush1.msra.mxu0 0.0
    %11810 = vmatprep.subr.mxu0 0.0
    %11811 = vmatpush1.msra.mxu0 0.0
    %11812 = vmatprep.subr.mxu0 0.0
    %11813 = vmatpush1.msra.mxu0 0.0
    %11814 = vmatprep.subr.mxu0 0.0
    %11815 = vmatpush1.msra.mxu0 0.0
    %11816 = vmatprep.subr.mxu0 0.0
    %11817 = vmatpush1.msra.mxu0 0.0
    %11818 = vmatprep.subr.mxu0 0.0
    %11819 = vmatpush1.msra.mxu0 0.0
    %11820 = vmatprep.subr.mxu0 0.0
    %11821 = vmatpush1.msra.mxu0 0.0
    %11822 = vmatprep.subr.mxu0 0.0
    %11823 = vmatpush1.msra.mxu0 0.0
    %11824 = vmatprep.subr.mxu0 0.0
    %11825 = vmatpush1.msra.mxu0 0.0
    %11826 = vmatprep.subr.mxu0 0.0
    %11827 = vmatpush1.msra.mxu0 0.0
    %11828 = vmatprep.subr.mxu0 0.0
    %11829 = vmatpush1.msra.mxu0 0.0
    %11830 = vmatprep.subr.mxu0 0.0
    %11831 = vmatpush1.msra.mxu0 0.0
    %11832 = vmatprep.subr.mxu0 0.0
    %11833 = vmatpush1.msra.mxu0 0.0
    %11834 = vmatprep.subr.mxu0 0.0
    %11835 = vmatpush1.msra.mxu0 0.0
    %11836 = vmatprep.subr.mxu0 0.0
    %11837 = vmatpush1.msra.mxu0 0.0
    %11838 = vmatprep.subr.mxu0 0.0
    %11839 = vmatpush1.msra.mxu0 0.0
    %11840 = vmatprep.subr.mxu0 0.0
    %11841 = vmatpush1.msra.mxu0 0.0
    %11842 = vmatprep.subr.mxu0 0.0
    %11843 = vmatpush1.msra.mxu0 0.0
    %11844 = vmatprep.subr.mxu0 0.0
    %11845 = vmatpush1.msra.mxu0 0.0
    %11846 = vmatprep.subr.mxu0 0.0
    %11847 = vmatpush1.msra.mxu0 0.0
    %11848 = vmatprep.subr.mxu0 0.0
    %11849 = vmatpush1.msra.mxu0 0.0
    %11850 = vmatprep.subr.mxu0 0.0
    %11851 = vmatpush1.msra.mxu0 0.0
    %11852 = vmatprep.subr.mxu0 0.0
    %11853 = vmatpush1.msra.mxu0 0.0
    %11854 = vmatprep.subr.mxu0 0.0
    %11855 = vmatpush1.msra.mxu0 0.0
    %11856 = vmatprep.subr.mxu0 0.0
    %11857 = vmatpush1.msra.mxu0 0.0
    %11858 = vmatprep.subr.mxu0 0.0
    %11859 = vmatpush1.msra.mxu0 0.0
    %11860 = vmatprep.mubr.f32.mxu0 0.0
    %11861 = vmatmul.mubr.f32.gmra.mrb[0].mxu0 %v11794
    %v11862 = vpop.f32.mrb[0].mxu0
    %v11863 = vadd.f32 %v11790, %v11862
    %v11864 = vpop.f32.mrb[0].mxu0
    %11865 = vdwg.mxu0
    %vm11866 = vcmp.ge.f32.partialorder %v11863, 0.0
    %v11867 = vsel %vm11866, 1.0, -1.0
    %v11868 = vld [vmem:[%s11] sm:$0xff]
    %v11869 = vld [vmem:[%s11 + $0x8] sm:$0xff]
    %v11870 = vld [vmem:[%s11 + $0x10] sm:$0xff]
    %v11871 = vld [vmem:[%s11 + $0x18] sm:$0xff]
    %v11872 = vld [vmem:[%s12] sm:$0x1]
    %v11874 = vlaneseq
    %v11875 = vshrl.u32 %v11874, 7
    %v11876 = vsub.s32 0, %v11875
    %v11877 = vrot.slane %v11872, %v11876
    %v11880 = vsel %vm11792, %v11867, 0
    %11882 = vmatprep.subr.mxu0 0.0
    %11883 = vmatpush1.msra.mxu0 %v11868
    %11884 = vmatprep.subr.mxu0 0.0
    %11885 = vmatpush1.msra.mxu0 %v11869
    %11886 = vmatprep.subr.mxu0 0.0
    %11887 = vmatpush1.msra.mxu0 %v11870
    %11888 = vmatprep.subr.mxu0 0.0
    %11889 = vmatpush1.msra.mxu0 %v11871
    %11890 = vmatprep.subr.mxu0 0.0
    %11891 = vmatpush1.msra.mxu0 0.0
    %11892 = vmatprep.subr.mxu0 0.0
    %11893 = vmatpush1.msra.mxu0 0.0
    %11894 = vmatprep.subr.mxu0 0.0
    %11895 = vmatpush1.msra.mxu0 0.0
    %11896 = vmatprep.subr.mxu0 0.0
    %11897 = vmatpush1.msra.mxu0 0.0
    %11898 = vmatprep.subr.mxu0 0.0
    %11899 = vmatpush1.msra.mxu0 0.0
    %11900 = vmatprep.subr.mxu0 0.0
    %11901 = vmatpush1.msra.mxu0 0.0
    %11902 = vmatprep.subr.mxu0 0.0
    %11903 = vmatpush1.msra.mxu0 0.0
    %11904 = vmatprep.subr.mxu0 0.0
    %11905 = vmatpush1.msra.mxu0 0.0
    %11906 = vmatprep.subr.mxu0 0.0
    %11907 = vmatpush1.msra.mxu0 0.0
    %11908 = vmatprep.subr.mxu0 0.0
    %11909 = vmatpush1.msra.mxu0 0.0
    %11910 = vmatprep.subr.mxu0 0.0
    %11911 = vmatpush1.msra.mxu0 0.0
    %11912 = vmatprep.subr.mxu0 0.0
    %11913 = vmatpush1.msra.mxu0 0.0
    %11914 = vmatprep.subr.mxu0 0.0
    %11915 = vmatpush1.msra.mxu0 0.0
    %11916 = vmatprep.subr.mxu0 0.0
    %11917 = vmatpush1.msra.mxu0 0.0
    %11918 = vmatprep.subr.mxu0 0.0
    %11919 = vmatpush1.msra.mxu0 0.0
    %11920 = vmatprep.subr.mxu0 0.0
    %11921 = vmatpush1.msra.mxu0 0.0
    %11922 = vmatprep.subr.mxu0 0.0
    %11923 = vmatpush1.msra.mxu0 0.0
    %11924 = vmatprep.subr.mxu0 0.0
    %11925 = vmatpush1.msra.mxu0 0.0
    %11926 = vmatprep.subr.mxu0 0.0
    %11927 = vmatpush1.msra.mxu0 0.0
    %11928 = vmatprep.subr.mxu0 0.0
    %11929 = vmatpush1.msra.mxu0 0.0
    %11930 = vmatprep.subr.mxu0 0.0
    %11931 = vmatpush1.msra.mxu0 0.0
    %11932 = vmatprep.subr.mxu0 0.0
    %11933 = vmatpush1.msra.mxu0 0.0
    %11934 = vmatprep.subr.mxu0 0.0
    %11935 = vmatpush1.msra.mxu0 0.0
    %11936 = vmatprep.subr.mxu0 0.0
    %11937 = vmatpush1.msra.mxu0 0.0
    %11938 = vmatprep.subr.mxu0 0.0
    %11939 = vmatpush1.msra.mxu0 0.0
    %11940 = vmatprep.subr.mxu0 0.0
    %11941 = vmatpush1.msra.mxu0 0.0
    %11942 = vmatprep.subr.mxu0 0.0
    %11943 = vmatpush1.msra.mxu0 0.0
    %11944 = vmatprep.subr.mxu0 0.0
    %11945 = vmatpush1.msra.mxu0 0.0
    %11946 = vmatprep.mubr.f32.mxu0 0.0
    %11947 = vmatmul.mubr.f32.gmra.mrb[0].mxu0 %v11880
    %v11948 = vpop.f32.mrb[0].mxu0
    %v11949 = vadd.f32 %v11877, %v11948
    %v11950 = vpop.f32.mrb[0].mxu0
    %11951 = vdwg.mxu0
    %vm11952 = vcmask 74752
    %11953 = vst.msk [vmem:[#allocation8] sm:$0x3] %vm11952, %v11949
    // Predicated region
    $region54: #{cnn_forward.1} parent=1 // pred_check
      _
    $region55: #{cnn_forward.1} parent=1 // pred_check_branch
      %11955 = sbr.rel (0) target = $region57
    $region56: #{cnn_forward.1} parent=1 // pred_region
      %s11957 = ssub.s32 32, 32
      %11958 = vsyncadd [#allocation9], %s11957
      %s11960 = sshll.u32 [#allocation8], 4
      %s11961 = int_to_ptr.vmem [resolvable:$true] %s11960
      %11963 = dma.vmem_to_hbm [thread:$0]  %s11961, 32, %s13, [#allocation9]
    $region57: #{cnn_forward.1} parent=1 // pred_fallthru
      _
    // Predicated region
    $region58: #{cnn_forward.1} parent=1 // pred_check
      _
    $region59: #{cnn_forward.1} parent=1 // pred_check_branch
      %11965 = sbr.rel (0) target = $region61
    $region60: #{cnn_forward.1} parent=1 // pred_region
      %11966 = dma.done [#allocation9], 32
    $region61: #{cnn_forward.1} parent=1 // pred_fallthru
      _
    %11967 = vsyncpa [#allocation9], 1

</llo_original>
